<compile_context>
chip_gen: v5e
topology: v5e:2x2
jax: 0.10.0
libtpu: 0.0.40
codegen_flags: <defaults>
</compile_context>

<pallas_src>
import jax
import jax.numpy as jnp
from jax.experimental import pallas as pl
from jax.experimental.pallas import tpu as pltpu


# --------------------------- fused conv + pool kernel ------------------------

def fused_conv_kernel(p1_ref, w1_ref, b1_ref, w2_ref, b2_ref, o_ref,
                      h1_scr, h2_scr):
    """Per image: conv1+ReLU, conv2+ReLU (in-kernel im2col), 2x2 max-pool."""
    # conv1: (676, 9) @ (9, 32) + bias, ReLU.
    h1_scr[...] = jnp.maximum(
        jnp.dot(p1_ref[0], w1_ref[...], preferred_element_type=jnp.float32)
        + b1_ref[...], 0.0)

    # conv2: 9 shifted-window matmuls over the flat 26-wide spatial layout.
    # Row m = i*26 + j of h1_scr is conv1's output at (i, j); tap (ki, kj)
    # just shifts the window by ki*26 + kj.  Columns j in {24, 25} of the
    # result are wrap-around garbage and are never read by the pool below.
    acc = None
    for k in range(9):
        ki, kj = divmod(k, 3)
        part = jnp.dot(h1_scr[pl.ds(ki * 26 + kj, 622), :], w2_ref[k],
                       preferred_element_type=jnp.float32)       # (622, 64)
        acc = part if acc is None else acc + part
    h2_scr[pl.ds(0, 622), :] = jnp.maximum(acc + b2_ref[...], 0.0)

    # Fused 2x2/stride-2 max-pool straight out of VMEM.  Output row h*12 + w
    # holds pooled[h, w, :], i.e. the activations already in NHWC-flat order.
    for h in range(12):
        r0 = 2 * h * 26
        a = h2_scr[pl.ds(r0,      12, stride=2), :]
        b = h2_scr[pl.ds(r0 + 1,  12, stride=2), :]
        c = h2_scr[pl.ds(r0 + 26, 12, stride=2), :]
        d = h2_scr[pl.ds(r0 + 27, 12, stride=2), :]
        o_ref[0, pl.ds(h * 12, 12), :] = jnp.maximum(jnp.maximum(a, b),
                                                     jnp.maximum(c, d))


# ------------------------------- MLP head kernel -----------------------------

def mlp_head_kernel(x_ref, w1_ref, b1_ref, w2_ref, b2_ref, o_ref, acc_ref):
    """fc1 (K-tiled, bf16 weights, f32 accumulation) + ReLU + fc2 + log_softmax."""
    k = pl.program_id(0)

    @pl.when(k == 0)
    def _():
        acc_ref[...] = jnp.zeros_like(acc_ref)

    acc_ref[...] += jnp.dot(x_ref[...].astype(jnp.bfloat16), w1_ref[...],
                            preferred_element_type=jnp.float32)

    @pl.when(k == pl.num_programs(0) - 1)
    def _():
        h = jnp.maximum(acc_ref[...] + b1_ref[...], 0.0)          # fc1 + ReLU
        z = jnp.dot(h, w2_ref[...],
                    preferred_element_type=jnp.float32) + b2_ref[...]
        m = jnp.max(z, axis=-1, keepdims=True)                    # log_softmax
        lse = m + jnp.log(jnp.sum(jnp.exp(z - m), axis=-1, keepdims=True))
        o_ref[...] = z - lse


# ----------------------------- pallas_call wrappers --------------------------

def fused_conv_pool(p1, w1, b1, w2, b2):
    n = p1.shape[0]
    return pl.pallas_call(
        fused_conv_kernel,
        out_shape=jax.ShapeDtypeStruct((n, 144, 64), jnp.float32),
        grid_spec=pltpu.PrefetchScalarGridSpec(
            num_scalar_prefetch=0,
            grid=(n,),
            in_specs=[
                pl.BlockSpec((1, 676, 9), lambda i: (i, 0, 0)),
                pl.BlockSpec((9, 32), lambda i: (0, 0)),
                pl.BlockSpec((1, 32), lambda i: (0, 0)),
                pl.BlockSpec((9, 32, 64), lambda i: (0, 0, 0)),
                pl.BlockSpec((1, 64), lambda i: (0, 0)),
            ],
            out_specs=pl.BlockSpec((1, 144, 64), lambda i: (i, 0, 0)),
            scratch_shapes=[pltpu.VMEM((676, 32), jnp.float32),
                            pltpu.VMEM((624, 64), jnp.float32)],
        ),
        compiler_params=pltpu.CompilerParams(
            dimension_semantics=("parallel",)),
    )(p1, w1, b1, w2, b2)


def mlp_head(x, w1_bf16, b1, w2, b2, *, k_tiles=4):
    n, kdim = x.shape
    _, hdim = w1_bf16.shape
    _, classes = w2.shape
    tk = kdim // k_tiles
    return pl.pallas_call(
        mlp_head_kernel,
        out_shape=jax.ShapeDtypeStruct((n, classes), jnp.float32),
        grid_spec=pltpu.PrefetchScalarGridSpec(
            num_scalar_prefetch=0,
            grid=(k_tiles,),
            in_specs=[
                pl.BlockSpec((n, tk), lambda k: (0, k)),
                pl.BlockSpec((tk, hdim), lambda k: (k, 0)),
                pl.BlockSpec((1, hdim), lambda k: (0, 0)),
                pl.BlockSpec((hdim, classes), lambda k: (0, 0)),
                pl.BlockSpec((1, classes), lambda k: (0, 0)),
            ],
            out_specs=pl.BlockSpec((n, classes), lambda k: (0, 0)),
            scratch_shapes=[pltpu.VMEM((n, hdim), jnp.float32)],
        ),
        compiler_params=pltpu.CompilerParams(
            dimension_semantics=("arbitrary",)),
    )(x, w1_bf16, b1, w2, b2)


# ----------------------------- glue & parameters -----------------------------

def im2col_conv1(x_img):
    """(N, 28, 28) -> (N, 676, 9) conv1 patches; column order (ki, kj)."""
    n = x_img.shape[0]
    cols = [x_img[:, i:i + 26, j:j + 26].reshape(n, 676)
            for i in range(3) for j in range(3)]
    return jnp.stack(cols, axis=-1)


def init_params(key, classes=2):
    ks = jax.random.split(key, 8)

    def uni(k, shape, fan_in):
        bound = 1.0 / jnp.sqrt(jnp.float32(fan_in))
        return jax.random.uniform(k, shape, jnp.float32, -bound, bound)

    return {
        "conv1_w": uni(ks[0], (32, 1, 3, 3), 1 * 9),
        "conv1_b": uni(ks[1], (32,), 1 * 9),
        "conv2_w": uni(ks[2], (64, 32, 3, 3), 32 * 9),
        "conv2_b": uni(ks[3], (64,), 32 * 9),
        "fc1_w": uni(ks[4], (128, 9216), 9216),   # torch Linear: (out, in)
        "fc1_b": uni(ks[5], (128,), 9216),
        "fc2_w": uni(ks[6], (classes, 128), 128),
        "fc2_b": uni(ks[7], (classes,), 128),
    }


def pack_params(p, classes=2):
    """One-time weight packing: conv weights to matmul layout, fc1 rows
    permuted to the pooled NHWC-flat order (folds torch.flatten's NCHW order
    into the weight) and stored as bf16 to halve the head's HBM traffic."""
    w1c = jnp.transpose(p["conv1_w"], (2, 3, 1, 0)).reshape(9, 32)
    w2c = jnp.transpose(p["conv2_w"], (2, 3, 1, 0)).reshape(9, 32, 64)
    # fc1_w[o, c*144 + h*12 + w]  ->  w1h[(h*12 + w)*64 + c, o]
    w1h = jnp.transpose(p["fc1_w"].reshape(128, 64, 144), (0, 2, 1))
    w1h = w1h.reshape(128, 9216).T.astype(jnp.bfloat16)            # (9216, 128)
    return {
        "w1c": w1c, "b1c": p["conv1_b"].reshape(1, 32),
        "w2c": w2c, "b2c": p["conv2_b"].reshape(1, 64),
        "w1h": w1h, "b1h": p["fc1_b"].reshape(1, 128),
        "w2h": p["fc2_w"].T, "b2h": p["fc2_b"].reshape(1, classes),
    }


def net_forward(x_nchw, kp):
    n = x_nchw.shape[0]
    x_img = x_nchw.reshape(n, 28, 28).astype(jnp.float32)
    p1 = im2col_conv1(x_img)                                    # (N, 676, 9)
    pooled = fused_conv_pool(p1, kp["w1c"], kp["b1c"], kp["w2c"], kp["b2c"])
    flat = pooled.reshape(n, 9216)     # NHWC-flat; fc1 rows permuted to match
    return mlp_head(flat, kp["w1h"], kp["b1h"], kp["w2h"], kp["b2h"])


# ----------------------------- reference (pure JAX) --------------------------

def reference_forward(x, params):
    hp = jax.lax.Precision.HIGHEST
    y = jax.lax.conv_general_dilated(
        x, params["conv1_w"], (1, 1), "VALID",
        dimension_numbers=("NCHW", "OIHW", "NCHW"), precision=hp)
    y = jax.nn.relu(y + params["conv1_b"][None, :, None, None])
    y = jax.lax.conv_general_dilated(
        y, params["conv2_w"], (1, 1), "VALID",
        dimension_numbers=("NCHW", "OIHW", "NCHW"), precision=hp)
    y = jax.nn.relu(y + params["conv2_b"][None, :, None, None])
    y = jax.lax.reduce_window(y, -jnp.inf, jax.lax.max,
                              (1, 1, 2, 2), (1, 1, 2, 2), "VALID")
    y = y.reshape(y.shape[0], -1)
    y = jax.nn.relu(jnp.dot(y, params["fc1_w"].T, precision=hp) + params["fc1_b"])
    y = jnp.dot(y, params["fc2_w"].T, precision=hp) + params["fc2_b"]
    return jax.nn.log_softmax(y, axis=1)


# ----------------------------------- main -------------------------------------

if __name__ == "__main__":
    classes = 2
    key = jax.random.PRNGKey(0)
    k_param, k_x = jax.random.split(key)
    params = init_params(k_param, classes=classes)
    kp = pack_params(params, classes=classes)

    # fc1 expects 9216 = 64*12*12 -> 28x28 single-channel images.
    x = jax.random.normal(k_x, (2, 1, 28, 28), dtype=jnp.float32)

    out = jax.jit(net_forward)(x, kp)
    out = jax.block_until_ready(out)

    ref = jax.block_until_ready(reference_forward(x, params))
    assert out.shape == (2, classes) and out.dtype == jnp.float32
    max_err = float(jnp.max(jnp.abs(out - ref)))
    # fc1 runs with bf16 weights/activations (f32 accumulation); everything
    # else is f32, so the error stays well inside this tolerance.
    assert max_err < 2e-2, f"mismatch vs reference: {max_err}"

    print("KERNEL_OK")
</pallas_src>

<mosaic_0001>
module attributes {stable_mosaic.version = 11 : i64} {
  func.func @fused_conv_kernel(%arg0: i32, %arg1: memref<1x676x9xf32, #tpu.memory_space<vmem>>, %arg2: memref<9x32xf32, #tpu.memory_space<vmem>>, %arg3: memref<1x32xf32, #tpu.memory_space<vmem>>, %arg4: memref<9x32x64xf32, #tpu.memory_space<vmem>>, %arg5: memref<1x64xf32, #tpu.memory_space<vmem>>, %arg6: memref<1x144x64xf32, #tpu.memory_space<vmem>>, %arg7: memref<676x32xf32, #tpu.memory_space<vmem>>, %arg8: memref<624x64xf32, #tpu.memory_space<vmem>>) attributes {dimension_semantics = [#tpu.dimension_semantics<parallel>], iteration_bounds = array<i64: 2>, scalar_prefetch = 0 : i64, scratch_operands = 2 : i64, tpu.core_type = #tpu.core_type<tc>, window_params = [{transform_indices = @transform_0, window_bounds = array<i64: 1, 676, 9>}, {pipeline_mode = #tpu.pipeline_mode<synchronous>, transform_indices = @transform_1, window_bounds = array<i64: 9, 32>}, {pipeline_mode = #tpu.pipeline_mode<synchronous>, transform_indices = @transform_2, window_bounds = array<i64: 1, 32>}, {pipeline_mode = #tpu.pipeline_mode<synchronous>, transform_indices = @transform_3, window_bounds = array<i64: 9, 32, 64>}, {pipeline_mode = #tpu.pipeline_mode<synchronous>, transform_indices = @transform_4, window_bounds = array<i64: 1, 64>}, {transform_indices = @transform_5, window_bounds = array<i64: 1, 144, 64>}]} {
    %c0 = arith.constant 0 : index
    %c0_0 = arith.constant 0 : index
    %c0_1 = arith.constant 0 : index
    %0 = vector.load %arg1[%c0, %c0_0, %c0_1] : memref<1x676x9xf32, #tpu.memory_space<vmem>>, vector<1x676x9xf32>
    %1 = vector.shape_cast %0 : vector<1x676x9xf32> to vector<676x9xf32>
    %c0_2 = arith.constant 0 : index
    %c0_3 = arith.constant 0 : index
    %2 = vector.load %arg2[%c0_2, %c0_3] : memref<9x32xf32, #tpu.memory_space<vmem>>, vector<9x32xf32>
    %cst = arith.constant dense<0.000000e+00> : vector<676x32xf32>
    %3 = tpu.matmul %1, %2, %cst {dimension_numbers = #tpu.dot_dimension_numbers<[1], [0], [0], [1], [0, 0, 1, 1], [], []>} : vector<676x9xf32>, vector<9x32xf32>, vector<676x32xf32> -> vector<676x32xf32>
    %c0_4 = arith.constant 0 : index
    %c0_5 = arith.constant 0 : index
    %4 = vector.load %arg3[%c0_4, %c0_5] : memref<1x32xf32, #tpu.memory_space<vmem>>, vector<1x32xf32>
    %5 = vector.broadcast %4 : vector<1x32xf32> to vector<676x32xf32>
    %6 = arith.addf %3, %5 : vector<676x32xf32>
    %cst_6 = arith.constant 0.000000e+00 : f32
    %7 = vector.broadcast %cst_6 : f32 to vector<676x32xf32>
    %8 = arith.maximumf %6, %7 : vector<676x32xf32>
    %c0_7 = arith.constant 0 : index
    %c0_8 = arith.constant 0 : index
    %9 = vector.load %arg7[%c0_7, %c0_8] : memref<676x32xf32, #tpu.memory_space<vmem>>, vector<676x32xf32>
    tpu.vector_store %arg7[%c0_7, %c0_8], %8 {strides = array<i32>} : memref<676x32xf32, #tpu.memory_space<vmem>>, vector<676x32xf32>,
    %c0_9 = arith.constant 0 : index
    %c0_10 = arith.constant 0 : index
    %10 = vector.load %arg7[%c0_9, %c0_10] : memref<676x32xf32, #tpu.memory_space<vmem>>, vector<622x32xf32>
    %c0_11 = arith.constant 0 : index
    %c0_12 = arith.constant 0 : index
    %c0_13 = arith.constant 0 : index
    %11 = vector.load %arg4[%c0_11, %c0_12, %c0_13] : memref<9x32x64xf32, #tpu.memory_space<vmem>>, vector<1x32x64xf32>
    %12 = vector.shape_cast %11 : vector<1x32x64xf32> to vector<32x64xf32>
    %cst_14 = arith.constant dense<0.000000e+00> : vector<622x64xf32>
    %13 = tpu.matmul %10, %12, %cst_14 {dimension_numbers = #tpu.dot_dimension_numbers<[1], [0], [0], [1], [0, 0, 1, 1], [], []>} : vector<622x32xf32>, vector<32x64xf32>, vector<622x64xf32> -> vector<622x64xf32>
    %c1 = arith.constant 1 : index
    %c0_15 = arith.constant 0 : index
    %14 = vector.load %arg7[%c1, %c0_15] : memref<676x32xf32, #tpu.memory_space<vmem>>, vector<622x32xf32>
    %c1_16 = arith.constant 1 : index
    %c0_17 = arith.constant 0 : index
    %c0_18 = arith.constant 0 : index
    %15 = vector.load %arg4[%c1_16, %c0_17, %c0_18] : memref<9x32x64xf32, #tpu.memory_space<vmem>>, vector<1x32x64xf32>
    %16 = vector.shape_cast %15 : vector<1x32x64xf32> to vector<32x64xf32>
    %cst_19 = arith.constant dense<0.000000e+00> : vector<622x64xf32>
    %17 = tpu.matmul %14, %16, %cst_19 {dimension_numbers = #tpu.dot_dimension_numbers<[1], [0], [0], [1], [0, 0, 1, 1], [], []>} : vector<622x32xf32>, vector<32x64xf32>, vector<622x64xf32> -> vector<622x64xf32>
    %18 = arith.addf %13, %17 : vector<622x64xf32>
    %c2 = arith.constant 2 : index
    %c0_20 = arith.constant 0 : index
    %19 = vector.load %arg7[%c2, %c0_20] : memref<676x32xf32, #tpu.memory_space<vmem>>, vector<622x32xf32>
    %c2_21 = arith.constant 2 : index
    %c0_22 = arith.constant 0 : index
    %c0_23 = arith.constant 0 : index
    %20 = vector.load %arg4[%c2_21, %c0_22, %c0_23] : memref<9x32x64xf32, #tpu.memory_space<vmem>>, vector<1x32x64xf32>
    %21 = vector.shape_cast %20 : vector<1x32x64xf32> to vector<32x64xf32>
    %cst_24 = arith.constant dense<0.000000e+00> : vector<622x64xf32>
    %22 = tpu.matmul %19, %21, %cst_24 {dimension_numbers = #tpu.dot_dimension_numbers<[1], [0], [0], [1], [0, 0, 1, 1], [], []>} : vector<622x32xf32>, vector<32x64xf32>, vector<622x64xf32> -> vector<622x64xf32>
    %23 = arith.addf %18, %22 : vector<622x64xf32>
    %c26 = arith.constant 26 : index
    %c0_25 = arith.constant 0 : index
    %24 = vector.load %arg7[%c26, %c0_25] : memref<676x32xf32, #tpu.memory_space<vmem>>, vector<622x32xf32>
    %c3 = arith.constant 3 : index
    %c0_26 = arith.constant 0 : index
    %c0_27 = arith.constant 0 : index
    %25 = vector.load %arg4[%c3, %c0_26, %c0_27] : memref<9x32x64xf32, #tpu.memory_space<vmem>>, vector<1x32x64xf32>
    %26 = vector.shape_cast %25 : vector<1x32x64xf32> to vector<32x64xf32>
    %cst_28 = arith.constant dense<0.000000e+00> : vector<622x64xf32>
    %27 = tpu.matmul %24, %26, %cst_28 {dimension_numbers = #tpu.dot_dimension_numbers<[1], [0], [0], [1], [0, 0, 1, 1], [], []>} : vector<622x32xf32>, vector<32x64xf32>, vector<622x64xf32> -> vector<622x64xf32>
    %28 = arith.addf %23, %27 : vector<622x64xf32>
    %c27 = arith.constant 27 : index
    %c0_29 = arith.constant 0 : index
    %29 = vector.load %arg7[%c27, %c0_29] : memref<676x32xf32, #tpu.memory_space<vmem>>, vector<622x32xf32>
    %c4 = arith.constant 4 : index
    %c0_30 = arith.constant 0 : index
    %c0_31 = arith.constant 0 : index
    %30 = vector.load %arg4[%c4, %c0_30, %c0_31] : memref<9x32x64xf32, #tpu.memory_space<vmem>>, vector<1x32x64xf32>
    %31 = vector.shape_cast %30 : vector<1x32x64xf32> to vector<32x64xf32>
    %cst_32 = arith.constant dense<0.000000e+00> : vector<622x64xf32>
    %32 = tpu.matmul %29, %31, %cst_32 {dimension_numbers = #tpu.dot_dimension_numbers<[1], [0], [0], [1], [0, 0, 1, 1], [], []>} : vector<622x32xf32>, vector<32x64xf32>, vector<622x64xf32> -> vector<622x64xf32>
    %33 = arith.addf %28, %32 : vector<622x64xf32>
    %c28 = arith.constant 28 : index
    %c0_33 = arith.constant 0 : index
    %34 = vector.load %arg7[%c28, %c0_33] : memref<676x32xf32, #tpu.memory_space<vmem>>, vector<622x32xf32>
    %c5 = arith.constant 5 : index
    %c0_34 = arith.constant 0 : index
    %c0_35 = arith.constant 0 : index
    %35 = vector.load %arg4[%c5, %c0_34, %c0_35] : memref<9x32x64xf32, #tpu.memory_space<vmem>>, vector<1x32x64xf32>
    %36 = vector.shape_cast %35 : vector<1x32x64xf32> to vector<32x64xf32>
    %cst_36 = arith.constant dense<0.000000e+00> : vector<622x64xf32>
    %37 = tpu.matmul %34, %36, %cst_36 {dimension_numbers = #tpu.dot_dimension_numbers<[1], [0], [0], [1], [0, 0, 1, 1], [], []>} : vector<622x32xf32>, vector<32x64xf32>, vector<622x64xf32> -> vector<622x64xf32>
    %38 = arith.addf %33, %37 : vector<622x64xf32>
    %c52 = arith.constant 52 : index
    %c0_37 = arith.constant 0 : index
    %39 = vector.load %arg7[%c52, %c0_37] : memref<676x32xf32, #tpu.memory_space<vmem>>, vector<622x32xf32>
    %c6 = arith.constant 6 : index
    %c0_38 = arith.constant 0 : index
    %c0_39 = arith.constant 0 : index
    %40 = vector.load %arg4[%c6, %c0_38, %c0_39] : memref<9x32x64xf32, #tpu.memory_space<vmem>>, vector<1x32x64xf32>
    %41 = vector.shape_cast %40 : vector<1x32x64xf32> to vector<32x64xf32>
    %cst_40 = arith.constant dense<0.000000e+00> : vector<622x64xf32>
    %42 = tpu.matmul %39, %41, %cst_40 {dimension_numbers = #tpu.dot_dimension_numbers<[1], [0], [0], [1], [0, 0, 1, 1], [], []>} : vector<622x32xf32>, vector<32x64xf32>, vector<622x64xf32> -> vector<622x64xf32>
    %43 = arith.addf %38, %42 : vector<622x64xf32>
    %c53 = arith.constant 53 : index
    %c0_41 = arith.constant 0 : index
    %44 = vector.load %arg7[%c53, %c0_41] : memref<676x32xf32, #tpu.memory_space<vmem>>, vector<622x32xf32>
    %c7 = arith.constant 7 : index
    %c0_42 = arith.constant 0 : index
    %c0_43 = arith.constant 0 : index
    %45 = vector.load %arg4[%c7, %c0_42, %c0_43] : memref<9x32x64xf32, #tpu.memory_space<vmem>>, vector<1x32x64xf32>
    %46 = vector.shape_cast %45 : vector<1x32x64xf32> to vector<32x64xf32>
    %cst_44 = arith.constant dense<0.000000e+00> : vector<622x64xf32>
    %47 = tpu.matmul %44, %46, %cst_44 {dimension_numbers = #tpu.dot_dimension_numbers<[1], [0], [0], [1], [0, 0, 1, 1], [], []>} : vector<622x32xf32>, vector<32x64xf32>, vector<622x64xf32> -> vector<622x64xf32>
    %48 = arith.addf %43, %47 : vector<622x64xf32>
    %c54 = arith.constant 54 : index
    %c0_45 = arith.constant 0 : index
    %49 = vector.load %arg7[%c54, %c0_45] : memref<676x32xf32, #tpu.memory_space<vmem>>, vector<622x32xf32>
    %c8 = arith.constant 8 : index
    %c0_46 = arith.constant 0 : index
    %c0_47 = arith.constant 0 : index
    %50 = vector.load %arg4[%c8, %c0_46, %c0_47] : memref<9x32x64xf32, #tpu.memory_space<vmem>>, vector<1x32x64xf32>
    %51 = vector.shape_cast %50 : vector<1x32x64xf32> to vector<32x64xf32>
    %cst_48 = arith.constant dense<0.000000e+00> : vector<622x64xf32>
    %52 = tpu.matmul %49, %51, %cst_48 {dimension_numbers = #tpu.dot_dimension_numbers<[1], [0], [0], [1], [0, 0, 1, 1], [], []>} : vector<622x32xf32>, vector<32x64xf32>, vector<622x64xf32> -> vector<622x64xf32>
    %53 = arith.addf %48, %52 : vector<622x64xf32>
    %c0_49 = arith.constant 0 : index
    %c0_50 = arith.constant 0 : index
    %54 = vector.load %arg5[%c0_49, %c0_50] : memref<1x64xf32, #tpu.memory_space<vmem>>, vector<1x64xf32>
    %55 = vector.broadcast %54 : vector<1x64xf32> to vector<622x64xf32>
    %56 = arith.addf %53, %55 : vector<622x64xf32>
    %cst_51 = arith.constant 0.000000e+00 : f32
    %57 = vector.broadcast %cst_51 : f32 to vector<622x64xf32>
    %58 = arith.maximumf %56, %57 : vector<622x64xf32>
    %c0_52 = arith.constant 0 : index
    %c0_53 = arith.constant 0 : index
    %59 = vector.load %arg8[%c0_52, %c0_53] : memref<624x64xf32, #tpu.memory_space<vmem>>, vector<622x64xf32>
    tpu.vector_store %arg8[%c0_52, %c0_53], %58 {strides = array<i32>} : memref<624x64xf32, #tpu.memory_space<vmem>>, vector<622x64xf32>,
    %c0_54 = arith.constant 0 : index
    %c0_55 = arith.constant 0 : index
    %60 = tpu.strided_load %arg8[%c0_54, %c0_55] {strides = array<i32: 2, 1>} : memref<624x64xf32, #tpu.memory_space<vmem>>, vector<12x64xf32>
    %c1_56 = arith.constant 1 : index
    %c0_57 = arith.constant 0 : index
    %61 = tpu.strided_load %arg8[%c1_56, %c0_57] {strides = array<i32: 2, 1>} : memref<624x64xf32, #tpu.memory_space<vmem>>, vector<12x64xf32>
    %c26_58 = arith.constant 26 : index
    %c0_59 = arith.constant 0 : index
    %62 = tpu.strided_load %arg8[%c26_58, %c0_59] {strides = array<i32: 2, 1>} : memref<624x64xf32, #tpu.memory_space<vmem>>, vector<12x64xf32>
    %c27_60 = arith.constant 27 : index
    %c0_61 = arith.constant 0 : index
    %63 = tpu.strided_load %arg8[%c27_60, %c0_61] {strides = array<i32: 2, 1>} : memref<624x64xf32, #tpu.memory_space<vmem>>, vector<12x64xf32>
    %64 = arith.maximumf %60, %61 : vector<12x64xf32>
    %65 = arith.maximumf %62, %63 : vector<12x64xf32>
    %66 = arith.maximumf %64, %65 : vector<12x64xf32>
    %c0_62 = arith.constant 0 : index
    %c0_63 = arith.constant 0 : index
    %c0_64 = arith.constant 0 : index
    %67 = vector.load %arg6[%c0_62, %c0_63, %c0_64] : memref<1x144x64xf32, #tpu.memory_space<vmem>>, vector<1x12x64xf32>
    %68 = vector.shape_cast %67 : vector<1x12x64xf32> to vector<12x64xf32>
    %69 = vector.shape_cast %66 : vector<12x64xf32> to vector<1x12x64xf32>
    tpu.vector_store %arg6[%c0_62, %c0_63, %c0_64], %69 {strides = array<i32>} : memref<1x144x64xf32, #tpu.memory_space<vmem>>, vector<1x12x64xf32>,
    %c52_65 = arith.constant 52 : index
    %c0_66 = arith.constant 0 : index
    %70 = tpu.strided_load %arg8[%c52_65, %c0_66] {strides = array<i32: 2, 1>} : memref<624x64xf32, #tpu.memory_space<vmem>>, vector<12x64xf32>
    %c53_67 = arith.constant 53 : index
    %c0_68 = arith.constant 0 : index
    %71 = tpu.strided_load %arg8[%c53_67, %c0_68] {strides = array<i32: 2, 1>} : memref<624x64xf32, #tpu.memory_space<vmem>>, vector<12x64xf32>
    %c78 = arith.constant 78 : index
    %c0_69 = arith.constant 0 : index
    %72 = tpu.strided_load %arg8[%c78, %c0_69] {strides = array<i32: 2, 1>} : memref<624x64xf32, #tpu.memory_space<vmem>>, vector<12x64xf32>
    %c79 = arith.constant 79 : index
    %c0_70 = arith.constant 0 : index
    %73 = tpu.strided_load %arg8[%c79, %c0_70] {strides = array<i32: 2, 1>} : memref<624x64xf32, #tpu.memory_space<vmem>>, vector<12x64xf32>
    %74 = arith.maximumf %70, %71 : vector<12x64xf32>
    %75 = arith.maximumf %72, %73 : vector<12x64xf32>
    %76 = arith.maximumf %74, %75 : vector<12x64xf32>
    %c0_71 = arith.constant 0 : index
    %c12 = arith.constant 12 : index
    %c0_72 = arith.constant 0 : index
    %77 = vector.load %arg6[%c0_71, %c12, %c0_72] : memref<1x144x64xf32, #tpu.memory_space<vmem>>, vector<1x12x64xf32>
    %78 = vector.shape_cast %77 : vector<1x12x64xf32> to vector<12x64xf32>
    %79 = vector.shape_cast %76 : vector<12x64xf32> to vector<1x12x64xf32>
    tpu.vector_store %arg6[%c0_71, %c12, %c0_72], %79 {strides = array<i32>} : memref<1x144x64xf32, #tpu.memory_space<vmem>>, vector<1x12x64xf32>,
    %c104 = arith.constant 104 : index
    %c0_73 = arith.constant 0 : index
    %80 = tpu.strided_load %arg8[%c104, %c0_73] {strides = array<i32: 2, 1>} : memref<624x64xf32, #tpu.memory_space<vmem>>, vector<12x64xf32>
    %c105 = arith.constant 105 : index
    %c0_74 = arith.constant 0 : index
    %81 = tpu.strided_load %arg8[%c105, %c0_74] {strides = array<i32: 2, 1>} : memref<624x64xf32, #tpu.memory_space<vmem>>, vector<12x64xf32>
    %c130 = arith.constant 130 : index
    %c0_75 = arith.constant 0 : index
    %82 = tpu.strided_load %arg8[%c130, %c0_75] {strides = array<i32: 2, 1>} : memref<624x64xf32, #tpu.memory_space<vmem>>, vector<12x64xf32>
    %c131 = arith.constant 131 : index
    %c0_76 = arith.constant 0 : index
    %83 = tpu.strided_load %arg8[%c131, %c0_76] {strides = array<i32: 2, 1>} : memref<624x64xf32, #tpu.memory_space<vmem>>, vector<12x64xf32>
    %84 = arith.maximumf %80, %81 : vector<12x64xf32>
    %85 = arith.maximumf %82, %83 : vector<12x64xf32>
    %86 = arith.maximumf %84, %85 : vector<12x64xf32>
    %c0_77 = arith.constant 0 : index
    %c24 = arith.constant 24 : index
    %c0_78 = arith.constant 0 : index
    %87 = vector.load %arg6[%c0_77, %c24, %c0_78] : memref<1x144x64xf32, #tpu.memory_space<vmem>>, vector<1x12x64xf32>
    %88 = vector.shape_cast %87 : vector<1x12x64xf32> to vector<12x64xf32>
    %89 = vector.shape_cast %86 : vector<12x64xf32> to vector<1x12x64xf32>
    tpu.vector_store %arg6[%c0_77, %c24, %c0_78], %89 {strides = array<i32>} : memref<1x144x64xf32, #tpu.memory_space<vmem>>, vector<1x12x64xf32>,
    %c156 = arith.constant 156 : index
    %c0_79 = arith.constant 0 : index
    %90 = tpu.strided_load %arg8[%c156, %c0_79] {strides = array<i32: 2, 1>} : memref<624x64xf32, #tpu.memory_space<vmem>>, vector<12x64xf32>
    %c157 = arith.constant 157 : index
    %c0_80 = arith.constant 0 : index
    %91 = tpu.strided_load %arg8[%c157, %c0_80] {strides = array<i32: 2, 1>} : memref<624x64xf32, #tpu.memory_space<vmem>>, vector<12x64xf32>
    %c182 = arith.constant 182 : index
    %c0_81 = arith.constant 0 : index
    %92 = tpu.strided_load %arg8[%c182, %c0_81] {strides = array<i32: 2, 1>} : memref<624x64xf32, #tpu.memory_space<vmem>>, vector<12x64xf32>
    %c183 = arith.constant 183 : index
    %c0_82 = arith.constant 0 : index
    %93 = tpu.strided_load %arg8[%c183, %c0_82] {strides = array<i32: 2, 1>} : memref<624x64xf32, #tpu.memory_space<vmem>>, vector<12x64xf32>
    %94 = arith.maximumf %90, %91 : vector<12x64xf32>
    %95 = arith.maximumf %92, %93 : vector<12x64xf32>
    %96 = arith.maximumf %94, %95 : vector<12x64xf32>
    %c0_83 = arith.constant 0 : index
    %c36 = arith.constant 36 : index
    %c0_84 = arith.constant 0 : index
    %97 = vector.load %arg6[%c0_83, %c36, %c0_84] : memref<1x144x64xf32, #tpu.memory_space<vmem>>, vector<1x12x64xf32>
    %98 = vector.shape_cast %97 : vector<1x12x64xf32> to vector<12x64xf32>
    %99 = vector.shape_cast %96 : vector<12x64xf32> to vector<1x12x64xf32>
    tpu.vector_store %arg6[%c0_83, %c36, %c0_84], %99 {strides = array<i32>} : memref<1x144x64xf32, #tpu.memory_space<vmem>>, vector<1x12x64xf32>,
    %c208 = arith.constant 208 : index
    %c0_85 = arith.constant 0 : index
    %100 = tpu.strided_load %arg8[%c208, %c0_85] {strides = array<i32: 2, 1>} : memref<624x64xf32, #tpu.memory_space<vmem>>, vector<12x64xf32>
    %c209 = arith.constant 209 : index
    %c0_86 = arith.constant 0 : index
    %101 = tpu.strided_load %arg8[%c209, %c0_86] {strides = array<i32: 2, 1>} : memref<624x64xf32, #tpu.memory_space<vmem>>, vector<12x64xf32>
    %c234 = arith.constant 234 : index
    %c0_87 = arith.constant 0 : index
    %102 = tpu.strided_load %arg8[%c234, %c0_87] {strides = array<i32: 2, 1>} : memref<624x64xf32, #tpu.memory_space<vmem>>, vector<12x64xf32>
    %c235 = arith.constant 235 : index
    %c0_88 = arith.constant 0 : index
    %103 = tpu.strided_load %arg8[%c235, %c0_88] {strides = array<i32: 2, 1>} : memref<624x64xf32, #tpu.memory_space<vmem>>, vector<12x64xf32>
    %104 = arith.maximumf %100, %101 : vector<12x64xf32>
    %105 = arith.maximumf %102, %103 : vector<12x64xf32>
    %106 = arith.maximumf %104, %105 : vector<12x64xf32>
    %c0_89 = arith.constant 0 : index
    %c48 = arith.constant 48 : index
    %c0_90 = arith.constant 0 : index
    %107 = vector.load %arg6[%c0_89, %c48, %c0_90] : memref<1x144x64xf32, #tpu.memory_space<vmem>>, vector<1x12x64xf32>
    %108 = vector.shape_cast %107 : vector<1x12x64xf32> to vector<12x64xf32>
    %109 = vector.shape_cast %106 : vector<12x64xf32> to vector<1x12x64xf32>
    tpu.vector_store %arg6[%c0_89, %c48, %c0_90], %109 {strides = array<i32>} : memref<1x144x64xf32, #tpu.memory_space<vmem>>, vector<1x12x64xf32>,
    %c260 = arith.constant 260 : index
    %c0_91 = arith.constant 0 : index
    %110 = tpu.strided_load %arg8[%c260, %c0_91] {strides = array<i32: 2, 1>} : memref<624x64xf32, #tpu.memory_space<vmem>>, vector<12x64xf32>
    %c261 = arith.constant 261 : index
    %c0_92 = arith.constant 0 : index
    %111 = tpu.strided_load %arg8[%c261, %c0_92] {strides = array<i32: 2, 1>} : memref<624x64xf32, #tpu.memory_space<vmem>>, vector<12x64xf32>
    %c286 = arith.constant 286 : index
    %c0_93 = arith.constant 0 : index
    %112 = tpu.strided_load %arg8[%c286, %c0_93] {strides = array<i32: 2, 1>} : memref<624x64xf32, #tpu.memory_space<vmem>>, vector<12x64xf32>
    %c287 = arith.constant 287 : index
    %c0_94 = arith.constant 0 : index
    %113 = tpu.strided_load %arg8[%c287, %c0_94] {strides = array<i32: 2, 1>} : memref<624x64xf32, #tpu.memory_space<vmem>>, vector<12x64xf32>
    %114 = arith.maximumf %110, %111 : vector<12x64xf32>
    %115 = arith.maximumf %112, %113 : vector<12x64xf32>
    %116 = arith.maximumf %114, %115 : vector<12x64xf32>
    %c0_95 = arith.constant 0 : index
    %c60 = arith.constant 60 : index
    %c0_96 = arith.constant 0 : index
    %117 = vector.load %arg6[%c0_95, %c60, %c0_96] : memref<1x144x64xf32, #tpu.memory_space<vmem>>, vector<1x12x64xf32>
    %118 = vector.shape_cast %117 : vector<1x12x64xf32> to vector<12x64xf32>
    %119 = vector.shape_cast %116 : vector<12x64xf32> to vector<1x12x64xf32>
    tpu.vector_store %arg6[%c0_95, %c60, %c0_96], %119 {strides = array<i32>} : memref<1x144x64xf32, #tpu.memory_space<vmem>>, vector<1x12x64xf32>,
    %c312 = arith.constant 312 : index
    %c0_97 = arith.constant 0 : index
    %120 = tpu.strided_load %arg8[%c312, %c0_97] {strides = array<i32: 2, 1>} : memref<624x64xf32, #tpu.memory_space<vmem>>, vector<12x64xf32>
    %c313 = arith.constant 313 : index
    %c0_98 = arith.constant 0 : index
    %121 = tpu.strided_load %arg8[%c313, %c0_98] {strides = array<i32: 2, 1>} : memref<624x64xf32, #tpu.memory_space<vmem>>, vector<12x64xf32>
    %c338 = arith.constant 338 : index
    %c0_99 = arith.constant 0 : index
    %122 = tpu.strided_load %arg8[%c338, %c0_99] {strides = array<i32: 2, 1>} : memref<624x64xf32, #tpu.memory_space<vmem>>, vector<12x64xf32>
    %c339 = arith.constant 339 : index
    %c0_100 = arith.constant 0 : index
    %123 = tpu.strided_load %arg8[%c339, %c0_100] {strides = array<i32: 2, 1>} : memref<624x64xf32, #tpu.memory_space<vmem>>, vector<12x64xf32>
    %124 = arith.maximumf %120, %121 : vector<12x64xf32>
    %125 = arith.maximumf %122, %123 : vector<12x64xf32>
    %126 = arith.maximumf %124, %125 : vector<12x64xf32>
    %c0_101 = arith.constant 0 : index
    %c72 = arith.constant 72 : index
    %c0_102 = arith.constant 0 : index
    %127 = vector.load %arg6[%c0_101, %c72, %c0_102] : memref<1x144x64xf32, #tpu.memory_space<vmem>>, vector<1x12x64xf32>
    %128 = vector.shape_cast %127 : vector<1x12x64xf32> to vector<12x64xf32>
    %129 = vector.shape_cast %126 : vector<12x64xf32> to vector<1x12x64xf32>
    tpu.vector_store %arg6[%c0_101, %c72, %c0_102], %129 {strides = array<i32>} : memref<1x144x64xf32, #tpu.memory_space<vmem>>, vector<1x12x64xf32>,
    %c364 = arith.constant 364 : index
    %c0_103 = arith.constant 0 : index
    %130 = tpu.strided_load %arg8[%c364, %c0_103] {strides = array<i32: 2, 1>} : memref<624x64xf32, #tpu.memory_space<vmem>>, vector<12x64xf32>
    %c365 = arith.constant 365 : index
    %c0_104 = arith.constant 0 : index
    %131 = tpu.strided_load %arg8[%c365, %c0_104] {strides = array<i32: 2, 1>} : memref<624x64xf32, #tpu.memory_space<vmem>>, vector<12x64xf32>
    %c390 = arith.constant 390 : index
    %c0_105 = arith.constant 0 : index
    %132 = tpu.strided_load %arg8[%c390, %c0_105] {strides = array<i32: 2, 1>} : memref<624x64xf32, #tpu.memory_space<vmem>>, vector<12x64xf32>
    %c391 = arith.constant 391 : index
    %c0_106 = arith.constant 0 : index
    %133 = tpu.strided_load %arg8[%c391, %c0_106] {strides = array<i32: 2, 1>} : memref<624x64xf32, #tpu.memory_space<vmem>>, vector<12x64xf32>
    %134 = arith.maximumf %130, %131 : vector<12x64xf32>
    %135 = arith.maximumf %132, %133 : vector<12x64xf32>
    %136 = arith.maximumf %134, %135 : vector<12x64xf32>
    %c0_107 = arith.constant 0 : index
    %c84 = arith.constant 84 : index
    %c0_108 = arith.constant 0 : index
    %137 = vector.load %arg6[%c0_107, %c84, %c0_108] : memref<1x144x64xf32, #tpu.memory_space<vmem>>, vector<1x12x64xf32>
    %138 = vector.shape_cast %137 : vector<1x12x64xf32> to vector<12x64xf32>
    %139 = vector.shape_cast %136 : vector<12x64xf32> to vector<1x12x64xf32>
    tpu.vector_store %arg6[%c0_107, %c84, %c0_108], %139 {strides = array<i32>} : memref<1x144x64xf32, #tpu.memory_space<vmem>>, vector<1x12x64xf32>,
    %c416 = arith.constant 416 : index
    %c0_109 = arith.constant 0 : index
    %140 = tpu.strided_load %arg8[%c416, %c0_109] {strides = array<i32: 2, 1>} : memref<624x64xf32, #tpu.memory_space<vmem>>, vector<12x64xf32>
    %c417 = arith.constant 417 : index
    %c0_110 = arith.constant 0 : index
    %141 = tpu.strided_load %arg8[%c417, %c0_110] {strides = array<i32: 2, 1>} : memref<624x64xf32, #tpu.memory_space<vmem>>, vector<12x64xf32>
    %c442 = arith.constant 442 : index
    %c0_111 = arith.constant 0 : index
    %142 = tpu.strided_load %arg8[%c442, %c0_111] {strides = array<i32: 2, 1>} : memref<624x64xf32, #tpu.memory_space<vmem>>, vector<12x64xf32>
    %c443 = arith.constant 443 : index
    %c0_112 = arith.constant 0 : index
    %143 = tpu.strided_load %arg8[%c443, %c0_112] {strides = array<i32: 2, 1>} : memref<624x64xf32, #tpu.memory_space<vmem>>, vector<12x64xf32>
    %144 = arith.maximumf %140, %141 : vector<12x64xf32>
    %145 = arith.maximumf %142, %143 : vector<12x64xf32>
    %146 = arith.maximumf %144, %145 : vector<12x64xf32>
    %c0_113 = arith.constant 0 : index
    %c96 = arith.constant 96 : index
    %c0_114 = arith.constant 0 : index
    %147 = vector.load %arg6[%c0_113, %c96, %c0_114] : memref<1x144x64xf32, #tpu.memory_space<vmem>>, vector<1x12x64xf32>
    %148 = vector.shape_cast %147 : vector<1x12x64xf32> to vector<12x64xf32>
    %149 = vector.shape_cast %146 : vector<12x64xf32> to vector<1x12x64xf32>
    tpu.vector_store %arg6[%c0_113, %c96, %c0_114], %149 {strides = array<i32>} : memref<1x144x64xf32, #tpu.memory_space<vmem>>, vector<1x12x64xf32>,
    %c468 = arith.constant 468 : index
    %c0_115 = arith.constant 0 : index
    %150 = tpu.strided_load %arg8[%c468, %c0_115] {strides = array<i32: 2, 1>} : memref<624x64xf32, #tpu.memory_space<vmem>>, vector<12x64xf32>
    %c469 = arith.constant 469 : index
    %c0_116 = arith.constant 0 : index
    %151 = tpu.strided_load %arg8[%c469, %c0_116] {strides = array<i32: 2, 1>} : memref<624x64xf32, #tpu.memory_space<vmem>>, vector<12x64xf32>
    %c494 = arith.constant 494 : index
    %c0_117 = arith.constant 0 : index
    %152 = tpu.strided_load %arg8[%c494, %c0_117] {strides = array<i32: 2, 1>} : memref<624x64xf32, #tpu.memory_space<vmem>>, vector<12x64xf32>
    %c495 = arith.constant 495 : index
    %c0_118 = arith.constant 0 : index
    %153 = tpu.strided_load %arg8[%c495, %c0_118] {strides = array<i32: 2, 1>} : memref<624x64xf32, #tpu.memory_space<vmem>>, vector<12x64xf32>
    %154 = arith.maximumf %150, %151 : vector<12x64xf32>
    %155 = arith.maximumf %152, %153 : vector<12x64xf32>
    %156 = arith.maximumf %154, %155 : vector<12x64xf32>
    %c0_119 = arith.constant 0 : index
    %c108 = arith.constant 108 : index
    %c0_120 = arith.constant 0 : index
    %157 = vector.load %arg6[%c0_119, %c108, %c0_120] : memref<1x144x64xf32, #tpu.memory_space<vmem>>, vector<1x12x64xf32>
    %158 = vector.shape_cast %157 : vector<1x12x64xf32> to vector<12x64xf32>
    %159 = vector.shape_cast %156 : vector<12x64xf32> to vector<1x12x64xf32>
    tpu.vector_store %arg6[%c0_119, %c108, %c0_120], %159 {strides = array<i32>} : memref<1x144x64xf32, #tpu.memory_space<vmem>>, vector<1x12x64xf32>,
    %c520 = arith.constant 520 : index
    %c0_121 = arith.constant 0 : index
    %160 = tpu.strided_load %arg8[%c520, %c0_121] {strides = array<i32: 2, 1>} : memref<624x64xf32, #tpu.memory_space<vmem>>, vector<12x64xf32>
    %c521 = arith.constant 521 : index
    %c0_122 = arith.constant 0 : index
    %161 = tpu.strided_load %arg8[%c521, %c0_122] {strides = array<i32: 2, 1>} : memref<624x64xf32, #tpu.memory_space<vmem>>, vector<12x64xf32>
    %c546 = arith.constant 546 : index
    %c0_123 = arith.constant 0 : index
    %162 = tpu.strided_load %arg8[%c546, %c0_123] {strides = array<i32: 2, 1>} : memref<624x64xf32, #tpu.memory_space<vmem>>, vector<12x64xf32>
    %c547 = arith.constant 547 : index
    %c0_124 = arith.constant 0 : index
    %163 = tpu.strided_load %arg8[%c547, %c0_124] {strides = array<i32: 2, 1>} : memref<624x64xf32, #tpu.memory_space<vmem>>, vector<12x64xf32>
    %164 = arith.maximumf %160, %161 : vector<12x64xf32>
    %165 = arith.maximumf %162, %163 : vector<12x64xf32>
    %166 = arith.maximumf %164, %165 : vector<12x64xf32>
    %c0_125 = arith.constant 0 : index
    %c120 = arith.constant 120 : index
    %c0_126 = arith.constant 0 : index
    %167 = vector.load %arg6[%c0_125, %c120, %c0_126] : memref<1x144x64xf32, #tpu.memory_space<vmem>>, vector<1x12x64xf32>
    %168 = vector.shape_cast %167 : vector<1x12x64xf32> to vector<12x64xf32>
    %169 = vector.shape_cast %166 : vector<12x64xf32> to vector<1x12x64xf32>
    tpu.vector_store %arg6[%c0_125, %c120, %c0_126], %169 {strides = array<i32>} : memref<1x144x64xf32, #tpu.memory_space<vmem>>, vector<1x12x64xf32>,
    %c572 = arith.constant 572 : index
    %c0_127 = arith.constant 0 : index
    %170 = tpu.strided_load %arg8[%c572, %c0_127] {strides = array<i32: 2, 1>} : memref<624x64xf32, #tpu.memory_space<vmem>>, vector<12x64xf32>
    %c573 = arith.constant 573 : index
    %c0_128 = arith.constant 0 : index
    %171 = tpu.strided_load %arg8[%c573, %c0_128] {strides = array<i32: 2, 1>} : memref<624x64xf32, #tpu.memory_space<vmem>>, vector<12x64xf32>
    %c598 = arith.constant 598 : index
    %c0_129 = arith.constant 0 : index
    %172 = tpu.strided_load %arg8[%c598, %c0_129] {strides = array<i32: 2, 1>} : memref<624x64xf32, #tpu.memory_space<vmem>>, vector<12x64xf32>
    %c599 = arith.constant 599 : index
    %c0_130 = arith.constant 0 : index
    %173 = tpu.strided_load %arg8[%c599, %c0_130] {strides = array<i32: 2, 1>} : memref<624x64xf32, #tpu.memory_space<vmem>>, vector<12x64xf32>
    %174 = arith.maximumf %170, %171 : vector<12x64xf32>
    %175 = arith.maximumf %172, %173 : vector<12x64xf32>
    %176 = arith.maximumf %174, %175 : vector<12x64xf32>
    %c0_131 = arith.constant 0 : index
    %c132 = arith.constant 132 : index
    %c0_132 = arith.constant 0 : index
    %177 = vector.load %arg6[%c0_131, %c132, %c0_132] : memref<1x144x64xf32, #tpu.memory_space<vmem>>, vector<1x12x64xf32>
    %178 = vector.shape_cast %177 : vector<1x12x64xf32> to vector<12x64xf32>
    %179 = vector.shape_cast %176 : vector<12x64xf32> to vector<1x12x64xf32>
    tpu.vector_store %arg6[%c0_131, %c132, %c0_132], %179 {strides = array<i32>} : memref<1x144x64xf32, #tpu.memory_space<vmem>>, vector<1x12x64xf32>,
    return
  }
  func.func @transform_0(%arg0: i32) -> (i32, i32, i32) {
    %c0_i32 = arith.constant 0 : i32
    %c0_i32_0 = arith.constant 0 : i32
    %c0_i32_1 = arith.constant 0 : i32
    return %arg0, %c0_i32, %c0_i32_0 : i32, i32, i32
  }
  func.func @transform_1(%arg0: i32) -> (i32, i32) {
    %c0_i32 = arith.constant 0 : i32
    %c0_i32_0 = arith.constant 0 : i32
    %c0_i32_1 = arith.constant 0 : i32
    return %c0_i32, %c0_i32_0 : i32, i32
  }
  func.func @transform_2(%arg0: i32) -> (i32, i32) {
    %c0_i32 = arith.constant 0 : i32
    %c0_i32_0 = arith.constant 0 : i32
    %c0_i32_1 = arith.constant 0 : i32
    return %c0_i32, %c0_i32_0 : i32, i32
  }
  func.func @transform_3(%arg0: i32) -> (i32, i32, i32) {
    %c0_i32 = arith.constant 0 : i32
    %c0_i32_0 = arith.constant 0 : i32
    %c0_i32_1 = arith.constant 0 : i32
    %c0_i32_2 = arith.constant 0 : i32
    return %c0_i32, %c0_i32_0, %c0_i32_1 : i32, i32, i32
  }
  func.func @transform_4(%arg0: i32) -> (i32, i32) {
    %c0_i32 = arith.constant 0 : i32
    %c0_i32_0 = arith.constant 0 : i32
    %c0_i32_1 = arith.constant 0 : i32
    return %c0_i32, %c0_i32_0 : i32, i32
  }
  func.func @transform_5(%arg0: i32) -> (i32, i32, i32) {
    %c0_i32 = arith.constant 0 : i32
    %c0_i32_0 = arith.constant 0 : i32
    %c0_i32_1 = arith.constant 0 : i32
    return %arg0, %c0_i32, %c0_i32_0 : i32, i32, i32
  }
}

module attributes {stable_mosaic.version = 11 : i64} {
  func.func @mlp_head_kernel(%arg0: i32, %arg1: memref<2x2304xf32, #tpu.memory_space<vmem>>, %arg2: memref<2304x128xbf16, #tpu.memory_space<vmem>>, %arg3: memref<1x128xf32, #tpu.memory_space<vmem>>, %arg4: memref<128x2xf32, #tpu.memory_space<vmem>>, %arg5: memref<1x2xf32, #tpu.memory_space<vmem>>, %arg6: memref<2x2xf32, #tpu.memory_space<vmem>>, %arg7: memref<2x128xf32, #tpu.memory_space<vmem>>) attributes {dimension_semantics = [#tpu.dimension_semantics<arbitrary>], iteration_bounds = array<i64: 4>, scalar_prefetch = 0 : i64, scratch_operands = 1 : i64, tpu.core_type = #tpu.core_type<tc>, window_params = [{transform_indices = @transform_0, window_bounds = array<i64: 2, 2304>}, {transform_indices = @transform_1, window_bounds = array<i64: 2304, 128>}, {pipeline_mode = #tpu.pipeline_mode<synchronous>, transform_indices = @transform_2, window_bounds = array<i64: 1, 128>}, {pipeline_mode = #tpu.pipeline_mode<synchronous>, transform_indices = @transform_3, window_bounds = array<i64: 128, 2>}, {pipeline_mode = #tpu.pipeline_mode<synchronous>, transform_indices = @transform_4, window_bounds = array<i64: 1, 2>}, {pipeline_mode = #tpu.pipeline_mode<synchronous>, transform_indices = @transform_5, window_bounds = array<i64: 2, 2>}]} {
    %c0_i32 = arith.constant 0 : i32
    %0 = arith.cmpi eq, %arg0, %c0_i32 : i32
    %1 = arith.extui %0 : i1 to i32
    %c0_i32_0 = arith.constant 0 : i32
    %2 = arith.cmpi ne, %1, %c0_i32_0 : i32
    scf.if %2 {
      %cst_9 = arith.constant 0.000000e+00 : f32
      %13 = vector.broadcast %cst_9 : f32 to vector<2x128xf32>
      %c0_10 = arith.constant 0 : index
      %c0_11 = arith.constant 0 : index
      %14 = vector.load %arg7[%c0_10, %c0_11] : memref<2x128xf32, #tpu.memory_space<vmem>>, vector<2x128xf32>
      tpu.vector_store %arg7[%c0_10, %c0_11], %13 {strides = array<i32>} : memref<2x128xf32, #tpu.memory_space<vmem>>, vector<2x128xf32>,
    } else {
    }
    %c0 = arith.constant 0 : index
    %c0_1 = arith.constant 0 : index
    %3 = vector.load %arg7[%c0, %c0_1] : memref<2x128xf32, #tpu.memory_space<vmem>>, vector<2x128xf32>
    %c0_2 = arith.constant 0 : index
    %c0_3 = arith.constant 0 : index
    %4 = vector.load %arg1[%c0_2, %c0_3] : memref<2x2304xf32, #tpu.memory_space<vmem>>, vector<2x2304xf32>
    %5 = arith.truncf %4 : vector<2x2304xf32> to vector<2x2304xbf16>
    %c0_4 = arith.constant 0 : index
    %c0_5 = arith.constant 0 : index
    %6 = vector.load %arg2[%c0_4, %c0_5] : memref<2304x128xbf16, #tpu.memory_space<vmem>>, vector<2304x128xbf16>
    %cst = arith.constant dense<0.000000e+00> : vector<2x128xf32>
    %7 = tpu.matmul %5, %6, %cst {dimension_numbers = #tpu.dot_dimension_numbers<[1], [0], [0], [1], [0, 0, 1, 1], [], []>} : vector<2x2304xbf16>, vector<2304x128xbf16>, vector<2x128xf32> -> vector<2x128xf32>
    %8 = arith.addf %3, %7 : vector<2x128xf32>
    %c0_6 = arith.constant 0 : index
    %c0_7 = arith.constant 0 : index
    %9 = vector.load %arg7[%c0_6, %c0_7] : memref<2x128xf32, #tpu.memory_space<vmem>>, vector<2x128xf32>
    tpu.vector_store %arg7[%c0_6, %c0_7], %8 {strides = array<i32>} : memref<2x128xf32, #tpu.memory_space<vmem>>, vector<2x128xf32>,
    %c3_i32 = arith.constant 3 : i32
    %10 = arith.cmpi eq, %arg0, %c3_i32 : i32
    %11 = arith.extui %10 : i1 to i32
    %c0_i32_8 = arith.constant 0 : i32
    %12 = arith.cmpi ne, %11, %c0_i32_8 : i32
    scf.if %12 {
      %c0_9 = arith.constant 0 : index
      %c0_10 = arith.constant 0 : index
      %13 = vector.load %arg7[%c0_9, %c0_10] : memref<2x128xf32, #tpu.memory_space<vmem>>, vector<2x128xf32>
      %c0_11 = arith.constant 0 : index
      %c0_12 = arith.constant 0 : index
      %14 = vector.load %arg3[%c0_11, %c0_12] : memref<1x128xf32, #tpu.memory_space<vmem>>, vector<1x128xf32>
      %15 = vector.broadcast %14 : vector<1x128xf32> to vector<2x128xf32>
      %16 = arith.addf %13, %15 : vector<2x128xf32>
      %cst_13 = arith.constant 0.000000e+00 : f32
      %17 = vector.broadcast %cst_13 : f32 to vector<2x128xf32>
      %18 = arith.maximumf %16, %17 : vector<2x128xf32>
      %c0_14 = arith.constant 0 : index
      %c0_15 = arith.constant 0 : index
      %19 = vector.load %arg4[%c0_14, %c0_15] : memref<128x2xf32, #tpu.memory_space<vmem>>, vector<128x2xf32>
      %cst_16 = arith.constant dense<0.000000e+00> : vector<2x2xf32>
      %20 = tpu.matmul %18, %19, %cst_16 {dimension_numbers = #tpu.dot_dimension_numbers<[1], [0], [0], [1], [0, 0, 1, 1], [], []>} : vector<2x128xf32>, vector<128x2xf32>, vector<2x2xf32> -> vector<2x2xf32>
      %c0_17 = arith.constant 0 : index
      %c0_18 = arith.constant 0 : index
      %21 = vector.load %arg5[%c0_17, %c0_18] : memref<1x2xf32, #tpu.memory_space<vmem>>, vector<1x2xf32>
      %22 = vector.broadcast %21 : vector<1x2xf32> to vector<2x2xf32>
      %23 = arith.addf %20, %22 : vector<2x2xf32>
      %cst_19 = arith.constant dense<0xFF800000> : vector<2xf32>
      %24 = vector.multi_reduction <maximumf>, %23, %cst_19 [1] : vector<2x2xf32> to vector<2xf32>
      %25 = vector.shape_cast %24 : vector<2xf32> to vector<2x1xf32>
      %26 = vector.broadcast %25 : vector<2x1xf32> to vector<2x2xf32>
      %27 = arith.subf %23, %26 : vector<2x2xf32>
      %28 = math.exp %27 : vector<2x2xf32>
      %cst_20 = arith.constant dense<0.000000e+00> : vector<2xf32>
      %29 = vector.multi_reduction <add>, %28, %cst_20 [1] : vector<2x2xf32> to vector<2xf32>
      %30 = vector.shape_cast %29 : vector<2xf32> to vector<2x1xf32>
      %31 = math.log %30 : vector<2x1xf32>
      %32 = arith.addf %25, %31 : vector<2x1xf32>
      %33 = vector.broadcast %32 : vector<2x1xf32> to vector<2x2xf32>
      %34 = arith.subf %23, %33 : vector<2x2xf32>
      %c0_21 = arith.constant 0 : index
      %c0_22 = arith.constant 0 : index
      %35 = vector.load %arg6[%c0_21, %c0_22] : memref<2x2xf32, #tpu.memory_space<vmem>>, vector<2x2xf32>
      tpu.vector_store %arg6[%c0_21, %c0_22], %34 {strides = array<i32>} : memref<2x2xf32, #tpu.memory_space<vmem>>, vector<2x2xf32>,
    } else {
    }
    return
  }
  func.func @transform_0(%arg0: i32) -> (i32, i32) {
    %c0_i32 = arith.constant 0 : i32
    %c0_i32_0 = arith.constant 0 : i32
    return %c0_i32, %arg0 : i32, i32
  }
  func.func @transform_1(%arg0: i32) -> (i32, i32) {
    %c0_i32 = arith.constant 0 : i32
    %c0_i32_0 = arith.constant 0 : i32
    return %arg0, %c0_i32 : i32, i32
  }
  func.func @transform_2(%arg0: i32) -> (i32, i32) {
    %c0_i32 = arith.constant 0 : i32
    %c0_i32_0 = arith.constant 0 : i32
    %c0_i32_1 = arith.constant 0 : i32
    return %c0_i32, %c0_i32_0 : i32, i32
  }
  func.func @transform_3(%arg0: i32) -> (i32, i32) {
    %c0_i32 = arith.constant 0 : i32
    %c0_i32_0 = arith.constant 0 : i32
    %c0_i32_1 = arith.constant 0 : i32
    return %c0_i32, %c0_i32_0 : i32, i32
  }
  func.func @transform_4(%arg0: i32) -> (i32, i32) {
    %c0_i32 = arith.constant 0 : i32
    %c0_i32_0 = arith.constant 0 : i32
    %c0_i32_1 = arith.constant 0 : i32
    return %c0_i32, %c0_i32_0 : i32, i32
  }
  func.func @transform_5(%arg0: i32) -> (i32, i32) {
    %c0_i32 = arith.constant 0 : i32
    %c0_i32_0 = arith.constant 0 : i32
    %c0_i32_1 = arith.constant 0 : i32
    return %c0_i32, %c0_i32_0 : i32, i32
  }
}

</mosaic_0001>

<llo_original>
// kernel: net_forward.3
$region0: #{net_forward.3}
  #allocation0 [shape = 'u32[]', space=smem, size = 0x4, offset = 0x4, fixed_abs, tag = 'smem constant byte address 0x4 - core index']
  #allocation1 [shape = 'u32[72,128]{1,0:T(1,128)}', space=vmem, size = 0x9000, scoped, tag = 'internal scratch']
  #allocation2 [shape = 'f32[2,128]{1,0:T(2,128)}', space=vmem, size = 0x400, scoped, tag = 'scratch operand']
  %s0 = inlined_call_operand.vmem [shape: f32[2,9216], index: 0, kind: input, shape index: {}]
  %s1 = inlined_call_operand.vmem [shape: bf16[9216,128], index: 1, kind: input, shape index: {}]
  %s2 = inlined_call_operand.vmem [shape: f32[1,128], index: 2, kind: input, shape index: {}]
  %s3 = inlined_call_operand.vmem [shape: f32[128,2], index: 3, kind: input, shape index: {}]
  %s4 = inlined_call_operand.vmem [shape: f32[1,2], index: 4, kind: input, shape index: {}]
  %s5 = inlined_call_operand.hbm [shape: f32[2,2], index: 5, kind: output, shape index: {}]
  %s6 = sld [smem:[#allocation0]]
  $region61: #{net_forward.3} parent=0
    _
  %s8 = ssub.s32 1, %s6
  %s9 = scalar_select 0, %s8, %s6
  $region1: #{net_forward.3} parent=0
    #allocation3 [shape = 'u8[1024]{0}', space=vmem, size = 0x400, scoped, tag = 'output window, operand 0, single buffered']
    #allocation4 [shape = 's32[2]{0}', space=sflag, size = 0x8, scoped, tag = 'scoped memory for net_forward.3']
    %10 = vsyncpa [#allocation4], 0
    loop: start=0, step=1, limit=6
    $region2: #{net_forward.3} parent=1 // loop_pre_header
      _
    $region3: #{net_forward.3} parent=1 // loop_header
      %s12 = sphi 0, %s16
      %p13 = scmp.ge.s32.totalorder %s12, 6
      %s22 = sphi 0, %s24
      %s25 = sphi 0, %s22
      %s26 = sphi 0, %s25
      %s42 = sphi 0, %s26
      %s48 = sphi 0, %s50
      %s51 = sphi 0, %s48
      %s52 = sphi 0, %s51
      %s68 = sphi 0, %s52
      %s72 = sphi 0, %s72
      %s74 = sphi 0, %s72
      %s75 = sphi 0, %s74
      %s89 = sphi 0, %s75
      %s93 = sphi 0, %s93
      %s95 = sphi 0, %s93
      %s96 = sphi 0, %s95
      %s110 = sphi 0, %s96
      %s114 = sphi 0, %s114
      %s116 = sphi 0, %s114
      %s117 = sphi 0, %s116
      %s131 = sphi 0, %s117
      %s135 = sphi 0, %s135
      %s137 = sphi 0, %s135
      %s138 = sphi 0, %s137
      %s152 = sphi 0, %s138
    $region4: #{net_forward.3} parent=1 // loop_header_branch
      %15 = sbr.rel (%p13) target = $region8
    $region5: #{net_forward.3} parent=1 // loop_body
      %s17 = ssub.s32 %s12, 1
      %s18 = ssub.s32 %s12, 2
      %s19 = sadd.s32 %s12, 1
      %s20 = ssub.s32 %s12, %s19
      %p21 = scmp.eq.s32.totalorder %s20, 0
      %s23 = sadd.s32 %s22, 1
      %s24 = scalar_select %p21, %s22, %s23
      %p27 = pneg %p21
      %p28 = scmp.eq.s32.totalorder %s12, 3
      %p29 = por %p27, %p28
      %p30 = scmp.ne.s32.totalorder %s22, %s25
      %p31 = scmp.eq.s32.totalorder %s12, 0
      %p32 = por %p30, %p31
      %p33 = scmp.ne.s32.totalorder %s22, %s25
      %p34 = scmp.eq.s32.totalorder %s17, 3
      %p35 = por %p33, %p34
      %p36 = scmp.ne.s32.totalorder %s25, %s26
      %p37 = scmp.eq.s32.totalorder %s17, 0
      %p38 = por %p36, %p37
      %p39 = scmp.ne.s32.totalorder %s25, %s26
      %p40 = scmp.eq.s32.totalorder %s18, 3
      %p41 = por %p39, %p40
      %p43 = scmp.ne.s32.totalorder %s26, %s42
      %p44 = scmp.eq.s32.totalorder %s18, 0
      %p45 = por %p43, %p44
      %s46 = ssub.s32 %s12, %s19
      %p47 = scmp.eq.s32.totalorder %s46, 0
      %s49 = sadd.s32 %s48, 1
      %s50 = scalar_select %p47, %s48, %s49
      %p53 = pneg %p47
      %p54 = scmp.eq.s32.totalorder %s12, 3
      %p55 = por %p53, %p54
      %p56 = scmp.ne.s32.totalorder %s48, %s51
      %p57 = scmp.eq.s32.totalorder %s12, 0
      %p58 = por %p56, %p57
      %p59 = scmp.ne.s32.totalorder %s48, %s51
      %p60 = scmp.eq.s32.totalorder %s17, 3
      %p61 = por %p59, %p60
      %p62 = scmp.ne.s32.totalorder %s51, %s52
      %p63 = scmp.eq.s32.totalorder %s17, 0
      %p64 = por %p62, %p63
      %p65 = scmp.ne.s32.totalorder %s51, %s52
      %p66 = scmp.eq.s32.totalorder %s18, 3
      %p67 = por %p65, %p66
      %p69 = scmp.ne.s32.totalorder %s52, %s68
      %p70 = scmp.eq.s32.totalorder %s18, 0
      %p71 = por %p69, %p70
      %s73 = sadd.s32 %s72, 1
      %p76 = scmp.eq.s32.totalorder %s12, 3
      %p77 = scmp.ne.s32.totalorder %s72, %s74
      %p78 = scmp.eq.s32.totalorder %s12, 0
      %p79 = por %p77, %p78
      %p80 = scmp.ne.s32.totalorder %s72, %s74
      %p81 = scmp.eq.s32.totalorder %s17, 3
      %p82 = por %p80, %p81
      %p83 = scmp.ne.s32.totalorder %s74, %s75
      %p84 = scmp.eq.s32.totalorder %s17, 0
      %p85 = por %p83, %p84
      %p86 = scmp.ne.s32.totalorder %s74, %s75
      %p87 = scmp.eq.s32.totalorder %s18, 3
      %p88 = por %p86, %p87
      %p90 = scmp.ne.s32.totalorder %s75, %s89
      %p91 = scmp.eq.s32.totalorder %s18, 0
      %p92 = por %p90, %p91
      %s94 = sadd.s32 %s93, 1
      %p97 = scmp.eq.s32.totalorder %s12, 3
      %p98 = scmp.ne.s32.totalorder %s93, %s95
      %p99 = scmp.eq.s32.totalorder %s12, 0
      %p100 = por %p98, %p99
      %p101 = scmp.ne.s32.totalorder %s93, %s95
      %p102 = scmp.eq.s32.totalorder %s17, 3
      %p103 = por %p101, %p102
      %p104 = scmp.ne.s32.totalorder %s95, %s96
      %p105 = scmp.eq.s32.totalorder %s17, 0
      %p106 = por %p104, %p105
      %p107 = scmp.ne.s32.totalorder %s95, %s96
      %p108 = scmp.eq.s32.totalorder %s18, 3
      %p109 = por %p107, %p108
      %p111 = scmp.ne.s32.totalorder %s96, %s110
      %p112 = scmp.eq.s32.totalorder %s18, 0
      %p113 = por %p111, %p112
      %s115 = sadd.s32 %s114, 1
      %p118 = scmp.eq.s32.totalorder %s12, 3
      %p119 = scmp.ne.s32.totalorder %s114, %s116
      %p120 = scmp.eq.s32.totalorder %s12, 0
      %p121 = por %p119, %p120
      %p122 = scmp.ne.s32.totalorder %s114, %s116
      %p123 = scmp.eq.s32.totalorder %s17, 3
      %p124 = por %p122, %p123
      %p125 = scmp.ne.s32.totalorder %s116, %s117
      %p126 = scmp.eq.s32.totalorder %s17, 0
      %p127 = por %p125, %p126
      %p128 = scmp.ne.s32.totalorder %s116, %s117
      %p129 = scmp.eq.s32.totalorder %s18, 3
      %p130 = por %p128, %p129
      %p132 = scmp.ne.s32.totalorder %s117, %s131
      %p133 = scmp.eq.s32.totalorder %s18, 0
      %p134 = por %p132, %p133
      %s136 = sadd.s32 %s135, 1
      %p139 = scmp.eq.s32.totalorder %s12, 3
      %p140 = scmp.ne.s32.totalorder %s135, %s137
      %p141 = scmp.eq.s32.totalorder %s12, 0
      %p142 = por %p140, %p141
      %p143 = scmp.ne.s32.totalorder %s135, %s137
      %p144 = scmp.eq.s32.totalorder %s17, 3
      %p145 = por %p143, %p144
      %p146 = scmp.ne.s32.totalorder %s137, %s138
      %p147 = scmp.eq.s32.totalorder %s17, 0
      %p148 = por %p146, %p147
      %p149 = scmp.ne.s32.totalorder %s137, %s138
      %p150 = scmp.eq.s32.totalorder %s18, 3
      %p151 = por %p149, %p150
      %p153 = scmp.ne.s32.totalorder %s138, %s152
      %p154 = scmp.eq.s32.totalorder %s18, 0
      %p155 = por %p153, %p154
      %p156 = scmp.le.s32.totalorder 1, %s12
      %p157 = scmp.lt.s32.totalorder %s12, 5
      %p158 = pnand %p156, %p157
      %p159 = pneg %p158
      // Predicated region
      $region9: #{net_forward.3} parent=5 // pred_check
        _
      $region10: #{net_forward.3} parent=5 // pred_check_branch
        %161 = sbr.rel (%p158) target = $region12
      $region11: #{net_forward.3} parent=5 // pred_region
        %s162 = ssub.s32 %s12, 1
        // Predicated region
        $region13: #{net_forward.3} parent=11 // pred_check
          %p163 = pneg %p85
        $region14: #{net_forward.3} parent=11 // pred_check_branch
          %165 = sbr.rel (%p163) target = $region16
        $region15: #{net_forward.3} parent=11 // pred_region
          _
        $region16: #{net_forward.3} parent=11 // pred_fallthru
          _
        // Predicated region
        $region17: #{net_forward.3} parent=11 // pred_check
          %p166 = pneg %p106
        $region18: #{net_forward.3} parent=11 // pred_check_branch
          %168 = sbr.rel (%p166) target = $region20
        $region19: #{net_forward.3} parent=11 // pred_region
          _
        $region20: #{net_forward.3} parent=11 // pred_fallthru
          _
        // Predicated region
        $region21: #{net_forward.3} parent=11 // pred_check
          %p169 = pneg %p127
        $region22: #{net_forward.3} parent=11 // pred_check_branch
          %171 = sbr.rel (%p169) target = $region24
        $region23: #{net_forward.3} parent=11 // pred_region
          _
        $region24: #{net_forward.3} parent=11 // pred_fallthru
          _
      $region12: #{net_forward.3} parent=5 // pred_fallthru
        _
      %p172 = scmp.lt.s32.totalorder %s12, 4
      // Predicated region
      $region25: #{net_forward.3} parent=5 // pred_check
        %p173 = pneg %p172
      $region26: #{net_forward.3} parent=5 // pred_check_branch
        %175 = sbr.rel (%p173) target = $region28
      $region27: #{net_forward.3} parent=5 // pred_region
        // Predicated region
        $region29: #{net_forward.3} parent=27 // pred_check
          %p176 = pneg %p32
        $region30: #{net_forward.3} parent=27 // pred_check_branch
          %178 = sbr.rel (%p176) target = $region32
        $region31: #{net_forward.3} parent=27 // pred_region
          %s179 = smul.u32 18, %s12
          %p180 = scmp.lt.s32.totalorder %s179, 71
          %s181 = scalar_select %p180, %s179, 71
          %s182 = smul.addr %s181, 2
          %s183 = scalar_lea.vmem %s0, %s182
          %s184 = smul.u32 18, %s12
        $region32: #{net_forward.3} parent=27 // pred_fallthru
          _
        // Predicated region
        $region33: #{net_forward.3} parent=27 // pred_check
          %p185 = pneg %p58
        $region34: #{net_forward.3} parent=27 // pred_check_branch
          %187 = sbr.rel (%p185) target = $region36
        $region35: #{net_forward.3} parent=27 // pred_region
          %s188 = smul.u32 288, %s12
          %p189 = scmp.lt.s32.totalorder %s188, 1151
          %s190 = scalar_select %p189, %s188, 1151
          %s191 = smul.addr %s190, 4
          %s192 = scalar_lea.vmem %s1, %s191
          %s193 = smul.u32 288, %s12
        $region36: #{net_forward.3} parent=27 // pred_fallthru
          _
      $region28: #{net_forward.3} parent=5 // pred_fallthru
        _
      %p194 = scmp.le.s32.totalorder 1, %s12
      %p195 = scmp.lt.s32.totalorder %s12, 5
      %p196 = pnand %p194, %p195
      %p197 = pneg %p196
      // Predicated region
      $region37: #{net_forward.3} parent=5 // pred_check
        _
      $region38: #{net_forward.3} parent=5 // pred_check_branch
        %199 = sbr.rel (%p196) target = $region40
      $region39: #{net_forward.3} parent=5 // pred_region
        %s200 = ssub.s32 %s12, 1
        %s201 = smul.u32 18, %s17
        %p202 = scmp.lt.s32.totalorder %s201, 71
        %s203 = scalar_select %p202, %s201, 71
        %s204 = smul.addr %s203, 2
        %s205 = scalar_lea.vmem %s0, %s204
        %p206 = pneg %p38
        %p207 = pneg %p35
        %s208 = smul.u32 288, %s17
        %p209 = scmp.lt.s32.totalorder %s208, 1151
        %s210 = scalar_select %p209, %s208, 1151
        %s211 = smul.addr %s210, 4
        %s212 = scalar_lea.vmem %s1, %s211
        %p213 = pneg %p64
        %p214 = pneg %p61
        %p215 = pneg %p85
        %p216 = pneg %p82
        %p217 = pneg %p106
        %p218 = pneg %p103
        %p219 = pneg %p127
        %p220 = pneg %p124
        %p221 = pneg %p148
        %p222 = pneg %p145
        %s223 = smul.u32 18, %s17
        %p224 = scmp.lt.s32.totalorder %s223, 71
        %s225 = scalar_select %p224, %s223, 71
        %s226 = smul.addr %s225, 2
        %s227 = scalar_lea.vmem %s0, %s226
        %s228 = smul.u32 18, %s17
        %s229 = smul.u32 288, %s17
        %p230 = scmp.lt.s32.totalorder %s229, 1151
        %s231 = scalar_select %p230, %s229, 1151
        %s232 = smul.addr %s231, 4
        %s233 = scalar_lea.vmem %s1, %s232
        %s234 = smul.u32 288, %s17
        %p235 = scmp.eq.s32.totalorder %s17, 0
        // Predicated region
        $region41: #{net_forward.3} parent=39 // pred_check
          %p236 = pneg %p235
        $region42: #{net_forward.3} parent=39 // pred_check_branch
          %238 = sbr.rel (%p236) target = $region44
        $region43: #{net_forward.3} parent=39 // pred_region
          %239 = vst [vmem:[#allocation2] sm:$0x3] 0.0
        $region44: #{net_forward.3} parent=39 // pred_fallthru
          _
        %v240 = vld [vmem:[#allocation2] sm:$0x3]
        %v241 = vld [vmem:[%s227] sm:$0xff]
        %v242 = vld [vmem:[%s227 + $0x8] sm:$0xff]
        %v243 = vld [vmem:[%s227 + $0x10] sm:$0xff]
        %v244 = vld [vmem:[%s227 + $0x18] sm:$0xff]
        %v245 = vld [vmem:[%s227 + $0x20] sm:$0xf]
        %251 = vst [vmem:[#allocation1] ss:$4 sm:$0xff] %v241
        %s252 = scalar_lea.vmem [#allocation1], 32
        %253 = vst [vmem:[%s252] ss:$4 sm:$0xff] %v242
        %v254 = vld.sshfl [vmem:[#allocation1] sm:$0xff pattern:$0x73625140]
        %v255 = vld.sshfl [vmem:[#allocation1 + $0x8] sm:$0xff pattern:$0x73625140]
        %v256 = vld.sshfl [vmem:[#allocation1 + $0x10] sm:$0xff pattern:$0x73625140]
        %v257 = vld.sshfl [vmem:[#allocation1 + $0x18] sm:$0xff pattern:$0x73625140]
        %v258 = vld.sshfl [vmem:[#allocation1 + $0x20] sm:$0xff pattern:$0x73625140]
        %v259 = vld.sshfl [vmem:[#allocation1 + $0x28] sm:$0xff pattern:$0x73625140]
        %v260 = vld.sshfl [vmem:[#allocation1 + $0x30] sm:$0xff pattern:$0x73625140]
        %v261 = vld.sshfl [vmem:[#allocation1 + $0x38] sm:$0xff pattern:$0x73625140]
        %262 = vst [vmem:[#allocation1] ss:$4 sm:$0xff] %v243
        %263 = vst [vmem:[%s252] ss:$4 sm:$0xff] %v244
        %v264 = vld.sshfl [vmem:[#allocation1] sm:$0xff pattern:$0x73625140]
        %v265 = vld.sshfl [vmem:[#allocation1 + $0x8] sm:$0xff pattern:$0x73625140]
        %v266 = vld.sshfl [vmem:[#allocation1 + $0x10] sm:$0xff pattern:$0x73625140]
        %v267 = vld.sshfl [vmem:[#allocation1 + $0x18] sm:$0xff pattern:$0x73625140]
        %v268 = vld.sshfl [vmem:[#allocation1 + $0x20] sm:$0xff pattern:$0x73625140]
        %v269 = vld.sshfl [vmem:[#allocation1 + $0x28] sm:$0xff pattern:$0x73625140]
        %v270 = vld.sshfl [vmem:[#allocation1 + $0x30] sm:$0xff pattern:$0x73625140]
        %v271 = vld.sshfl [vmem:[#allocation1 + $0x38] sm:$0xff pattern:$0x73625140]
        %272 = vst [vmem:[#allocation1] ss:$4 sm:$0xff] %v245
        %v273 = vld.sshfl [vmem:[#allocation1] sm:$0xff pattern:$0x73625140]
        %v274 = vld.sshfl [vmem:[#allocation1 + $0x8] sm:$0xff pattern:$0x73625140]
        %v293 = vpack.c.bf16 %v254, %v254
        %v294 = vpack.c.bf16 %v255, %v255
        %v295 = vpack.c.bf16 %v256, %v256
        %v296 = vpack.c.bf16 %v257, %v257
        %v297 = vpack.c.bf16 %v258, %v258
        %v298 = vpack.c.bf16 %v259, %v259
        %v299 = vpack.c.bf16 %v260, %v260
        %v300 = vpack.c.bf16 %v261, %v261
        %v301 = vpack.c.bf16 %v264, %v264
        %v302 = vpack.c.bf16 %v265, %v265
        %v303 = vpack.c.bf16 %v266, %v266
        %v304 = vpack.c.bf16 %v267, %v267
        %v305 = vpack.c.bf16 %v268, %v268
        %v306 = vpack.c.bf16 %v269, %v269
        %v307 = vpack.c.bf16 %v270, %v270
        %v308 = vpack.c.bf16 %v271, %v271
        %v309 = vpack.c.bf16 %v273, %v273
        %v310 = vpack.c.bf16 %v274, %v274
        %v311 = vld [vmem:[%s233] sm:$0xf]
        %v312 = vld [vmem:[%s233 + $0x4] sm:$0xf]
        %v313 = vld [vmem:[%s233 + $0x8] sm:$0xf]
        %v314 = vld [vmem:[%s233 + $0xc] sm:$0xf]
        %v315 = vld [vmem:[%s233 + $0x10] sm:$0xf]
        %v316 = vld [vmem:[%s233 + $0x14] sm:$0xf]
        %v317 = vld [vmem:[%s233 + $0x18] sm:$0xf]
        %v318 = vld [vmem:[%s233 + $0x1c] sm:$0xf]
        %v319 = vld [vmem:[%s233 + $0x20] sm:$0xf]
        %v320 = vld [vmem:[%s233 + $0x24] sm:$0xf]
        %v321 = vld [vmem:[%s233 + $0x28] sm:$0xf]
        %v322 = vld [vmem:[%s233 + $0x2c] sm:$0xf]
        %v323 = vld [vmem:[%s233 + $0x30] sm:$0xf]
        %v324 = vld [vmem:[%s233 + $0x34] sm:$0xf]
        %v325 = vld [vmem:[%s233 + $0x38] sm:$0xf]
        %v326 = vld [vmem:[%s233 + $0x3c] sm:$0xf]
        %v327 = vld [vmem:[%s233 + $0x40] sm:$0xf]
        %v328 = vld [vmem:[%s233 + $0x44] sm:$0xf]
        %v329 = vld [vmem:[%s233 + $0x48] sm:$0xf]
        %v330 = vld [vmem:[%s233 + $0x4c] sm:$0xf]
        %v331 = vld [vmem:[%s233 + $0x50] sm:$0xf]
        %v332 = vld [vmem:[%s233 + $0x54] sm:$0xf]
        %v333 = vld [vmem:[%s233 + $0x58] sm:$0xf]
        %v334 = vld [vmem:[%s233 + $0x5c] sm:$0xf]
        %v335 = vld [vmem:[%s233 + $0x60] sm:$0xf]
        %v336 = vld [vmem:[%s233 + $0x64] sm:$0xf]
        %v337 = vld [vmem:[%s233 + $0x68] sm:$0xf]
        %v338 = vld [vmem:[%s233 + $0x6c] sm:$0xf]
        %v339 = vld [vmem:[%s233 + $0x70] sm:$0xf]
        %v340 = vld [vmem:[%s233 + $0x74] sm:$0xf]
        %v341 = vld [vmem:[%s233 + $0x78] sm:$0xf]
        %v342 = vld [vmem:[%s233 + $0x7c] sm:$0xf]
        %v343 = vld [vmem:[%s233 + $0x80] sm:$0xf]
        %v344 = vld [vmem:[%s233 + $0x84] sm:$0xf]
        %v345 = vld [vmem:[%s233 + $0x88] sm:$0xf]
        %v346 = vld [vmem:[%s233 + $0x8c] sm:$0xf]
        %v347 = vld [vmem:[%s233 + $0x90] sm:$0xf]
        %v348 = vld [vmem:[%s233 + $0x94] sm:$0xf]
        %v349 = vld [vmem:[%s233 + $0x98] sm:$0xf]
        %v350 = vld [vmem:[%s233 + $0x9c] sm:$0xf]
        %v351 = vld [vmem:[%s233 + $0xa0] sm:$0xf]
        %v352 = vld [vmem:[%s233 + $0xa4] sm:$0xf]
        %v353 = vld [vmem:[%s233 + $0xa8] sm:$0xf]
        %v354 = vld [vmem:[%s233 + $0xac] sm:$0xf]
        %v355 = vld [vmem:[%s233 + $0xb0] sm:$0xf]
        %v356 = vld [vmem:[%s233 + $0xb4] sm:$0xf]
        %v357 = vld [vmem:[%s233 + $0xb8] sm:$0xf]
        %v358 = vld [vmem:[%s233 + $0xbc] sm:$0xf]
        %v359 = vld [vmem:[%s233 + $0xc0] sm:$0xf]
        %v360 = vld [vmem:[%s233 + $0xc4] sm:$0xf]
        %v361 = vld [vmem:[%s233 + $0xc8] sm:$0xf]
        %v362 = vld [vmem:[%s233 + $0xcc] sm:$0xf]
        %v363 = vld [vmem:[%s233 + $0xd0] sm:$0xf]
        %v364 = vld [vmem:[%s233 + $0xd4] sm:$0xf]
        %v365 = vld [vmem:[%s233 + $0xd8] sm:$0xf]
        %v366 = vld [vmem:[%s233 + $0xdc] sm:$0xf]
        %v367 = vld [vmem:[%s233 + $0xe0] sm:$0xf]
        %v368 = vld [vmem:[%s233 + $0xe4] sm:$0xf]
        %v369 = vld [vmem:[%s233 + $0xe8] sm:$0xf]
        %v370 = vld [vmem:[%s233 + $0xec] sm:$0xf]
        %v371 = vld [vmem:[%s233 + $0xf0] sm:$0xf]
        %v372 = vld [vmem:[%s233 + $0xf4] sm:$0xf]
        %v373 = vld [vmem:[%s233 + $0xf8] sm:$0xf]
        %v374 = vld [vmem:[%s233 + $0xfc] sm:$0xf]
        %v375 = vld [vmem:[%s233 + $0x100] sm:$0xf]
        %v376 = vld [vmem:[%s233 + $0x104] sm:$0xf]
        %v377 = vld [vmem:[%s233 + $0x108] sm:$0xf]
        %v378 = vld [vmem:[%s233 + $0x10c] sm:$0xf]
        %v379 = vld [vmem:[%s233 + $0x110] sm:$0xf]
        %v380 = vld [vmem:[%s233 + $0x114] sm:$0xf]
        %v381 = vld [vmem:[%s233 + $0x118] sm:$0xf]
        %v382 = vld [vmem:[%s233 + $0x11c] sm:$0xf]
        %v383 = vld [vmem:[%s233 + $0x120] sm:$0xf]
        %v384 = vld [vmem:[%s233 + $0x124] sm:$0xf]
        %v385 = vld [vmem:[%s233 + $0x128] sm:$0xf]
        %v386 = vld [vmem:[%s233 + $0x12c] sm:$0xf]
        %v387 = vld [vmem:[%s233 + $0x130] sm:$0xf]
        %v388 = vld [vmem:[%s233 + $0x134] sm:$0xf]
        %v389 = vld [vmem:[%s233 + $0x138] sm:$0xf]
        %v390 = vld [vmem:[%s233 + $0x13c] sm:$0xf]
        %v391 = vld [vmem:[%s233 + $0x140] sm:$0xf]
        %v392 = vld [vmem:[%s233 + $0x144] sm:$0xf]
        %v393 = vld [vmem:[%s233 + $0x148] sm:$0xf]
        %v394 = vld [vmem:[%s233 + $0x14c] sm:$0xf]
        %v395 = vld [vmem:[%s233 + $0x150] sm:$0xf]
        %v396 = vld [vmem:[%s233 + $0x154] sm:$0xf]
        %v397 = vld [vmem:[%s233 + $0x158] sm:$0xf]
        %v398 = vld [vmem:[%s233 + $0x15c] sm:$0xf]
        %v399 = vld [vmem:[%s233 + $0x160] sm:$0xf]
        %v400 = vld [vmem:[%s233 + $0x164] sm:$0xf]
        %v401 = vld [vmem:[%s233 + $0x168] sm:$0xf]
        %v402 = vld [vmem:[%s233 + $0x16c] sm:$0xf]
        %v403 = vld [vmem:[%s233 + $0x170] sm:$0xf]
        %v404 = vld [vmem:[%s233 + $0x174] sm:$0xf]
        %v405 = vld [vmem:[%s233 + $0x178] sm:$0xf]
        %v406 = vld [vmem:[%s233 + $0x17c] sm:$0xf]
        %v407 = vld [vmem:[%s233 + $0x180] sm:$0xf]
        %v408 = vld [vmem:[%s233 + $0x184] sm:$0xf]
        %v409 = vld [vmem:[%s233 + $0x188] sm:$0xf]
        %v410 = vld [vmem:[%s233 + $0x18c] sm:$0xf]
        %v411 = vld [vmem:[%s233 + $0x190] sm:$0xf]
        %v412 = vld [vmem:[%s233 + $0x194] sm:$0xf]
        %v413 = vld [vmem:[%s233 + $0x198] sm:$0xf]
        %v414 = vld [vmem:[%s233 + $0x19c] sm:$0xf]
        %v415 = vld [vmem:[%s233 + $0x1a0] sm:$0xf]
        %v416 = vld [vmem:[%s233 + $0x1a4] sm:$0xf]
        %v417 = vld [vmem:[%s233 + $0x1a8] sm:$0xf]
        %v418 = vld [vmem:[%s233 + $0x1ac] sm:$0xf]
        %v419 = vld [vmem:[%s233 + $0x1b0] sm:$0xf]
        %v420 = vld [vmem:[%s233 + $0x1b4] sm:$0xf]
        %v421 = vld [vmem:[%s233 + $0x1b8] sm:$0xf]
        %v422 = vld [vmem:[%s233 + $0x1bc] sm:$0xf]
        %v423 = vld [vmem:[%s233 + $0x1c0] sm:$0xf]
        %v424 = vld [vmem:[%s233 + $0x1c4] sm:$0xf]
        %v425 = vld [vmem:[%s233 + $0x1c8] sm:$0xf]
        %v426 = vld [vmem:[%s233 + $0x1cc] sm:$0xf]
        %v427 = vld [vmem:[%s233 + $0x1d0] sm:$0xf]
        %v428 = vld [vmem:[%s233 + $0x1d4] sm:$0xf]
        %v429 = vld [vmem:[%s233 + $0x1d8] sm:$0xf]
        %v430 = vld [vmem:[%s233 + $0x1dc] sm:$0xf]
        %v431 = vld [vmem:[%s233 + $0x1e0] sm:$0xf]
        %v432 = vld [vmem:[%s233 + $0x1e4] sm:$0xf]
        %v433 = vld [vmem:[%s233 + $0x1e8] sm:$0xf]
        %v434 = vld [vmem:[%s233 + $0x1ec] sm:$0xf]
        %v435 = vld [vmem:[%s233 + $0x1f0] sm:$0xf]
        %v436 = vld [vmem:[%s233 + $0x1f4] sm:$0xf]
        %v437 = vld [vmem:[%s233 + $0x1f8] sm:$0xf]
        %v438 = vld [vmem:[%s233 + $0x1fc] sm:$0xf]
        %v439 = vld [vmem:[%s233 + $0x200] sm:$0xf]
        %v440 = vld [vmem:[%s233 + $0x204] sm:$0xf]
        %v441 = vld [vmem:[%s233 + $0x208] sm:$0xf]
        %v442 = vld [vmem:[%s233 + $0x20c] sm:$0xf]
        %v443 = vld [vmem:[%s233 + $0x210] sm:$0xf]
        %v444 = vld [vmem:[%s233 + $0x214] sm:$0xf]
        %v445 = vld [vmem:[%s233 + $0x218] sm:$0xf]
        %v446 = vld [vmem:[%s233 + $0x21c] sm:$0xf]
        %v447 = vld [vmem:[%s233 + $0x220] sm:$0xf]
        %v448 = vld [vmem:[%s233 + $0x224] sm:$0xf]
        %v449 = vld [vmem:[%s233 + $0x228] sm:$0xf]
        %v450 = vld [vmem:[%s233 + $0x22c] sm:$0xf]
        %v451 = vld [vmem:[%s233 + $0x230] sm:$0xf]
        %v452 = vld [vmem:[%s233 + $0x234] sm:$0xf]
        %v453 = vld [vmem:[%s233 + $0x238] sm:$0xf]
        %v454 = vld [vmem:[%s233 + $0x23c] sm:$0xf]
        %v455 = vld [vmem:[%s233 + $0x240] sm:$0xf]
        %v456 = vld [vmem:[%s233 + $0x244] sm:$0xf]
        %v457 = vld [vmem:[%s233 + $0x248] sm:$0xf]
        %v458 = vld [vmem:[%s233 + $0x24c] sm:$0xf]
        %v459 = vld [vmem:[%s233 + $0x250] sm:$0xf]
        %v460 = vld [vmem:[%s233 + $0x254] sm:$0xf]
        %v461 = vld [vmem:[%s233 + $0x258] sm:$0xf]
        %v462 = vld [vmem:[%s233 + $0x25c] sm:$0xf]
        %v463 = vld [vmem:[%s233 + $0x260] sm:$0xf]
        %v464 = vld [vmem:[%s233 + $0x264] sm:$0xf]
        %v465 = vld [vmem:[%s233 + $0x268] sm:$0xf]
        %v466 = vld [vmem:[%s233 + $0x26c] sm:$0xf]
        %v467 = vld [vmem:[%s233 + $0x270] sm:$0xf]
        %v468 = vld [vmem:[%s233 + $0x274] sm:$0xf]
        %v469 = vld [vmem:[%s233 + $0x278] sm:$0xf]
        %v470 = vld [vmem:[%s233 + $0x27c] sm:$0xf]
        %v471 = vld [vmem:[%s233 + $0x280] sm:$0xf]
        %v472 = vld [vmem:[%s233 + $0x284] sm:$0xf]
        %v473 = vld [vmem:[%s233 + $0x288] sm:$0xf]
        %v474 = vld [vmem:[%s233 + $0x28c] sm:$0xf]
        %v475 = vld [vmem:[%s233 + $0x290] sm:$0xf]
        %v476 = vld [vmem:[%s233 + $0x294] sm:$0xf]
        %v477 = vld [vmem:[%s233 + $0x298] sm:$0xf]
        %v478 = vld [vmem:[%s233 + $0x29c] sm:$0xf]
        %v479 = vld [vmem:[%s233 + $0x2a0] sm:$0xf]
        %v480 = vld [vmem:[%s233 + $0x2a4] sm:$0xf]
        %v481 = vld [vmem:[%s233 + $0x2a8] sm:$0xf]
        %v482 = vld [vmem:[%s233 + $0x2ac] sm:$0xf]
        %v483 = vld [vmem:[%s233 + $0x2b0] sm:$0xf]
        %v484 = vld [vmem:[%s233 + $0x2b4] sm:$0xf]
        %v485 = vld [vmem:[%s233 + $0x2b8] sm:$0xf]
        %v486 = vld [vmem:[%s233 + $0x2bc] sm:$0xf]
        %v487 = vld [vmem:[%s233 + $0x2c0] sm:$0xf]
        %v488 = vld [vmem:[%s233 + $0x2c4] sm:$0xf]
        %v489 = vld [vmem:[%s233 + $0x2c8] sm:$0xf]
        %v490 = vld [vmem:[%s233 + $0x2cc] sm:$0xf]
        %v491 = vld [vmem:[%s233 + $0x2d0] sm:$0xf]
        %v492 = vld [vmem:[%s233 + $0x2d4] sm:$0xf]
        %v493 = vld [vmem:[%s233 + $0x2d8] sm:$0xf]
        %v494 = vld [vmem:[%s233 + $0x2dc] sm:$0xf]
        %v495 = vld [vmem:[%s233 + $0x2e0] sm:$0xf]
        %v496 = vld [vmem:[%s233 + $0x2e4] sm:$0xf]
        %v497 = vld [vmem:[%s233 + $0x2e8] sm:$0xf]
        %v498 = vld [vmem:[%s233 + $0x2ec] sm:$0xf]
        %v499 = vld [vmem:[%s233 + $0x2f0] sm:$0xf]
        %v500 = vld [vmem:[%s233 + $0x2f4] sm:$0xf]
        %v501 = vld [vmem:[%s233 + $0x2f8] sm:$0xf]
        %v502 = vld [vmem:[%s233 + $0x2fc] sm:$0xf]
        %v503 = vld [vmem:[%s233 + $0x300] sm:$0xf]
        %v504 = vld [vmem:[%s233 + $0x304] sm:$0xf]
        %v505 = vld [vmem:[%s233 + $0x308] sm:$0xf]
        %v506 = vld [vmem:[%s233 + $0x30c] sm:$0xf]
        %v507 = vld [vmem:[%s233 + $0x310] sm:$0xf]
        %v508 = vld [vmem:[%s233 + $0x314] sm:$0xf]
        %v509 = vld [vmem:[%s233 + $0x318] sm:$0xf]
        %v510 = vld [vmem:[%s233 + $0x31c] sm:$0xf]
        %v511 = vld [vmem:[%s233 + $0x320] sm:$0xf]
        %v512 = vld [vmem:[%s233 + $0x324] sm:$0xf]
        %v513 = vld [vmem:[%s233 + $0x328] sm:$0xf]
        %v514 = vld [vmem:[%s233 + $0x32c] sm:$0xf]
        %v515 = vld [vmem:[%s233 + $0x330] sm:$0xf]
        %v516 = vld [vmem:[%s233 + $0x334] sm:$0xf]
        %v517 = vld [vmem:[%s233 + $0x338] sm:$0xf]
        %v518 = vld [vmem:[%s233 + $0x33c] sm:$0xf]
        %v519 = vld [vmem:[%s233 + $0x340] sm:$0xf]
        %v520 = vld [vmem:[%s233 + $0x344] sm:$0xf]
        %v521 = vld [vmem:[%s233 + $0x348] sm:$0xf]
        %v522 = vld [vmem:[%s233 + $0x34c] sm:$0xf]
        %v523 = vld [vmem:[%s233 + $0x350] sm:$0xf]
        %v524 = vld [vmem:[%s233 + $0x354] sm:$0xf]
        %v525 = vld [vmem:[%s233 + $0x358] sm:$0xf]
        %v526 = vld [vmem:[%s233 + $0x35c] sm:$0xf]
        %v527 = vld [vmem:[%s233 + $0x360] sm:$0xf]
        %v528 = vld [vmem:[%s233 + $0x364] sm:$0xf]
        %v529 = vld [vmem:[%s233 + $0x368] sm:$0xf]
        %v530 = vld [vmem:[%s233 + $0x36c] sm:$0xf]
        %v531 = vld [vmem:[%s233 + $0x370] sm:$0xf]
        %v532 = vld [vmem:[%s233 + $0x374] sm:$0xf]
        %v533 = vld [vmem:[%s233 + $0x378] sm:$0xf]
        %v534 = vld [vmem:[%s233 + $0x37c] sm:$0xf]
        %v535 = vld [vmem:[%s233 + $0x380] sm:$0xf]
        %v536 = vld [vmem:[%s233 + $0x384] sm:$0xf]
        %v537 = vld [vmem:[%s233 + $0x388] sm:$0xf]
        %v538 = vld [vmem:[%s233 + $0x38c] sm:$0xf]
        %v539 = vld [vmem:[%s233 + $0x390] sm:$0xf]
        %v540 = vld [vmem:[%s233 + $0x394] sm:$0xf]
        %v541 = vld [vmem:[%s233 + $0x398] sm:$0xf]
        %v542 = vld [vmem:[%s233 + $0x39c] sm:$0xf]
        %v543 = vld [vmem:[%s233 + $0x3a0] sm:$0xf]
        %v544 = vld [vmem:[%s233 + $0x3a4] sm:$0xf]
        %v545 = vld [vmem:[%s233 + $0x3a8] sm:$0xf]
        %v546 = vld [vmem:[%s233 + $0x3ac] sm:$0xf]
        %v547 = vld [vmem:[%s233 + $0x3b0] sm:$0xf]
        %v548 = vld [vmem:[%s233 + $0x3b4] sm:$0xf]
        %v549 = vld [vmem:[%s233 + $0x3b8] sm:$0xf]
        %v550 = vld [vmem:[%s233 + $0x3bc] sm:$0xf]
        %v551 = vld [vmem:[%s233 + $0x3c0] sm:$0xf]
        %v552 = vld [vmem:[%s233 + $0x3c4] sm:$0xf]
        %v553 = vld [vmem:[%s233 + $0x3c8] sm:$0xf]
        %v554 = vld [vmem:[%s233 + $0x3cc] sm:$0xf]
        %v555 = vld [vmem:[%s233 + $0x3d0] sm:$0xf]
        %v556 = vld [vmem:[%s233 + $0x3d4] sm:$0xf]
        %v557 = vld [vmem:[%s233 + $0x3d8] sm:$0xf]
        %v558 = vld [vmem:[%s233 + $0x3dc] sm:$0xf]
        %v559 = vld [vmem:[%s233 + $0x3e0] sm:$0xf]
        %v560 = vld [vmem:[%s233 + $0x3e4] sm:$0xf]
        %v561 = vld [vmem:[%s233 + $0x3e8] sm:$0xf]
        %v562 = vld [vmem:[%s233 + $0x3ec] sm:$0xf]
        %v563 = vld [vmem:[%s233 + $0x3f0] sm:$0xf]
        %v564 = vld [vmem:[%s233 + $0x3f4] sm:$0xf]
        %v565 = vld [vmem:[%s233 + $0x3f8] sm:$0xf]
        %v566 = vld [vmem:[%s233 + $0x3fc] sm:$0xf]
        %v567 = vld [vmem:[%s233 + $0x400] sm:$0xf]
        %v568 = vld [vmem:[%s233 + $0x404] sm:$0xf]
        %v569 = vld [vmem:[%s233 + $0x408] sm:$0xf]
        %v570 = vld [vmem:[%s233 + $0x40c] sm:$0xf]
        %v571 = vld [vmem:[%s233 + $0x410] sm:$0xf]
        %v572 = vld [vmem:[%s233 + $0x414] sm:$0xf]
        %v573 = vld [vmem:[%s233 + $0x418] sm:$0xf]
        %v574 = vld [vmem:[%s233 + $0x41c] sm:$0xf]
        %v575 = vld [vmem:[%s233 + $0x420] sm:$0xf]
        %v576 = vld [vmem:[%s233 + $0x424] sm:$0xf]
        %v577 = vld [vmem:[%s233 + $0x428] sm:$0xf]
        %v578 = vld [vmem:[%s233 + $0x42c] sm:$0xf]
        %v579 = vld [vmem:[%s233 + $0x430] sm:$0xf]
        %v580 = vld [vmem:[%s233 + $0x434] sm:$0xf]
        %v581 = vld [vmem:[%s233 + $0x438] sm:$0xf]
        %v582 = vld [vmem:[%s233 + $0x43c] sm:$0xf]
        %v583 = vld [vmem:[%s233 + $0x440] sm:$0xf]
        %v584 = vld [vmem:[%s233 + $0x444] sm:$0xf]
        %v585 = vld [vmem:[%s233 + $0x448] sm:$0xf]
        %v586 = vld [vmem:[%s233 + $0x44c] sm:$0xf]
        %v587 = vld [vmem:[%s233 + $0x450] sm:$0xf]
        %v588 = vld [vmem:[%s233 + $0x454] sm:$0xf]
        %v589 = vld [vmem:[%s233 + $0x458] sm:$0xf]
        %v590 = vld [vmem:[%s233 + $0x45c] sm:$0xf]
        %v591 = vld [vmem:[%s233 + $0x460] sm:$0xf]
        %v592 = vld [vmem:[%s233 + $0x464] sm:$0xf]
        %v593 = vld [vmem:[%s233 + $0x468] sm:$0xf]
        %v594 = vld [vmem:[%s233 + $0x46c] sm:$0xf]
        %v595 = vld [vmem:[%s233 + $0x470] sm:$0xf]
        %v596 = vld [vmem:[%s233 + $0x474] sm:$0xf]
        %v597 = vld [vmem:[%s233 + $0x478] sm:$0xf]
        %v598 = vld [vmem:[%s233 + $0x47c] sm:$0xf]
        %v887 = vunpack.c.l.b16 %v311
        %v888 = vunpack.c.l.b16 %v312
        %v889 = vunpack.c.l.b16 %v313
        %v890 = vunpack.c.l.b16 %v314
        %v891 = vunpack.c.l.b16 %v315
        %v892 = vunpack.c.l.b16 %v316
        %v893 = vunpack.c.l.b16 %v317
        %v894 = vunpack.c.l.b16 %v318
        %v895 = vunpack.c.l.b16 %v319
        %v896 = vunpack.c.l.b16 %v320
        %v897 = vunpack.c.l.b16 %v321
        %v898 = vunpack.c.l.b16 %v322
        %v899 = vunpack.c.l.b16 %v323
        %v900 = vunpack.c.l.b16 %v324
        %v901 = vunpack.c.l.b16 %v325
        %v902 = vunpack.c.l.b16 %v326
        %v903 = vunpack.c.l.b16 %v327
        %v904 = vunpack.c.l.b16 %v328
        %v905 = vunpack.c.l.b16 %v329
        %v906 = vunpack.c.l.b16 %v330
        %v907 = vunpack.c.l.b16 %v331
        %v908 = vunpack.c.l.b16 %v332
        %v909 = vunpack.c.l.b16 %v333
        %v910 = vunpack.c.l.b16 %v334
        %v911 = vunpack.c.l.b16 %v335
        %v912 = vunpack.c.l.b16 %v336
        %v913 = vunpack.c.l.b16 %v337
        %v914 = vunpack.c.l.b16 %v338
        %v915 = vunpack.c.l.b16 %v339
        %v916 = vunpack.c.l.b16 %v340
        %v917 = vunpack.c.l.b16 %v341
        %v918 = vunpack.c.l.b16 %v342
        %v919 = vunpack.c.l.b16 %v343
        %v920 = vunpack.c.l.b16 %v344
        %v921 = vunpack.c.l.b16 %v345
        %v922 = vunpack.c.l.b16 %v346
        %v923 = vunpack.c.l.b16 %v347
        %v924 = vunpack.c.l.b16 %v348
        %v925 = vunpack.c.l.b16 %v349
        %v926 = vunpack.c.l.b16 %v350
        %v927 = vunpack.c.l.b16 %v351
        %v928 = vunpack.c.l.b16 %v352
        %v929 = vunpack.c.l.b16 %v353
        %v930 = vunpack.c.l.b16 %v354
        %v931 = vunpack.c.l.b16 %v355
        %v932 = vunpack.c.l.b16 %v356
        %v933 = vunpack.c.l.b16 %v357
        %v934 = vunpack.c.l.b16 %v358
        %v935 = vunpack.c.l.b16 %v359
        %v936 = vunpack.c.l.b16 %v360
        %v937 = vunpack.c.l.b16 %v361
        %v938 = vunpack.c.l.b16 %v362
        %v939 = vunpack.c.l.b16 %v363
        %v940 = vunpack.c.l.b16 %v364
        %v941 = vunpack.c.l.b16 %v365
        %v942 = vunpack.c.l.b16 %v366
        %v943 = vunpack.c.l.b16 %v367
        %v944 = vunpack.c.l.b16 %v368
        %v945 = vunpack.c.l.b16 %v369
        %v946 = vunpack.c.l.b16 %v370
        %v947 = vunpack.c.l.b16 %v371
        %v948 = vunpack.c.l.b16 %v372
        %v949 = vunpack.c.l.b16 %v373
        %v950 = vunpack.c.l.b16 %v374
        %v951 = vunpack.c.l.b16 %v375
        %v952 = vunpack.c.l.b16 %v376
        %v953 = vunpack.c.l.b16 %v377
        %v954 = vunpack.c.l.b16 %v378
        %v955 = vunpack.c.l.b16 %v379
        %v956 = vunpack.c.l.b16 %v380
        %v957 = vunpack.c.l.b16 %v381
        %v958 = vunpack.c.l.b16 %v382
        %v959 = vunpack.c.l.b16 %v383
        %v960 = vunpack.c.l.b16 %v384
        %v961 = vunpack.c.l.b16 %v385
        %v962 = vunpack.c.l.b16 %v386
        %v963 = vunpack.c.l.b16 %v387
        %v964 = vunpack.c.l.b16 %v388
        %v965 = vunpack.c.l.b16 %v389
        %v966 = vunpack.c.l.b16 %v390
        %v967 = vunpack.c.l.b16 %v391
        %v968 = vunpack.c.l.b16 %v392
        %v969 = vunpack.c.l.b16 %v393
        %v970 = vunpack.c.l.b16 %v394
        %v971 = vunpack.c.l.b16 %v395
        %v972 = vunpack.c.l.b16 %v396
        %v973 = vunpack.c.l.b16 %v397
        %v974 = vunpack.c.l.b16 %v398
        %v975 = vunpack.c.l.b16 %v399
        %v976 = vunpack.c.l.b16 %v400
        %v977 = vunpack.c.l.b16 %v401
        %v978 = vunpack.c.l.b16 %v402
        %v979 = vunpack.c.l.b16 %v403
        %v980 = vunpack.c.l.b16 %v404
        %v981 = vunpack.c.l.b16 %v405
        %v982 = vunpack.c.l.b16 %v406
        %v983 = vunpack.c.l.b16 %v407
        %v984 = vunpack.c.l.b16 %v408
        %v985 = vunpack.c.l.b16 %v409
        %v986 = vunpack.c.l.b16 %v410
        %v987 = vunpack.c.l.b16 %v411
        %v988 = vunpack.c.l.b16 %v412
        %v989 = vunpack.c.l.b16 %v413
        %v990 = vunpack.c.l.b16 %v414
        %v991 = vunpack.c.l.b16 %v415
        %v992 = vunpack.c.l.b16 %v416
        %v993 = vunpack.c.l.b16 %v417
        %v994 = vunpack.c.l.b16 %v418
        %v995 = vunpack.c.l.b16 %v419
        %v996 = vunpack.c.l.b16 %v420
        %v997 = vunpack.c.l.b16 %v421
        %v998 = vunpack.c.l.b16 %v422
        %v999 = vunpack.c.l.b16 %v423
        %v1000 = vunpack.c.l.b16 %v424
        %v1001 = vunpack.c.l.b16 %v425
        %v1002 = vunpack.c.l.b16 %v426
        %v1003 = vunpack.c.l.b16 %v427
        %v1004 = vunpack.c.l.b16 %v428
        %v1005 = vunpack.c.l.b16 %v429
        %v1006 = vunpack.c.l.b16 %v430
        %v1007 = vunpack.c.l.b16 %v431
        %v1008 = vunpack.c.l.b16 %v432
        %v1009 = vunpack.c.l.b16 %v433
        %v1010 = vunpack.c.l.b16 %v434
        %v1011 = vunpack.c.l.b16 %v435
        %v1012 = vunpack.c.l.b16 %v436
        %v1013 = vunpack.c.l.b16 %v437
        %v1014 = vunpack.c.l.b16 %v438
        %v1015 = vunpack.c.l.b16 %v439
        %v1016 = vunpack.c.l.b16 %v440
        %v1017 = vunpack.c.l.b16 %v441
        %v1018 = vunpack.c.l.b16 %v442
        %v1019 = vunpack.c.l.b16 %v443
        %v1020 = vunpack.c.l.b16 %v444
        %v1021 = vunpack.c.l.b16 %v445
        %v1022 = vunpack.c.l.b16 %v446
        %v1023 = vunpack.c.l.b16 %v447
        %v1024 = vunpack.c.l.b16 %v448
        %v1025 = vunpack.c.l.b16 %v449
        %v1026 = vunpack.c.l.b16 %v450
        %v1027 = vunpack.c.l.b16 %v451
        %v1028 = vunpack.c.l.b16 %v452
        %v1029 = vunpack.c.l.b16 %v453
        %v1030 = vunpack.c.l.b16 %v454
        %v1031 = vunpack.c.l.b16 %v455
        %v1032 = vunpack.c.l.b16 %v456
        %v1033 = vunpack.c.l.b16 %v457
        %v1034 = vunpack.c.l.b16 %v458
        %v1035 = vunpack.c.l.b16 %v459
        %v1036 = vunpack.c.l.b16 %v460
        %v1037 = vunpack.c.l.b16 %v461
        %v1038 = vunpack.c.l.b16 %v462
        %v1039 = vunpack.c.l.b16 %v463
        %v1040 = vunpack.c.l.b16 %v464
        %v1041 = vunpack.c.l.b16 %v465
        %v1042 = vunpack.c.l.b16 %v466
        %v1043 = vunpack.c.l.b16 %v467
        %v1044 = vunpack.c.l.b16 %v468
        %v1045 = vunpack.c.l.b16 %v469
        %v1046 = vunpack.c.l.b16 %v470
        %v1047 = vunpack.c.l.b16 %v471
        %v1048 = vunpack.c.l.b16 %v472
        %v1049 = vunpack.c.l.b16 %v473
        %v1050 = vunpack.c.l.b16 %v474
        %v1051 = vunpack.c.l.b16 %v475
        %v1052 = vunpack.c.l.b16 %v476
        %v1053 = vunpack.c.l.b16 %v477
        %v1054 = vunpack.c.l.b16 %v478
        %v1055 = vunpack.c.l.b16 %v479
        %v1056 = vunpack.c.l.b16 %v480
        %v1057 = vunpack.c.l.b16 %v481
        %v1058 = vunpack.c.l.b16 %v482
        %v1059 = vunpack.c.l.b16 %v483
        %v1060 = vunpack.c.l.b16 %v484
        %v1061 = vunpack.c.l.b16 %v485
        %v1062 = vunpack.c.l.b16 %v486
        %v1063 = vunpack.c.l.b16 %v487
        %v1064 = vunpack.c.l.b16 %v488
        %v1065 = vunpack.c.l.b16 %v489
        %v1066 = vunpack.c.l.b16 %v490
        %v1067 = vunpack.c.l.b16 %v491
        %v1068 = vunpack.c.l.b16 %v492
        %v1069 = vunpack.c.l.b16 %v493
        %v1070 = vunpack.c.l.b16 %v494
        %v1071 = vunpack.c.l.b16 %v495
        %v1072 = vunpack.c.l.b16 %v496
        %v1073 = vunpack.c.l.b16 %v497
        %v1074 = vunpack.c.l.b16 %v498
        %v1075 = vunpack.c.l.b16 %v499
        %v1076 = vunpack.c.l.b16 %v500
        %v1077 = vunpack.c.l.b16 %v501
        %v1078 = vunpack.c.l.b16 %v502
        %v1079 = vunpack.c.l.b16 %v503
        %v1080 = vunpack.c.l.b16 %v504
        %v1081 = vunpack.c.l.b16 %v505
        %v1082 = vunpack.c.l.b16 %v506
        %v1083 = vunpack.c.l.b16 %v507
        %v1084 = vunpack.c.l.b16 %v508
        %v1085 = vunpack.c.l.b16 %v509
        %v1086 = vunpack.c.l.b16 %v510
        %v1087 = vunpack.c.l.b16 %v511
        %v1088 = vunpack.c.l.b16 %v512
        %v1089 = vunpack.c.l.b16 %v513
        %v1090 = vunpack.c.l.b16 %v514
        %v1091 = vunpack.c.l.b16 %v515
        %v1092 = vunpack.c.l.b16 %v516
        %v1093 = vunpack.c.l.b16 %v517
        %v1094 = vunpack.c.l.b16 %v518
        %v1095 = vunpack.c.l.b16 %v519
        %v1096 = vunpack.c.l.b16 %v520
        %v1097 = vunpack.c.l.b16 %v521
        %v1098 = vunpack.c.l.b16 %v522
        %v1099 = vunpack.c.l.b16 %v523
        %v1100 = vunpack.c.l.b16 %v524
        %v1101 = vunpack.c.l.b16 %v525
        %v1102 = vunpack.c.l.b16 %v526
        %v1103 = vunpack.c.l.b16 %v527
        %v1104 = vunpack.c.l.b16 %v528
        %v1105 = vunpack.c.l.b16 %v529
        %v1106 = vunpack.c.l.b16 %v530
        %v1107 = vunpack.c.l.b16 %v531
        %v1108 = vunpack.c.l.b16 %v532
        %v1109 = vunpack.c.l.b16 %v533
        %v1110 = vunpack.c.l.b16 %v534
        %v1111 = vunpack.c.l.b16 %v535
        %v1112 = vunpack.c.l.b16 %v536
        %v1113 = vunpack.c.l.b16 %v537
        %v1114 = vunpack.c.l.b16 %v538
        %v1115 = vunpack.c.l.b16 %v539
        %v1116 = vunpack.c.l.b16 %v540
        %v1117 = vunpack.c.l.b16 %v541
        %v1118 = vunpack.c.l.b16 %v542
        %v1119 = vunpack.c.l.b16 %v543
        %v1120 = vunpack.c.l.b16 %v544
        %v1121 = vunpack.c.l.b16 %v545
        %v1122 = vunpack.c.l.b16 %v546
        %v1123 = vunpack.c.l.b16 %v547
        %v1124 = vunpack.c.l.b16 %v548
        %v1125 = vunpack.c.l.b16 %v549
        %v1126 = vunpack.c.l.b16 %v550
        %v1127 = vunpack.c.l.b16 %v551
        %v1128 = vunpack.c.l.b16 %v552
        %v1129 = vunpack.c.l.b16 %v553
        %v1130 = vunpack.c.l.b16 %v554
        %v1131 = vunpack.c.l.b16 %v555
        %v1132 = vunpack.c.l.b16 %v556
        %v1133 = vunpack.c.l.b16 %v557
        %v1134 = vunpack.c.l.b16 %v558
        %v1135 = vunpack.c.l.b16 %v559
        %v1136 = vunpack.c.l.b16 %v560
        %v1137 = vunpack.c.l.b16 %v561
        %v1138 = vunpack.c.l.b16 %v562
        %v1139 = vunpack.c.l.b16 %v563
        %v1140 = vunpack.c.l.b16 %v564
        %v1141 = vunpack.c.l.b16 %v565
        %v1142 = vunpack.c.l.b16 %v566
        %v1143 = vunpack.c.l.b16 %v567
        %v1144 = vunpack.c.l.b16 %v568
        %v1145 = vunpack.c.l.b16 %v569
        %v1146 = vunpack.c.l.b16 %v570
        %v1147 = vunpack.c.l.b16 %v571
        %v1148 = vunpack.c.l.b16 %v572
        %v1149 = vunpack.c.l.b16 %v573
        %v1150 = vunpack.c.l.b16 %v574
        %v1151 = vunpack.c.l.b16 %v575
        %v1152 = vunpack.c.l.b16 %v576
        %v1153 = vunpack.c.l.b16 %v577
        %v1154 = vunpack.c.l.b16 %v578
        %v1155 = vunpack.c.l.b16 %v579
        %v1156 = vunpack.c.l.b16 %v580
        %v1157 = vunpack.c.l.b16 %v581
        %v1158 = vunpack.c.l.b16 %v582
        %v1159 = vunpack.c.l.b16 %v583
        %v1160 = vunpack.c.l.b16 %v584
        %v1161 = vunpack.c.l.b16 %v585
        %v1162 = vunpack.c.l.b16 %v586
        %v1163 = vunpack.c.l.b16 %v587
        %v1164 = vunpack.c.l.b16 %v588
        %v1165 = vunpack.c.l.b16 %v589
        %v1166 = vunpack.c.l.b16 %v590
        %v1167 = vunpack.c.l.b16 %v591
        %v1168 = vunpack.c.l.b16 %v592
        %v1169 = vunpack.c.l.b16 %v593
        %v1170 = vunpack.c.l.b16 %v594
        %v1171 = vunpack.c.l.b16 %v595
        %v1172 = vunpack.c.l.b16 %v596
        %v1173 = vunpack.c.l.b16 %v597
        %v1174 = vunpack.c.l.b16 %v598
        %v1175 = vpack.c.b16 %v888, %v887
        %v1176 = vpack.c.b16 %v890, %v889
        %v1177 = vpack.c.b16 %v892, %v891
        %v1178 = vpack.c.b16 %v894, %v893
        %v1179 = vpack.c.b16 %v896, %v895
        %v1180 = vpack.c.b16 %v898, %v897
        %v1181 = vpack.c.b16 %v900, %v899
        %v1182 = vpack.c.b16 %v902, %v901
        %v1183 = vpack.c.b16 %v904, %v903
        %v1184 = vpack.c.b16 %v906, %v905
        %v1185 = vpack.c.b16 %v908, %v907
        %v1186 = vpack.c.b16 %v910, %v909
        %v1187 = vpack.c.b16 %v912, %v911
        %v1188 = vpack.c.b16 %v914, %v913
        %v1189 = vpack.c.b16 %v916, %v915
        %v1190 = vpack.c.b16 %v918, %v917
        %v1191 = vpack.c.b16 %v920, %v919
        %v1192 = vpack.c.b16 %v922, %v921
        %v1193 = vpack.c.b16 %v924, %v923
        %v1194 = vpack.c.b16 %v926, %v925
        %v1195 = vpack.c.b16 %v928, %v927
        %v1196 = vpack.c.b16 %v930, %v929
        %v1197 = vpack.c.b16 %v932, %v931
        %v1198 = vpack.c.b16 %v934, %v933
        %v1199 = vpack.c.b16 %v936, %v935
        %v1200 = vpack.c.b16 %v938, %v937
        %v1201 = vpack.c.b16 %v940, %v939
        %v1202 = vpack.c.b16 %v942, %v941
        %v1203 = vpack.c.b16 %v944, %v943
        %v1204 = vpack.c.b16 %v946, %v945
        %v1205 = vpack.c.b16 %v948, %v947
        %v1206 = vpack.c.b16 %v950, %v949
        %v1207 = vpack.c.b16 %v952, %v951
        %v1208 = vpack.c.b16 %v954, %v953
        %v1209 = vpack.c.b16 %v956, %v955
        %v1210 = vpack.c.b16 %v958, %v957
        %v1211 = vpack.c.b16 %v960, %v959
        %v1212 = vpack.c.b16 %v962, %v961
        %v1213 = vpack.c.b16 %v964, %v963
        %v1214 = vpack.c.b16 %v966, %v965
        %v1215 = vpack.c.b16 %v968, %v967
        %v1216 = vpack.c.b16 %v970, %v969
        %v1217 = vpack.c.b16 %v972, %v971
        %v1218 = vpack.c.b16 %v974, %v973
        %v1219 = vpack.c.b16 %v976, %v975
        %v1220 = vpack.c.b16 %v978, %v977
        %v1221 = vpack.c.b16 %v980, %v979
        %v1222 = vpack.c.b16 %v982, %v981
        %v1223 = vpack.c.b16 %v984, %v983
        %v1224 = vpack.c.b16 %v986, %v985
        %v1225 = vpack.c.b16 %v988, %v987
        %v1226 = vpack.c.b16 %v990, %v989
        %v1227 = vpack.c.b16 %v992, %v991
        %v1228 = vpack.c.b16 %v994, %v993
        %v1229 = vpack.c.b16 %v996, %v995
        %v1230 = vpack.c.b16 %v998, %v997
        %v1231 = vpack.c.b16 %v1000, %v999
        %v1232 = vpack.c.b16 %v1002, %v1001
        %v1233 = vpack.c.b16 %v1004, %v1003
        %v1234 = vpack.c.b16 %v1006, %v1005
        %v1235 = vpack.c.b16 %v1008, %v1007
        %v1236 = vpack.c.b16 %v1010, %v1009
        %v1237 = vpack.c.b16 %v1012, %v1011
        %v1238 = vpack.c.b16 %v1014, %v1013
        %v1239 = vpack.c.b16 %v1016, %v1015
        %v1240 = vpack.c.b16 %v1018, %v1017
        %v1241 = vpack.c.b16 %v1020, %v1019
        %v1242 = vpack.c.b16 %v1022, %v1021
        %v1243 = vpack.c.b16 %v1024, %v1023
        %v1244 = vpack.c.b16 %v1026, %v1025
        %v1245 = vpack.c.b16 %v1028, %v1027
        %v1246 = vpack.c.b16 %v1030, %v1029
        %v1247 = vpack.c.b16 %v1032, %v1031
        %v1248 = vpack.c.b16 %v1034, %v1033
        %v1249 = vpack.c.b16 %v1036, %v1035
        %v1250 = vpack.c.b16 %v1038, %v1037
        %v1251 = vpack.c.b16 %v1040, %v1039
        %v1252 = vpack.c.b16 %v1042, %v1041
        %v1253 = vpack.c.b16 %v1044, %v1043
        %v1254 = vpack.c.b16 %v1046, %v1045
        %v1255 = vpack.c.b16 %v1048, %v1047
        %v1256 = vpack.c.b16 %v1050, %v1049
        %v1257 = vpack.c.b16 %v1052, %v1051
        %v1258 = vpack.c.b16 %v1054, %v1053
        %v1259 = vpack.c.b16 %v1056, %v1055
        %v1260 = vpack.c.b16 %v1058, %v1057
        %v1261 = vpack.c.b16 %v1060, %v1059
        %v1262 = vpack.c.b16 %v1062, %v1061
        %v1263 = vpack.c.b16 %v1064, %v1063
        %v1264 = vpack.c.b16 %v1066, %v1065
        %v1265 = vpack.c.b16 %v1068, %v1067
        %v1266 = vpack.c.b16 %v1070, %v1069
        %v1267 = vpack.c.b16 %v1072, %v1071
        %v1268 = vpack.c.b16 %v1074, %v1073
        %v1269 = vpack.c.b16 %v1076, %v1075
        %v1270 = vpack.c.b16 %v1078, %v1077
        %v1271 = vpack.c.b16 %v1080, %v1079
        %v1272 = vpack.c.b16 %v1082, %v1081
        %v1273 = vpack.c.b16 %v1084, %v1083
        %v1274 = vpack.c.b16 %v1086, %v1085
        %v1275 = vpack.c.b16 %v1088, %v1087
        %v1276 = vpack.c.b16 %v1090, %v1089
        %v1277 = vpack.c.b16 %v1092, %v1091
        %v1278 = vpack.c.b16 %v1094, %v1093
        %v1279 = vpack.c.b16 %v1096, %v1095
        %v1280 = vpack.c.b16 %v1098, %v1097
        %v1281 = vpack.c.b16 %v1100, %v1099
        %v1282 = vpack.c.b16 %v1102, %v1101
        %v1283 = vpack.c.b16 %v1104, %v1103
        %v1284 = vpack.c.b16 %v1106, %v1105
        %v1285 = vpack.c.b16 %v1108, %v1107
        %v1286 = vpack.c.b16 %v1110, %v1109
        %v1287 = vpack.c.b16 %v1112, %v1111
        %v1288 = vpack.c.b16 %v1114, %v1113
        %v1289 = vpack.c.b16 %v1116, %v1115
        %v1290 = vpack.c.b16 %v1118, %v1117
        %v1291 = vpack.c.b16 %v1120, %v1119
        %v1292 = vpack.c.b16 %v1122, %v1121
        %v1293 = vpack.c.b16 %v1124, %v1123
        %v1294 = vpack.c.b16 %v1126, %v1125
        %v1295 = vpack.c.b16 %v1128, %v1127
        %v1296 = vpack.c.b16 %v1130, %v1129
        %v1297 = vpack.c.b16 %v1132, %v1131
        %v1298 = vpack.c.b16 %v1134, %v1133
        %v1299 = vpack.c.b16 %v1136, %v1135
        %v1300 = vpack.c.b16 %v1138, %v1137
        %v1301 = vpack.c.b16 %v1140, %v1139
        %v1302 = vpack.c.b16 %v1142, %v1141
        %v1303 = vpack.c.b16 %v1144, %v1143
        %v1304 = vpack.c.b16 %v1146, %v1145
        %v1305 = vpack.c.b16 %v1148, %v1147
        %v1306 = vpack.c.b16 %v1150, %v1149
        %v1307 = vpack.c.b16 %v1152, %v1151
        %v1308 = vpack.c.b16 %v1154, %v1153
        %v1309 = vpack.c.b16 %v1156, %v1155
        %v1310 = vpack.c.b16 %v1158, %v1157
        %v1311 = vpack.c.b16 %v1160, %v1159
        %v1312 = vpack.c.b16 %v1162, %v1161
        %v1313 = vpack.c.b16 %v1164, %v1163
        %v1314 = vpack.c.b16 %v1166, %v1165
        %v1315 = vpack.c.b16 %v1168, %v1167
        %v1316 = vpack.c.b16 %v1170, %v1169
        %v1317 = vpack.c.b16 %v1172, %v1171
        %v1318 = vpack.c.b16 %v1174, %v1173
        %1463 = vmatpush.bf16.msra.mxu0 %v1182
        %1464 = vmatpush.bf16.msra.mxu0 %v1181
        %1465 = vmatpush.bf16.msra.mxu0 %v1180
        %1466 = vmatpush.bf16.msra.mxu0 %v1179
        %1467 = vmatpush.bf16.msra.mxu0 %v1178
        %1468 = vmatpush.bf16.msra.mxu0 %v1177
        %1469 = vmatpush.bf16.msra.mxu0 %v1176
        %1470 = vmatpush.bf16.msra.mxu0 %v1175
        %1471 = vmatmul.bf16.gmra.mxu0 %v293
        %v1472 = vpop.f32.mrf.mxu0
        %v1473 = vadd.f32 0.0, %v1472
        %v1474 = vpop.f32.mrf.mxu0
        %1475 = vdwg.mxu0
        %1476 = vmatpush.bf16.msra.mxu0 %v1190
        %1477 = vmatpush.bf16.msra.mxu0 %v1189
        %1478 = vmatpush.bf16.msra.mxu0 %v1188
        %1479 = vmatpush.bf16.msra.mxu0 %v1187
        %1480 = vmatpush.bf16.msra.mxu0 %v1186
        %1481 = vmatpush.bf16.msra.mxu0 %v1185
        %1482 = vmatpush.bf16.msra.mxu0 %v1184
        %1483 = vmatpush.bf16.msra.mxu0 %v1183
        %1484 = vmatmul.bf16.gmra.mxu0 %v294
        %v1485 = vpop.f32.mrf.mxu0
        %v1486 = vadd.f32 %v1473, %v1485
        %v1487 = vpop.f32.mrf.mxu0
        %1488 = vdwg.mxu0
        %1489 = vmatpush.bf16.msra.mxu0 %v1198
        %1490 = vmatpush.bf16.msra.mxu0 %v1197
        %1491 = vmatpush.bf16.msra.mxu0 %v1196
        %1492 = vmatpush.bf16.msra.mxu0 %v1195
        %1493 = vmatpush.bf16.msra.mxu0 %v1194
        %1494 = vmatpush.bf16.msra.mxu0 %v1193
        %1495 = vmatpush.bf16.msra.mxu0 %v1192
        %1496 = vmatpush.bf16.msra.mxu0 %v1191
        %1497 = vmatmul.bf16.gmra.mxu0 %v295
        %v1498 = vpop.f32.mrf.mxu0
        %v1499 = vadd.f32 %v1486, %v1498
        %v1500 = vpop.f32.mrf.mxu0
        %1501 = vdwg.mxu0
        %1502 = vmatpush.bf16.msra.mxu0 %v1206
        %1503 = vmatpush.bf16.msra.mxu0 %v1205
        %1504 = vmatpush.bf16.msra.mxu0 %v1204
        %1505 = vmatpush.bf16.msra.mxu0 %v1203
        %1506 = vmatpush.bf16.msra.mxu0 %v1202
        %1507 = vmatpush.bf16.msra.mxu0 %v1201
        %1508 = vmatpush.bf16.msra.mxu0 %v1200
        %1509 = vmatpush.bf16.msra.mxu0 %v1199
        %1510 = vmatmul.bf16.gmra.mxu0 %v296
        %v1511 = vpop.f32.mrf.mxu0
        %v1512 = vadd.f32 %v1499, %v1511
        %v1513 = vpop.f32.mrf.mxu0
        %1514 = vdwg.mxu0
        %1515 = vmatpush.bf16.msra.mxu0 %v1214
        %1516 = vmatpush.bf16.msra.mxu0 %v1213
        %1517 = vmatpush.bf16.msra.mxu0 %v1212
        %1518 = vmatpush.bf16.msra.mxu0 %v1211
        %1519 = vmatpush.bf16.msra.mxu0 %v1210
        %1520 = vmatpush.bf16.msra.mxu0 %v1209
        %1521 = vmatpush.bf16.msra.mxu0 %v1208
        %1522 = vmatpush.bf16.msra.mxu0 %v1207
        %1523 = vmatmul.bf16.gmra.mxu0 %v297
        %v1524 = vpop.f32.mrf.mxu0
        %v1525 = vadd.f32 %v1512, %v1524
        %v1526 = vpop.f32.mrf.mxu0
        %1527 = vdwg.mxu0
        %1528 = vmatpush.bf16.msra.mxu0 %v1222
        %1529 = vmatpush.bf16.msra.mxu0 %v1221
        %1530 = vmatpush.bf16.msra.mxu0 %v1220
        %1531 = vmatpush.bf16.msra.mxu0 %v1219
        %1532 = vmatpush.bf16.msra.mxu0 %v1218
        %1533 = vmatpush.bf16.msra.mxu0 %v1217
        %1534 = vmatpush.bf16.msra.mxu0 %v1216
        %1535 = vmatpush.bf16.msra.mxu0 %v1215
        %1536 = vmatmul.bf16.gmra.mxu0 %v298
        %v1537 = vpop.f32.mrf.mxu0
        %v1538 = vadd.f32 %v1525, %v1537
        %v1539 = vpop.f32.mrf.mxu0
        %1540 = vdwg.mxu0
        %1541 = vmatpush.bf16.msra.mxu0 %v1230
        %1542 = vmatpush.bf16.msra.mxu0 %v1229
        %1543 = vmatpush.bf16.msra.mxu0 %v1228
        %1544 = vmatpush.bf16.msra.mxu0 %v1227
        %1545 = vmatpush.bf16.msra.mxu0 %v1226
        %1546 = vmatpush.bf16.msra.mxu0 %v1225
        %1547 = vmatpush.bf16.msra.mxu0 %v1224
        %1548 = vmatpush.bf16.msra.mxu0 %v1223
        %1549 = vmatmul.bf16.gmra.mxu0 %v299
        %v1550 = vpop.f32.mrf.mxu0
        %v1551 = vadd.f32 %v1538, %v1550
        %v1552 = vpop.f32.mrf.mxu0
        %1553 = vdwg.mxu0
        %1554 = vmatpush.bf16.msra.mxu0 %v1238
        %1555 = vmatpush.bf16.msra.mxu0 %v1237
        %1556 = vmatpush.bf16.msra.mxu0 %v1236
        %1557 = vmatpush.bf16.msra.mxu0 %v1235
        %1558 = vmatpush.bf16.msra.mxu0 %v1234
        %1559 = vmatpush.bf16.msra.mxu0 %v1233
        %1560 = vmatpush.bf16.msra.mxu0 %v1232
        %1561 = vmatpush.bf16.msra.mxu0 %v1231
        %1562 = vmatmul.bf16.gmra.mxu0 %v300
        %v1563 = vpop.f32.mrf.mxu0
        %v1564 = vadd.f32 %v1551, %v1563
        %v1565 = vpop.f32.mrf.mxu0
        %1566 = vdwg.mxu0
        %1567 = vmatpush.bf16.msra.mxu0 %v1246
        %1568 = vmatpush.bf16.msra.mxu0 %v1245
        %1569 = vmatpush.bf16.msra.mxu0 %v1244
        %1570 = vmatpush.bf16.msra.mxu0 %v1243
        %1571 = vmatpush.bf16.msra.mxu0 %v1242
        %1572 = vmatpush.bf16.msra.mxu0 %v1241
        %1573 = vmatpush.bf16.msra.mxu0 %v1240
        %1574 = vmatpush.bf16.msra.mxu0 %v1239
        %1575 = vmatmul.bf16.gmra.mxu0 %v301
        %v1576 = vpop.f32.mrf.mxu0
        %v1577 = vadd.f32 %v1564, %v1576
        %v1578 = vpop.f32.mrf.mxu0
        %1579 = vdwg.mxu0
        %1580 = vmatpush.bf16.msra.mxu0 %v1254
        %1581 = vmatpush.bf16.msra.mxu0 %v1253
        %1582 = vmatpush.bf16.msra.mxu0 %v1252
        %1583 = vmatpush.bf16.msra.mxu0 %v1251
        %1584 = vmatpush.bf16.msra.mxu0 %v1250
        %1585 = vmatpush.bf16.msra.mxu0 %v1249
        %1586 = vmatpush.bf16.msra.mxu0 %v1248
        %1587 = vmatpush.bf16.msra.mxu0 %v1247
        %1588 = vmatmul.bf16.gmra.mxu0 %v302
        %v1589 = vpop.f32.mrf.mxu0
        %v1590 = vadd.f32 %v1577, %v1589
        %v1591 = vpop.f32.mrf.mxu0
        %1592 = vdwg.mxu0
        %1593 = vmatpush.bf16.msra.mxu0 %v1262
        %1594 = vmatpush.bf16.msra.mxu0 %v1261
        %1595 = vmatpush.bf16.msra.mxu0 %v1260
        %1596 = vmatpush.bf16.msra.mxu0 %v1259
        %1597 = vmatpush.bf16.msra.mxu0 %v1258
        %1598 = vmatpush.bf16.msra.mxu0 %v1257
        %1599 = vmatpush.bf16.msra.mxu0 %v1256
        %1600 = vmatpush.bf16.msra.mxu0 %v1255
        %1601 = vmatmul.bf16.gmra.mxu0 %v303
        %v1602 = vpop.f32.mrf.mxu0
        %v1603 = vadd.f32 %v1590, %v1602
        %v1604 = vpop.f32.mrf.mxu0
        %1605 = vdwg.mxu0
        %1606 = vmatpush.bf16.msra.mxu0 %v1270
        %1607 = vmatpush.bf16.msra.mxu0 %v1269
        %1608 = vmatpush.bf16.msra.mxu0 %v1268
        %1609 = vmatpush.bf16.msra.mxu0 %v1267
        %1610 = vmatpush.bf16.msra.mxu0 %v1266
        %1611 = vmatpush.bf16.msra.mxu0 %v1265
        %1612 = vmatpush.bf16.msra.mxu0 %v1264
        %1613 = vmatpush.bf16.msra.mxu0 %v1263
        %1614 = vmatmul.bf16.gmra.mxu0 %v304
        %v1615 = vpop.f32.mrf.mxu0
        %v1616 = vadd.f32 %v1603, %v1615
        %v1617 = vpop.f32.mrf.mxu0
        %1618 = vdwg.mxu0
        %1619 = vmatpush.bf16.msra.mxu0 %v1278
        %1620 = vmatpush.bf16.msra.mxu0 %v1277
        %1621 = vmatpush.bf16.msra.mxu0 %v1276
        %1622 = vmatpush.bf16.msra.mxu0 %v1275
        %1623 = vmatpush.bf16.msra.mxu0 %v1274
        %1624 = vmatpush.bf16.msra.mxu0 %v1273
        %1625 = vmatpush.bf16.msra.mxu0 %v1272
        %1626 = vmatpush.bf16.msra.mxu0 %v1271
        %1627 = vmatmul.bf16.gmra.mxu0 %v305
        %v1628 = vpop.f32.mrf.mxu0
        %v1629 = vadd.f32 %v1616, %v1628
        %v1630 = vpop.f32.mrf.mxu0
        %1631 = vdwg.mxu0
        %1632 = vmatpush.bf16.msra.mxu0 %v1286
        %1633 = vmatpush.bf16.msra.mxu0 %v1285
        %1634 = vmatpush.bf16.msra.mxu0 %v1284
        %1635 = vmatpush.bf16.msra.mxu0 %v1283
        %1636 = vmatpush.bf16.msra.mxu0 %v1282
        %1637 = vmatpush.bf16.msra.mxu0 %v1281
        %1638 = vmatpush.bf16.msra.mxu0 %v1280
        %1639 = vmatpush.bf16.msra.mxu0 %v1279
        %1640 = vmatmul.bf16.gmra.mxu0 %v306
        %v1641 = vpop.f32.mrf.mxu0
        %v1642 = vadd.f32 %v1629, %v1641
        %v1643 = vpop.f32.mrf.mxu0
        %1644 = vdwg.mxu0
        %1645 = vmatpush.bf16.msra.mxu0 %v1294
        %1646 = vmatpush.bf16.msra.mxu0 %v1293
        %1647 = vmatpush.bf16.msra.mxu0 %v1292
        %1648 = vmatpush.bf16.msra.mxu0 %v1291
        %1649 = vmatpush.bf16.msra.mxu0 %v1290
        %1650 = vmatpush.bf16.msra.mxu0 %v1289
        %1651 = vmatpush.bf16.msra.mxu0 %v1288
        %1652 = vmatpush.bf16.msra.mxu0 %v1287
        %1653 = vmatmul.bf16.gmra.mxu0 %v307
        %v1654 = vpop.f32.mrf.mxu0
        %v1655 = vadd.f32 %v1642, %v1654
        %v1656 = vpop.f32.mrf.mxu0
        %1657 = vdwg.mxu0
        %1658 = vmatpush.bf16.msra.mxu0 %v1302
        %1659 = vmatpush.bf16.msra.mxu0 %v1301
        %1660 = vmatpush.bf16.msra.mxu0 %v1300
        %1661 = vmatpush.bf16.msra.mxu0 %v1299
        %1662 = vmatpush.bf16.msra.mxu0 %v1298
        %1663 = vmatpush.bf16.msra.mxu0 %v1297
        %1664 = vmatpush.bf16.msra.mxu0 %v1296
        %1665 = vmatpush.bf16.msra.mxu0 %v1295
        %1666 = vmatmul.bf16.gmra.mxu0 %v308
        %v1667 = vpop.f32.mrf.mxu0
        %v1668 = vadd.f32 %v1655, %v1667
        %v1669 = vpop.f32.mrf.mxu0
        %1670 = vdwg.mxu0
        %1671 = vmatpush.bf16.msra.mxu0 %v1310
        %1672 = vmatpush.bf16.msra.mxu0 %v1309
        %1673 = vmatpush.bf16.msra.mxu0 %v1308
        %1674 = vmatpush.bf16.msra.mxu0 %v1307
        %1675 = vmatpush.bf16.msra.mxu0 %v1306
        %1676 = vmatpush.bf16.msra.mxu0 %v1305
        %1677 = vmatpush.bf16.msra.mxu0 %v1304
        %1678 = vmatpush.bf16.msra.mxu0 %v1303
        %1679 = vmatmul.bf16.gmra.mxu0 %v309
        %v1680 = vpop.f32.mrf.mxu0
        %v1681 = vadd.f32 %v1668, %v1680
        %v1682 = vpop.f32.mrf.mxu0
        %1683 = vdwg.mxu0
        %1684 = vmatpush.bf16.msra.mxu0 %v1318
        %1685 = vmatpush.bf16.msra.mxu0 %v1317
        %1686 = vmatpush.bf16.msra.mxu0 %v1316
        %1687 = vmatpush.bf16.msra.mxu0 %v1315
        %1688 = vmatpush.bf16.msra.mxu0 %v1314
        %1689 = vmatpush.bf16.msra.mxu0 %v1313
        %1690 = vmatpush.bf16.msra.mxu0 %v1312
        %1691 = vmatpush.bf16.msra.mxu0 %v1311
        %1692 = vmatmul.bf16.gmra.mxu0 %v310
        %v1693 = vpop.f32.mrf.mxu0
        %v1694 = vadd.f32 %v1681, %v1693
        %v1695 = vpop.f32.mrf.mxu0
        %1696 = vdwg.mxu0
        %v1697 = vadd.f32 %v240, %v1694
        %1698 = vst [vmem:[#allocation2] sm:$0x3] %v1697
        %p1699 = scmp.eq.s32.totalorder %s17, 3
        // Predicated region
        $region45: #{net_forward.3} parent=39 // pred_check
          %p1700 = pneg %p1699
        $region46: #{net_forward.3} parent=39 // pred_check_branch
          %1702 = sbr.rel (%p1700) target = $region48
        $region47: #{net_forward.3} parent=39 // pred_region
          %v1703 = vld [vmem:[#allocation2] sm:$0x3]
          %v1704 = vld [vmem:[%s2] sm:$0x1]
          %v1706 = vperm.slane %v1704, 0
          %v1708 = vadd.f32 %v1703, %v1706
          %v1709 = vmax.f32 %v1708, 0.0
          %v1710 = vld [vmem:[%s3] sm:$0xff]
          %v1711 = vld [vmem:[%s3 + $0x8] sm:$0xff]
          %v1712 = vld [vmem:[%s3 + $0x10] sm:$0xff]
          %v1713 = vld [vmem:[%s3 + $0x18] sm:$0xff]
          %v1714 = vld [vmem:[%s3 + $0x20] sm:$0xff]
          %v1715 = vld [vmem:[%s3 + $0x28] sm:$0xff]
          %v1716 = vld [vmem:[%s3 + $0x30] sm:$0xff]
          %v1717 = vld [vmem:[%s3 + $0x38] sm:$0xff]
          %v1718 = vld [vmem:[%s3 + $0x40] sm:$0xff]
          %v1719 = vld [vmem:[%s3 + $0x48] sm:$0xff]
          %v1720 = vld [vmem:[%s3 + $0x50] sm:$0xff]
          %v1721 = vld [vmem:[%s3 + $0x58] sm:$0xff]
          %v1722 = vld [vmem:[%s3 + $0x60] sm:$0xff]
          %v1723 = vld [vmem:[%s3 + $0x68] sm:$0xff]
          %v1724 = vld [vmem:[%s3 + $0x70] sm:$0xff]
          %v1725 = vld [vmem:[%s3 + $0x78] sm:$0xff]
          %v1726 = vld [vmem:[%s4] sm:$0x1]
          %v1728 = vperm.slane %v1726, 0
          %1730 = vmatpush.msra.mxu0 %v1725
          %1731 = vmatpush.msra.mxu0 %v1724
          %1732 = vmatpush.msra.mxu0 %v1723
          %1733 = vmatpush.msra.mxu0 %v1722
          %1734 = vmatpush.msra.mxu0 %v1721
          %1735 = vmatpush.msra.mxu0 %v1720
          %1736 = vmatpush.msra.mxu0 %v1719
          %1737 = vmatpush.msra.mxu0 %v1718
          %1738 = vmatpush.msra.mxu0 %v1717
          %1739 = vmatpush.msra.mxu0 %v1716
          %1740 = vmatpush.msra.mxu0 %v1715
          %1741 = vmatpush.msra.mxu0 %v1714
          %1742 = vmatpush.msra.mxu0 %v1713
          %1743 = vmatpush.msra.mxu0 %v1712
          %1744 = vmatpush.msra.mxu0 %v1711
          %1745 = vmatpush.msra.mxu0 %v1710
          %1746 = vmatmul.f32.gmra.mxu0 %v1709
          %v1747 = vpop.f32.mrf.mxu0
          %v1748 = vadd.f32 %v1728, %v1747
          %1749 = vdwg.mxu0
          %vm1750 = vcmask 9216
          %v1751 = vsel %vm1750, %v1748, -inf
          %1752 = vmax.xlane.f32.xlu0 %v1751
          %v1753 = vpop.xlane.xlu0 %1752
          %v1754 = vsub.f32 %v1748, %v1753
          %v1755 = vmul.f32 %v1754, 1.442695
          %v1756 = vpow.pop %v1755
          %v1757 = vsel %vm1750, %v1756, 0.0
          %1758 = vadd.xlane.f32.xlu0 %v1757
          %v1759 = vpop.xlane.xlu0 %1758
          %v1760 = vlog2.pop %v1759
          %v1761 = vmul.f32 %v1760, 0.6931472
          %v1762 = vadd.f32 %v1753, %v1761
          %v1763 = vsub.f32 %v1748, %v1762
          %1764 = vst.msk [vmem:[#allocation3] sm:$0x3] %vm1750, %v1763
        $region48: #{net_forward.3} parent=39 // pred_fallthru
          _
        // Predicated region
        $region49: #{net_forward.3} parent=39 // pred_check
          %p1765 = pneg %p145
        $region50: #{net_forward.3} parent=39 // pred_check_branch
          %1767 = sbr.rel (%p1765) target = $region52
        $region51: #{net_forward.3} parent=39 // pred_region
          %1769 = vsyncadd [#allocation4], 0
          %s1771 = sshll.u32 [#allocation3], 4
          %s1772 = int_to_ptr.vmem [resolvable:$true] %s1771
          %s1773 = sshll.u32 %s5, 4
          %s1774 = int_to_ptr.hbm [resolvable:$true] %s1773
          %1776 = dma.vmem_to_hbm [thread:$0]  %s1772, 32, %s1774, [#allocation4]
        $region52: #{net_forward.3} parent=39 // pred_fallthru
          _
        // Predicated region
        $region53: #{net_forward.3} parent=39 // pred_check
          %p1777 = pneg %p145
        $region54: #{net_forward.3} parent=39 // pred_check_branch
          %1779 = sbr.rel (%p1777) target = $region56
        $region55: #{net_forward.3} parent=39 // pred_region
          %1781 = dma.done [#allocation4], 32
        $region56: #{net_forward.3} parent=39 // pred_fallthru
          _
      $region40: #{net_forward.3} parent=5 // pred_fallthru
        _
      %p1782 = scmp.le.s32.totalorder 2, %s12
      // Predicated region
      $region57: #{net_forward.3} parent=5 // pred_check
        %p1783 = pneg %p1782
      $region58: #{net_forward.3} parent=5 // pred_check_branch
        %1785 = sbr.rel (%p1783) target = $region60
      $region59: #{net_forward.3} parent=5 // pred_region
        %s1786 = ssub.s32 %s12, 2
      $region60: #{net_forward.3} parent=5 // pred_fallthru
        _
    $region6: #{net_forward.3} parent=1 // loop_footer
      %s16 = sadd.s32 1, %s12
    $region7: #{net_forward.3} parent=1 // loop_footer_branch
      %11 = sbr.rel target = $region3
    $region8: #{net_forward.3} parent=1 // loop_exit
      _
    %1787 = vsyncpa [#allocation4], 1
    %s1788 = scalar_lea.sflag [#allocation4], 1
    %1789 = vsyncpa %s1788, 1

// kernel: net_forward.2
$region0: #{net_forward.2}
  #allocation0 [shape = 'u32[]', space=smem, size = 0x4, offset = 0x4, fixed_abs, tag = 'smem constant byte address 0x4 - core index']
  #allocation1 [shape = 'u32[72,128]{1,0:T(1,128)}', space=vmem, size = 0x9000, scoped, tag = 'internal scratch']
  #allocation2 [shape = 'f32[676,32]{1,0:T(8,128)}', space=vmem, size = 0x55000, scoped, tag = 'scratch operand']
  #allocation3 [shape = 'f32[624,64]{1,0:T(8,128)}', space=vmem, size = 0x4e000, scoped, tag = 'scratch operand']
  %s0 = inlined_call_operand.vmem [shape: f32[2,676,9], index: 0, kind: input, shape index: {}]
  %s1 = inlined_call_operand.hbm [shape: f32[9,32], index: 1, kind: input, shape index: {}]
  %s2 = inlined_call_operand.hbm [shape: f32[1,32], index: 2, kind: input, shape index: {}]
  %s3 = inlined_call_operand.hbm [shape: f32[9,32,64], index: 3, kind: input, shape index: {}]
  %s4 = inlined_call_operand.hbm [shape: f32[1,64], index: 4, kind: input, shape index: {}]
  %s5 = inlined_call_operand.vmem [shape: f32[2,144,64], index: 5, kind: output, shape index: {}]
  %s6 = sld [smem:[#allocation0]]
  $region69: #{net_forward.2} parent=0
    _
  %s8 = ssub.s32 1, %s6
  %s9 = scalar_select 0, %s8, %s6
  $region1: #{net_forward.2} parent=0
    #allocation4 [shape = 'u8[8192]{0}', space=vmem, size = 0x2000, scoped, tag = 'input window, operand 1, single buffered']
    #allocation5 [shape = 's32[2]{0}', space=sflag, size = 0x8, scoped, tag = 'scoped memory for net_forward.2']
    #allocation6 [shape = 'u8[512]{0}', space=vmem, size = 0x400, scoped, tag = 'input window, operand 2, single buffered']
    #allocation7 [shape = 's32[1]{0}', space=sflag, size = 0x4, scoped, tag = 'scoped memory for net_forward.2']
    #allocation8 [shape = 'u8[147456]{0}', space=vmem, size = 0x24000, scoped, tag = 'input window, operand 3, single buffered']
    #allocation9 [shape = 'u8[512]{0}', space=vmem, size = 0x400, scoped, tag = 'input window, operand 4, single buffered']
    #allocation10 [shape = 's32[1]{0}', space=sflag, size = 0x4, scoped, tag = 'scoped memory for net_forward.2']
    %10 = vsyncpa [#allocation5], 0
    %11 = vsyncpa [#allocation7], 0
    %12 = vsyncpa [#allocation10], 0
    loop: start=0, step=1, limit=4
    $region2: #{net_forward.2} parent=1 // loop_pre_header
      _
    $region3: #{net_forward.2} parent=1 // loop_header
      %s14 = sphi 0, %s18
      %p15 = scmp.ge.s32.totalorder %s14, 4
      %s24 = sphi 0, %s26
      %s27 = sphi 0, %s24
      %s28 = sphi 0, %s27
      %s44 = sphi 0, %s28
      %s48 = sphi 0, %s48
      %s50 = sphi 0, %s48
      %s51 = sphi 0, %s50
      %s65 = sphi 0, %s51
      %s69 = sphi 0, %s69
      %s71 = sphi 0, %s69
      %s72 = sphi 0, %s71
      %s86 = sphi 0, %s72
      %s90 = sphi 0, %s90
      %s92 = sphi 0, %s90
      %s93 = sphi 0, %s92
      %s107 = sphi 0, %s93
      %s111 = sphi 0, %s111
      %s113 = sphi 0, %s111
      %s114 = sphi 0, %s113
      %s128 = sphi 0, %s114
      %s134 = sphi 0, %s136
      %s137 = sphi 0, %s134
      %s138 = sphi 0, %s137
      %s154 = sphi 0, %s138
    $region4: #{net_forward.2} parent=1 // loop_header_branch
      %17 = sbr.rel (%p15) target = $region8
    $region5: #{net_forward.2} parent=1 // loop_body
      %s19 = ssub.s32 %s14, 1
      %s20 = ssub.s32 %s14, 2
      %s21 = sadd.s32 %s14, 1
      %s22 = ssub.s32 %s14, %s21
      %p23 = scmp.eq.s32.totalorder %s22, 0
      %s25 = sadd.s32 %s24, 1
      %s26 = scalar_select %p23, %s24, %s25
      %p29 = pneg %p23
      %p30 = scmp.eq.s32.totalorder %s14, 1
      %p31 = por %p29, %p30
      %p32 = scmp.ne.s32.totalorder %s24, %s27
      %p33 = scmp.eq.s32.totalorder %s14, 0
      %p34 = por %p32, %p33
      %p35 = scmp.ne.s32.totalorder %s24, %s27
      %p36 = scmp.eq.s32.totalorder %s19, 1
      %p37 = por %p35, %p36
      %p38 = scmp.ne.s32.totalorder %s27, %s28
      %p39 = scmp.eq.s32.totalorder %s19, 0
      %p40 = por %p38, %p39
      %p41 = scmp.ne.s32.totalorder %s27, %s28
      %p42 = scmp.eq.s32.totalorder %s20, 1
      %p43 = por %p41, %p42
      %p45 = scmp.ne.s32.totalorder %s28, %s44
      %p46 = scmp.eq.s32.totalorder %s20, 0
      %p47 = por %p45, %p46
      %s49 = sadd.s32 %s48, 1
      %p52 = scmp.eq.s32.totalorder %s14, 1
      %p53 = scmp.ne.s32.totalorder %s48, %s50
      %p54 = scmp.eq.s32.totalorder %s14, 0
      %p55 = por %p53, %p54
      %p56 = scmp.ne.s32.totalorder %s48, %s50
      %p57 = scmp.eq.s32.totalorder %s19, 1
      %p58 = por %p56, %p57
      %p59 = scmp.ne.s32.totalorder %s50, %s51
      %p60 = scmp.eq.s32.totalorder %s19, 0
      %p61 = por %p59, %p60
      %p62 = scmp.ne.s32.totalorder %s50, %s51
      %p63 = scmp.eq.s32.totalorder %s20, 1
      %p64 = por %p62, %p63
      %p66 = scmp.ne.s32.totalorder %s51, %s65
      %p67 = scmp.eq.s32.totalorder %s20, 0
      %p68 = por %p66, %p67
      %s70 = sadd.s32 %s69, 1
      %p73 = scmp.eq.s32.totalorder %s14, 1
      %p74 = scmp.ne.s32.totalorder %s69, %s71
      %p75 = scmp.eq.s32.totalorder %s14, 0
      %p76 = por %p74, %p75
      %p77 = scmp.ne.s32.totalorder %s69, %s71
      %p78 = scmp.eq.s32.totalorder %s19, 1
      %p79 = por %p77, %p78
      %p80 = scmp.ne.s32.totalorder %s71, %s72
      %p81 = scmp.eq.s32.totalorder %s19, 0
      %p82 = por %p80, %p81
      %p83 = scmp.ne.s32.totalorder %s71, %s72
      %p84 = scmp.eq.s32.totalorder %s20, 1
      %p85 = por %p83, %p84
      %p87 = scmp.ne.s32.totalorder %s72, %s86
      %p88 = scmp.eq.s32.totalorder %s20, 0
      %p89 = por %p87, %p88
      %s91 = sadd.s32 %s90, 1
      %p94 = scmp.eq.s32.totalorder %s14, 1
      %p95 = scmp.ne.s32.totalorder %s90, %s92
      %p96 = scmp.eq.s32.totalorder %s14, 0
      %p97 = por %p95, %p96
      %p98 = scmp.ne.s32.totalorder %s90, %s92
      %p99 = scmp.eq.s32.totalorder %s19, 1
      %p100 = por %p98, %p99
      %p101 = scmp.ne.s32.totalorder %s92, %s93
      %p102 = scmp.eq.s32.totalorder %s19, 0
      %p103 = por %p101, %p102
      %p104 = scmp.ne.s32.totalorder %s92, %s93
      %p105 = scmp.eq.s32.totalorder %s20, 1
      %p106 = por %p104, %p105
      %p108 = scmp.ne.s32.totalorder %s93, %s107
      %p109 = scmp.eq.s32.totalorder %s20, 0
      %p110 = por %p108, %p109
      %s112 = sadd.s32 %s111, 1
      %p115 = scmp.eq.s32.totalorder %s14, 1
      %p116 = scmp.ne.s32.totalorder %s111, %s113
      %p117 = scmp.eq.s32.totalorder %s14, 0
      %p118 = por %p116, %p117
      %p119 = scmp.ne.s32.totalorder %s111, %s113
      %p120 = scmp.eq.s32.totalorder %s19, 1
      %p121 = por %p119, %p120
      %p122 = scmp.ne.s32.totalorder %s113, %s114
      %p123 = scmp.eq.s32.totalorder %s19, 0
      %p124 = por %p122, %p123
      %p125 = scmp.ne.s32.totalorder %s113, %s114
      %p126 = scmp.eq.s32.totalorder %s20, 1
      %p127 = por %p125, %p126
      %p129 = scmp.ne.s32.totalorder %s114, %s128
      %p130 = scmp.eq.s32.totalorder %s20, 0
      %p131 = por %p129, %p130
      %s132 = ssub.s32 %s14, %s21
      %p133 = scmp.eq.s32.totalorder %s132, 0
      %s135 = sadd.s32 %s134, 1
      %s136 = scalar_select %p133, %s134, %s135
      %p139 = pneg %p133
      %p140 = scmp.eq.s32.totalorder %s14, 1
      %p141 = por %p139, %p140
      %p142 = scmp.ne.s32.totalorder %s134, %s137
      %p143 = scmp.eq.s32.totalorder %s14, 0
      %p144 = por %p142, %p143
      %p145 = scmp.ne.s32.totalorder %s134, %s137
      %p146 = scmp.eq.s32.totalorder %s19, 1
      %p147 = por %p145, %p146
      %p148 = scmp.ne.s32.totalorder %s137, %s138
      %p149 = scmp.eq.s32.totalorder %s19, 0
      %p150 = por %p148, %p149
      %p151 = scmp.ne.s32.totalorder %s137, %s138
      %p152 = scmp.eq.s32.totalorder %s20, 1
      %p153 = por %p151, %p152
      %p155 = scmp.ne.s32.totalorder %s138, %s154
      %p156 = scmp.eq.s32.totalorder %s20, 0
      %p157 = por %p155, %p156
      %p158 = scmp.le.s32.totalorder 1, %s14
      %p159 = scmp.lt.s32.totalorder %s14, 3
      %p160 = pnand %p158, %p159
      %p161 = pneg %p160
      // Predicated region
      $region9: #{net_forward.2} parent=5 // pred_check
        _
      $region10: #{net_forward.2} parent=5 // pred_check_branch
        %163 = sbr.rel (%p160) target = $region12
      $region11: #{net_forward.2} parent=5 // pred_region
        %s164 = ssub.s32 %s14, 1
        // Predicated region
        $region13: #{net_forward.2} parent=11 // pred_check
          %p165 = pneg %p61
        $region14: #{net_forward.2} parent=11 // pred_check_branch
          %167 = sbr.rel (%p165) target = $region16
        $region15: #{net_forward.2} parent=11 // pred_region
          %169 = vsyncadd [#allocation5], 0
          %s170 = sshll.u32 %s1, 4
          %s171 = int_to_ptr.hbm [resolvable:$true] %s170
          %s172 = sshll.u32 [#allocation4], 4
          %s173 = int_to_ptr.vmem [resolvable:$true] %s172
          %178 = dma.hbm_to_vmem [thread:$0]  %s171, 256, %s173, [#allocation5], 128, 128, 8
        $region16: #{net_forward.2} parent=11 // pred_fallthru
          _
        // Predicated region
        $region17: #{net_forward.2} parent=11 // pred_check
          %p179 = pneg %p82
        $region18: #{net_forward.2} parent=11 // pred_check_branch
          %181 = sbr.rel (%p179) target = $region20
        $region19: #{net_forward.2} parent=11 // pred_region
          %183 = vsyncadd [#allocation7], 0
          %s185 = sshll.u32 %s2, 4
          %s186 = int_to_ptr.hbm [resolvable:$true] %s185
          %s187 = sshll.u32 [#allocation6], 4
          %s188 = int_to_ptr.vmem [resolvable:$true] %s187
          %190 = dma.hbm_to_vmem [thread:$0]  %s186, 16, %s188, [#allocation7]
        $region20: #{net_forward.2} parent=11 // pred_fallthru
          _
        // Predicated region
        $region21: #{net_forward.2} parent=11 // pred_check
          %p191 = pneg %p103
        $region22: #{net_forward.2} parent=11 // pred_check_branch
          %193 = sbr.rel (%p191) target = $region24
        $region23: #{net_forward.2} parent=11 // pred_region
          %195 = vsyncadd [#allocation7], 0
          %s196 = sshll.u32 %s3, 4
          %s197 = int_to_ptr.hbm [resolvable:$true] %s196
          %s198 = sshll.u32 [#allocation8], 4
          %s199 = int_to_ptr.vmem [resolvable:$true] %s198
          %204 = dma.hbm_to_vmem [thread:$0]  %s197, 4608, %s199, [#allocation7], 128, 128, 8
        $region24: #{net_forward.2} parent=11 // pred_fallthru
          _
        // Predicated region
        $region25: #{net_forward.2} parent=11 // pred_check
          %p205 = pneg %p124
        $region26: #{net_forward.2} parent=11 // pred_check_branch
          %207 = sbr.rel (%p205) target = $region28
        $region27: #{net_forward.2} parent=11 // pred_region
          %209 = vsyncadd [#allocation10], 0
          %s211 = sshll.u32 %s4, 4
          %s212 = int_to_ptr.hbm [resolvable:$true] %s211
          %s213 = sshll.u32 [#allocation9], 4
          %s214 = int_to_ptr.vmem [resolvable:$true] %s213
          %216 = dma.hbm_to_vmem [thread:$0]  %s212, 16, %s214, [#allocation10]
        $region28: #{net_forward.2} parent=11 // pred_fallthru
          _
      $region12: #{net_forward.2} parent=5 // pred_fallthru
        _
      %p217 = scmp.lt.s32.totalorder %s14, 2
      // Predicated region
      $region29: #{net_forward.2} parent=5 // pred_check
        %p218 = pneg %p217
      $region30: #{net_forward.2} parent=5 // pred_check_branch
        %220 = sbr.rel (%p218) target = $region32
      $region31: #{net_forward.2} parent=5 // pred_region
        // Predicated region
        $region33: #{net_forward.2} parent=31 // pred_check
          %p221 = pneg %p34
        $region34: #{net_forward.2} parent=31 // pred_check_branch
          %223 = sbr.rel (%p221) target = $region36
        $region35: #{net_forward.2} parent=31 // pred_region
          %p224 = scmp.lt.s32.totalorder %s14, 1
          %s225 = scalar_select %p224, %s14, 1
          %s226 = smul.addr %s225, 85
          %s227 = smul.addr %s226, 8
          %s228 = scalar_lea.vmem %s0, %s227
        $region36: #{net_forward.2} parent=31 // pred_fallthru
          _
      $region32: #{net_forward.2} parent=5 // pred_fallthru
        _
      %p229 = scmp.le.s32.totalorder 1, %s14
      %p230 = scmp.lt.s32.totalorder %s14, 3
      %p231 = pnand %p229, %p230
      %p232 = pneg %p231
      // Predicated region
      $region37: #{net_forward.2} parent=5 // pred_check
        _
      $region38: #{net_forward.2} parent=5 // pred_check_branch
        %234 = sbr.rel (%p231) target = $region40
      $region39: #{net_forward.2} parent=5 // pred_region
        %s235 = ssub.s32 %s14, 1
        // Predicated region
        $region41: #{net_forward.2} parent=39 // pred_check
          %p236 = pneg %p61
        $region42: #{net_forward.2} parent=39 // pred_check_branch
          %238 = sbr.rel (%p236) target = $region44
        $region43: #{net_forward.2} parent=39 // pred_region
          %240 = dma.done [#allocation5], 256
        $region44: #{net_forward.2} parent=39 // pred_fallthru
          _
        // Predicated region
        $region45: #{net_forward.2} parent=39 // pred_check
          %p241 = pneg %p82
        $region46: #{net_forward.2} parent=39 // pred_check_branch
          %243 = sbr.rel (%p241) target = $region48
        $region47: #{net_forward.2} parent=39 // pred_region
          %245 = dma.done [#allocation7], 16
        $region48: #{net_forward.2} parent=39 // pred_fallthru
          _
        // Predicated region
        $region49: #{net_forward.2} parent=39 // pred_check
          %p246 = pneg %p103
        $region50: #{net_forward.2} parent=39 // pred_check_branch
          %248 = sbr.rel (%p246) target = $region52
        $region51: #{net_forward.2} parent=39 // pred_region
          %250 = dma.done [#allocation7], 4608
        $region52: #{net_forward.2} parent=39 // pred_fallthru
          _
        // Predicated region
        $region53: #{net_forward.2} parent=39 // pred_check
          %p251 = pneg %p124
        $region54: #{net_forward.2} parent=39 // pred_check_branch
          %253 = sbr.rel (%p251) target = $region56
        $region55: #{net_forward.2} parent=39 // pred_region
          %255 = dma.done [#allocation10], 16
        $region56: #{net_forward.2} parent=39 // pred_fallthru
          _
        %p256 = scmp.lt.s32.totalorder %s19, 1
        %s257 = scalar_select %p256, %s19, 1
        %s258 = smul.addr %s257, 85
        %s259 = smul.addr %s258, 8
        %s260 = scalar_lea.vmem %s0, %s259
        %p261 = pneg %p40
        %p262 = pneg %p37
        %p263 = pneg %p61
        %p264 = pneg %p58
        %p265 = pneg %p82
        %p266 = pneg %p79
        %p267 = pneg %p103
        %p268 = pneg %p100
        %p269 = pneg %p124
        %p270 = pneg %p121
        %p271 = pneg %p150
        %p272 = pneg %p147
        %p273 = scmp.lt.s32.totalorder %s19, 1
        %s274 = scalar_select %p273, %s19, 1
        %s275 = smul.addr %s274, 18
        %s276 = smul.addr %s275, 8
        %s277 = scalar_lea.vmem %s5, %s276
        %p278 = scmp.lt.s32.totalorder %s19, 1
        %s279 = scalar_select %p278, %s19, 1
        %s280 = smul.addr %s279, 85
        %s281 = smul.addr %s280, 8
        %s282 = scalar_lea.vmem %s0, %s281
        %p283 = scmp.lt.s32.totalorder %s19, 1
        %s284 = scalar_select %p283, %s19, 1
        %s285 = smul.addr %s284, 18
        %s286 = smul.addr %s285, 8
        %s287 = scalar_lea.vmem %s5, %s286
        %v288 = vld [vmem:[%s282] sm:$0xff]
        %v289 = vld [vmem:[%s282 + $0x8] sm:$0xff]
        %v290 = vld [vmem:[%s282 + $0x10] sm:$0xff]
        %v291 = vld [vmem:[%s282 + $0x18] sm:$0xff]
        %v292 = vld [vmem:[%s282 + $0x20] sm:$0xff]
        %v293 = vld [vmem:[%s282 + $0x28] sm:$0xff]
        %v294 = vld [vmem:[%s282 + $0x30] sm:$0xff]
        %v295 = vld [vmem:[%s282 + $0x38] sm:$0xff]
        %v296 = vld [vmem:[%s282 + $0x40] sm:$0xff]
        %v297 = vld [vmem:[%s282 + $0x48] sm:$0xff]
        %v298 = vld [vmem:[%s282 + $0x50] sm:$0xff]
        %v299 = vld [vmem:[%s282 + $0x58] sm:$0xff]
        %v300 = vld [vmem:[%s282 + $0x60] sm:$0xff]
        %v301 = vld [vmem:[%s282 + $0x68] sm:$0xff]
        %v302 = vld [vmem:[%s282 + $0x70] sm:$0xff]
        %v303 = vld [vmem:[%s282 + $0x78] sm:$0xff]
        %v304 = vld [vmem:[%s282 + $0x80] sm:$0xff]
        %v305 = vld [vmem:[%s282 + $0x88] sm:$0xff]
        %v306 = vld [vmem:[%s282 + $0x90] sm:$0xff]
        %v307 = vld [vmem:[%s282 + $0x98] sm:$0xff]
        %v308 = vld [vmem:[%s282 + $0xa0] sm:$0xff]
        %v309 = vld [vmem:[%s282 + $0xa8] sm:$0xff]
        %v310 = vld [vmem:[%s282 + $0xb0] sm:$0xff]
        %v311 = vld [vmem:[%s282 + $0xb8] sm:$0xff]
        %v312 = vld [vmem:[%s282 + $0xc0] sm:$0xff]
        %v313 = vld [vmem:[%s282 + $0xc8] sm:$0xff]
        %v314 = vld [vmem:[%s282 + $0xd0] sm:$0xff]
        %v315 = vld [vmem:[%s282 + $0xd8] sm:$0xff]
        %v316 = vld [vmem:[%s282 + $0xe0] sm:$0xff]
        %v317 = vld [vmem:[%s282 + $0xe8] sm:$0xff]
        %v318 = vld [vmem:[%s282 + $0xf0] sm:$0xff]
        %v319 = vld [vmem:[%s282 + $0xf8] sm:$0xff]
        %v320 = vld [vmem:[%s282 + $0x100] sm:$0xff]
        %v321 = vld [vmem:[%s282 + $0x108] sm:$0xff]
        %v322 = vld [vmem:[%s282 + $0x110] sm:$0xff]
        %v323 = vld [vmem:[%s282 + $0x118] sm:$0xff]
        %v324 = vld [vmem:[%s282 + $0x120] sm:$0xff]
        %v325 = vld [vmem:[%s282 + $0x128] sm:$0xff]
        %v326 = vld [vmem:[%s282 + $0x130] sm:$0xff]
        %v327 = vld [vmem:[%s282 + $0x138] sm:$0xff]
        %v328 = vld [vmem:[%s282 + $0x140] sm:$0xff]
        %v329 = vld [vmem:[%s282 + $0x148] sm:$0xff]
        %v330 = vld [vmem:[%s282 + $0x150] sm:$0xff]
        %v331 = vld [vmem:[%s282 + $0x158] sm:$0xff]
        %v332 = vld [vmem:[%s282 + $0x160] sm:$0xff]
        %v333 = vld [vmem:[%s282 + $0x168] sm:$0xff]
        %v334 = vld [vmem:[%s282 + $0x170] sm:$0xff]
        %v335 = vld [vmem:[%s282 + $0x178] sm:$0xff]
        %v336 = vld [vmem:[%s282 + $0x180] sm:$0xff]
        %v337 = vld [vmem:[%s282 + $0x188] sm:$0xff]
        %v338 = vld [vmem:[%s282 + $0x190] sm:$0xff]
        %v339 = vld [vmem:[%s282 + $0x198] sm:$0xff]
        %v340 = vld [vmem:[%s282 + $0x1a0] sm:$0xff]
        %v341 = vld [vmem:[%s282 + $0x1a8] sm:$0xff]
        %v342 = vld [vmem:[%s282 + $0x1b0] sm:$0xff]
        %v343 = vld [vmem:[%s282 + $0x1b8] sm:$0xff]
        %v344 = vld [vmem:[%s282 + $0x1c0] sm:$0xff]
        %v345 = vld [vmem:[%s282 + $0x1c8] sm:$0xff]
        %v346 = vld [vmem:[%s282 + $0x1d0] sm:$0xff]
        %v347 = vld [vmem:[%s282 + $0x1d8] sm:$0xff]
        %v348 = vld [vmem:[%s282 + $0x1e0] sm:$0xff]
        %v349 = vld [vmem:[%s282 + $0x1e8] sm:$0xff]
        %v350 = vld [vmem:[%s282 + $0x1f0] sm:$0xff]
        %v351 = vld [vmem:[%s282 + $0x1f8] sm:$0xff]
        %v352 = vld [vmem:[%s282 + $0x200] sm:$0xff]
        %v353 = vld [vmem:[%s282 + $0x208] sm:$0xff]
        %v354 = vld [vmem:[%s282 + $0x210] sm:$0xff]
        %v355 = vld [vmem:[%s282 + $0x218] sm:$0xff]
        %v356 = vld [vmem:[%s282 + $0x220] sm:$0xff]
        %v357 = vld [vmem:[%s282 + $0x228] sm:$0xff]
        %v358 = vld [vmem:[%s282 + $0x230] sm:$0xff]
        %v359 = vld [vmem:[%s282 + $0x238] sm:$0xff]
        %v360 = vld [vmem:[%s282 + $0x240] sm:$0xff]
        %v361 = vld [vmem:[%s282 + $0x248] sm:$0xff]
        %v362 = vld [vmem:[%s282 + $0x250] sm:$0xff]
        %v363 = vld [vmem:[%s282 + $0x258] sm:$0xff]
        %v364 = vld [vmem:[%s282 + $0x260] sm:$0xff]
        %v365 = vld [vmem:[%s282 + $0x268] sm:$0xff]
        %v366 = vld [vmem:[%s282 + $0x270] sm:$0xff]
        %v367 = vld [vmem:[%s282 + $0x278] sm:$0xff]
        %v368 = vld [vmem:[%s282 + $0x280] sm:$0xff]
        %v369 = vld [vmem:[%s282 + $0x288] sm:$0xff]
        %v370 = vld [vmem:[%s282 + $0x290] sm:$0xff]
        %v371 = vld [vmem:[%s282 + $0x298] sm:$0xff]
        %v372 = vld [vmem:[%s282 + $0x2a0] sm:$0xf]
        %v373 = vld [vmem:[#allocation4] sm:$0xff]
        %v374 = vld [vmem:[#allocation4 + $0x8] sm:$0x1]
        %v375 = vld [vmem:[#allocation6] sm:$0x1]
        %v377 = vperm.slane %v375, 0
        %vm379 = vcmask 72704
        %v381 = vsel %vm379, %v288, 0
        %v384 = vsel %vm379, %v289, 0
        %v387 = vsel %vm379, %v290, 0
        %v390 = vsel %vm379, %v291, 0
        %v393 = vsel %vm379, %v292, 0
        %v396 = vsel %vm379, %v293, 0
        %v399 = vsel %vm379, %v294, 0
        %v402 = vsel %vm379, %v295, 0
        %v405 = vsel %vm379, %v296, 0
        %v408 = vsel %vm379, %v297, 0
        %v411 = vsel %vm379, %v298, 0
        %v414 = vsel %vm379, %v299, 0
        %v417 = vsel %vm379, %v300, 0
        %v420 = vsel %vm379, %v301, 0
        %v423 = vsel %vm379, %v302, 0
        %v426 = vsel %vm379, %v303, 0
        %v429 = vsel %vm379, %v304, 0
        %v432 = vsel %vm379, %v305, 0
        %v435 = vsel %vm379, %v306, 0
        %v438 = vsel %vm379, %v307, 0
        %v441 = vsel %vm379, %v308, 0
        %v444 = vsel %vm379, %v309, 0
        %v447 = vsel %vm379, %v310, 0
        %v450 = vsel %vm379, %v311, 0
        %v453 = vsel %vm379, %v312, 0
        %v456 = vsel %vm379, %v313, 0
        %v459 = vsel %vm379, %v314, 0
        %v462 = vsel %vm379, %v315, 0
        %v465 = vsel %vm379, %v316, 0
        %v468 = vsel %vm379, %v317, 0
        %v471 = vsel %vm379, %v318, 0
        %v474 = vsel %vm379, %v319, 0
        %v477 = vsel %vm379, %v320, 0
        %v480 = vsel %vm379, %v321, 0
        %v483 = vsel %vm379, %v322, 0
        %v486 = vsel %vm379, %v323, 0
        %v489 = vsel %vm379, %v324, 0
        %v492 = vsel %vm379, %v325, 0
        %v495 = vsel %vm379, %v326, 0
        %v498 = vsel %vm379, %v327, 0
        %v501 = vsel %vm379, %v328, 0
        %v504 = vsel %vm379, %v329, 0
        %v507 = vsel %vm379, %v330, 0
        %v510 = vsel %vm379, %v331, 0
        %v513 = vsel %vm379, %v332, 0
        %v516 = vsel %vm379, %v333, 0
        %v519 = vsel %vm379, %v334, 0
        %v522 = vsel %vm379, %v335, 0
        %v525 = vsel %vm379, %v336, 0
        %v528 = vsel %vm379, %v337, 0
        %v531 = vsel %vm379, %v338, 0
        %v534 = vsel %vm379, %v339, 0
        %v537 = vsel %vm379, %v340, 0
        %v540 = vsel %vm379, %v341, 0
        %v543 = vsel %vm379, %v342, 0
        %v546 = vsel %vm379, %v343, 0
        %v549 = vsel %vm379, %v344, 0
        %v552 = vsel %vm379, %v345, 0
        %v555 = vsel %vm379, %v346, 0
        %v558 = vsel %vm379, %v347, 0
        %v561 = vsel %vm379, %v348, 0
        %v564 = vsel %vm379, %v349, 0
        %v567 = vsel %vm379, %v350, 0
        %v570 = vsel %vm379, %v351, 0
        %v573 = vsel %vm379, %v352, 0
        %v576 = vsel %vm379, %v353, 0
        %v579 = vsel %vm379, %v354, 0
        %v582 = vsel %vm379, %v355, 0
        %v585 = vsel %vm379, %v356, 0
        %v588 = vsel %vm379, %v357, 0
        %v591 = vsel %vm379, %v358, 0
        %v594 = vsel %vm379, %v359, 0
        %v597 = vsel %vm379, %v360, 0
        %v600 = vsel %vm379, %v361, 0
        %v603 = vsel %vm379, %v362, 0
        %v606 = vsel %vm379, %v363, 0
        %v609 = vsel %vm379, %v364, 0
        %v612 = vsel %vm379, %v365, 0
        %v615 = vsel %vm379, %v366, 0
        %v618 = vsel %vm379, %v367, 0
        %v621 = vsel %vm379, %v368, 0
        %v624 = vsel %vm379, %v369, 0
        %v627 = vsel %vm379, %v370, 0
        %v630 = vsel %vm379, %v371, 0
        %v633 = vsel %vm379, %v372, 0
        %vm635 = vcmask 1040384
        %v637 = vsel %vm635, %v374, 0
        %639 = vmatpush.msra.mxu0 0.0
        %640 = vmatpush.msra.mxu0 0.0
        %641 = vmatpush.msra.mxu0 0.0
        %642 = vmatpush.msra.mxu0 0.0
        %643 = vmatpush.msra.mxu0 0.0
        %644 = vmatpush.msra.mxu0 0.0
        %645 = vmatpush.msra.mxu0 0.0
        %646 = vmatpush.msra.mxu0 0.0
        %647 = vmatpush.msra.mxu0 0.0
        %648 = vmatpush.msra.mxu0 0.0
        %649 = vmatpush.msra.mxu0 0.0
        %650 = vmatpush.msra.mxu0 0.0
        %651 = vmatpush.msra.mxu0 0.0
        %652 = vmatpush.msra.mxu0 0.0
        %653 = vmatpush.msra.mxu0 %v637
        %654 = vmatpush.msra.mxu0 %v373
        %655 = vmatmul.f32.gmra.mxu0 %v381
        %v656 = vpop.f32.mrf.mxu0
        %v657 = vadd.f32 %v377, %v656
        %658 = vmatmul.f32.gmra.mxu0 %v384
        %v659 = vpop.f32.mrf.mxu0
        %v660 = vadd.f32 %v377, %v659
        %661 = vmatmul.f32.gmra.mxu0 %v387
        %v662 = vpop.f32.mrf.mxu0
        %v663 = vadd.f32 %v377, %v662
        %664 = vmatmul.f32.gmra.mxu0 %v390
        %v665 = vpop.f32.mrf.mxu0
        %v666 = vadd.f32 %v377, %v665
        %667 = vmatmul.f32.gmra.mxu0 %v393
        %v668 = vpop.f32.mrf.mxu0
        %v669 = vadd.f32 %v377, %v668
        %670 = vmatmul.f32.gmra.mxu0 %v396
        %v671 = vpop.f32.mrf.mxu0
        %v672 = vadd.f32 %v377, %v671
        %673 = vmatmul.f32.gmra.mxu0 %v399
        %v674 = vpop.f32.mrf.mxu0
        %v675 = vadd.f32 %v377, %v674
        %676 = vmatmul.f32.gmra.mxu0 %v402
        %v677 = vpop.f32.mrf.mxu0
        %v678 = vadd.f32 %v377, %v677
        %679 = vmatmul.f32.gmra.mxu0 %v405
        %v680 = vpop.f32.mrf.mxu0
        %v681 = vadd.f32 %v377, %v680
        %682 = vmatmul.f32.gmra.mxu0 %v408
        %v683 = vpop.f32.mrf.mxu0
        %v684 = vadd.f32 %v377, %v683
        %685 = vmatmul.f32.gmra.mxu0 %v411
        %v686 = vpop.f32.mrf.mxu0
        %v687 = vadd.f32 %v377, %v686
        %688 = vmatmul.f32.gmra.mxu0 %v414
        %v689 = vpop.f32.mrf.mxu0
        %v690 = vadd.f32 %v377, %v689
        %691 = vmatmul.f32.gmra.mxu0 %v417
        %v692 = vpop.f32.mrf.mxu0
        %v693 = vadd.f32 %v377, %v692
        %694 = vmatmul.f32.gmra.mxu0 %v420
        %v695 = vpop.f32.mrf.mxu0
        %v696 = vadd.f32 %v377, %v695
        %697 = vmatmul.f32.gmra.mxu0 %v423
        %v698 = vpop.f32.mrf.mxu0
        %v699 = vadd.f32 %v377, %v698
        %700 = vmatmul.f32.gmra.mxu0 %v426
        %v701 = vpop.f32.mrf.mxu0
        %v702 = vadd.f32 %v377, %v701
        %703 = vmatmul.f32.gmra.mxu0 %v429
        %v704 = vpop.f32.mrf.mxu0
        %v705 = vadd.f32 %v377, %v704
        %706 = vmatmul.f32.gmra.mxu0 %v432
        %v707 = vpop.f32.mrf.mxu0
        %v708 = vadd.f32 %v377, %v707
        %709 = vmatmul.f32.gmra.mxu0 %v435
        %v710 = vpop.f32.mrf.mxu0
        %v711 = vadd.f32 %v377, %v710
        %712 = vmatmul.f32.gmra.mxu0 %v438
        %v713 = vpop.f32.mrf.mxu0
        %v714 = vadd.f32 %v377, %v713
        %715 = vmatmul.f32.gmra.mxu0 %v441
        %v716 = vpop.f32.mrf.mxu0
        %v717 = vadd.f32 %v377, %v716
        %718 = vmatmul.f32.gmra.mxu0 %v444
        %v719 = vpop.f32.mrf.mxu0
        %v720 = vadd.f32 %v377, %v719
        %721 = vmatmul.f32.gmra.mxu0 %v447
        %v722 = vpop.f32.mrf.mxu0
        %v723 = vadd.f32 %v377, %v722
        %724 = vmatmul.f32.gmra.mxu0 %v450
        %v725 = vpop.f32.mrf.mxu0
        %v726 = vadd.f32 %v377, %v725
        %727 = vmatmul.f32.gmra.mxu0 %v453
        %v728 = vpop.f32.mrf.mxu0
        %v729 = vadd.f32 %v377, %v728
        %730 = vmatmul.f32.gmra.mxu0 %v456
        %v731 = vpop.f32.mrf.mxu0
        %v732 = vadd.f32 %v377, %v731
        %733 = vmatmul.f32.gmra.mxu0 %v459
        %v734 = vpop.f32.mrf.mxu0
        %v735 = vadd.f32 %v377, %v734
        %736 = vmatmul.f32.gmra.mxu0 %v462
        %v737 = vpop.f32.mrf.mxu0
        %v738 = vadd.f32 %v377, %v737
        %739 = vmatmul.f32.gmra.mxu0 %v465
        %v740 = vpop.f32.mrf.mxu0
        %v741 = vadd.f32 %v377, %v740
        %742 = vmatmul.f32.gmra.mxu0 %v468
        %v743 = vpop.f32.mrf.mxu0
        %v744 = vadd.f32 %v377, %v743
        %745 = vmatmul.f32.gmra.mxu0 %v471
        %v746 = vpop.f32.mrf.mxu0
        %v747 = vadd.f32 %v377, %v746
        %748 = vmatmul.f32.gmra.mxu0 %v474
        %v749 = vpop.f32.mrf.mxu0
        %v750 = vadd.f32 %v377, %v749
        %751 = vmatmul.f32.gmra.mxu0 %v477
        %v752 = vpop.f32.mrf.mxu0
        %v753 = vadd.f32 %v377, %v752
        %754 = vmatmul.f32.gmra.mxu0 %v480
        %v755 = vpop.f32.mrf.mxu0
        %v756 = vadd.f32 %v377, %v755
        %757 = vmatmul.f32.gmra.mxu0 %v483
        %v758 = vpop.f32.mrf.mxu0
        %v759 = vadd.f32 %v377, %v758
        %760 = vmatmul.f32.gmra.mxu0 %v486
        %v761 = vpop.f32.mrf.mxu0
        %v762 = vadd.f32 %v377, %v761
        %763 = vmatmul.f32.gmra.mxu0 %v489
        %v764 = vpop.f32.mrf.mxu0
        %v765 = vadd.f32 %v377, %v764
        %766 = vmatmul.f32.gmra.mxu0 %v492
        %v767 = vpop.f32.mrf.mxu0
        %v768 = vadd.f32 %v377, %v767
        %769 = vmatmul.f32.gmra.mxu0 %v495
        %v770 = vpop.f32.mrf.mxu0
        %v771 = vadd.f32 %v377, %v770
        %772 = vmatmul.f32.gmra.mxu0 %v498
        %v773 = vpop.f32.mrf.mxu0
        %v774 = vadd.f32 %v377, %v773
        %775 = vmatmul.f32.gmra.mxu0 %v501
        %v776 = vpop.f32.mrf.mxu0
        %v777 = vadd.f32 %v377, %v776
        %778 = vmatmul.f32.gmra.mxu0 %v504
        %v779 = vpop.f32.mrf.mxu0
        %v780 = vadd.f32 %v377, %v779
        %781 = vmatmul.f32.gmra.mxu0 %v507
        %v782 = vpop.f32.mrf.mxu0
        %v783 = vadd.f32 %v377, %v782
        %784 = vmatmul.f32.gmra.mxu0 %v510
        %v785 = vpop.f32.mrf.mxu0
        %v786 = vadd.f32 %v377, %v785
        %787 = vmatmul.f32.gmra.mxu0 %v513
        %v788 = vpop.f32.mrf.mxu0
        %v789 = vadd.f32 %v377, %v788
        %790 = vmatmul.f32.gmra.mxu0 %v516
        %v791 = vpop.f32.mrf.mxu0
        %v792 = vadd.f32 %v377, %v791
        %793 = vmatmul.f32.gmra.mxu0 %v519
        %v794 = vpop.f32.mrf.mxu0
        %v795 = vadd.f32 %v377, %v794
        %796 = vmatmul.f32.gmra.mxu0 %v522
        %v797 = vpop.f32.mrf.mxu0
        %v798 = vadd.f32 %v377, %v797
        %799 = vmatmul.f32.gmra.mxu0 %v525
        %v800 = vpop.f32.mrf.mxu0
        %v801 = vadd.f32 %v377, %v800
        %802 = vmatmul.f32.gmra.mxu0 %v528
        %v803 = vpop.f32.mrf.mxu0
        %v804 = vadd.f32 %v377, %v803
        %805 = vmatmul.f32.gmra.mxu0 %v531
        %v806 = vpop.f32.mrf.mxu0
        %v807 = vadd.f32 %v377, %v806
        %808 = vmatmul.f32.gmra.mxu0 %v534
        %v809 = vpop.f32.mrf.mxu0
        %v810 = vadd.f32 %v377, %v809
        %811 = vmatmul.f32.gmra.mxu0 %v537
        %v812 = vpop.f32.mrf.mxu0
        %v813 = vadd.f32 %v377, %v812
        %814 = vmatmul.f32.gmra.mxu0 %v540
        %v815 = vpop.f32.mrf.mxu0
        %v816 = vadd.f32 %v377, %v815
        %817 = vmatmul.f32.gmra.mxu0 %v543
        %v818 = vpop.f32.mrf.mxu0
        %v819 = vadd.f32 %v377, %v818
        %820 = vmatmul.f32.gmra.mxu0 %v546
        %v821 = vpop.f32.mrf.mxu0
        %v822 = vadd.f32 %v377, %v821
        %823 = vmatmul.f32.gmra.mxu0 %v549
        %v824 = vpop.f32.mrf.mxu0
        %v825 = vadd.f32 %v377, %v824
        %826 = vmatmul.f32.gmra.mxu0 %v552
        %v827 = vpop.f32.mrf.mxu0
        %v828 = vadd.f32 %v377, %v827
        %829 = vmatmul.f32.gmra.mxu0 %v555
        %v830 = vpop.f32.mrf.mxu0
        %v831 = vadd.f32 %v377, %v830
        %832 = vmatmul.f32.gmra.mxu0 %v558
        %v833 = vpop.f32.mrf.mxu0
        %v834 = vadd.f32 %v377, %v833
        %835 = vmatmul.f32.gmra.mxu0 %v561
        %v836 = vpop.f32.mrf.mxu0
        %v837 = vadd.f32 %v377, %v836
        %838 = vmatmul.f32.gmra.mxu0 %v564
        %v839 = vpop.f32.mrf.mxu0
        %v840 = vadd.f32 %v377, %v839
        %841 = vmatmul.f32.gmra.mxu0 %v567
        %v842 = vpop.f32.mrf.mxu0
        %v843 = vadd.f32 %v377, %v842
        %844 = vmatmul.f32.gmra.mxu0 %v570
        %v845 = vpop.f32.mrf.mxu0
        %v846 = vadd.f32 %v377, %v845
        %847 = vmatmul.f32.gmra.mxu0 %v573
        %v848 = vpop.f32.mrf.mxu0
        %v849 = vadd.f32 %v377, %v848
        %850 = vmatmul.f32.gmra.mxu0 %v576
        %v851 = vpop.f32.mrf.mxu0
        %v852 = vadd.f32 %v377, %v851
        %853 = vmatmul.f32.gmra.mxu0 %v579
        %v854 = vpop.f32.mrf.mxu0
        %v855 = vadd.f32 %v377, %v854
        %856 = vmatmul.f32.gmra.mxu0 %v582
        %v857 = vpop.f32.mrf.mxu0
        %v858 = vadd.f32 %v377, %v857
        %859 = vmatmul.f32.gmra.mxu0 %v585
        %v860 = vpop.f32.mrf.mxu0
        %v861 = vadd.f32 %v377, %v860
        %862 = vmatmul.f32.gmra.mxu0 %v588
        %v863 = vpop.f32.mrf.mxu0
        %v864 = vadd.f32 %v377, %v863
        %865 = vmatmul.f32.gmra.mxu0 %v591
        %v866 = vpop.f32.mrf.mxu0
        %v867 = vadd.f32 %v377, %v866
        %868 = vmatmul.f32.gmra.mxu0 %v594
        %v869 = vpop.f32.mrf.mxu0
        %v870 = vadd.f32 %v377, %v869
        %871 = vmatmul.f32.gmra.mxu0 %v597
        %v872 = vpop.f32.mrf.mxu0
        %v873 = vadd.f32 %v377, %v872
        %874 = vmatmul.f32.gmra.mxu0 %v600
        %v875 = vpop.f32.mrf.mxu0
        %v876 = vadd.f32 %v377, %v875
        %877 = vmatmul.f32.gmra.mxu0 %v603
        %v878 = vpop.f32.mrf.mxu0
        %v879 = vadd.f32 %v377, %v878
        %880 = vmatmul.f32.gmra.mxu0 %v606
        %v881 = vpop.f32.mrf.mxu0
        %v882 = vadd.f32 %v377, %v881
        %883 = vmatmul.f32.gmra.mxu0 %v609
        %v884 = vpop.f32.mrf.mxu0
        %v885 = vadd.f32 %v377, %v884
        %886 = vmatmul.f32.gmra.mxu0 %v612
        %v887 = vpop.f32.mrf.mxu0
        %v888 = vadd.f32 %v377, %v887
        %889 = vmatmul.f32.gmra.mxu0 %v615
        %v890 = vpop.f32.mrf.mxu0
        %v891 = vadd.f32 %v377, %v890
        %892 = vmatmul.f32.gmra.mxu0 %v618
        %v893 = vpop.f32.mrf.mxu0
        %v894 = vadd.f32 %v377, %v893
        %895 = vmatmul.f32.gmra.mxu0 %v621
        %v896 = vpop.f32.mrf.mxu0
        %v897 = vadd.f32 %v377, %v896
        %898 = vmatmul.f32.gmra.mxu0 %v624
        %v899 = vpop.f32.mrf.mxu0
        %v900 = vadd.f32 %v377, %v899
        %901 = vmatmul.f32.gmra.mxu0 %v627
        %v902 = vpop.f32.mrf.mxu0
        %v903 = vadd.f32 %v377, %v902
        %904 = vmatmul.f32.gmra.mxu0 %v630
        %v905 = vpop.f32.mrf.mxu0
        %v906 = vadd.f32 %v377, %v905
        %907 = vmatmul.f32.gmra.mxu0 %v633
        %v908 = vpop.f32.mrf.mxu0
        %v909 = vadd.f32 %v377, %v908
        %910 = vdwg.mxu0
        %v911 = vmax.f32 %v657, 0.0
        %v912 = vmax.f32 %v660, 0.0
        %v913 = vmax.f32 %v663, 0.0
        %v914 = vmax.f32 %v666, 0.0
        %v915 = vmax.f32 %v669, 0.0
        %v916 = vmax.f32 %v672, 0.0
        %v917 = vmax.f32 %v675, 0.0
        %v918 = vmax.f32 %v678, 0.0
        %v919 = vmax.f32 %v681, 0.0
        %v920 = vmax.f32 %v684, 0.0
        %v921 = vmax.f32 %v687, 0.0
        %v922 = vmax.f32 %v690, 0.0
        %v923 = vmax.f32 %v693, 0.0
        %v924 = vmax.f32 %v696, 0.0
        %v925 = vmax.f32 %v699, 0.0
        %v926 = vmax.f32 %v702, 0.0
        %v927 = vmax.f32 %v705, 0.0
        %v928 = vmax.f32 %v708, 0.0
        %v929 = vmax.f32 %v711, 0.0
        %v930 = vmax.f32 %v714, 0.0
        %v931 = vmax.f32 %v717, 0.0
        %v932 = vmax.f32 %v720, 0.0
        %v933 = vmax.f32 %v723, 0.0
        %v934 = vmax.f32 %v726, 0.0
        %v935 = vmax.f32 %v729, 0.0
        %v936 = vmax.f32 %v732, 0.0
        %v937 = vmax.f32 %v735, 0.0
        %v938 = vmax.f32 %v738, 0.0
        %v939 = vmax.f32 %v741, 0.0
        %v940 = vmax.f32 %v744, 0.0
        %v941 = vmax.f32 %v747, 0.0
        %v942 = vmax.f32 %v750, 0.0
        %v943 = vmax.f32 %v753, 0.0
        %v944 = vmax.f32 %v756, 0.0
        %v945 = vmax.f32 %v759, 0.0
        %v946 = vmax.f32 %v762, 0.0
        %v947 = vmax.f32 %v765, 0.0
        %v948 = vmax.f32 %v768, 0.0
        %v949 = vmax.f32 %v771, 0.0
        %v950 = vmax.f32 %v774, 0.0
        %v951 = vmax.f32 %v777, 0.0
        %v952 = vmax.f32 %v780, 0.0
        %v953 = vmax.f32 %v783, 0.0
        %v954 = vmax.f32 %v786, 0.0
        %v955 = vmax.f32 %v789, 0.0
        %v956 = vmax.f32 %v792, 0.0
        %v957 = vmax.f32 %v795, 0.0
        %v958 = vmax.f32 %v798, 0.0
        %v959 = vmax.f32 %v801, 0.0
        %v960 = vmax.f32 %v804, 0.0
        %v961 = vmax.f32 %v807, 0.0
        %v962 = vmax.f32 %v810, 0.0
        %v963 = vmax.f32 %v813, 0.0
        %v964 = vmax.f32 %v816, 0.0
        %v965 = vmax.f32 %v819, 0.0
        %v966 = vmax.f32 %v822, 0.0
        %v967 = vmax.f32 %v825, 0.0
        %v968 = vmax.f32 %v828, 0.0
        %v969 = vmax.f32 %v831, 0.0
        %v970 = vmax.f32 %v834, 0.0
        %v971 = vmax.f32 %v837, 0.0
        %v972 = vmax.f32 %v840, 0.0
        %v973 = vmax.f32 %v843, 0.0
        %v974 = vmax.f32 %v846, 0.0
        %v975 = vmax.f32 %v849, 0.0
        %v976 = vmax.f32 %v852, 0.0
        %v977 = vmax.f32 %v855, 0.0
        %v978 = vmax.f32 %v858, 0.0
        %v979 = vmax.f32 %v861, 0.0
        %v980 = vmax.f32 %v864, 0.0
        %v981 = vmax.f32 %v867, 0.0
        %v982 = vmax.f32 %v870, 0.0
        %v983 = vmax.f32 %v873, 0.0
        %v984 = vmax.f32 %v876, 0.0
        %v985 = vmax.f32 %v879, 0.0
        %v986 = vmax.f32 %v882, 0.0
        %v987 = vmax.f32 %v885, 0.0
        %v988 = vmax.f32 %v888, 0.0
        %v989 = vmax.f32 %v891, 0.0
        %v990 = vmax.f32 %v894, 0.0
        %v991 = vmax.f32 %v897, 0.0
        %v992 = vmax.f32 %v900, 0.0
        %v993 = vmax.f32 %v903, 0.0
        %v994 = vmax.f32 %v906, 0.0
        %v995 = vmax.f32 %v909, 0.0
        %vm996 = vcmask 261120
        %997 = vst.msk [vmem:[#allocation2] sm:$0xff] %vm996, %v911
        %998 = vst.msk [vmem:[#allocation2 + $0x8] sm:$0xff] %vm996, %v912
        %999 = vst.msk [vmem:[#allocation2 + $0x10] sm:$0xff] %vm996, %v913
        %1000 = vst.msk [vmem:[#allocation2 + $0x18] sm:$0xff] %vm996, %v914
        %1001 = vst.msk [vmem:[#allocation2 + $0x20] sm:$0xff] %vm996, %v915
        %1002 = vst.msk [vmem:[#allocation2 + $0x28] sm:$0xff] %vm996, %v916
        %1003 = vst.msk [vmem:[#allocation2 + $0x30] sm:$0xff] %vm996, %v917
        %1004 = vst.msk [vmem:[#allocation2 + $0x38] sm:$0xff] %vm996, %v918
        %1005 = vst.msk [vmem:[#allocation2 + $0x40] sm:$0xff] %vm996, %v919
        %1006 = vst.msk [vmem:[#allocation2 + $0x48] sm:$0xff] %vm996, %v920
        %1007 = vst.msk [vmem:[#allocation2 + $0x50] sm:$0xff] %vm996, %v921
        %1008 = vst.msk [vmem:[#allocation2 + $0x58] sm:$0xff] %vm996, %v922
        %1009 = vst.msk [vmem:[#allocation2 + $0x60] sm:$0xff] %vm996, %v923
        %1010 = vst.msk [vmem:[#allocation2 + $0x68] sm:$0xff] %vm996, %v924
        %1011 = vst.msk [vmem:[#allocation2 + $0x70] sm:$0xff] %vm996, %v925
        %1012 = vst.msk [vmem:[#allocation2 + $0x78] sm:$0xff] %vm996, %v926
        %1013 = vst.msk [vmem:[#allocation2 + $0x80] sm:$0xff] %vm996, %v927
        %1014 = vst.msk [vmem:[#allocation2 + $0x88] sm:$0xff] %vm996, %v928
        %1015 = vst.msk [vmem:[#allocation2 + $0x90] sm:$0xff] %vm996, %v929
        %1016 = vst.msk [vmem:[#allocation2 + $0x98] sm:$0xff] %vm996, %v930
        %1017 = vst.msk [vmem:[#allocation2 + $0xa0] sm:$0xff] %vm996, %v931
        %1018 = vst.msk [vmem:[#allocation2 + $0xa8] sm:$0xff] %vm996, %v932
        %1019 = vst.msk [vmem:[#allocation2 + $0xb0] sm:$0xff] %vm996, %v933
        %1020 = vst.msk [vmem:[#allocation2 + $0xb8] sm:$0xff] %vm996, %v934
        %1021 = vst.msk [vmem:[#allocation2 + $0xc0] sm:$0xff] %vm996, %v935
        %1022 = vst.msk [vmem:[#allocation2 + $0xc8] sm:$0xff] %vm996, %v936
        %1023 = vst.msk [vmem:[#allocation2 + $0xd0] sm:$0xff] %vm996, %v937
        %1024 = vst.msk [vmem:[#allocation2 + $0xd8] sm:$0xff] %vm996, %v938
        %1025 = vst.msk [vmem:[#allocation2 + $0xe0] sm:$0xff] %vm996, %v939
        %1026 = vst.msk [vmem:[#allocation2 + $0xe8] sm:$0xff] %vm996, %v940
        %1027 = vst.msk [vmem:[#allocation2 + $0xf0] sm:$0xff] %vm996, %v941
        %1028 = vst.msk [vmem:[#allocation2 + $0xf8] sm:$0xff] %vm996, %v942
        %1029 = vst.msk [vmem:[#allocation2 + $0x100] sm:$0xff] %vm996, %v943
        %1030 = vst.msk [vmem:[#allocation2 + $0x108] sm:$0xff] %vm996, %v944
        %1031 = vst.msk [vmem:[#allocation2 + $0x110] sm:$0xff] %vm996, %v945
        %1032 = vst.msk [vmem:[#allocation2 + $0x118] sm:$0xff] %vm996, %v946
        %1033 = vst.msk [vmem:[#allocation2 + $0x120] sm:$0xff] %vm996, %v947
        %1034 = vst.msk [vmem:[#allocation2 + $0x128] sm:$0xff] %vm996, %v948
        %1035 = vst.msk [vmem:[#allocation2 + $0x130] sm:$0xff] %vm996, %v949
        %1036 = vst.msk [vmem:[#allocation2 + $0x138] sm:$0xff] %vm996, %v950
        %1037 = vst.msk [vmem:[#allocation2 + $0x140] sm:$0xff] %vm996, %v951
        %1038 = vst.msk [vmem:[#allocation2 + $0x148] sm:$0xff] %vm996, %v952
        %1039 = vst.msk [vmem:[#allocation2 + $0x150] sm:$0xff] %vm996, %v953
        %1040 = vst.msk [vmem:[#allocation2 + $0x158] sm:$0xff] %vm996, %v954
        %1041 = vst.msk [vmem:[#allocation2 + $0x160] sm:$0xff] %vm996, %v955
        %1042 = vst.msk [vmem:[#allocation2 + $0x168] sm:$0xff] %vm996, %v956
        %1043 = vst.msk [vmem:[#allocation2 + $0x170] sm:$0xff] %vm996, %v957
        %1044 = vst.msk [vmem:[#allocation2 + $0x178] sm:$0xff] %vm996, %v958
        %1045 = vst.msk [vmem:[#allocation2 + $0x180] sm:$0xff] %vm996, %v959
        %1046 = vst.msk [vmem:[#allocation2 + $0x188] sm:$0xff] %vm996, %v960
        %1047 = vst.msk [vmem:[#allocation2 + $0x190] sm:$0xff] %vm996, %v961
        %1048 = vst.msk [vmem:[#allocation2 + $0x198] sm:$0xff] %vm996, %v962
        %1049 = vst.msk [vmem:[#allocation2 + $0x1a0] sm:$0xff] %vm996, %v963
        %1050 = vst.msk [vmem:[#allocation2 + $0x1a8] sm:$0xff] %vm996, %v964
        %1051 = vst.msk [vmem:[#allocation2 + $0x1b0] sm:$0xff] %vm996, %v965
        %1052 = vst.msk [vmem:[#allocation2 + $0x1b8] sm:$0xff] %vm996, %v966
        %1053 = vst.msk [vmem:[#allocation2 + $0x1c0] sm:$0xff] %vm996, %v967
        %1054 = vst.msk [vmem:[#allocation2 + $0x1c8] sm:$0xff] %vm996, %v968
        %1055 = vst.msk [vmem:[#allocation2 + $0x1d0] sm:$0xff] %vm996, %v969
        %1056 = vst.msk [vmem:[#allocation2 + $0x1d8] sm:$0xff] %vm996, %v970
        %1057 = vst.msk [vmem:[#allocation2 + $0x1e0] sm:$0xff] %vm996, %v971
        %1058 = vst.msk [vmem:[#allocation2 + $0x1e8] sm:$0xff] %vm996, %v972
        %1059 = vst.msk [vmem:[#allocation2 + $0x1f0] sm:$0xff] %vm996, %v973
        %1060 = vst.msk [vmem:[#allocation2 + $0x1f8] sm:$0xff] %vm996, %v974
        %1061 = vst.msk [vmem:[#allocation2 + $0x200] sm:$0xff] %vm996, %v975
        %1062 = vst.msk [vmem:[#allocation2 + $0x208] sm:$0xff] %vm996, %v976
        %1063 = vst.msk [vmem:[#allocation2 + $0x210] sm:$0xff] %vm996, %v977
        %1064 = vst.msk [vmem:[#allocation2 + $0x218] sm:$0xff] %vm996, %v978
        %1065 = vst.msk [vmem:[#allocation2 + $0x220] sm:$0xff] %vm996, %v979
        %1066 = vst.msk [vmem:[#allocation2 + $0x228] sm:$0xff] %vm996, %v980
        %1067 = vst.msk [vmem:[#allocation2 + $0x230] sm:$0xff] %vm996, %v981
        %1068 = vst.msk [vmem:[#allocation2 + $0x238] sm:$0xff] %vm996, %v982
        %1069 = vst.msk [vmem:[#allocation2 + $0x240] sm:$0xff] %vm996, %v983
        %1070 = vst.msk [vmem:[#allocation2 + $0x248] sm:$0xff] %vm996, %v984
        %1071 = vst.msk [vmem:[#allocation2 + $0x250] sm:$0xff] %vm996, %v985
        %1072 = vst.msk [vmem:[#allocation2 + $0x258] sm:$0xff] %vm996, %v986
        %1073 = vst.msk [vmem:[#allocation2 + $0x260] sm:$0xff] %vm996, %v987
        %1074 = vst.msk [vmem:[#allocation2 + $0x268] sm:$0xff] %vm996, %v988
        %1075 = vst.msk [vmem:[#allocation2 + $0x270] sm:$0xff] %vm996, %v989
        %1076 = vst.msk [vmem:[#allocation2 + $0x278] sm:$0xff] %vm996, %v990
        %1077 = vst.msk [vmem:[#allocation2 + $0x280] sm:$0xff] %vm996, %v991
        %1078 = vst.msk [vmem:[#allocation2 + $0x288] sm:$0xff] %vm996, %v992
        %1079 = vst.msk [vmem:[#allocation2 + $0x290] sm:$0xff] %vm996, %v993
        %1080 = vst.msk [vmem:[#allocation2 + $0x298] sm:$0xff] %vm996, %v994
        %vm1081 = vcmask 257024
        %1082 = vst.msk [vmem:[#allocation2 + $0x2a0] sm:$0xf] %vm1081, %v995
        %v1083 = vld [vmem:[#allocation2] sm:$0xff]
        %v1084 = vld [vmem:[#allocation2 + $0x8] sm:$0xff]
        %v1085 = vld [vmem:[#allocation2 + $0x10] sm:$0xff]
        %v1086 = vld [vmem:[#allocation2 + $0x18] sm:$0xff]
        %v1087 = vld [vmem:[#allocation2 + $0x20] sm:$0xff]
        %v1088 = vld [vmem:[#allocation2 + $0x28] sm:$0xff]
        %v1089 = vld [vmem:[#allocation2 + $0x30] sm:$0xff]
        %v1090 = vld [vmem:[#allocation2 + $0x38] sm:$0xff]
        %v1091 = vld [vmem:[#allocation2 + $0x40] sm:$0xff]
        %v1092 = vld [vmem:[#allocation2 + $0x48] sm:$0xff]
        %v1093 = vld [vmem:[#allocation2 + $0x50] sm:$0xff]
        %v1094 = vld [vmem:[#allocation2 + $0x58] sm:$0xff]
        %v1095 = vld [vmem:[#allocation2 + $0x60] sm:$0xff]
        %v1096 = vld [vmem:[#allocation2 + $0x68] sm:$0xff]
        %v1097 = vld [vmem:[#allocation2 + $0x70] sm:$0xff]
        %v1098 = vld [vmem:[#allocation2 + $0x78] sm:$0xff]
        %v1099 = vld [vmem:[#allocation2 + $0x80] sm:$0xff]
        %v1100 = vld [vmem:[#allocation2 + $0x88] sm:$0xff]
        %v1101 = vld [vmem:[#allocation2 + $0x90] sm:$0xff]
        %v1102 = vld [vmem:[#allocation2 + $0x98] sm:$0xff]
        %v1103 = vld [vmem:[#allocation2 + $0xa0] sm:$0xff]
        %v1104 = vld [vmem:[#allocation2 + $0xa8] sm:$0xff]
        %v1105 = vld [vmem:[#allocation2 + $0xb0] sm:$0xff]
        %v1106 = vld [vmem:[#allocation2 + $0xb8] sm:$0xff]
        %v1107 = vld [vmem:[#allocation2 + $0xc0] sm:$0xff]
        %v1108 = vld [vmem:[#allocation2 + $0xc8] sm:$0xff]
        %v1109 = vld [vmem:[#allocation2 + $0xd0] sm:$0xff]
        %v1110 = vld [vmem:[#allocation2 + $0xd8] sm:$0xff]
        %v1111 = vld [vmem:[#allocation2 + $0xe0] sm:$0xff]
        %v1112 = vld [vmem:[#allocation2 + $0xe8] sm:$0xff]
        %v1113 = vld [vmem:[#allocation2 + $0xf0] sm:$0xff]
        %v1114 = vld [vmem:[#allocation2 + $0xf8] sm:$0xff]
        %v1115 = vld [vmem:[#allocation2 + $0x100] sm:$0xff]
        %v1116 = vld [vmem:[#allocation2 + $0x108] sm:$0xff]
        %v1117 = vld [vmem:[#allocation2 + $0x110] sm:$0xff]
        %v1118 = vld [vmem:[#allocation2 + $0x118] sm:$0xff]
        %v1119 = vld [vmem:[#allocation2 + $0x120] sm:$0xff]
        %v1120 = vld [vmem:[#allocation2 + $0x128] sm:$0xff]
        %v1121 = vld [vmem:[#allocation2 + $0x130] sm:$0xff]
        %v1122 = vld [vmem:[#allocation2 + $0x138] sm:$0xff]
        %v1123 = vld [vmem:[#allocation2 + $0x140] sm:$0xff]
        %v1124 = vld [vmem:[#allocation2 + $0x148] sm:$0xff]
        %v1125 = vld [vmem:[#allocation2 + $0x150] sm:$0xff]
        %v1126 = vld [vmem:[#allocation2 + $0x158] sm:$0xff]
        %v1127 = vld [vmem:[#allocation2 + $0x160] sm:$0xff]
        %v1128 = vld [vmem:[#allocation2 + $0x168] sm:$0xff]
        %v1129 = vld [vmem:[#allocation2 + $0x170] sm:$0xff]
        %v1130 = vld [vmem:[#allocation2 + $0x178] sm:$0xff]
        %v1131 = vld [vmem:[#allocation2 + $0x180] sm:$0xff]
        %v1132 = vld [vmem:[#allocation2 + $0x188] sm:$0xff]
        %v1133 = vld [vmem:[#allocation2 + $0x190] sm:$0xff]
        %v1134 = vld [vmem:[#allocation2 + $0x198] sm:$0xff]
        %v1135 = vld [vmem:[#allocation2 + $0x1a0] sm:$0xff]
        %v1136 = vld [vmem:[#allocation2 + $0x1a8] sm:$0xff]
        %v1137 = vld [vmem:[#allocation2 + $0x1b0] sm:$0xff]
        %v1138 = vld [vmem:[#allocation2 + $0x1b8] sm:$0xff]
        %v1139 = vld [vmem:[#allocation2 + $0x1c0] sm:$0xff]
        %v1140 = vld [vmem:[#allocation2 + $0x1c8] sm:$0xff]
        %v1141 = vld [vmem:[#allocation2 + $0x1d0] sm:$0xff]
        %v1142 = vld [vmem:[#allocation2 + $0x1d8] sm:$0xff]
        %v1143 = vld [vmem:[#allocation2 + $0x1e0] sm:$0xff]
        %v1144 = vld [vmem:[#allocation2 + $0x1e8] sm:$0xff]
        %v1145 = vld [vmem:[#allocation2 + $0x1f0] sm:$0xff]
        %v1146 = vld [vmem:[#allocation2 + $0x1f8] sm:$0xff]
        %v1147 = vld [vmem:[#allocation2 + $0x200] sm:$0xff]
        %v1148 = vld [vmem:[#allocation2 + $0x208] sm:$0xff]
        %v1149 = vld [vmem:[#allocation2 + $0x210] sm:$0xff]
        %v1150 = vld [vmem:[#allocation2 + $0x218] sm:$0xff]
        %v1151 = vld [vmem:[#allocation2 + $0x220] sm:$0xff]
        %v1152 = vld [vmem:[#allocation2 + $0x228] sm:$0xff]
        %v1153 = vld [vmem:[#allocation2 + $0x230] sm:$0xff]
        %v1154 = vld [vmem:[#allocation2 + $0x238] sm:$0xff]
        %v1155 = vld [vmem:[#allocation2 + $0x240] sm:$0xff]
        %v1156 = vld [vmem:[#allocation2 + $0x248] sm:$0xff]
        %v1157 = vld [vmem:[#allocation2 + $0x250] sm:$0xff]
        %v1158 = vld [vmem:[#allocation2 + $0x258] sm:$0xff]
        %v1159 = vld [vmem:[#allocation2 + $0x260] sm:$0xff]
        %v1160 = vld [vmem:[#allocation2 + $0x268] sm:$0x3f]
        %v1161 = vld [vmem:[#allocation8] sm:$0xff]
        %v1162 = vld [vmem:[#allocation8 + $0x8] sm:$0xff]
        %v1163 = vld [vmem:[#allocation8 + $0x10] sm:$0xff]
        %v1164 = vld [vmem:[#allocation8 + $0x18] sm:$0xff]
        %v1165 = vld [vmem:[#allocation2 + $0x1] sm:$0xff]
        %v1166 = vld [vmem:[#allocation2 + $0x9] sm:$0xff]
        %v1167 = vld [vmem:[#allocation2 + $0x11] sm:$0xff]
        %v1168 = vld [vmem:[#allocation2 + $0x19] sm:$0xff]
        %v1169 = vld [vmem:[#allocation2 + $0x21] sm:$0xff]
        %v1170 = vld [vmem:[#allocation2 + $0x29] sm:$0xff]
        %v1171 = vld [vmem:[#allocation2 + $0x31] sm:$0xff]
        %v1172 = vld [vmem:[#allocation2 + $0x39] sm:$0xff]
        %v1173 = vld [vmem:[#allocation2 + $0x41] sm:$0xff]
        %v1174 = vld [vmem:[#allocation2 + $0x49] sm:$0xff]
        %v1175 = vld [vmem:[#allocation2 + $0x51] sm:$0xff]
        %v1176 = vld [vmem:[#allocation2 + $0x59] sm:$0xff]
        %v1177 = vld [vmem:[#allocation2 + $0x61] sm:$0xff]
        %v1178 = vld [vmem:[#allocation2 + $0x69] sm:$0xff]
        %v1179 = vld [vmem:[#allocation2 + $0x71] sm:$0xff]
        %v1180 = vld [vmem:[#allocation2 + $0x79] sm:$0xff]
        %v1181 = vld [vmem:[#allocation2 + $0x81] sm:$0xff]
        %v1182 = vld [vmem:[#allocation2 + $0x89] sm:$0xff]
        %v1183 = vld [vmem:[#allocation2 + $0x91] sm:$0xff]
        %v1184 = vld [vmem:[#allocation2 + $0x99] sm:$0xff]
        %v1185 = vld [vmem:[#allocation2 + $0xa1] sm:$0xff]
        %v1186 = vld [vmem:[#allocation2 + $0xa9] sm:$0xff]
        %v1187 = vld [vmem:[#allocation2 + $0xb1] sm:$0xff]
        %v1188 = vld [vmem:[#allocation2 + $0xb9] sm:$0xff]
        %v1189 = vld [vmem:[#allocation2 + $0xc1] sm:$0xff]
        %v1190 = vld [vmem:[#allocation2 + $0xc9] sm:$0xff]
        %v1191 = vld [vmem:[#allocation2 + $0xd1] sm:$0xff]
        %v1192 = vld [vmem:[#allocation2 + $0xd9] sm:$0xff]
        %v1193 = vld [vmem:[#allocation2 + $0xe1] sm:$0xff]
        %v1194 = vld [vmem:[#allocation2 + $0xe9] sm:$0xff]
        %v1195 = vld [vmem:[#allocation2 + $0xf1] sm:$0xff]
        %v1196 = vld [vmem:[#allocation2 + $0xf9] sm:$0xff]
        %v1197 = vld [vmem:[#allocation2 + $0x101] sm:$0xff]
        %v1198 = vld [vmem:[#allocation2 + $0x109] sm:$0xff]
        %v1199 = vld [vmem:[#allocation2 + $0x111] sm:$0xff]
        %v1200 = vld [vmem:[#allocation2 + $0x119] sm:$0xff]
        %v1201 = vld [vmem:[#allocation2 + $0x121] sm:$0xff]
        %v1202 = vld [vmem:[#allocation2 + $0x129] sm:$0xff]
        %v1203 = vld [vmem:[#allocation2 + $0x131] sm:$0xff]
        %v1204 = vld [vmem:[#allocation2 + $0x139] sm:$0xff]
        %v1205 = vld [vmem:[#allocation2 + $0x141] sm:$0xff]
        %v1206 = vld [vmem:[#allocation2 + $0x149] sm:$0xff]
        %v1207 = vld [vmem:[#allocation2 + $0x151] sm:$0xff]
        %v1208 = vld [vmem:[#allocation2 + $0x159] sm:$0xff]
        %v1209 = vld [vmem:[#allocation2 + $0x161] sm:$0xff]
        %v1210 = vld [vmem:[#allocation2 + $0x169] sm:$0xff]
        %v1211 = vld [vmem:[#allocation2 + $0x171] sm:$0xff]
        %v1212 = vld [vmem:[#allocation2 + $0x179] sm:$0xff]
        %v1213 = vld [vmem:[#allocation2 + $0x181] sm:$0xff]
        %v1214 = vld [vmem:[#allocation2 + $0x189] sm:$0xff]
        %v1215 = vld [vmem:[#allocation2 + $0x191] sm:$0xff]
        %v1216 = vld [vmem:[#allocation2 + $0x199] sm:$0xff]
        %v1217 = vld [vmem:[#allocation2 + $0x1a1] sm:$0xff]
        %v1218 = vld [vmem:[#allocation2 + $0x1a9] sm:$0xff]
        %v1219 = vld [vmem:[#allocation2 + $0x1b1] sm:$0xff]
        %v1220 = vld [vmem:[#allocation2 + $0x1b9] sm:$0xff]
        %v1221 = vld [vmem:[#allocation2 + $0x1c1] sm:$0xff]
        %v1222 = vld [vmem:[#allocation2 + $0x1c9] sm:$0xff]
        %v1223 = vld [vmem:[#allocation2 + $0x1d1] sm:$0xff]
        %v1224 = vld [vmem:[#allocation2 + $0x1d9] sm:$0xff]
        %v1225 = vld [vmem:[#allocation2 + $0x1e1] sm:$0xff]
        %v1226 = vld [vmem:[#allocation2 + $0x1e9] sm:$0xff]
        %v1227 = vld [vmem:[#allocation2 + $0x1f1] sm:$0xff]
        %v1228 = vld [vmem:[#allocation2 + $0x1f9] sm:$0xff]
        %v1229 = vld [vmem:[#allocation2 + $0x201] sm:$0xff]
        %v1230 = vld [vmem:[#allocation2 + $0x209] sm:$0xff]
        %v1231 = vld [vmem:[#allocation2 + $0x211] sm:$0xff]
        %v1232 = vld [vmem:[#allocation2 + $0x219] sm:$0xff]
        %v1233 = vld [vmem:[#allocation2 + $0x221] sm:$0xff]
        %v1234 = vld [vmem:[#allocation2 + $0x229] sm:$0xff]
        %v1235 = vld [vmem:[#allocation2 + $0x231] sm:$0xff]
        %v1236 = vld [vmem:[#allocation2 + $0x239] sm:$0xff]
        %v1237 = vld [vmem:[#allocation2 + $0x241] sm:$0xff]
        %v1238 = vld [vmem:[#allocation2 + $0x249] sm:$0xff]
        %v1239 = vld [vmem:[#allocation2 + $0x251] sm:$0xff]
        %v1240 = vld [vmem:[#allocation2 + $0x259] sm:$0xff]
        %v1241 = vld [vmem:[#allocation2 + $0x261] sm:$0xff]
        %v1242 = vld [vmem:[#allocation2 + $0x269] sm:$0x3f]
        %s1243 = scalar_lea.vmem [#allocation8], 32
        %v1244 = vld [vmem:[%s1243] sm:$0xff]
        %v1245 = vld [vmem:[%s1243 + $0x8] sm:$0xff]
        %v1246 = vld [vmem:[%s1243 + $0x10] sm:$0xff]
        %v1247 = vld [vmem:[%s1243 + $0x18] sm:$0xff]
        %v1249 = vsel %vm996, %v1165, 0
        %v1252 = vsel %vm996, %v1166, 0
        %v1255 = vsel %vm996, %v1167, 0
        %v1258 = vsel %vm996, %v1168, 0
        %v1261 = vsel %vm996, %v1169, 0
        %v1264 = vsel %vm996, %v1170, 0
        %v1267 = vsel %vm996, %v1171, 0
        %v1270 = vsel %vm996, %v1172, 0
        %v1273 = vsel %vm996, %v1173, 0
        %v1276 = vsel %vm996, %v1174, 0
        %v1279 = vsel %vm996, %v1175, 0
        %v1282 = vsel %vm996, %v1176, 0
        %v1285 = vsel %vm996, %v1177, 0
        %v1288 = vsel %vm996, %v1178, 0
        %v1291 = vsel %vm996, %v1179, 0
        %v1294 = vsel %vm996, %v1180, 0
        %v1297 = vsel %vm996, %v1181, 0
        %v1300 = vsel %vm996, %v1182, 0
        %v1303 = vsel %vm996, %v1183, 0
        %v1306 = vsel %vm996, %v1184, 0
        %v1309 = vsel %vm996, %v1185, 0
        %v1312 = vsel %vm996, %v1186, 0
        %v1315 = vsel %vm996, %v1187, 0
        %v1318 = vsel %vm996, %v1188, 0
        %v1321 = vsel %vm996, %v1189, 0
        %v1324 = vsel %vm996, %v1190, 0
        %v1327 = vsel %vm996, %v1191, 0
        %v1330 = vsel %vm996, %v1192, 0
        %v1333 = vsel %vm996, %v1193, 0
        %v1336 = vsel %vm996, %v1194, 0
        %v1339 = vsel %vm996, %v1195, 0
        %v1342 = vsel %vm996, %v1196, 0
        %v1345 = vsel %vm996, %v1197, 0
        %v1348 = vsel %vm996, %v1198, 0
        %v1351 = vsel %vm996, %v1199, 0
        %v1354 = vsel %vm996, %v1200, 0
        %v1357 = vsel %vm996, %v1201, 0
        %v1360 = vsel %vm996, %v1202, 0
        %v1363 = vsel %vm996, %v1203, 0
        %v1366 = vsel %vm996, %v1204, 0
        %v1369 = vsel %vm996, %v1205, 0
        %v1372 = vsel %vm996, %v1206, 0
        %v1375 = vsel %vm996, %v1207, 0
        %v1378 = vsel %vm996, %v1208, 0
        %v1381 = vsel %vm996, %v1209, 0
        %v1384 = vsel %vm996, %v1210, 0
        %v1387 = vsel %vm996, %v1211, 0
        %v1390 = vsel %vm996, %v1212, 0
        %v1393 = vsel %vm996, %v1213, 0
        %v1396 = vsel %vm996, %v1214, 0
        %v1399 = vsel %vm996, %v1215, 0
        %v1402 = vsel %vm996, %v1216, 0
        %v1405 = vsel %vm996, %v1217, 0
        %v1408 = vsel %vm996, %v1218, 0
        %v1411 = vsel %vm996, %v1219, 0
        %v1414 = vsel %vm996, %v1220, 0
        %v1417 = vsel %vm996, %v1221, 0
        %v1420 = vsel %vm996, %v1222, 0
        %v1423 = vsel %vm996, %v1223, 0
        %v1426 = vsel %vm996, %v1224, 0
        %v1429 = vsel %vm996, %v1225, 0
        %v1432 = vsel %vm996, %v1226, 0
        %v1435 = vsel %vm996, %v1227, 0
        %v1438 = vsel %vm996, %v1228, 0
        %v1441 = vsel %vm996, %v1229, 0
        %v1444 = vsel %vm996, %v1230, 0
        %v1447 = vsel %vm996, %v1231, 0
        %v1450 = vsel %vm996, %v1232, 0
        %v1453 = vsel %vm996, %v1233, 0
        %v1456 = vsel %vm996, %v1234, 0
        %v1459 = vsel %vm996, %v1235, 0
        %v1462 = vsel %vm996, %v1236, 0
        %v1465 = vsel %vm996, %v1237, 0
        %v1468 = vsel %vm996, %v1238, 0
        %v1471 = vsel %vm996, %v1239, 0
        %v1474 = vsel %vm996, %v1240, 0
        %v1477 = vsel %vm996, %v1241, 0
        %v1480 = vsel %vm996, %v1242, 0
        %1482 = vmatpush.msra.mxu0 0.0
        %1483 = vmatpush.msra.mxu0 0.0
        %1484 = vmatpush.msra.mxu0 0.0
        %1485 = vmatpush.msra.mxu0 0.0
        %1486 = vmatpush.msra.mxu0 0.0
        %1487 = vmatpush.msra.mxu0 0.0
        %1488 = vmatpush.msra.mxu0 0.0
        %1489 = vmatpush.msra.mxu0 0.0
        %1490 = vmatpush.msra.mxu0 0.0
        %1491 = vmatpush.msra.mxu0 0.0
        %1492 = vmatpush.msra.mxu0 0.0
        %1493 = vmatpush.msra.mxu0 0.0
        %1494 = vmatpush.msra.mxu0 %v1247
        %1495 = vmatpush.msra.mxu0 %v1246
        %1496 = vmatpush.msra.mxu0 %v1245
        %1497 = vmatpush.msra.mxu0 %v1244
        %1498 = vmatmul.f32.gmra.mxu0 %v1249
        %v1499 = vpop.f32.mrf.mxu0
        %v1500 = vadd.f32 0.0, %v1499
        %1501 = vmatmul.f32.gmra.mxu0 %v1252
        %v1502 = vpop.f32.mrf.mxu0
        %v1503 = vadd.f32 0.0, %v1502
        %1504 = vmatmul.f32.gmra.mxu0 %v1255
        %v1505 = vpop.f32.mrf.mxu0
        %v1506 = vadd.f32 0.0, %v1505
        %1507 = vmatmul.f32.gmra.mxu0 %v1258
        %v1508 = vpop.f32.mrf.mxu0
        %v1509 = vadd.f32 0.0, %v1508
        %1510 = vmatmul.f32.gmra.mxu0 %v1261
        %v1511 = vpop.f32.mrf.mxu0
        %v1512 = vadd.f32 0.0, %v1511
        %1513 = vmatmul.f32.gmra.mxu0 %v1264
        %v1514 = vpop.f32.mrf.mxu0
        %v1515 = vadd.f32 0.0, %v1514
        %1516 = vmatmul.f32.gmra.mxu0 %v1267
        %v1517 = vpop.f32.mrf.mxu0
        %v1518 = vadd.f32 0.0, %v1517
        %1519 = vmatmul.f32.gmra.mxu0 %v1270
        %v1520 = vpop.f32.mrf.mxu0
        %v1521 = vadd.f32 0.0, %v1520
        %1522 = vmatmul.f32.gmra.mxu0 %v1273
        %v1523 = vpop.f32.mrf.mxu0
        %v1524 = vadd.f32 0.0, %v1523
        %1525 = vmatmul.f32.gmra.mxu0 %v1276
        %v1526 = vpop.f32.mrf.mxu0
        %v1527 = vadd.f32 0.0, %v1526
        %1528 = vmatmul.f32.gmra.mxu0 %v1279
        %v1529 = vpop.f32.mrf.mxu0
        %v1530 = vadd.f32 0.0, %v1529
        %1531 = vmatmul.f32.gmra.mxu0 %v1282
        %v1532 = vpop.f32.mrf.mxu0
        %v1533 = vadd.f32 0.0, %v1532
        %1534 = vmatmul.f32.gmra.mxu0 %v1285
        %v1535 = vpop.f32.mrf.mxu0
        %v1536 = vadd.f32 0.0, %v1535
        %1537 = vmatmul.f32.gmra.mxu0 %v1288
        %v1538 = vpop.f32.mrf.mxu0
        %v1539 = vadd.f32 0.0, %v1538
        %1540 = vmatmul.f32.gmra.mxu0 %v1291
        %v1541 = vpop.f32.mrf.mxu0
        %v1542 = vadd.f32 0.0, %v1541
        %1543 = vmatmul.f32.gmra.mxu0 %v1294
        %v1544 = vpop.f32.mrf.mxu0
        %v1545 = vadd.f32 0.0, %v1544
        %1546 = vmatmul.f32.gmra.mxu0 %v1297
        %v1547 = vpop.f32.mrf.mxu0
        %v1548 = vadd.f32 0.0, %v1547
        %1549 = vmatmul.f32.gmra.mxu0 %v1300
        %v1550 = vpop.f32.mrf.mxu0
        %v1551 = vadd.f32 0.0, %v1550
        %1552 = vmatmul.f32.gmra.mxu0 %v1303
        %v1553 = vpop.f32.mrf.mxu0
        %v1554 = vadd.f32 0.0, %v1553
        %1555 = vmatmul.f32.gmra.mxu0 %v1306
        %v1556 = vpop.f32.mrf.mxu0
        %v1557 = vadd.f32 0.0, %v1556
        %1558 = vmatmul.f32.gmra.mxu0 %v1309
        %v1559 = vpop.f32.mrf.mxu0
        %v1560 = vadd.f32 0.0, %v1559
        %1561 = vmatmul.f32.gmra.mxu0 %v1312
        %v1562 = vpop.f32.mrf.mxu0
        %v1563 = vadd.f32 0.0, %v1562
        %1564 = vmatmul.f32.gmra.mxu0 %v1315
        %v1565 = vpop.f32.mrf.mxu0
        %v1566 = vadd.f32 0.0, %v1565
        %1567 = vmatmul.f32.gmra.mxu0 %v1318
        %v1568 = vpop.f32.mrf.mxu0
        %v1569 = vadd.f32 0.0, %v1568
        %1570 = vmatmul.f32.gmra.mxu0 %v1321
        %v1571 = vpop.f32.mrf.mxu0
        %v1572 = vadd.f32 0.0, %v1571
        %1573 = vmatmul.f32.gmra.mxu0 %v1324
        %v1574 = vpop.f32.mrf.mxu0
        %v1575 = vadd.f32 0.0, %v1574
        %1576 = vmatmul.f32.gmra.mxu0 %v1327
        %v1577 = vpop.f32.mrf.mxu0
        %v1578 = vadd.f32 0.0, %v1577
        %1579 = vmatmul.f32.gmra.mxu0 %v1330
        %v1580 = vpop.f32.mrf.mxu0
        %v1581 = vadd.f32 0.0, %v1580
        %1582 = vmatmul.f32.gmra.mxu0 %v1333
        %v1583 = vpop.f32.mrf.mxu0
        %v1584 = vadd.f32 0.0, %v1583
        %1585 = vmatmul.f32.gmra.mxu0 %v1336
        %v1586 = vpop.f32.mrf.mxu0
        %v1587 = vadd.f32 0.0, %v1586
        %1588 = vmatmul.f32.gmra.mxu0 %v1339
        %v1589 = vpop.f32.mrf.mxu0
        %v1590 = vadd.f32 0.0, %v1589
        %1591 = vmatmul.f32.gmra.mxu0 %v1342
        %v1592 = vpop.f32.mrf.mxu0
        %v1593 = vadd.f32 0.0, %v1592
        %1594 = vmatmul.f32.gmra.mxu0 %v1345
        %v1595 = vpop.f32.mrf.mxu0
        %v1596 = vadd.f32 0.0, %v1595
        %1597 = vmatmul.f32.gmra.mxu0 %v1348
        %v1598 = vpop.f32.mrf.mxu0
        %v1599 = vadd.f32 0.0, %v1598
        %1600 = vmatmul.f32.gmra.mxu0 %v1351
        %v1601 = vpop.f32.mrf.mxu0
        %v1602 = vadd.f32 0.0, %v1601
        %1603 = vmatmul.f32.gmra.mxu0 %v1354
        %v1604 = vpop.f32.mrf.mxu0
        %v1605 = vadd.f32 0.0, %v1604
        %1606 = vmatmul.f32.gmra.mxu0 %v1357
        %v1607 = vpop.f32.mrf.mxu0
        %v1608 = vadd.f32 0.0, %v1607
        %1609 = vmatmul.f32.gmra.mxu0 %v1360
        %v1610 = vpop.f32.mrf.mxu0
        %v1611 = vadd.f32 0.0, %v1610
        %1612 = vmatmul.f32.gmra.mxu0 %v1363
        %v1613 = vpop.f32.mrf.mxu0
        %v1614 = vadd.f32 0.0, %v1613
        %1615 = vmatmul.f32.gmra.mxu0 %v1366
        %v1616 = vpop.f32.mrf.mxu0
        %v1617 = vadd.f32 0.0, %v1616
        %1618 = vmatmul.f32.gmra.mxu0 %v1369
        %v1619 = vpop.f32.mrf.mxu0
        %v1620 = vadd.f32 0.0, %v1619
        %1621 = vmatmul.f32.gmra.mxu0 %v1372
        %v1622 = vpop.f32.mrf.mxu0
        %v1623 = vadd.f32 0.0, %v1622
        %1624 = vmatmul.f32.gmra.mxu0 %v1375
        %v1625 = vpop.f32.mrf.mxu0
        %v1626 = vadd.f32 0.0, %v1625
        %1627 = vmatmul.f32.gmra.mxu0 %v1378
        %v1628 = vpop.f32.mrf.mxu0
        %v1629 = vadd.f32 0.0, %v1628
        %1630 = vmatmul.f32.gmra.mxu0 %v1381
        %v1631 = vpop.f32.mrf.mxu0
        %v1632 = vadd.f32 0.0, %v1631
        %1633 = vmatmul.f32.gmra.mxu0 %v1384
        %v1634 = vpop.f32.mrf.mxu0
        %v1635 = vadd.f32 0.0, %v1634
        %1636 = vmatmul.f32.gmra.mxu0 %v1387
        %v1637 = vpop.f32.mrf.mxu0
        %v1638 = vadd.f32 0.0, %v1637
        %1639 = vmatmul.f32.gmra.mxu0 %v1390
        %v1640 = vpop.f32.mrf.mxu0
        %v1641 = vadd.f32 0.0, %v1640
        %1642 = vmatmul.f32.gmra.mxu0 %v1393
        %v1643 = vpop.f32.mrf.mxu0
        %v1644 = vadd.f32 0.0, %v1643
        %1645 = vmatmul.f32.gmra.mxu0 %v1396
        %v1646 = vpop.f32.mrf.mxu0
        %v1647 = vadd.f32 0.0, %v1646
        %1648 = vmatmul.f32.gmra.mxu0 %v1399
        %v1649 = vpop.f32.mrf.mxu0
        %v1650 = vadd.f32 0.0, %v1649
        %1651 = vmatmul.f32.gmra.mxu0 %v1402
        %v1652 = vpop.f32.mrf.mxu0
        %v1653 = vadd.f32 0.0, %v1652
        %1654 = vmatmul.f32.gmra.mxu0 %v1405
        %v1655 = vpop.f32.mrf.mxu0
        %v1656 = vadd.f32 0.0, %v1655
        %1657 = vmatmul.f32.gmra.mxu0 %v1408
        %v1658 = vpop.f32.mrf.mxu0
        %v1659 = vadd.f32 0.0, %v1658
        %1660 = vmatmul.f32.gmra.mxu0 %v1411
        %v1661 = vpop.f32.mrf.mxu0
        %v1662 = vadd.f32 0.0, %v1661
        %1663 = vmatmul.f32.gmra.mxu0 %v1414
        %v1664 = vpop.f32.mrf.mxu0
        %v1665 = vadd.f32 0.0, %v1664
        %1666 = vmatmul.f32.gmra.mxu0 %v1417
        %v1667 = vpop.f32.mrf.mxu0
        %v1668 = vadd.f32 0.0, %v1667
        %1669 = vmatmul.f32.gmra.mxu0 %v1420
        %v1670 = vpop.f32.mrf.mxu0
        %v1671 = vadd.f32 0.0, %v1670
        %1672 = vmatmul.f32.gmra.mxu0 %v1423
        %v1673 = vpop.f32.mrf.mxu0
        %v1674 = vadd.f32 0.0, %v1673
        %1675 = vmatmul.f32.gmra.mxu0 %v1426
        %v1676 = vpop.f32.mrf.mxu0
        %v1677 = vadd.f32 0.0, %v1676
        %1678 = vmatmul.f32.gmra.mxu0 %v1429
        %v1679 = vpop.f32.mrf.mxu0
        %v1680 = vadd.f32 0.0, %v1679
        %1681 = vmatmul.f32.gmra.mxu0 %v1432
        %v1682 = vpop.f32.mrf.mxu0
        %v1683 = vadd.f32 0.0, %v1682
        %1684 = vmatmul.f32.gmra.mxu0 %v1435
        %v1685 = vpop.f32.mrf.mxu0
        %v1686 = vadd.f32 0.0, %v1685
        %1687 = vmatmul.f32.gmra.mxu0 %v1438
        %v1688 = vpop.f32.mrf.mxu0
        %v1689 = vadd.f32 0.0, %v1688
        %1690 = vmatmul.f32.gmra.mxu0 %v1441
        %v1691 = vpop.f32.mrf.mxu0
        %v1692 = vadd.f32 0.0, %v1691
        %1693 = vmatmul.f32.gmra.mxu0 %v1444
        %v1694 = vpop.f32.mrf.mxu0
        %v1695 = vadd.f32 0.0, %v1694
        %1696 = vmatmul.f32.gmra.mxu0 %v1447
        %v1697 = vpop.f32.mrf.mxu0
        %v1698 = vadd.f32 0.0, %v1697
        %1699 = vmatmul.f32.gmra.mxu0 %v1450
        %v1700 = vpop.f32.mrf.mxu0
        %v1701 = vadd.f32 0.0, %v1700
        %1702 = vmatmul.f32.gmra.mxu0 %v1453
        %v1703 = vpop.f32.mrf.mxu0
        %v1704 = vadd.f32 0.0, %v1703
        %1705 = vmatmul.f32.gmra.mxu0 %v1456
        %v1706 = vpop.f32.mrf.mxu0
        %v1707 = vadd.f32 0.0, %v1706
        %1708 = vmatmul.f32.gmra.mxu0 %v1459
        %v1709 = vpop.f32.mrf.mxu0
        %v1710 = vadd.f32 0.0, %v1709
        %1711 = vmatmul.f32.gmra.mxu0 %v1462
        %v1712 = vpop.f32.mrf.mxu0
        %v1713 = vadd.f32 0.0, %v1712
        %1714 = vmatmul.f32.gmra.mxu0 %v1465
        %v1715 = vpop.f32.mrf.mxu0
        %v1716 = vadd.f32 0.0, %v1715
        %1717 = vmatmul.f32.gmra.mxu0 %v1468
        %v1718 = vpop.f32.mrf.mxu0
        %v1719 = vadd.f32 0.0, %v1718
        %1720 = vmatmul.f32.gmra.mxu0 %v1471
        %v1721 = vpop.f32.mrf.mxu0
        %v1722 = vadd.f32 0.0, %v1721
        %1723 = vmatmul.f32.gmra.mxu0 %v1474
        %v1724 = vpop.f32.mrf.mxu0
        %v1725 = vadd.f32 0.0, %v1724
        %1726 = vmatmul.f32.gmra.mxu0 %v1477
        %v1727 = vpop.f32.mrf.mxu0
        %v1728 = vadd.f32 0.0, %v1727
        %1729 = vmatmul.f32.gmra.mxu0 %v1480
        %v1730 = vpop.f32.mrf.mxu0
        %v1731 = vadd.f32 0.0, %v1730
        %1732 = vdwg.mxu0
        %v1734 = vsel %vm996, %v1083, 0
        %v1737 = vsel %vm996, %v1084, 0
        %v1740 = vsel %vm996, %v1085, 0
        %v1743 = vsel %vm996, %v1086, 0
        %v1746 = vsel %vm996, %v1087, 0
        %v1749 = vsel %vm996, %v1088, 0
        %v1752 = vsel %vm996, %v1089, 0
        %v1755 = vsel %vm996, %v1090, 0
        %v1758 = vsel %vm996, %v1091, 0
        %v1761 = vsel %vm996, %v1092, 0
        %v1764 = vsel %vm996, %v1093, 0
        %v1767 = vsel %vm996, %v1094, 0
        %v1770 = vsel %vm996, %v1095, 0
        %v1773 = vsel %vm996, %v1096, 0
        %v1776 = vsel %vm996, %v1097, 0
        %v1779 = vsel %vm996, %v1098, 0
        %v1782 = vsel %vm996, %v1099, 0
        %v1785 = vsel %vm996, %v1100, 0
        %v1788 = vsel %vm996, %v1101, 0
        %v1791 = vsel %vm996, %v1102, 0
        %v1794 = vsel %vm996, %v1103, 0
        %v1797 = vsel %vm996, %v1104, 0
        %v1800 = vsel %vm996, %v1105, 0
        %v1803 = vsel %vm996, %v1106, 0
        %v1806 = vsel %vm996, %v1107, 0
        %v1809 = vsel %vm996, %v1108, 0
        %v1812 = vsel %vm996, %v1109, 0
        %v1815 = vsel %vm996, %v1110, 0
        %v1818 = vsel %vm996, %v1111, 0
        %v1821 = vsel %vm996, %v1112, 0
        %v1824 = vsel %vm996, %v1113, 0
        %v1827 = vsel %vm996, %v1114, 0
        %v1830 = vsel %vm996, %v1115, 0
        %v1833 = vsel %vm996, %v1116, 0
        %v1836 = vsel %vm996, %v1117, 0
        %v1839 = vsel %vm996, %v1118, 0
        %v1842 = vsel %vm996, %v1119, 0
        %v1845 = vsel %vm996, %v1120, 0
        %v1848 = vsel %vm996, %v1121, 0
        %v1851 = vsel %vm996, %v1122, 0
        %v1854 = vsel %vm996, %v1123, 0
        %v1857 = vsel %vm996, %v1124, 0
        %v1860 = vsel %vm996, %v1125, 0
        %v1863 = vsel %vm996, %v1126, 0
        %v1866 = vsel %vm996, %v1127, 0
        %v1869 = vsel %vm996, %v1128, 0
        %v1872 = vsel %vm996, %v1129, 0
        %v1875 = vsel %vm996, %v1130, 0
        %v1878 = vsel %vm996, %v1131, 0
        %v1881 = vsel %vm996, %v1132, 0
        %v1884 = vsel %vm996, %v1133, 0
        %v1887 = vsel %vm996, %v1134, 0
        %v1890 = vsel %vm996, %v1135, 0
        %v1893 = vsel %vm996, %v1136, 0
        %v1896 = vsel %vm996, %v1137, 0
        %v1899 = vsel %vm996, %v1138, 0
        %v1902 = vsel %vm996, %v1139, 0
        %v1905 = vsel %vm996, %v1140, 0
        %v1908 = vsel %vm996, %v1141, 0
        %v1911 = vsel %vm996, %v1142, 0
        %v1914 = vsel %vm996, %v1143, 0
        %v1917 = vsel %vm996, %v1144, 0
        %v1920 = vsel %vm996, %v1145, 0
        %v1923 = vsel %vm996, %v1146, 0
        %v1926 = vsel %vm996, %v1147, 0
        %v1929 = vsel %vm996, %v1148, 0
        %v1932 = vsel %vm996, %v1149, 0
        %v1935 = vsel %vm996, %v1150, 0
        %v1938 = vsel %vm996, %v1151, 0
        %v1941 = vsel %vm996, %v1152, 0
        %v1944 = vsel %vm996, %v1153, 0
        %v1947 = vsel %vm996, %v1154, 0
        %v1950 = vsel %vm996, %v1155, 0
        %v1953 = vsel %vm996, %v1156, 0
        %v1956 = vsel %vm996, %v1157, 0
        %v1959 = vsel %vm996, %v1158, 0
        %v1962 = vsel %vm996, %v1159, 0
        %v1965 = vsel %vm996, %v1160, 0
        %1967 = vmatpush.msra.mxu0 0.0
        %1968 = vmatpush.msra.mxu0 0.0
        %1969 = vmatpush.msra.mxu0 0.0
        %1970 = vmatpush.msra.mxu0 0.0
        %1971 = vmatpush.msra.mxu0 0.0
        %1972 = vmatpush.msra.mxu0 0.0
        %1973 = vmatpush.msra.mxu0 0.0
        %1974 = vmatpush.msra.mxu0 0.0
        %1975 = vmatpush.msra.mxu0 0.0
        %1976 = vmatpush.msra.mxu0 0.0
        %1977 = vmatpush.msra.mxu0 0.0
        %1978 = vmatpush.msra.mxu0 0.0
        %1979 = vmatpush.msra.mxu0 %v1164
        %1980 = vmatpush.msra.mxu0 %v1163
        %1981 = vmatpush.msra.mxu0 %v1162
        %1982 = vmatpush.msra.mxu0 %v1161
        %1983 = vmatmul.f32.gmra.mxu0 %v1734
        %v1984 = vpop.f32.mrf.mxu0
        %v1985 = vadd.f32 %v1500, %v1984
        %1986 = vmatmul.f32.gmra.mxu0 %v1737
        %v1987 = vpop.f32.mrf.mxu0
        %v1988 = vadd.f32 %v1503, %v1987
        %1989 = vmatmul.f32.gmra.mxu0 %v1740
        %v1990 = vpop.f32.mrf.mxu0
        %v1991 = vadd.f32 %v1506, %v1990
        %1992 = vmatmul.f32.gmra.mxu0 %v1743
        %v1993 = vpop.f32.mrf.mxu0
        %v1994 = vadd.f32 %v1509, %v1993
        %1995 = vmatmul.f32.gmra.mxu0 %v1746
        %v1996 = vpop.f32.mrf.mxu0
        %v1997 = vadd.f32 %v1512, %v1996
        %1998 = vmatmul.f32.gmra.mxu0 %v1749
        %v1999 = vpop.f32.mrf.mxu0
        %v2000 = vadd.f32 %v1515, %v1999
        %2001 = vmatmul.f32.gmra.mxu0 %v1752
        %v2002 = vpop.f32.mrf.mxu0
        %v2003 = vadd.f32 %v1518, %v2002
        %2004 = vmatmul.f32.gmra.mxu0 %v1755
        %v2005 = vpop.f32.mrf.mxu0
        %v2006 = vadd.f32 %v1521, %v2005
        %2007 = vmatmul.f32.gmra.mxu0 %v1758
        %v2008 = vpop.f32.mrf.mxu0
        %v2009 = vadd.f32 %v1524, %v2008
        %2010 = vmatmul.f32.gmra.mxu0 %v1761
        %v2011 = vpop.f32.mrf.mxu0
        %v2012 = vadd.f32 %v1527, %v2011
        %2013 = vmatmul.f32.gmra.mxu0 %v1764
        %v2014 = vpop.f32.mrf.mxu0
        %v2015 = vadd.f32 %v1530, %v2014
        %2016 = vmatmul.f32.gmra.mxu0 %v1767
        %v2017 = vpop.f32.mrf.mxu0
        %v2018 = vadd.f32 %v1533, %v2017
        %2019 = vmatmul.f32.gmra.mxu0 %v1770
        %v2020 = vpop.f32.mrf.mxu0
        %v2021 = vadd.f32 %v1536, %v2020
        %2022 = vmatmul.f32.gmra.mxu0 %v1773
        %v2023 = vpop.f32.mrf.mxu0
        %v2024 = vadd.f32 %v1539, %v2023
        %2025 = vmatmul.f32.gmra.mxu0 %v1776
        %v2026 = vpop.f32.mrf.mxu0
        %v2027 = vadd.f32 %v1542, %v2026
        %2028 = vmatmul.f32.gmra.mxu0 %v1779
        %v2029 = vpop.f32.mrf.mxu0
        %v2030 = vadd.f32 %v1545, %v2029
        %2031 = vmatmul.f32.gmra.mxu0 %v1782
        %v2032 = vpop.f32.mrf.mxu0
        %v2033 = vadd.f32 %v1548, %v2032
        %2034 = vmatmul.f32.gmra.mxu0 %v1785
        %v2035 = vpop.f32.mrf.mxu0
        %v2036 = vadd.f32 %v1551, %v2035
        %2037 = vmatmul.f32.gmra.mxu0 %v1788
        %v2038 = vpop.f32.mrf.mxu0
        %v2039 = vadd.f32 %v1554, %v2038
        %2040 = vmatmul.f32.gmra.mxu0 %v1791
        %v2041 = vpop.f32.mrf.mxu0
        %v2042 = vadd.f32 %v1557, %v2041
        %2043 = vmatmul.f32.gmra.mxu0 %v1794
        %v2044 = vpop.f32.mrf.mxu0
        %v2045 = vadd.f32 %v1560, %v2044
        %2046 = vmatmul.f32.gmra.mxu0 %v1797
        %v2047 = vpop.f32.mrf.mxu0
        %v2048 = vadd.f32 %v1563, %v2047
        %2049 = vmatmul.f32.gmra.mxu0 %v1800
        %v2050 = vpop.f32.mrf.mxu0
        %v2051 = vadd.f32 %v1566, %v2050
        %2052 = vmatmul.f32.gmra.mxu0 %v1803
        %v2053 = vpop.f32.mrf.mxu0
        %v2054 = vadd.f32 %v1569, %v2053
        %2055 = vmatmul.f32.gmra.mxu0 %v1806
        %v2056 = vpop.f32.mrf.mxu0
        %v2057 = vadd.f32 %v1572, %v2056
        %2058 = vmatmul.f32.gmra.mxu0 %v1809
        %v2059 = vpop.f32.mrf.mxu0
        %v2060 = vadd.f32 %v1575, %v2059
        %2061 = vmatmul.f32.gmra.mxu0 %v1812
        %v2062 = vpop.f32.mrf.mxu0
        %v2063 = vadd.f32 %v1578, %v2062
        %2064 = vmatmul.f32.gmra.mxu0 %v1815
        %v2065 = vpop.f32.mrf.mxu0
        %v2066 = vadd.f32 %v1581, %v2065
        %2067 = vmatmul.f32.gmra.mxu0 %v1818
        %v2068 = vpop.f32.mrf.mxu0
        %v2069 = vadd.f32 %v1584, %v2068
        %2070 = vmatmul.f32.gmra.mxu0 %v1821
        %v2071 = vpop.f32.mrf.mxu0
        %v2072 = vadd.f32 %v1587, %v2071
        %2073 = vmatmul.f32.gmra.mxu0 %v1824
        %v2074 = vpop.f32.mrf.mxu0
        %v2075 = vadd.f32 %v1590, %v2074
        %2076 = vmatmul.f32.gmra.mxu0 %v1827
        %v2077 = vpop.f32.mrf.mxu0
        %v2078 = vadd.f32 %v1593, %v2077
        %2079 = vmatmul.f32.gmra.mxu0 %v1830
        %v2080 = vpop.f32.mrf.mxu0
        %v2081 = vadd.f32 %v1596, %v2080
        %2082 = vmatmul.f32.gmra.mxu0 %v1833
        %v2083 = vpop.f32.mrf.mxu0
        %v2084 = vadd.f32 %v1599, %v2083
        %2085 = vmatmul.f32.gmra.mxu0 %v1836
        %v2086 = vpop.f32.mrf.mxu0
        %v2087 = vadd.f32 %v1602, %v2086
        %2088 = vmatmul.f32.gmra.mxu0 %v1839
        %v2089 = vpop.f32.mrf.mxu0
        %v2090 = vadd.f32 %v1605, %v2089
        %2091 = vmatmul.f32.gmra.mxu0 %v1842
        %v2092 = vpop.f32.mrf.mxu0
        %v2093 = vadd.f32 %v1608, %v2092
        %2094 = vmatmul.f32.gmra.mxu0 %v1845
        %v2095 = vpop.f32.mrf.mxu0
        %v2096 = vadd.f32 %v1611, %v2095
        %2097 = vmatmul.f32.gmra.mxu0 %v1848
        %v2098 = vpop.f32.mrf.mxu0
        %v2099 = vadd.f32 %v1614, %v2098
        %2100 = vmatmul.f32.gmra.mxu0 %v1851
        %v2101 = vpop.f32.mrf.mxu0
        %v2102 = vadd.f32 %v1617, %v2101
        %2103 = vmatmul.f32.gmra.mxu0 %v1854
        %v2104 = vpop.f32.mrf.mxu0
        %v2105 = vadd.f32 %v1620, %v2104
        %2106 = vmatmul.f32.gmra.mxu0 %v1857
        %v2107 = vpop.f32.mrf.mxu0
        %v2108 = vadd.f32 %v1623, %v2107
        %2109 = vmatmul.f32.gmra.mxu0 %v1860
        %v2110 = vpop.f32.mrf.mxu0
        %v2111 = vadd.f32 %v1626, %v2110
        %2112 = vmatmul.f32.gmra.mxu0 %v1863
        %v2113 = vpop.f32.mrf.mxu0
        %v2114 = vadd.f32 %v1629, %v2113
        %2115 = vmatmul.f32.gmra.mxu0 %v1866
        %v2116 = vpop.f32.mrf.mxu0
        %v2117 = vadd.f32 %v1632, %v2116
        %2118 = vmatmul.f32.gmra.mxu0 %v1869
        %v2119 = vpop.f32.mrf.mxu0
        %v2120 = vadd.f32 %v1635, %v2119
        %2121 = vmatmul.f32.gmra.mxu0 %v1872
        %v2122 = vpop.f32.mrf.mxu0
        %v2123 = vadd.f32 %v1638, %v2122
        %2124 = vmatmul.f32.gmra.mxu0 %v1875
        %v2125 = vpop.f32.mrf.mxu0
        %v2126 = vadd.f32 %v1641, %v2125
        %2127 = vmatmul.f32.gmra.mxu0 %v1878
        %v2128 = vpop.f32.mrf.mxu0
        %v2129 = vadd.f32 %v1644, %v2128
        %2130 = vmatmul.f32.gmra.mxu0 %v1881
        %v2131 = vpop.f32.mrf.mxu0
        %v2132 = vadd.f32 %v1647, %v2131
        %2133 = vmatmul.f32.gmra.mxu0 %v1884
        %v2134 = vpop.f32.mrf.mxu0
        %v2135 = vadd.f32 %v1650, %v2134
        %2136 = vmatmul.f32.gmra.mxu0 %v1887
        %v2137 = vpop.f32.mrf.mxu0
        %v2138 = vadd.f32 %v1653, %v2137
        %2139 = vmatmul.f32.gmra.mxu0 %v1890
        %v2140 = vpop.f32.mrf.mxu0
        %v2141 = vadd.f32 %v1656, %v2140
        %2142 = vmatmul.f32.gmra.mxu0 %v1893
        %v2143 = vpop.f32.mrf.mxu0
        %v2144 = vadd.f32 %v1659, %v2143
        %2145 = vmatmul.f32.gmra.mxu0 %v1896
        %v2146 = vpop.f32.mrf.mxu0
        %v2147 = vadd.f32 %v1662, %v2146
        %2148 = vmatmul.f32.gmra.mxu0 %v1899
        %v2149 = vpop.f32.mrf.mxu0
        %v2150 = vadd.f32 %v1665, %v2149
        %2151 = vmatmul.f32.gmra.mxu0 %v1902
        %v2152 = vpop.f32.mrf.mxu0
        %v2153 = vadd.f32 %v1668, %v2152
        %2154 = vmatmul.f32.gmra.mxu0 %v1905
        %v2155 = vpop.f32.mrf.mxu0
        %v2156 = vadd.f32 %v1671, %v2155
        %2157 = vmatmul.f32.gmra.mxu0 %v1908
        %v2158 = vpop.f32.mrf.mxu0
        %v2159 = vadd.f32 %v1674, %v2158
        %2160 = vmatmul.f32.gmra.mxu0 %v1911
        %v2161 = vpop.f32.mrf.mxu0
        %v2162 = vadd.f32 %v1677, %v2161
        %2163 = vmatmul.f32.gmra.mxu0 %v1914
        %v2164 = vpop.f32.mrf.mxu0
        %v2165 = vadd.f32 %v1680, %v2164
        %2166 = vmatmul.f32.gmra.mxu0 %v1917
        %v2167 = vpop.f32.mrf.mxu0
        %v2168 = vadd.f32 %v1683, %v2167
        %2169 = vmatmul.f32.gmra.mxu0 %v1920
        %v2170 = vpop.f32.mrf.mxu0
        %v2171 = vadd.f32 %v1686, %v2170
        %2172 = vmatmul.f32.gmra.mxu0 %v1923
        %v2173 = vpop.f32.mrf.mxu0
        %v2174 = vadd.f32 %v1689, %v2173
        %2175 = vmatmul.f32.gmra.mxu0 %v1926
        %v2176 = vpop.f32.mrf.mxu0
        %v2177 = vadd.f32 %v1692, %v2176
        %2178 = vmatmul.f32.gmra.mxu0 %v1929
        %v2179 = vpop.f32.mrf.mxu0
        %v2180 = vadd.f32 %v1695, %v2179
        %2181 = vmatmul.f32.gmra.mxu0 %v1932
        %v2182 = vpop.f32.mrf.mxu0
        %v2183 = vadd.f32 %v1698, %v2182
        %2184 = vmatmul.f32.gmra.mxu0 %v1935
        %v2185 = vpop.f32.mrf.mxu0
        %v2186 = vadd.f32 %v1701, %v2185
        %2187 = vmatmul.f32.gmra.mxu0 %v1938
        %v2188 = vpop.f32.mrf.mxu0
        %v2189 = vadd.f32 %v1704, %v2188
        %2190 = vmatmul.f32.gmra.mxu0 %v1941
        %v2191 = vpop.f32.mrf.mxu0
        %v2192 = vadd.f32 %v1707, %v2191
        %2193 = vmatmul.f32.gmra.mxu0 %v1944
        %v2194 = vpop.f32.mrf.mxu0
        %v2195 = vadd.f32 %v1710, %v2194
        %2196 = vmatmul.f32.gmra.mxu0 %v1947
        %v2197 = vpop.f32.mrf.mxu0
        %v2198 = vadd.f32 %v1713, %v2197
        %2199 = vmatmul.f32.gmra.mxu0 %v1950
        %v2200 = vpop.f32.mrf.mxu0
        %v2201 = vadd.f32 %v1716, %v2200
        %2202 = vmatmul.f32.gmra.mxu0 %v1953
        %v2203 = vpop.f32.mrf.mxu0
        %v2204 = vadd.f32 %v1719, %v2203
        %2205 = vmatmul.f32.gmra.mxu0 %v1956
        %v2206 = vpop.f32.mrf.mxu0
        %v2207 = vadd.f32 %v1722, %v2206
        %2208 = vmatmul.f32.gmra.mxu0 %v1959
        %v2209 = vpop.f32.mrf.mxu0
        %v2210 = vadd.f32 %v1725, %v2209
        %2211 = vmatmul.f32.gmra.mxu0 %v1962
        %v2212 = vpop.f32.mrf.mxu0
        %v2213 = vadd.f32 %v1728, %v2212
        %2214 = vmatmul.f32.gmra.mxu0 %v1965
        %v2215 = vpop.f32.mrf.mxu0
        %v2216 = vadd.f32 %v1731, %v2215
        %2217 = vdwg.mxu0
        %v2218 = vld [vmem:[#allocation2 + $0x2] sm:$0xff]
        %v2219 = vld [vmem:[#allocation2 + $0xa] sm:$0xff]
        %v2220 = vld [vmem:[#allocation2 + $0x12] sm:$0xff]
        %v2221 = vld [vmem:[#allocation2 + $0x1a] sm:$0xff]
        %v2222 = vld [vmem:[#allocation2 + $0x22] sm:$0xff]
        %v2223 = vld [vmem:[#allocation2 + $0x2a] sm:$0xff]
        %v2224 = vld [vmem:[#allocation2 + $0x32] sm:$0xff]
        %v2225 = vld [vmem:[#allocation2 + $0x3a] sm:$0xff]
        %v2226 = vld [vmem:[#allocation2 + $0x42] sm:$0xff]
        %v2227 = vld [vmem:[#allocation2 + $0x4a] sm:$0xff]
        %v2228 = vld [vmem:[#allocation2 + $0x52] sm:$0xff]
        %v2229 = vld [vmem:[#allocation2 + $0x5a] sm:$0xff]
        %v2230 = vld [vmem:[#allocation2 + $0x62] sm:$0xff]
        %v2231 = vld [vmem:[#allocation2 + $0x6a] sm:$0xff]
        %v2232 = vld [vmem:[#allocation2 + $0x72] sm:$0xff]
        %v2233 = vld [vmem:[#allocation2 + $0x7a] sm:$0xff]
        %v2234 = vld [vmem:[#allocation2 + $0x82] sm:$0xff]
        %v2235 = vld [vmem:[#allocation2 + $0x8a] sm:$0xff]
        %v2236 = vld [vmem:[#allocation2 + $0x92] sm:$0xff]
        %v2237 = vld [vmem:[#allocation2 + $0x9a] sm:$0xff]
        %v2238 = vld [vmem:[#allocation2 + $0xa2] sm:$0xff]
        %v2239 = vld [vmem:[#allocation2 + $0xaa] sm:$0xff]
        %v2240 = vld [vmem:[#allocation2 + $0xb2] sm:$0xff]
        %v2241 = vld [vmem:[#allocation2 + $0xba] sm:$0xff]
        %v2242 = vld [vmem:[#allocation2 + $0xc2] sm:$0xff]
        %v2243 = vld [vmem:[#allocation2 + $0xca] sm:$0xff]
        %v2244 = vld [vmem:[#allocation2 + $0xd2] sm:$0xff]
        %v2245 = vld [vmem:[#allocation2 + $0xda] sm:$0xff]
        %v2246 = vld [vmem:[#allocation2 + $0xe2] sm:$0xff]
        %v2247 = vld [vmem:[#allocation2 + $0xea] sm:$0xff]
        %v2248 = vld [vmem:[#allocation2 + $0xf2] sm:$0xff]
        %v2249 = vld [vmem:[#allocation2 + $0xfa] sm:$0xff]
        %v2250 = vld [vmem:[#allocation2 + $0x102] sm:$0xff]
        %v2251 = vld [vmem:[#allocation2 + $0x10a] sm:$0xff]
        %v2252 = vld [vmem:[#allocation2 + $0x112] sm:$0xff]
        %v2253 = vld [vmem:[#allocation2 + $0x11a] sm:$0xff]
        %v2254 = vld [vmem:[#allocation2 + $0x122] sm:$0xff]
        %v2255 = vld [vmem:[#allocation2 + $0x12a] sm:$0xff]
        %v2256 = vld [vmem:[#allocation2 + $0x132] sm:$0xff]
        %v2257 = vld [vmem:[#allocation2 + $0x13a] sm:$0xff]
        %v2258 = vld [vmem:[#allocation2 + $0x142] sm:$0xff]
        %v2259 = vld [vmem:[#allocation2 + $0x14a] sm:$0xff]
        %v2260 = vld [vmem:[#allocation2 + $0x152] sm:$0xff]
        %v2261 = vld [vmem:[#allocation2 + $0x15a] sm:$0xff]
        %v2262 = vld [vmem:[#allocation2 + $0x162] sm:$0xff]
        %v2263 = vld [vmem:[#allocation2 + $0x16a] sm:$0xff]
        %v2264 = vld [vmem:[#allocation2 + $0x172] sm:$0xff]
        %v2265 = vld [vmem:[#allocation2 + $0x17a] sm:$0xff]
        %v2266 = vld [vmem:[#allocation2 + $0x182] sm:$0xff]
        %v2267 = vld [vmem:[#allocation2 + $0x18a] sm:$0xff]
        %v2268 = vld [vmem:[#allocation2 + $0x192] sm:$0xff]
        %v2269 = vld [vmem:[#allocation2 + $0x19a] sm:$0xff]
        %v2270 = vld [vmem:[#allocation2 + $0x1a2] sm:$0xff]
        %v2271 = vld [vmem:[#allocation2 + $0x1aa] sm:$0xff]
        %v2272 = vld [vmem:[#allocation2 + $0x1b2] sm:$0xff]
        %v2273 = vld [vmem:[#allocation2 + $0x1ba] sm:$0xff]
        %v2274 = vld [vmem:[#allocation2 + $0x1c2] sm:$0xff]
        %v2275 = vld [vmem:[#allocation2 + $0x1ca] sm:$0xff]
        %v2276 = vld [vmem:[#allocation2 + $0x1d2] sm:$0xff]
        %v2277 = vld [vmem:[#allocation2 + $0x1da] sm:$0xff]
        %v2278 = vld [vmem:[#allocation2 + $0x1e2] sm:$0xff]
        %v2279 = vld [vmem:[#allocation2 + $0x1ea] sm:$0xff]
        %v2280 = vld [vmem:[#allocation2 + $0x1f2] sm:$0xff]
        %v2281 = vld [vmem:[#allocation2 + $0x1fa] sm:$0xff]
        %v2282 = vld [vmem:[#allocation2 + $0x202] sm:$0xff]
        %v2283 = vld [vmem:[#allocation2 + $0x20a] sm:$0xff]
        %v2284 = vld [vmem:[#allocation2 + $0x212] sm:$0xff]
        %v2285 = vld [vmem:[#allocation2 + $0x21a] sm:$0xff]
        %v2286 = vld [vmem:[#allocation2 + $0x222] sm:$0xff]
        %v2287 = vld [vmem:[#allocation2 + $0x22a] sm:$0xff]
        %v2288 = vld [vmem:[#allocation2 + $0x232] sm:$0xff]
        %v2289 = vld [vmem:[#allocation2 + $0x23a] sm:$0xff]
        %v2290 = vld [vmem:[#allocation2 + $0x242] sm:$0xff]
        %v2291 = vld [vmem:[#allocation2 + $0x24a] sm:$0xff]
        %v2292 = vld [vmem:[#allocation2 + $0x252] sm:$0xff]
        %v2293 = vld [vmem:[#allocation2 + $0x25a] sm:$0xff]
        %v2294 = vld [vmem:[#allocation2 + $0x262] sm:$0xff]
        %v2295 = vld [vmem:[#allocation2 + $0x26a] sm:$0x3f]
        %s2296 = scalar_lea.vmem [#allocation8], 64
        %v2297 = vld [vmem:[%s2296] sm:$0xff]
        %v2298 = vld [vmem:[%s2296 + $0x8] sm:$0xff]
        %v2299 = vld [vmem:[%s2296 + $0x10] sm:$0xff]
        %v2300 = vld [vmem:[%s2296 + $0x18] sm:$0xff]
        %v2302 = vsel %vm996, %v2218, 0
        %v2305 = vsel %vm996, %v2219, 0
        %v2308 = vsel %vm996, %v2220, 0
        %v2311 = vsel %vm996, %v2221, 0
        %v2314 = vsel %vm996, %v2222, 0
        %v2317 = vsel %vm996, %v2223, 0
        %v2320 = vsel %vm996, %v2224, 0
        %v2323 = vsel %vm996, %v2225, 0
        %v2326 = vsel %vm996, %v2226, 0
        %v2329 = vsel %vm996, %v2227, 0
        %v2332 = vsel %vm996, %v2228, 0
        %v2335 = vsel %vm996, %v2229, 0
        %v2338 = vsel %vm996, %v2230, 0
        %v2341 = vsel %vm996, %v2231, 0
        %v2344 = vsel %vm996, %v2232, 0
        %v2347 = vsel %vm996, %v2233, 0
        %v2350 = vsel %vm996, %v2234, 0
        %v2353 = vsel %vm996, %v2235, 0
        %v2356 = vsel %vm996, %v2236, 0
        %v2359 = vsel %vm996, %v2237, 0
        %v2362 = vsel %vm996, %v2238, 0
        %v2365 = vsel %vm996, %v2239, 0
        %v2368 = vsel %vm996, %v2240, 0
        %v2371 = vsel %vm996, %v2241, 0
        %v2374 = vsel %vm996, %v2242, 0
        %v2377 = vsel %vm996, %v2243, 0
        %v2380 = vsel %vm996, %v2244, 0
        %v2383 = vsel %vm996, %v2245, 0
        %v2386 = vsel %vm996, %v2246, 0
        %v2389 = vsel %vm996, %v2247, 0
        %v2392 = vsel %vm996, %v2248, 0
        %v2395 = vsel %vm996, %v2249, 0
        %v2398 = vsel %vm996, %v2250, 0
        %v2401 = vsel %vm996, %v2251, 0
        %v2404 = vsel %vm996, %v2252, 0
        %v2407 = vsel %vm996, %v2253, 0
        %v2410 = vsel %vm996, %v2254, 0
        %v2413 = vsel %vm996, %v2255, 0
        %v2416 = vsel %vm996, %v2256, 0
        %v2419 = vsel %vm996, %v2257, 0
        %v2422 = vsel %vm996, %v2258, 0
        %v2425 = vsel %vm996, %v2259, 0
        %v2428 = vsel %vm996, %v2260, 0
        %v2431 = vsel %vm996, %v2261, 0
        %v2434 = vsel %vm996, %v2262, 0
        %v2437 = vsel %vm996, %v2263, 0
        %v2440 = vsel %vm996, %v2264, 0
        %v2443 = vsel %vm996, %v2265, 0
        %v2446 = vsel %vm996, %v2266, 0
        %v2449 = vsel %vm996, %v2267, 0
        %v2452 = vsel %vm996, %v2268, 0
        %v2455 = vsel %vm996, %v2269, 0
        %v2458 = vsel %vm996, %v2270, 0
        %v2461 = vsel %vm996, %v2271, 0
        %v2464 = vsel %vm996, %v2272, 0
        %v2467 = vsel %vm996, %v2273, 0
        %v2470 = vsel %vm996, %v2274, 0
        %v2473 = vsel %vm996, %v2275, 0
        %v2476 = vsel %vm996, %v2276, 0
        %v2479 = vsel %vm996, %v2277, 0
        %v2482 = vsel %vm996, %v2278, 0
        %v2485 = vsel %vm996, %v2279, 0
        %v2488 = vsel %vm996, %v2280, 0
        %v2491 = vsel %vm996, %v2281, 0
        %v2494 = vsel %vm996, %v2282, 0
        %v2497 = vsel %vm996, %v2283, 0
        %v2500 = vsel %vm996, %v2284, 0
        %v2503 = vsel %vm996, %v2285, 0
        %v2506 = vsel %vm996, %v2286, 0
        %v2509 = vsel %vm996, %v2287, 0
        %v2512 = vsel %vm996, %v2288, 0
        %v2515 = vsel %vm996, %v2289, 0
        %v2518 = vsel %vm996, %v2290, 0
        %v2521 = vsel %vm996, %v2291, 0
        %v2524 = vsel %vm996, %v2292, 0
        %v2527 = vsel %vm996, %v2293, 0
        %v2530 = vsel %vm996, %v2294, 0
        %v2533 = vsel %vm996, %v2295, 0
        %2535 = vmatpush.msra.mxu0 0.0
        %2536 = vmatpush.msra.mxu0 0.0
        %2537 = vmatpush.msra.mxu0 0.0
        %2538 = vmatpush.msra.mxu0 0.0
        %2539 = vmatpush.msra.mxu0 0.0
        %2540 = vmatpush.msra.mxu0 0.0
        %2541 = vmatpush.msra.mxu0 0.0
        %2542 = vmatpush.msra.mxu0 0.0
        %2543 = vmatpush.msra.mxu0 0.0
        %2544 = vmatpush.msra.mxu0 0.0
        %2545 = vmatpush.msra.mxu0 0.0
        %2546 = vmatpush.msra.mxu0 0.0
        %2547 = vmatpush.msra.mxu0 %v2300
        %2548 = vmatpush.msra.mxu0 %v2299
        %2549 = vmatpush.msra.mxu0 %v2298
        %2550 = vmatpush.msra.mxu0 %v2297
        %2551 = vmatmul.f32.gmra.mxu0 %v2302
        %v2552 = vpop.f32.mrf.mxu0
        %v2553 = vadd.f32 0.0, %v2552
        %2554 = vmatmul.f32.gmra.mxu0 %v2305
        %v2555 = vpop.f32.mrf.mxu0
        %v2556 = vadd.f32 0.0, %v2555
        %2557 = vmatmul.f32.gmra.mxu0 %v2308
        %v2558 = vpop.f32.mrf.mxu0
        %v2559 = vadd.f32 0.0, %v2558
        %2560 = vmatmul.f32.gmra.mxu0 %v2311
        %v2561 = vpop.f32.mrf.mxu0
        %v2562 = vadd.f32 0.0, %v2561
        %2563 = vmatmul.f32.gmra.mxu0 %v2314
        %v2564 = vpop.f32.mrf.mxu0
        %v2565 = vadd.f32 0.0, %v2564
        %2566 = vmatmul.f32.gmra.mxu0 %v2317
        %v2567 = vpop.f32.mrf.mxu0
        %v2568 = vadd.f32 0.0, %v2567
        %2569 = vmatmul.f32.gmra.mxu0 %v2320
        %v2570 = vpop.f32.mrf.mxu0
        %v2571 = vadd.f32 0.0, %v2570
        %2572 = vmatmul.f32.gmra.mxu0 %v2323
        %v2573 = vpop.f32.mrf.mxu0
        %v2574 = vadd.f32 0.0, %v2573
        %2575 = vmatmul.f32.gmra.mxu0 %v2326
        %v2576 = vpop.f32.mrf.mxu0
        %v2577 = vadd.f32 0.0, %v2576
        %2578 = vmatmul.f32.gmra.mxu0 %v2329
        %v2579 = vpop.f32.mrf.mxu0
        %v2580 = vadd.f32 0.0, %v2579
        %2581 = vmatmul.f32.gmra.mxu0 %v2332
        %v2582 = vpop.f32.mrf.mxu0
        %v2583 = vadd.f32 0.0, %v2582
        %2584 = vmatmul.f32.gmra.mxu0 %v2335
        %v2585 = vpop.f32.mrf.mxu0
        %v2586 = vadd.f32 0.0, %v2585
        %2587 = vmatmul.f32.gmra.mxu0 %v2338
        %v2588 = vpop.f32.mrf.mxu0
        %v2589 = vadd.f32 0.0, %v2588
        %2590 = vmatmul.f32.gmra.mxu0 %v2341
        %v2591 = vpop.f32.mrf.mxu0
        %v2592 = vadd.f32 0.0, %v2591
        %2593 = vmatmul.f32.gmra.mxu0 %v2344
        %v2594 = vpop.f32.mrf.mxu0
        %v2595 = vadd.f32 0.0, %v2594
        %2596 = vmatmul.f32.gmra.mxu0 %v2347
        %v2597 = vpop.f32.mrf.mxu0
        %v2598 = vadd.f32 0.0, %v2597
        %2599 = vmatmul.f32.gmra.mxu0 %v2350
        %v2600 = vpop.f32.mrf.mxu0
        %v2601 = vadd.f32 0.0, %v2600
        %2602 = vmatmul.f32.gmra.mxu0 %v2353
        %v2603 = vpop.f32.mrf.mxu0
        %v2604 = vadd.f32 0.0, %v2603
        %2605 = vmatmul.f32.gmra.mxu0 %v2356
        %v2606 = vpop.f32.mrf.mxu0
        %v2607 = vadd.f32 0.0, %v2606
        %2608 = vmatmul.f32.gmra.mxu0 %v2359
        %v2609 = vpop.f32.mrf.mxu0
        %v2610 = vadd.f32 0.0, %v2609
        %2611 = vmatmul.f32.gmra.mxu0 %v2362
        %v2612 = vpop.f32.mrf.mxu0
        %v2613 = vadd.f32 0.0, %v2612
        %2614 = vmatmul.f32.gmra.mxu0 %v2365
        %v2615 = vpop.f32.mrf.mxu0
        %v2616 = vadd.f32 0.0, %v2615
        %2617 = vmatmul.f32.gmra.mxu0 %v2368
        %v2618 = vpop.f32.mrf.mxu0
        %v2619 = vadd.f32 0.0, %v2618
        %2620 = vmatmul.f32.gmra.mxu0 %v2371
        %v2621 = vpop.f32.mrf.mxu0
        %v2622 = vadd.f32 0.0, %v2621
        %2623 = vmatmul.f32.gmra.mxu0 %v2374
        %v2624 = vpop.f32.mrf.mxu0
        %v2625 = vadd.f32 0.0, %v2624
        %2626 = vmatmul.f32.gmra.mxu0 %v2377
        %v2627 = vpop.f32.mrf.mxu0
        %v2628 = vadd.f32 0.0, %v2627
        %2629 = vmatmul.f32.gmra.mxu0 %v2380
        %v2630 = vpop.f32.mrf.mxu0
        %v2631 = vadd.f32 0.0, %v2630
        %2632 = vmatmul.f32.gmra.mxu0 %v2383
        %v2633 = vpop.f32.mrf.mxu0
        %v2634 = vadd.f32 0.0, %v2633
        %2635 = vmatmul.f32.gmra.mxu0 %v2386
        %v2636 = vpop.f32.mrf.mxu0
        %v2637 = vadd.f32 0.0, %v2636
        %2638 = vmatmul.f32.gmra.mxu0 %v2389
        %v2639 = vpop.f32.mrf.mxu0
        %v2640 = vadd.f32 0.0, %v2639
        %2641 = vmatmul.f32.gmra.mxu0 %v2392
        %v2642 = vpop.f32.mrf.mxu0
        %v2643 = vadd.f32 0.0, %v2642
        %2644 = vmatmul.f32.gmra.mxu0 %v2395
        %v2645 = vpop.f32.mrf.mxu0
        %v2646 = vadd.f32 0.0, %v2645
        %2647 = vmatmul.f32.gmra.mxu0 %v2398
        %v2648 = vpop.f32.mrf.mxu0
        %v2649 = vadd.f32 0.0, %v2648
        %2650 = vmatmul.f32.gmra.mxu0 %v2401
        %v2651 = vpop.f32.mrf.mxu0
        %v2652 = vadd.f32 0.0, %v2651
        %2653 = vmatmul.f32.gmra.mxu0 %v2404
        %v2654 = vpop.f32.mrf.mxu0
        %v2655 = vadd.f32 0.0, %v2654
        %2656 = vmatmul.f32.gmra.mxu0 %v2407
        %v2657 = vpop.f32.mrf.mxu0
        %v2658 = vadd.f32 0.0, %v2657
        %2659 = vmatmul.f32.gmra.mxu0 %v2410
        %v2660 = vpop.f32.mrf.mxu0
        %v2661 = vadd.f32 0.0, %v2660
        %2662 = vmatmul.f32.gmra.mxu0 %v2413
        %v2663 = vpop.f32.mrf.mxu0
        %v2664 = vadd.f32 0.0, %v2663
        %2665 = vmatmul.f32.gmra.mxu0 %v2416
        %v2666 = vpop.f32.mrf.mxu0
        %v2667 = vadd.f32 0.0, %v2666
        %2668 = vmatmul.f32.gmra.mxu0 %v2419
        %v2669 = vpop.f32.mrf.mxu0
        %v2670 = vadd.f32 0.0, %v2669
        %2671 = vmatmul.f32.gmra.mxu0 %v2422
        %v2672 = vpop.f32.mrf.mxu0
        %v2673 = vadd.f32 0.0, %v2672
        %2674 = vmatmul.f32.gmra.mxu0 %v2425
        %v2675 = vpop.f32.mrf.mxu0
        %v2676 = vadd.f32 0.0, %v2675
        %2677 = vmatmul.f32.gmra.mxu0 %v2428
        %v2678 = vpop.f32.mrf.mxu0
        %v2679 = vadd.f32 0.0, %v2678
        %2680 = vmatmul.f32.gmra.mxu0 %v2431
        %v2681 = vpop.f32.mrf.mxu0
        %v2682 = vadd.f32 0.0, %v2681
        %2683 = vmatmul.f32.gmra.mxu0 %v2434
        %v2684 = vpop.f32.mrf.mxu0
        %v2685 = vadd.f32 0.0, %v2684
        %2686 = vmatmul.f32.gmra.mxu0 %v2437
        %v2687 = vpop.f32.mrf.mxu0
        %v2688 = vadd.f32 0.0, %v2687
        %2689 = vmatmul.f32.gmra.mxu0 %v2440
        %v2690 = vpop.f32.mrf.mxu0
        %v2691 = vadd.f32 0.0, %v2690
        %2692 = vmatmul.f32.gmra.mxu0 %v2443
        %v2693 = vpop.f32.mrf.mxu0
        %v2694 = vadd.f32 0.0, %v2693
        %2695 = vmatmul.f32.gmra.mxu0 %v2446
        %v2696 = vpop.f32.mrf.mxu0
        %v2697 = vadd.f32 0.0, %v2696
        %2698 = vmatmul.f32.gmra.mxu0 %v2449
        %v2699 = vpop.f32.mrf.mxu0
        %v2700 = vadd.f32 0.0, %v2699
        %2701 = vmatmul.f32.gmra.mxu0 %v2452
        %v2702 = vpop.f32.mrf.mxu0
        %v2703 = vadd.f32 0.0, %v2702
        %2704 = vmatmul.f32.gmra.mxu0 %v2455
        %v2705 = vpop.f32.mrf.mxu0
        %v2706 = vadd.f32 0.0, %v2705
        %2707 = vmatmul.f32.gmra.mxu0 %v2458
        %v2708 = vpop.f32.mrf.mxu0
        %v2709 = vadd.f32 0.0, %v2708
        %2710 = vmatmul.f32.gmra.mxu0 %v2461
        %v2711 = vpop.f32.mrf.mxu0
        %v2712 = vadd.f32 0.0, %v2711
        %2713 = vmatmul.f32.gmra.mxu0 %v2464
        %v2714 = vpop.f32.mrf.mxu0
        %v2715 = vadd.f32 0.0, %v2714
        %2716 = vmatmul.f32.gmra.mxu0 %v2467
        %v2717 = vpop.f32.mrf.mxu0
        %v2718 = vadd.f32 0.0, %v2717
        %2719 = vmatmul.f32.gmra.mxu0 %v2470
        %v2720 = vpop.f32.mrf.mxu0
        %v2721 = vadd.f32 0.0, %v2720
        %2722 = vmatmul.f32.gmra.mxu0 %v2473
        %v2723 = vpop.f32.mrf.mxu0
        %v2724 = vadd.f32 0.0, %v2723
        %2725 = vmatmul.f32.gmra.mxu0 %v2476
        %v2726 = vpop.f32.mrf.mxu0
        %v2727 = vadd.f32 0.0, %v2726
        %2728 = vmatmul.f32.gmra.mxu0 %v2479
        %v2729 = vpop.f32.mrf.mxu0
        %v2730 = vadd.f32 0.0, %v2729
        %2731 = vmatmul.f32.gmra.mxu0 %v2482
        %v2732 = vpop.f32.mrf.mxu0
        %v2733 = vadd.f32 0.0, %v2732
        %2734 = vmatmul.f32.gmra.mxu0 %v2485
        %v2735 = vpop.f32.mrf.mxu0
        %v2736 = vadd.f32 0.0, %v2735
        %2737 = vmatmul.f32.gmra.mxu0 %v2488
        %v2738 = vpop.f32.mrf.mxu0
        %v2739 = vadd.f32 0.0, %v2738
        %2740 = vmatmul.f32.gmra.mxu0 %v2491
        %v2741 = vpop.f32.mrf.mxu0
        %v2742 = vadd.f32 0.0, %v2741
        %2743 = vmatmul.f32.gmra.mxu0 %v2494
        %v2744 = vpop.f32.mrf.mxu0
        %v2745 = vadd.f32 0.0, %v2744
        %2746 = vmatmul.f32.gmra.mxu0 %v2497
        %v2747 = vpop.f32.mrf.mxu0
        %v2748 = vadd.f32 0.0, %v2747
        %2749 = vmatmul.f32.gmra.mxu0 %v2500
        %v2750 = vpop.f32.mrf.mxu0
        %v2751 = vadd.f32 0.0, %v2750
        %2752 = vmatmul.f32.gmra.mxu0 %v2503
        %v2753 = vpop.f32.mrf.mxu0
        %v2754 = vadd.f32 0.0, %v2753
        %2755 = vmatmul.f32.gmra.mxu0 %v2506
        %v2756 = vpop.f32.mrf.mxu0
        %v2757 = vadd.f32 0.0, %v2756
        %2758 = vmatmul.f32.gmra.mxu0 %v2509
        %v2759 = vpop.f32.mrf.mxu0
        %v2760 = vadd.f32 0.0, %v2759
        %2761 = vmatmul.f32.gmra.mxu0 %v2512
        %v2762 = vpop.f32.mrf.mxu0
        %v2763 = vadd.f32 0.0, %v2762
        %2764 = vmatmul.f32.gmra.mxu0 %v2515
        %v2765 = vpop.f32.mrf.mxu0
        %v2766 = vadd.f32 0.0, %v2765
        %2767 = vmatmul.f32.gmra.mxu0 %v2518
        %v2768 = vpop.f32.mrf.mxu0
        %v2769 = vadd.f32 0.0, %v2768
        %2770 = vmatmul.f32.gmra.mxu0 %v2521
        %v2771 = vpop.f32.mrf.mxu0
        %v2772 = vadd.f32 0.0, %v2771
        %2773 = vmatmul.f32.gmra.mxu0 %v2524
        %v2774 = vpop.f32.mrf.mxu0
        %v2775 = vadd.f32 0.0, %v2774
        %2776 = vmatmul.f32.gmra.mxu0 %v2527
        %v2777 = vpop.f32.mrf.mxu0
        %v2778 = vadd.f32 0.0, %v2777
        %2779 = vmatmul.f32.gmra.mxu0 %v2530
        %v2780 = vpop.f32.mrf.mxu0
        %v2781 = vadd.f32 0.0, %v2780
        %2782 = vmatmul.f32.gmra.mxu0 %v2533
        %v2783 = vpop.f32.mrf.mxu0
        %v2784 = vadd.f32 0.0, %v2783
        %2785 = vdwg.mxu0
        %v2786 = vadd.f32 %v1985, %v2553
        %v2787 = vadd.f32 %v1988, %v2556
        %v2788 = vadd.f32 %v1991, %v2559
        %v2789 = vadd.f32 %v1994, %v2562
        %v2790 = vadd.f32 %v1997, %v2565
        %v2791 = vadd.f32 %v2000, %v2568
        %v2792 = vadd.f32 %v2003, %v2571
        %v2793 = vadd.f32 %v2006, %v2574
        %v2794 = vadd.f32 %v2009, %v2577
        %v2795 = vadd.f32 %v2012, %v2580
        %v2796 = vadd.f32 %v2015, %v2583
        %v2797 = vadd.f32 %v2018, %v2586
        %v2798 = vadd.f32 %v2021, %v2589
        %v2799 = vadd.f32 %v2024, %v2592
        %v2800 = vadd.f32 %v2027, %v2595
        %v2801 = vadd.f32 %v2030, %v2598
        %v2802 = vadd.f32 %v2033, %v2601
        %v2803 = vadd.f32 %v2036, %v2604
        %v2804 = vadd.f32 %v2039, %v2607
        %v2805 = vadd.f32 %v2042, %v2610
        %v2806 = vadd.f32 %v2045, %v2613
        %v2807 = vadd.f32 %v2048, %v2616
        %v2808 = vadd.f32 %v2051, %v2619
        %v2809 = vadd.f32 %v2054, %v2622
        %v2810 = vadd.f32 %v2057, %v2625
        %v2811 = vadd.f32 %v2060, %v2628
        %v2812 = vadd.f32 %v2063, %v2631
        %v2813 = vadd.f32 %v2066, %v2634
        %v2814 = vadd.f32 %v2069, %v2637
        %v2815 = vadd.f32 %v2072, %v2640
        %v2816 = vadd.f32 %v2075, %v2643
        %v2817 = vadd.f32 %v2078, %v2646
        %v2818 = vadd.f32 %v2081, %v2649
        %v2819 = vadd.f32 %v2084, %v2652
        %v2820 = vadd.f32 %v2087, %v2655
        %v2821 = vadd.f32 %v2090, %v2658
        %v2822 = vadd.f32 %v2093, %v2661
        %v2823 = vadd.f32 %v2096, %v2664
        %v2824 = vadd.f32 %v2099, %v2667
        %v2825 = vadd.f32 %v2102, %v2670
        %v2826 = vadd.f32 %v2105, %v2673
        %v2827 = vadd.f32 %v2108, %v2676
        %v2828 = vadd.f32 %v2111, %v2679
        %v2829 = vadd.f32 %v2114, %v2682
        %v2830 = vadd.f32 %v2117, %v2685
        %v2831 = vadd.f32 %v2120, %v2688
        %v2832 = vadd.f32 %v2123, %v2691
        %v2833 = vadd.f32 %v2126, %v2694
        %v2834 = vadd.f32 %v2129, %v2697
        %v2835 = vadd.f32 %v2132, %v2700
        %v2836 = vadd.f32 %v2135, %v2703
        %v2837 = vadd.f32 %v2138, %v2706
        %v2838 = vadd.f32 %v2141, %v2709
        %v2839 = vadd.f32 %v2144, %v2712
        %v2840 = vadd.f32 %v2147, %v2715
        %v2841 = vadd.f32 %v2150, %v2718
        %v2842 = vadd.f32 %v2153, %v2721
        %v2843 = vadd.f32 %v2156, %v2724
        %v2844 = vadd.f32 %v2159, %v2727
        %v2845 = vadd.f32 %v2162, %v2730
        %v2846 = vadd.f32 %v2165, %v2733
        %v2847 = vadd.f32 %v2168, %v2736
        %v2848 = vadd.f32 %v2171, %v2739
        %v2849 = vadd.f32 %v2174, %v2742
        %v2850 = vadd.f32 %v2177, %v2745
        %v2851 = vadd.f32 %v2180, %v2748
        %v2852 = vadd.f32 %v2183, %v2751
        %v2853 = vadd.f32 %v2186, %v2754
        %v2854 = vadd.f32 %v2189, %v2757
        %v2855 = vadd.f32 %v2192, %v2760
        %v2856 = vadd.f32 %v2195, %v2763
        %v2857 = vadd.f32 %v2198, %v2766
        %v2858 = vadd.f32 %v2201, %v2769
        %v2859 = vadd.f32 %v2204, %v2772
        %v2860 = vadd.f32 %v2207, %v2775
        %v2861 = vadd.f32 %v2210, %v2778
        %v2862 = vadd.f32 %v2213, %v2781
        %v2863 = vadd.f32 %v2216, %v2784
        %v2864 = vld [vmem:[#allocation2 + $0x1a] sm:$0xff]
        %v2865 = vld [vmem:[#allocation2 + $0x22] sm:$0xff]
        %v2866 = vld [vmem:[#allocation2 + $0x2a] sm:$0xff]
        %v2867 = vld [vmem:[#allocation2 + $0x32] sm:$0xff]
        %v2868 = vld [vmem:[#allocation2 + $0x3a] sm:$0xff]
        %v2869 = vld [vmem:[#allocation2 + $0x42] sm:$0xff]
        %v2870 = vld [vmem:[#allocation2 + $0x4a] sm:$0xff]
        %v2871 = vld [vmem:[#allocation2 + $0x52] sm:$0xff]
        %v2872 = vld [vmem:[#allocation2 + $0x5a] sm:$0xff]
        %v2873 = vld [vmem:[#allocation2 + $0x62] sm:$0xff]
        %v2874 = vld [vmem:[#allocation2 + $0x6a] sm:$0xff]
        %v2875 = vld [vmem:[#allocation2 + $0x72] sm:$0xff]
        %v2876 = vld [vmem:[#allocation2 + $0x7a] sm:$0xff]
        %v2877 = vld [vmem:[#allocation2 + $0x82] sm:$0xff]
        %v2878 = vld [vmem:[#allocation2 + $0x8a] sm:$0xff]
        %v2879 = vld [vmem:[#allocation2 + $0x92] sm:$0xff]
        %v2880 = vld [vmem:[#allocation2 + $0x9a] sm:$0xff]
        %v2881 = vld [vmem:[#allocation2 + $0xa2] sm:$0xff]
        %v2882 = vld [vmem:[#allocation2 + $0xaa] sm:$0xff]
        %v2883 = vld [vmem:[#allocation2 + $0xb2] sm:$0xff]
        %v2884 = vld [vmem:[#allocation2 + $0xba] sm:$0xff]
        %v2885 = vld [vmem:[#allocation2 + $0xc2] sm:$0xff]
        %v2886 = vld [vmem:[#allocation2 + $0xca] sm:$0xff]
        %v2887 = vld [vmem:[#allocation2 + $0xd2] sm:$0xff]
        %v2888 = vld [vmem:[#allocation2 + $0xda] sm:$0xff]
        %v2889 = vld [vmem:[#allocation2 + $0xe2] sm:$0xff]
        %v2890 = vld [vmem:[#allocation2 + $0xea] sm:$0xff]
        %v2891 = vld [vmem:[#allocation2 + $0xf2] sm:$0xff]
        %v2892 = vld [vmem:[#allocation2 + $0xfa] sm:$0xff]
        %v2893 = vld [vmem:[#allocation2 + $0x102] sm:$0xff]
        %v2894 = vld [vmem:[#allocation2 + $0x10a] sm:$0xff]
        %v2895 = vld [vmem:[#allocation2 + $0x112] sm:$0xff]
        %v2896 = vld [vmem:[#allocation2 + $0x11a] sm:$0xff]
        %v2897 = vld [vmem:[#allocation2 + $0x122] sm:$0xff]
        %v2898 = vld [vmem:[#allocation2 + $0x12a] sm:$0xff]
        %v2899 = vld [vmem:[#allocation2 + $0x132] sm:$0xff]
        %v2900 = vld [vmem:[#allocation2 + $0x13a] sm:$0xff]
        %v2901 = vld [vmem:[#allocation2 + $0x142] sm:$0xff]
        %v2902 = vld [vmem:[#allocation2 + $0x14a] sm:$0xff]
        %v2903 = vld [vmem:[#allocation2 + $0x152] sm:$0xff]
        %v2904 = vld [vmem:[#allocation2 + $0x15a] sm:$0xff]
        %v2905 = vld [vmem:[#allocation2 + $0x162] sm:$0xff]
        %v2906 = vld [vmem:[#allocation2 + $0x16a] sm:$0xff]
        %v2907 = vld [vmem:[#allocation2 + $0x172] sm:$0xff]
        %v2908 = vld [vmem:[#allocation2 + $0x17a] sm:$0xff]
        %v2909 = vld [vmem:[#allocation2 + $0x182] sm:$0xff]
        %v2910 = vld [vmem:[#allocation2 + $0x18a] sm:$0xff]
        %v2911 = vld [vmem:[#allocation2 + $0x192] sm:$0xff]
        %v2912 = vld [vmem:[#allocation2 + $0x19a] sm:$0xff]
        %v2913 = vld [vmem:[#allocation2 + $0x1a2] sm:$0xff]
        %v2914 = vld [vmem:[#allocation2 + $0x1aa] sm:$0xff]
        %v2915 = vld [vmem:[#allocation2 + $0x1b2] sm:$0xff]
        %v2916 = vld [vmem:[#allocation2 + $0x1ba] sm:$0xff]
        %v2917 = vld [vmem:[#allocation2 + $0x1c2] sm:$0xff]
        %v2918 = vld [vmem:[#allocation2 + $0x1ca] sm:$0xff]
        %v2919 = vld [vmem:[#allocation2 + $0x1d2] sm:$0xff]
        %v2920 = vld [vmem:[#allocation2 + $0x1da] sm:$0xff]
        %v2921 = vld [vmem:[#allocation2 + $0x1e2] sm:$0xff]
        %v2922 = vld [vmem:[#allocation2 + $0x1ea] sm:$0xff]
        %v2923 = vld [vmem:[#allocation2 + $0x1f2] sm:$0xff]
        %v2924 = vld [vmem:[#allocation2 + $0x1fa] sm:$0xff]
        %v2925 = vld [vmem:[#allocation2 + $0x202] sm:$0xff]
        %v2926 = vld [vmem:[#allocation2 + $0x20a] sm:$0xff]
        %v2927 = vld [vmem:[#allocation2 + $0x212] sm:$0xff]
        %v2928 = vld [vmem:[#allocation2 + $0x21a] sm:$0xff]
        %v2929 = vld [vmem:[#allocation2 + $0x222] sm:$0xff]
        %v2930 = vld [vmem:[#allocation2 + $0x22a] sm:$0xff]
        %v2931 = vld [vmem:[#allocation2 + $0x232] sm:$0xff]
        %v2932 = vld [vmem:[#allocation2 + $0x23a] sm:$0xff]
        %v2933 = vld [vmem:[#allocation2 + $0x242] sm:$0xff]
        %v2934 = vld [vmem:[#allocation2 + $0x24a] sm:$0xff]
        %v2935 = vld [vmem:[#allocation2 + $0x252] sm:$0xff]
        %v2936 = vld [vmem:[#allocation2 + $0x25a] sm:$0xff]
        %v2937 = vld [vmem:[#allocation2 + $0x262] sm:$0xff]
        %v2938 = vld [vmem:[#allocation2 + $0x26a] sm:$0xff]
        %v2939 = vld [vmem:[#allocation2 + $0x272] sm:$0xff]
        %v2940 = vld [vmem:[#allocation2 + $0x27a] sm:$0xff]
        %v2941 = vld [vmem:[#allocation2 + $0x282] sm:$0x3f]
        %s2942 = scalar_lea.vmem [#allocation8], 96
        %v2943 = vld [vmem:[%s2942] sm:$0xff]
        %v2944 = vld [vmem:[%s2942 + $0x8] sm:$0xff]
        %v2945 = vld [vmem:[%s2942 + $0x10] sm:$0xff]
        %v2946 = vld [vmem:[%s2942 + $0x18] sm:$0xff]
        %v2948 = vsel %vm996, %v2864, 0
        %v2951 = vsel %vm996, %v2865, 0
        %v2954 = vsel %vm996, %v2866, 0
        %v2957 = vsel %vm996, %v2867, 0
        %v2960 = vsel %vm996, %v2868, 0
        %v2963 = vsel %vm996, %v2869, 0
        %v2966 = vsel %vm996, %v2870, 0
        %v2969 = vsel %vm996, %v2871, 0
        %v2972 = vsel %vm996, %v2872, 0
        %v2975 = vsel %vm996, %v2873, 0
        %v2978 = vsel %vm996, %v2874, 0
        %v2981 = vsel %vm996, %v2875, 0
        %v2984 = vsel %vm996, %v2876, 0
        %v2987 = vsel %vm996, %v2877, 0
        %v2990 = vsel %vm996, %v2878, 0
        %v2993 = vsel %vm996, %v2879, 0
        %v2996 = vsel %vm996, %v2880, 0
        %v2999 = vsel %vm996, %v2881, 0
        %v3002 = vsel %vm996, %v2882, 0
        %v3005 = vsel %vm996, %v2883, 0
        %v3008 = vsel %vm996, %v2884, 0
        %v3011 = vsel %vm996, %v2885, 0
        %v3014 = vsel %vm996, %v2886, 0
        %v3017 = vsel %vm996, %v2887, 0
        %v3020 = vsel %vm996, %v2888, 0
        %v3023 = vsel %vm996, %v2889, 0
        %v3026 = vsel %vm996, %v2890, 0
        %v3029 = vsel %vm996, %v2891, 0
        %v3032 = vsel %vm996, %v2892, 0
        %v3035 = vsel %vm996, %v2893, 0
        %v3038 = vsel %vm996, %v2894, 0
        %v3041 = vsel %vm996, %v2895, 0
        %v3044 = vsel %vm996, %v2896, 0
        %v3047 = vsel %vm996, %v2897, 0
        %v3050 = vsel %vm996, %v2898, 0
        %v3053 = vsel %vm996, %v2899, 0
        %v3056 = vsel %vm996, %v2900, 0
        %v3059 = vsel %vm996, %v2901, 0
        %v3062 = vsel %vm996, %v2902, 0
        %v3065 = vsel %vm996, %v2903, 0
        %v3068 = vsel %vm996, %v2904, 0
        %v3071 = vsel %vm996, %v2905, 0
        %v3074 = vsel %vm996, %v2906, 0
        %v3077 = vsel %vm996, %v2907, 0
        %v3080 = vsel %vm996, %v2908, 0
        %v3083 = vsel %vm996, %v2909, 0
        %v3086 = vsel %vm996, %v2910, 0
        %v3089 = vsel %vm996, %v2911, 0
        %v3092 = vsel %vm996, %v2912, 0
        %v3095 = vsel %vm996, %v2913, 0
        %v3098 = vsel %vm996, %v2914, 0
        %v3101 = vsel %vm996, %v2915, 0
        %v3104 = vsel %vm996, %v2916, 0
        %v3107 = vsel %vm996, %v2917, 0
        %v3110 = vsel %vm996, %v2918, 0
        %v3113 = vsel %vm996, %v2919, 0
        %v3116 = vsel %vm996, %v2920, 0
        %v3119 = vsel %vm996, %v2921, 0
        %v3122 = vsel %vm996, %v2922, 0
        %v3125 = vsel %vm996, %v2923, 0
        %v3128 = vsel %vm996, %v2924, 0
        %v3131 = vsel %vm996, %v2925, 0
        %v3134 = vsel %vm996, %v2926, 0
        %v3137 = vsel %vm996, %v2927, 0
        %v3140 = vsel %vm996, %v2928, 0
        %v3143 = vsel %vm996, %v2929, 0
        %v3146 = vsel %vm996, %v2930, 0
        %v3149 = vsel %vm996, %v2931, 0
        %v3152 = vsel %vm996, %v2932, 0
        %v3155 = vsel %vm996, %v2933, 0
        %v3158 = vsel %vm996, %v2934, 0
        %v3161 = vsel %vm996, %v2935, 0
        %v3164 = vsel %vm996, %v2936, 0
        %v3167 = vsel %vm996, %v2937, 0
        %v3170 = vsel %vm996, %v2938, 0
        %v3173 = vsel %vm996, %v2939, 0
        %v3176 = vsel %vm996, %v2940, 0
        %v3179 = vsel %vm996, %v2941, 0
        %3181 = vmatpush.msra.mxu0 0.0
        %3182 = vmatpush.msra.mxu0 0.0
        %3183 = vmatpush.msra.mxu0 0.0
        %3184 = vmatpush.msra.mxu0 0.0
        %3185 = vmatpush.msra.mxu0 0.0
        %3186 = vmatpush.msra.mxu0 0.0
        %3187 = vmatpush.msra.mxu0 0.0
        %3188 = vmatpush.msra.mxu0 0.0
        %3189 = vmatpush.msra.mxu0 0.0
        %3190 = vmatpush.msra.mxu0 0.0
        %3191 = vmatpush.msra.mxu0 0.0
        %3192 = vmatpush.msra.mxu0 0.0
        %3193 = vmatpush.msra.mxu0 %v2946
        %3194 = vmatpush.msra.mxu0 %v2945
        %3195 = vmatpush.msra.mxu0 %v2944
        %3196 = vmatpush.msra.mxu0 %v2943
        %3197 = vmatmul.f32.gmra.mxu0 %v2948
        %v3198 = vpop.f32.mrf.mxu0
        %v3199 = vadd.f32 0.0, %v3198
        %3200 = vmatmul.f32.gmra.mxu0 %v2951
        %v3201 = vpop.f32.mrf.mxu0
        %v3202 = vadd.f32 0.0, %v3201
        %3203 = vmatmul.f32.gmra.mxu0 %v2954
        %v3204 = vpop.f32.mrf.mxu0
        %v3205 = vadd.f32 0.0, %v3204
        %3206 = vmatmul.f32.gmra.mxu0 %v2957
        %v3207 = vpop.f32.mrf.mxu0
        %v3208 = vadd.f32 0.0, %v3207
        %3209 = vmatmul.f32.gmra.mxu0 %v2960
        %v3210 = vpop.f32.mrf.mxu0
        %v3211 = vadd.f32 0.0, %v3210
        %3212 = vmatmul.f32.gmra.mxu0 %v2963
        %v3213 = vpop.f32.mrf.mxu0
        %v3214 = vadd.f32 0.0, %v3213
        %3215 = vmatmul.f32.gmra.mxu0 %v2966
        %v3216 = vpop.f32.mrf.mxu0
        %v3217 = vadd.f32 0.0, %v3216
        %3218 = vmatmul.f32.gmra.mxu0 %v2969
        %v3219 = vpop.f32.mrf.mxu0
        %v3220 = vadd.f32 0.0, %v3219
        %3221 = vmatmul.f32.gmra.mxu0 %v2972
        %v3222 = vpop.f32.mrf.mxu0
        %v3223 = vadd.f32 0.0, %v3222
        %3224 = vmatmul.f32.gmra.mxu0 %v2975
        %v3225 = vpop.f32.mrf.mxu0
        %v3226 = vadd.f32 0.0, %v3225
        %3227 = vmatmul.f32.gmra.mxu0 %v2978
        %v3228 = vpop.f32.mrf.mxu0
        %v3229 = vadd.f32 0.0, %v3228
        %3230 = vmatmul.f32.gmra.mxu0 %v2981
        %v3231 = vpop.f32.mrf.mxu0
        %v3232 = vadd.f32 0.0, %v3231
        %3233 = vmatmul.f32.gmra.mxu0 %v2984
        %v3234 = vpop.f32.mrf.mxu0
        %v3235 = vadd.f32 0.0, %v3234
        %3236 = vmatmul.f32.gmra.mxu0 %v2987
        %v3237 = vpop.f32.mrf.mxu0
        %v3238 = vadd.f32 0.0, %v3237
        %3239 = vmatmul.f32.gmra.mxu0 %v2990
        %v3240 = vpop.f32.mrf.mxu0
        %v3241 = vadd.f32 0.0, %v3240
        %3242 = vmatmul.f32.gmra.mxu0 %v2993
        %v3243 = vpop.f32.mrf.mxu0
        %v3244 = vadd.f32 0.0, %v3243
        %3245 = vmatmul.f32.gmra.mxu0 %v2996
        %v3246 = vpop.f32.mrf.mxu0
        %v3247 = vadd.f32 0.0, %v3246
        %3248 = vmatmul.f32.gmra.mxu0 %v2999
        %v3249 = vpop.f32.mrf.mxu0
        %v3250 = vadd.f32 0.0, %v3249
        %3251 = vmatmul.f32.gmra.mxu0 %v3002
        %v3252 = vpop.f32.mrf.mxu0
        %v3253 = vadd.f32 0.0, %v3252
        %3254 = vmatmul.f32.gmra.mxu0 %v3005
        %v3255 = vpop.f32.mrf.mxu0
        %v3256 = vadd.f32 0.0, %v3255
        %3257 = vmatmul.f32.gmra.mxu0 %v3008
        %v3258 = vpop.f32.mrf.mxu0
        %v3259 = vadd.f32 0.0, %v3258
        %3260 = vmatmul.f32.gmra.mxu0 %v3011
        %v3261 = vpop.f32.mrf.mxu0
        %v3262 = vadd.f32 0.0, %v3261
        %3263 = vmatmul.f32.gmra.mxu0 %v3014
        %v3264 = vpop.f32.mrf.mxu0
        %v3265 = vadd.f32 0.0, %v3264
        %3266 = vmatmul.f32.gmra.mxu0 %v3017
        %v3267 = vpop.f32.mrf.mxu0
        %v3268 = vadd.f32 0.0, %v3267
        %3269 = vmatmul.f32.gmra.mxu0 %v3020
        %v3270 = vpop.f32.mrf.mxu0
        %v3271 = vadd.f32 0.0, %v3270
        %3272 = vmatmul.f32.gmra.mxu0 %v3023
        %v3273 = vpop.f32.mrf.mxu0
        %v3274 = vadd.f32 0.0, %v3273
        %3275 = vmatmul.f32.gmra.mxu0 %v3026
        %v3276 = vpop.f32.mrf.mxu0
        %v3277 = vadd.f32 0.0, %v3276
        %3278 = vmatmul.f32.gmra.mxu0 %v3029
        %v3279 = vpop.f32.mrf.mxu0
        %v3280 = vadd.f32 0.0, %v3279
        %3281 = vmatmul.f32.gmra.mxu0 %v3032
        %v3282 = vpop.f32.mrf.mxu0
        %v3283 = vadd.f32 0.0, %v3282
        %3284 = vmatmul.f32.gmra.mxu0 %v3035
        %v3285 = vpop.f32.mrf.mxu0
        %v3286 = vadd.f32 0.0, %v3285
        %3287 = vmatmul.f32.gmra.mxu0 %v3038
        %v3288 = vpop.f32.mrf.mxu0
        %v3289 = vadd.f32 0.0, %v3288
        %3290 = vmatmul.f32.gmra.mxu0 %v3041
        %v3291 = vpop.f32.mrf.mxu0
        %v3292 = vadd.f32 0.0, %v3291
        %3293 = vmatmul.f32.gmra.mxu0 %v3044
        %v3294 = vpop.f32.mrf.mxu0
        %v3295 = vadd.f32 0.0, %v3294
        %3296 = vmatmul.f32.gmra.mxu0 %v3047
        %v3297 = vpop.f32.mrf.mxu0
        %v3298 = vadd.f32 0.0, %v3297
        %3299 = vmatmul.f32.gmra.mxu0 %v3050
        %v3300 = vpop.f32.mrf.mxu0
        %v3301 = vadd.f32 0.0, %v3300
        %3302 = vmatmul.f32.gmra.mxu0 %v3053
        %v3303 = vpop.f32.mrf.mxu0
        %v3304 = vadd.f32 0.0, %v3303
        %3305 = vmatmul.f32.gmra.mxu0 %v3056
        %v3306 = vpop.f32.mrf.mxu0
        %v3307 = vadd.f32 0.0, %v3306
        %3308 = vmatmul.f32.gmra.mxu0 %v3059
        %v3309 = vpop.f32.mrf.mxu0
        %v3310 = vadd.f32 0.0, %v3309
        %3311 = vmatmul.f32.gmra.mxu0 %v3062
        %v3312 = vpop.f32.mrf.mxu0
        %v3313 = vadd.f32 0.0, %v3312
        %3314 = vmatmul.f32.gmra.mxu0 %v3065
        %v3315 = vpop.f32.mrf.mxu0
        %v3316 = vadd.f32 0.0, %v3315
        %3317 = vmatmul.f32.gmra.mxu0 %v3068
        %v3318 = vpop.f32.mrf.mxu0
        %v3319 = vadd.f32 0.0, %v3318
        %3320 = vmatmul.f32.gmra.mxu0 %v3071
        %v3321 = vpop.f32.mrf.mxu0
        %v3322 = vadd.f32 0.0, %v3321
        %3323 = vmatmul.f32.gmra.mxu0 %v3074
        %v3324 = vpop.f32.mrf.mxu0
        %v3325 = vadd.f32 0.0, %v3324
        %3326 = vmatmul.f32.gmra.mxu0 %v3077
        %v3327 = vpop.f32.mrf.mxu0
        %v3328 = vadd.f32 0.0, %v3327
        %3329 = vmatmul.f32.gmra.mxu0 %v3080
        %v3330 = vpop.f32.mrf.mxu0
        %v3331 = vadd.f32 0.0, %v3330
        %3332 = vmatmul.f32.gmra.mxu0 %v3083
        %v3333 = vpop.f32.mrf.mxu0
        %v3334 = vadd.f32 0.0, %v3333
        %3335 = vmatmul.f32.gmra.mxu0 %v3086
        %v3336 = vpop.f32.mrf.mxu0
        %v3337 = vadd.f32 0.0, %v3336
        %3338 = vmatmul.f32.gmra.mxu0 %v3089
        %v3339 = vpop.f32.mrf.mxu0
        %v3340 = vadd.f32 0.0, %v3339
        %3341 = vmatmul.f32.gmra.mxu0 %v3092
        %v3342 = vpop.f32.mrf.mxu0
        %v3343 = vadd.f32 0.0, %v3342
        %3344 = vmatmul.f32.gmra.mxu0 %v3095
        %v3345 = vpop.f32.mrf.mxu0
        %v3346 = vadd.f32 0.0, %v3345
        %3347 = vmatmul.f32.gmra.mxu0 %v3098
        %v3348 = vpop.f32.mrf.mxu0
        %v3349 = vadd.f32 0.0, %v3348
        %3350 = vmatmul.f32.gmra.mxu0 %v3101
        %v3351 = vpop.f32.mrf.mxu0
        %v3352 = vadd.f32 0.0, %v3351
        %3353 = vmatmul.f32.gmra.mxu0 %v3104
        %v3354 = vpop.f32.mrf.mxu0
        %v3355 = vadd.f32 0.0, %v3354
        %3356 = vmatmul.f32.gmra.mxu0 %v3107
        %v3357 = vpop.f32.mrf.mxu0
        %v3358 = vadd.f32 0.0, %v3357
        %3359 = vmatmul.f32.gmra.mxu0 %v3110
        %v3360 = vpop.f32.mrf.mxu0
        %v3361 = vadd.f32 0.0, %v3360
        %3362 = vmatmul.f32.gmra.mxu0 %v3113
        %v3363 = vpop.f32.mrf.mxu0
        %v3364 = vadd.f32 0.0, %v3363
        %3365 = vmatmul.f32.gmra.mxu0 %v3116
        %v3366 = vpop.f32.mrf.mxu0
        %v3367 = vadd.f32 0.0, %v3366
        %3368 = vmatmul.f32.gmra.mxu0 %v3119
        %v3369 = vpop.f32.mrf.mxu0
        %v3370 = vadd.f32 0.0, %v3369
        %3371 = vmatmul.f32.gmra.mxu0 %v3122
        %v3372 = vpop.f32.mrf.mxu0
        %v3373 = vadd.f32 0.0, %v3372
        %3374 = vmatmul.f32.gmra.mxu0 %v3125
        %v3375 = vpop.f32.mrf.mxu0
        %v3376 = vadd.f32 0.0, %v3375
        %3377 = vmatmul.f32.gmra.mxu0 %v3128
        %v3378 = vpop.f32.mrf.mxu0
        %v3379 = vadd.f32 0.0, %v3378
        %3380 = vmatmul.f32.gmra.mxu0 %v3131
        %v3381 = vpop.f32.mrf.mxu0
        %v3382 = vadd.f32 0.0, %v3381
        %3383 = vmatmul.f32.gmra.mxu0 %v3134
        %v3384 = vpop.f32.mrf.mxu0
        %v3385 = vadd.f32 0.0, %v3384
        %3386 = vmatmul.f32.gmra.mxu0 %v3137
        %v3387 = vpop.f32.mrf.mxu0
        %v3388 = vadd.f32 0.0, %v3387
        %3389 = vmatmul.f32.gmra.mxu0 %v3140
        %v3390 = vpop.f32.mrf.mxu0
        %v3391 = vadd.f32 0.0, %v3390
        %3392 = vmatmul.f32.gmra.mxu0 %v3143
        %v3393 = vpop.f32.mrf.mxu0
        %v3394 = vadd.f32 0.0, %v3393
        %3395 = vmatmul.f32.gmra.mxu0 %v3146
        %v3396 = vpop.f32.mrf.mxu0
        %v3397 = vadd.f32 0.0, %v3396
        %3398 = vmatmul.f32.gmra.mxu0 %v3149
        %v3399 = vpop.f32.mrf.mxu0
        %v3400 = vadd.f32 0.0, %v3399
        %3401 = vmatmul.f32.gmra.mxu0 %v3152
        %v3402 = vpop.f32.mrf.mxu0
        %v3403 = vadd.f32 0.0, %v3402
        %3404 = vmatmul.f32.gmra.mxu0 %v3155
        %v3405 = vpop.f32.mrf.mxu0
        %v3406 = vadd.f32 0.0, %v3405
        %3407 = vmatmul.f32.gmra.mxu0 %v3158
        %v3408 = vpop.f32.mrf.mxu0
        %v3409 = vadd.f32 0.0, %v3408
        %3410 = vmatmul.f32.gmra.mxu0 %v3161
        %v3411 = vpop.f32.mrf.mxu0
        %v3412 = vadd.f32 0.0, %v3411
        %3413 = vmatmul.f32.gmra.mxu0 %v3164
        %v3414 = vpop.f32.mrf.mxu0
        %v3415 = vadd.f32 0.0, %v3414
        %3416 = vmatmul.f32.gmra.mxu0 %v3167
        %v3417 = vpop.f32.mrf.mxu0
        %v3418 = vadd.f32 0.0, %v3417
        %3419 = vmatmul.f32.gmra.mxu0 %v3170
        %v3420 = vpop.f32.mrf.mxu0
        %v3421 = vadd.f32 0.0, %v3420
        %3422 = vmatmul.f32.gmra.mxu0 %v3173
        %v3423 = vpop.f32.mrf.mxu0
        %v3424 = vadd.f32 0.0, %v3423
        %3425 = vmatmul.f32.gmra.mxu0 %v3176
        %v3426 = vpop.f32.mrf.mxu0
        %v3427 = vadd.f32 0.0, %v3426
        %3428 = vmatmul.f32.gmra.mxu0 %v3179
        %v3429 = vpop.f32.mrf.mxu0
        %v3430 = vadd.f32 0.0, %v3429
        %3431 = vdwg.mxu0
        %v3432 = vadd.f32 %v2786, %v3199
        %v3433 = vadd.f32 %v2787, %v3202
        %v3434 = vadd.f32 %v2788, %v3205
        %v3435 = vadd.f32 %v2789, %v3208
        %v3436 = vadd.f32 %v2790, %v3211
        %v3437 = vadd.f32 %v2791, %v3214
        %v3438 = vadd.f32 %v2792, %v3217
        %v3439 = vadd.f32 %v2793, %v3220
        %v3440 = vadd.f32 %v2794, %v3223
        %v3441 = vadd.f32 %v2795, %v3226
        %v3442 = vadd.f32 %v2796, %v3229
        %v3443 = vadd.f32 %v2797, %v3232
        %v3444 = vadd.f32 %v2798, %v3235
        %v3445 = vadd.f32 %v2799, %v3238
        %v3446 = vadd.f32 %v2800, %v3241
        %v3447 = vadd.f32 %v2801, %v3244
        %v3448 = vadd.f32 %v2802, %v3247
        %v3449 = vadd.f32 %v2803, %v3250
        %v3450 = vadd.f32 %v2804, %v3253
        %v3451 = vadd.f32 %v2805, %v3256
        %v3452 = vadd.f32 %v2806, %v3259
        %v3453 = vadd.f32 %v2807, %v3262
        %v3454 = vadd.f32 %v2808, %v3265
        %v3455 = vadd.f32 %v2809, %v3268
        %v3456 = vadd.f32 %v2810, %v3271
        %v3457 = vadd.f32 %v2811, %v3274
        %v3458 = vadd.f32 %v2812, %v3277
        %v3459 = vadd.f32 %v2813, %v3280
        %v3460 = vadd.f32 %v2814, %v3283
        %v3461 = vadd.f32 %v2815, %v3286
        %v3462 = vadd.f32 %v2816, %v3289
        %v3463 = vadd.f32 %v2817, %v3292
        %v3464 = vadd.f32 %v2818, %v3295
        %v3465 = vadd.f32 %v2819, %v3298
        %v3466 = vadd.f32 %v2820, %v3301
        %v3467 = vadd.f32 %v2821, %v3304
        %v3468 = vadd.f32 %v2822, %v3307
        %v3469 = vadd.f32 %v2823, %v3310
        %v3470 = vadd.f32 %v2824, %v3313
        %v3471 = vadd.f32 %v2825, %v3316
        %v3472 = vadd.f32 %v2826, %v3319
        %v3473 = vadd.f32 %v2827, %v3322
        %v3474 = vadd.f32 %v2828, %v3325
        %v3475 = vadd.f32 %v2829, %v3328
        %v3476 = vadd.f32 %v2830, %v3331
        %v3477 = vadd.f32 %v2831, %v3334
        %v3478 = vadd.f32 %v2832, %v3337
        %v3479 = vadd.f32 %v2833, %v3340
        %v3480 = vadd.f32 %v2834, %v3343
        %v3481 = vadd.f32 %v2835, %v3346
        %v3482 = vadd.f32 %v2836, %v3349
        %v3483 = vadd.f32 %v2837, %v3352
        %v3484 = vadd.f32 %v2838, %v3355
        %v3485 = vadd.f32 %v2839, %v3358
        %v3486 = vadd.f32 %v2840, %v3361
        %v3487 = vadd.f32 %v2841, %v3364
        %v3488 = vadd.f32 %v2842, %v3367
        %v3489 = vadd.f32 %v2843, %v3370
        %v3490 = vadd.f32 %v2844, %v3373
        %v3491 = vadd.f32 %v2845, %v3376
        %v3492 = vadd.f32 %v2846, %v3379
        %v3493 = vadd.f32 %v2847, %v3382
        %v3494 = vadd.f32 %v2848, %v3385
        %v3495 = vadd.f32 %v2849, %v3388
        %v3496 = vadd.f32 %v2850, %v3391
        %v3497 = vadd.f32 %v2851, %v3394
        %v3498 = vadd.f32 %v2852, %v3397
        %v3499 = vadd.f32 %v2853, %v3400
        %v3500 = vadd.f32 %v2854, %v3403
        %v3501 = vadd.f32 %v2855, %v3406
        %v3502 = vadd.f32 %v2856, %v3409
        %v3503 = vadd.f32 %v2857, %v3412
        %v3504 = vadd.f32 %v2858, %v3415
        %v3505 = vadd.f32 %v2859, %v3418
        %v3506 = vadd.f32 %v2860, %v3421
        %v3507 = vadd.f32 %v2861, %v3424
        %v3508 = vadd.f32 %v2862, %v3427
        %v3509 = vadd.f32 %v2863, %v3430
        %v3510 = vld [vmem:[#allocation2 + $0x1b] sm:$0xff]
        %v3511 = vld [vmem:[#allocation2 + $0x23] sm:$0xff]
        %v3512 = vld [vmem:[#allocation2 + $0x2b] sm:$0xff]
        %v3513 = vld [vmem:[#allocation2 + $0x33] sm:$0xff]
        %v3514 = vld [vmem:[#allocation2 + $0x3b] sm:$0xff]
        %v3515 = vld [vmem:[#allocation2 + $0x43] sm:$0xff]
        %v3516 = vld [vmem:[#allocation2 + $0x4b] sm:$0xff]
        %v3517 = vld [vmem:[#allocation2 + $0x53] sm:$0xff]
        %v3518 = vld [vmem:[#allocation2 + $0x5b] sm:$0xff]
        %v3519 = vld [vmem:[#allocation2 + $0x63] sm:$0xff]
        %v3520 = vld [vmem:[#allocation2 + $0x6b] sm:$0xff]
        %v3521 = vld [vmem:[#allocation2 + $0x73] sm:$0xff]
        %v3522 = vld [vmem:[#allocation2 + $0x7b] sm:$0xff]
        %v3523 = vld [vmem:[#allocation2 + $0x83] sm:$0xff]
        %v3524 = vld [vmem:[#allocation2 + $0x8b] sm:$0xff]
        %v3525 = vld [vmem:[#allocation2 + $0x93] sm:$0xff]
        %v3526 = vld [vmem:[#allocation2 + $0x9b] sm:$0xff]
        %v3527 = vld [vmem:[#allocation2 + $0xa3] sm:$0xff]
        %v3528 = vld [vmem:[#allocation2 + $0xab] sm:$0xff]
        %v3529 = vld [vmem:[#allocation2 + $0xb3] sm:$0xff]
        %v3530 = vld [vmem:[#allocation2 + $0xbb] sm:$0xff]
        %v3531 = vld [vmem:[#allocation2 + $0xc3] sm:$0xff]
        %v3532 = vld [vmem:[#allocation2 + $0xcb] sm:$0xff]
        %v3533 = vld [vmem:[#allocation2 + $0xd3] sm:$0xff]
        %v3534 = vld [vmem:[#allocation2 + $0xdb] sm:$0xff]
        %v3535 = vld [vmem:[#allocation2 + $0xe3] sm:$0xff]
        %v3536 = vld [vmem:[#allocation2 + $0xeb] sm:$0xff]
        %v3537 = vld [vmem:[#allocation2 + $0xf3] sm:$0xff]
        %v3538 = vld [vmem:[#allocation2 + $0xfb] sm:$0xff]
        %v3539 = vld [vmem:[#allocation2 + $0x103] sm:$0xff]
        %v3540 = vld [vmem:[#allocation2 + $0x10b] sm:$0xff]
        %v3541 = vld [vmem:[#allocation2 + $0x113] sm:$0xff]
        %v3542 = vld [vmem:[#allocation2 + $0x11b] sm:$0xff]
        %v3543 = vld [vmem:[#allocation2 + $0x123] sm:$0xff]
        %v3544 = vld [vmem:[#allocation2 + $0x12b] sm:$0xff]
        %v3545 = vld [vmem:[#allocation2 + $0x133] sm:$0xff]
        %v3546 = vld [vmem:[#allocation2 + $0x13b] sm:$0xff]
        %v3547 = vld [vmem:[#allocation2 + $0x143] sm:$0xff]
        %v3548 = vld [vmem:[#allocation2 + $0x14b] sm:$0xff]
        %v3549 = vld [vmem:[#allocation2 + $0x153] sm:$0xff]
        %v3550 = vld [vmem:[#allocation2 + $0x15b] sm:$0xff]
        %v3551 = vld [vmem:[#allocation2 + $0x163] sm:$0xff]
        %v3552 = vld [vmem:[#allocation2 + $0x16b] sm:$0xff]
        %v3553 = vld [vmem:[#allocation2 + $0x173] sm:$0xff]
        %v3554 = vld [vmem:[#allocation2 + $0x17b] sm:$0xff]
        %v3555 = vld [vmem:[#allocation2 + $0x183] sm:$0xff]
        %v3556 = vld [vmem:[#allocation2 + $0x18b] sm:$0xff]
        %v3557 = vld [vmem:[#allocation2 + $0x193] sm:$0xff]
        %v3558 = vld [vmem:[#allocation2 + $0x19b] sm:$0xff]
        %v3559 = vld [vmem:[#allocation2 + $0x1a3] sm:$0xff]
        %v3560 = vld [vmem:[#allocation2 + $0x1ab] sm:$0xff]
        %v3561 = vld [vmem:[#allocation2 + $0x1b3] sm:$0xff]
        %v3562 = vld [vmem:[#allocation2 + $0x1bb] sm:$0xff]
        %v3563 = vld [vmem:[#allocation2 + $0x1c3] sm:$0xff]
        %v3564 = vld [vmem:[#allocation2 + $0x1cb] sm:$0xff]
        %v3565 = vld [vmem:[#allocation2 + $0x1d3] sm:$0xff]
        %v3566 = vld [vmem:[#allocation2 + $0x1db] sm:$0xff]
        %v3567 = vld [vmem:[#allocation2 + $0x1e3] sm:$0xff]
        %v3568 = vld [vmem:[#allocation2 + $0x1eb] sm:$0xff]
        %v3569 = vld [vmem:[#allocation2 + $0x1f3] sm:$0xff]
        %v3570 = vld [vmem:[#allocation2 + $0x1fb] sm:$0xff]
        %v3571 = vld [vmem:[#allocation2 + $0x203] sm:$0xff]
        %v3572 = vld [vmem:[#allocation2 + $0x20b] sm:$0xff]
        %v3573 = vld [vmem:[#allocation2 + $0x213] sm:$0xff]
        %v3574 = vld [vmem:[#allocation2 + $0x21b] sm:$0xff]
        %v3575 = vld [vmem:[#allocation2 + $0x223] sm:$0xff]
        %v3576 = vld [vmem:[#allocation2 + $0x22b] sm:$0xff]
        %v3577 = vld [vmem:[#allocation2 + $0x233] sm:$0xff]
        %v3578 = vld [vmem:[#allocation2 + $0x23b] sm:$0xff]
        %v3579 = vld [vmem:[#allocation2 + $0x243] sm:$0xff]
        %v3580 = vld [vmem:[#allocation2 + $0x24b] sm:$0xff]
        %v3581 = vld [vmem:[#allocation2 + $0x253] sm:$0xff]
        %v3582 = vld [vmem:[#allocation2 + $0x25b] sm:$0xff]
        %v3583 = vld [vmem:[#allocation2 + $0x263] sm:$0xff]
        %v3584 = vld [vmem:[#allocation2 + $0x26b] sm:$0xff]
        %v3585 = vld [vmem:[#allocation2 + $0x273] sm:$0xff]
        %v3586 = vld [vmem:[#allocation2 + $0x27b] sm:$0xff]
        %v3587 = vld [vmem:[#allocation2 + $0x283] sm:$0x3f]
        %s3588 = scalar_lea.vmem [#allocation8], 128
        %v3589 = vld [vmem:[%s3588] sm:$0xff]
        %v3590 = vld [vmem:[%s3588 + $0x8] sm:$0xff]
        %v3591 = vld [vmem:[%s3588 + $0x10] sm:$0xff]
        %v3592 = vld [vmem:[%s3588 + $0x18] sm:$0xff]
        %v3594 = vsel %vm996, %v3510, 0
        %v3597 = vsel %vm996, %v3511, 0
        %v3600 = vsel %vm996, %v3512, 0
        %v3603 = vsel %vm996, %v3513, 0
        %v3606 = vsel %vm996, %v3514, 0
        %v3609 = vsel %vm996, %v3515, 0
        %v3612 = vsel %vm996, %v3516, 0
        %v3615 = vsel %vm996, %v3517, 0
        %v3618 = vsel %vm996, %v3518, 0
        %v3621 = vsel %vm996, %v3519, 0
        %v3624 = vsel %vm996, %v3520, 0
        %v3627 = vsel %vm996, %v3521, 0
        %v3630 = vsel %vm996, %v3522, 0
        %v3633 = vsel %vm996, %v3523, 0
        %v3636 = vsel %vm996, %v3524, 0
        %v3639 = vsel %vm996, %v3525, 0
        %v3642 = vsel %vm996, %v3526, 0
        %v3645 = vsel %vm996, %v3527, 0
        %v3648 = vsel %vm996, %v3528, 0
        %v3651 = vsel %vm996, %v3529, 0
        %v3654 = vsel %vm996, %v3530, 0
        %v3657 = vsel %vm996, %v3531, 0
        %v3660 = vsel %vm996, %v3532, 0
        %v3663 = vsel %vm996, %v3533, 0
        %v3666 = vsel %vm996, %v3534, 0
        %v3669 = vsel %vm996, %v3535, 0
        %v3672 = vsel %vm996, %v3536, 0
        %v3675 = vsel %vm996, %v3537, 0
        %v3678 = vsel %vm996, %v3538, 0
        %v3681 = vsel %vm996, %v3539, 0
        %v3684 = vsel %vm996, %v3540, 0
        %v3687 = vsel %vm996, %v3541, 0
        %v3690 = vsel %vm996, %v3542, 0
        %v3693 = vsel %vm996, %v3543, 0
        %v3696 = vsel %vm996, %v3544, 0
        %v3699 = vsel %vm996, %v3545, 0
        %v3702 = vsel %vm996, %v3546, 0
        %v3705 = vsel %vm996, %v3547, 0
        %v3708 = vsel %vm996, %v3548, 0
        %v3711 = vsel %vm996, %v3549, 0
        %v3714 = vsel %vm996, %v3550, 0
        %v3717 = vsel %vm996, %v3551, 0
        %v3720 = vsel %vm996, %v3552, 0
        %v3723 = vsel %vm996, %v3553, 0
        %v3726 = vsel %vm996, %v3554, 0
        %v3729 = vsel %vm996, %v3555, 0
        %v3732 = vsel %vm996, %v3556, 0
        %v3735 = vsel %vm996, %v3557, 0
        %v3738 = vsel %vm996, %v3558, 0
        %v3741 = vsel %vm996, %v3559, 0
        %v3744 = vsel %vm996, %v3560, 0
        %v3747 = vsel %vm996, %v3561, 0
        %v3750 = vsel %vm996, %v3562, 0
        %v3753 = vsel %vm996, %v3563, 0
        %v3756 = vsel %vm996, %v3564, 0
        %v3759 = vsel %vm996, %v3565, 0
        %v3762 = vsel %vm996, %v3566, 0
        %v3765 = vsel %vm996, %v3567, 0
        %v3768 = vsel %vm996, %v3568, 0
        %v3771 = vsel %vm996, %v3569, 0
        %v3774 = vsel %vm996, %v3570, 0
        %v3777 = vsel %vm996, %v3571, 0
        %v3780 = vsel %vm996, %v3572, 0
        %v3783 = vsel %vm996, %v3573, 0
        %v3786 = vsel %vm996, %v3574, 0
        %v3789 = vsel %vm996, %v3575, 0
        %v3792 = vsel %vm996, %v3576, 0
        %v3795 = vsel %vm996, %v3577, 0
        %v3798 = vsel %vm996, %v3578, 0
        %v3801 = vsel %vm996, %v3579, 0
        %v3804 = vsel %vm996, %v3580, 0
        %v3807 = vsel %vm996, %v3581, 0
        %v3810 = vsel %vm996, %v3582, 0
        %v3813 = vsel %vm996, %v3583, 0
        %v3816 = vsel %vm996, %v3584, 0
        %v3819 = vsel %vm996, %v3585, 0
        %v3822 = vsel %vm996, %v3586, 0
        %v3825 = vsel %vm996, %v3587, 0
        %3827 = vmatpush.msra.mxu0 0.0
        %3828 = vmatpush.msra.mxu0 0.0
        %3829 = vmatpush.msra.mxu0 0.0
        %3830 = vmatpush.msra.mxu0 0.0
        %3831 = vmatpush.msra.mxu0 0.0
        %3832 = vmatpush.msra.mxu0 0.0
        %3833 = vmatpush.msra.mxu0 0.0
        %3834 = vmatpush.msra.mxu0 0.0
        %3835 = vmatpush.msra.mxu0 0.0
        %3836 = vmatpush.msra.mxu0 0.0
        %3837 = vmatpush.msra.mxu0 0.0
        %3838 = vmatpush.msra.mxu0 0.0
        %3839 = vmatpush.msra.mxu0 %v3592
        %3840 = vmatpush.msra.mxu0 %v3591
        %3841 = vmatpush.msra.mxu0 %v3590
        %3842 = vmatpush.msra.mxu0 %v3589
        %3843 = vmatmul.f32.gmra.mxu0 %v3594
        %v3844 = vpop.f32.mrf.mxu0
        %v3845 = vadd.f32 0.0, %v3844
        %3846 = vmatmul.f32.gmra.mxu0 %v3597
        %v3847 = vpop.f32.mrf.mxu0
        %v3848 = vadd.f32 0.0, %v3847
        %3849 = vmatmul.f32.gmra.mxu0 %v3600
        %v3850 = vpop.f32.mrf.mxu0
        %v3851 = vadd.f32 0.0, %v3850
        %3852 = vmatmul.f32.gmra.mxu0 %v3603
        %v3853 = vpop.f32.mrf.mxu0
        %v3854 = vadd.f32 0.0, %v3853
        %3855 = vmatmul.f32.gmra.mxu0 %v3606
        %v3856 = vpop.f32.mrf.mxu0
        %v3857 = vadd.f32 0.0, %v3856
        %3858 = vmatmul.f32.gmra.mxu0 %v3609
        %v3859 = vpop.f32.mrf.mxu0
        %v3860 = vadd.f32 0.0, %v3859
        %3861 = vmatmul.f32.gmra.mxu0 %v3612
        %v3862 = vpop.f32.mrf.mxu0
        %v3863 = vadd.f32 0.0, %v3862
        %3864 = vmatmul.f32.gmra.mxu0 %v3615
        %v3865 = vpop.f32.mrf.mxu0
        %v3866 = vadd.f32 0.0, %v3865
        %3867 = vmatmul.f32.gmra.mxu0 %v3618
        %v3868 = vpop.f32.mrf.mxu0
        %v3869 = vadd.f32 0.0, %v3868
        %3870 = vmatmul.f32.gmra.mxu0 %v3621
        %v3871 = vpop.f32.mrf.mxu0
        %v3872 = vadd.f32 0.0, %v3871
        %3873 = vmatmul.f32.gmra.mxu0 %v3624
        %v3874 = vpop.f32.mrf.mxu0
        %v3875 = vadd.f32 0.0, %v3874
        %3876 = vmatmul.f32.gmra.mxu0 %v3627
        %v3877 = vpop.f32.mrf.mxu0
        %v3878 = vadd.f32 0.0, %v3877
        %3879 = vmatmul.f32.gmra.mxu0 %v3630
        %v3880 = vpop.f32.mrf.mxu0
        %v3881 = vadd.f32 0.0, %v3880
        %3882 = vmatmul.f32.gmra.mxu0 %v3633
        %v3883 = vpop.f32.mrf.mxu0
        %v3884 = vadd.f32 0.0, %v3883
        %3885 = vmatmul.f32.gmra.mxu0 %v3636
        %v3886 = vpop.f32.mrf.mxu0
        %v3887 = vadd.f32 0.0, %v3886
        %3888 = vmatmul.f32.gmra.mxu0 %v3639
        %v3889 = vpop.f32.mrf.mxu0
        %v3890 = vadd.f32 0.0, %v3889
        %3891 = vmatmul.f32.gmra.mxu0 %v3642
        %v3892 = vpop.f32.mrf.mxu0
        %v3893 = vadd.f32 0.0, %v3892
        %3894 = vmatmul.f32.gmra.mxu0 %v3645
        %v3895 = vpop.f32.mrf.mxu0
        %v3896 = vadd.f32 0.0, %v3895
        %3897 = vmatmul.f32.gmra.mxu0 %v3648
        %v3898 = vpop.f32.mrf.mxu0
        %v3899 = vadd.f32 0.0, %v3898
        %3900 = vmatmul.f32.gmra.mxu0 %v3651
        %v3901 = vpop.f32.mrf.mxu0
        %v3902 = vadd.f32 0.0, %v3901
        %3903 = vmatmul.f32.gmra.mxu0 %v3654
        %v3904 = vpop.f32.mrf.mxu0
        %v3905 = vadd.f32 0.0, %v3904
        %3906 = vmatmul.f32.gmra.mxu0 %v3657
        %v3907 = vpop.f32.mrf.mxu0
        %v3908 = vadd.f32 0.0, %v3907
        %3909 = vmatmul.f32.gmra.mxu0 %v3660
        %v3910 = vpop.f32.mrf.mxu0
        %v3911 = vadd.f32 0.0, %v3910
        %3912 = vmatmul.f32.gmra.mxu0 %v3663
        %v3913 = vpop.f32.mrf.mxu0
        %v3914 = vadd.f32 0.0, %v3913
        %3915 = vmatmul.f32.gmra.mxu0 %v3666
        %v3916 = vpop.f32.mrf.mxu0
        %v3917 = vadd.f32 0.0, %v3916
        %3918 = vmatmul.f32.gmra.mxu0 %v3669
        %v3919 = vpop.f32.mrf.mxu0
        %v3920 = vadd.f32 0.0, %v3919
        %3921 = vmatmul.f32.gmra.mxu0 %v3672
        %v3922 = vpop.f32.mrf.mxu0
        %v3923 = vadd.f32 0.0, %v3922
        %3924 = vmatmul.f32.gmra.mxu0 %v3675
        %v3925 = vpop.f32.mrf.mxu0
        %v3926 = vadd.f32 0.0, %v3925
        %3927 = vmatmul.f32.gmra.mxu0 %v3678
        %v3928 = vpop.f32.mrf.mxu0
        %v3929 = vadd.f32 0.0, %v3928
        %3930 = vmatmul.f32.gmra.mxu0 %v3681
        %v3931 = vpop.f32.mrf.mxu0
        %v3932 = vadd.f32 0.0, %v3931
        %3933 = vmatmul.f32.gmra.mxu0 %v3684
        %v3934 = vpop.f32.mrf.mxu0
        %v3935 = vadd.f32 0.0, %v3934
        %3936 = vmatmul.f32.gmra.mxu0 %v3687
        %v3937 = vpop.f32.mrf.mxu0
        %v3938 = vadd.f32 0.0, %v3937
        %3939 = vmatmul.f32.gmra.mxu0 %v3690
        %v3940 = vpop.f32.mrf.mxu0
        %v3941 = vadd.f32 0.0, %v3940
        %3942 = vmatmul.f32.gmra.mxu0 %v3693
        %v3943 = vpop.f32.mrf.mxu0
        %v3944 = vadd.f32 0.0, %v3943
        %3945 = vmatmul.f32.gmra.mxu0 %v3696
        %v3946 = vpop.f32.mrf.mxu0
        %v3947 = vadd.f32 0.0, %v3946
        %3948 = vmatmul.f32.gmra.mxu0 %v3699
        %v3949 = vpop.f32.mrf.mxu0
        %v3950 = vadd.f32 0.0, %v3949
        %3951 = vmatmul.f32.gmra.mxu0 %v3702
        %v3952 = vpop.f32.mrf.mxu0
        %v3953 = vadd.f32 0.0, %v3952
        %3954 = vmatmul.f32.gmra.mxu0 %v3705
        %v3955 = vpop.f32.mrf.mxu0
        %v3956 = vadd.f32 0.0, %v3955
        %3957 = vmatmul.f32.gmra.mxu0 %v3708
        %v3958 = vpop.f32.mrf.mxu0
        %v3959 = vadd.f32 0.0, %v3958
        %3960 = vmatmul.f32.gmra.mxu0 %v3711
        %v3961 = vpop.f32.mrf.mxu0
        %v3962 = vadd.f32 0.0, %v3961
        %3963 = vmatmul.f32.gmra.mxu0 %v3714
        %v3964 = vpop.f32.mrf.mxu0
        %v3965 = vadd.f32 0.0, %v3964
        %3966 = vmatmul.f32.gmra.mxu0 %v3717
        %v3967 = vpop.f32.mrf.mxu0
        %v3968 = vadd.f32 0.0, %v3967
        %3969 = vmatmul.f32.gmra.mxu0 %v3720
        %v3970 = vpop.f32.mrf.mxu0
        %v3971 = vadd.f32 0.0, %v3970
        %3972 = vmatmul.f32.gmra.mxu0 %v3723
        %v3973 = vpop.f32.mrf.mxu0
        %v3974 = vadd.f32 0.0, %v3973
        %3975 = vmatmul.f32.gmra.mxu0 %v3726
        %v3976 = vpop.f32.mrf.mxu0
        %v3977 = vadd.f32 0.0, %v3976
        %3978 = vmatmul.f32.gmra.mxu0 %v3729
        %v3979 = vpop.f32.mrf.mxu0
        %v3980 = vadd.f32 0.0, %v3979
        %3981 = vmatmul.f32.gmra.mxu0 %v3732
        %v3982 = vpop.f32.mrf.mxu0
        %v3983 = vadd.f32 0.0, %v3982
        %3984 = vmatmul.f32.gmra.mxu0 %v3735
        %v3985 = vpop.f32.mrf.mxu0
        %v3986 = vadd.f32 0.0, %v3985
        %3987 = vmatmul.f32.gmra.mxu0 %v3738
        %v3988 = vpop.f32.mrf.mxu0
        %v3989 = vadd.f32 0.0, %v3988
        %3990 = vmatmul.f32.gmra.mxu0 %v3741
        %v3991 = vpop.f32.mrf.mxu0
        %v3992 = vadd.f32 0.0, %v3991
        %3993 = vmatmul.f32.gmra.mxu0 %v3744
        %v3994 = vpop.f32.mrf.mxu0
        %v3995 = vadd.f32 0.0, %v3994
        %3996 = vmatmul.f32.gmra.mxu0 %v3747
        %v3997 = vpop.f32.mrf.mxu0
        %v3998 = vadd.f32 0.0, %v3997
        %3999 = vmatmul.f32.gmra.mxu0 %v3750
        %v4000 = vpop.f32.mrf.mxu0
        %v4001 = vadd.f32 0.0, %v4000
        %4002 = vmatmul.f32.gmra.mxu0 %v3753
        %v4003 = vpop.f32.mrf.mxu0
        %v4004 = vadd.f32 0.0, %v4003
        %4005 = vmatmul.f32.gmra.mxu0 %v3756
        %v4006 = vpop.f32.mrf.mxu0
        %v4007 = vadd.f32 0.0, %v4006
        %4008 = vmatmul.f32.gmra.mxu0 %v3759
        %v4009 = vpop.f32.mrf.mxu0
        %v4010 = vadd.f32 0.0, %v4009
        %4011 = vmatmul.f32.gmra.mxu0 %v3762
        %v4012 = vpop.f32.mrf.mxu0
        %v4013 = vadd.f32 0.0, %v4012
        %4014 = vmatmul.f32.gmra.mxu0 %v3765
        %v4015 = vpop.f32.mrf.mxu0
        %v4016 = vadd.f32 0.0, %v4015
        %4017 = vmatmul.f32.gmra.mxu0 %v3768
        %v4018 = vpop.f32.mrf.mxu0
        %v4019 = vadd.f32 0.0, %v4018
        %4020 = vmatmul.f32.gmra.mxu0 %v3771
        %v4021 = vpop.f32.mrf.mxu0
        %v4022 = vadd.f32 0.0, %v4021
        %4023 = vmatmul.f32.gmra.mxu0 %v3774
        %v4024 = vpop.f32.mrf.mxu0
        %v4025 = vadd.f32 0.0, %v4024
        %4026 = vmatmul.f32.gmra.mxu0 %v3777
        %v4027 = vpop.f32.mrf.mxu0
        %v4028 = vadd.f32 0.0, %v4027
        %4029 = vmatmul.f32.gmra.mxu0 %v3780
        %v4030 = vpop.f32.mrf.mxu0
        %v4031 = vadd.f32 0.0, %v4030
        %4032 = vmatmul.f32.gmra.mxu0 %v3783
        %v4033 = vpop.f32.mrf.mxu0
        %v4034 = vadd.f32 0.0, %v4033
        %4035 = vmatmul.f32.gmra.mxu0 %v3786
        %v4036 = vpop.f32.mrf.mxu0
        %v4037 = vadd.f32 0.0, %v4036
        %4038 = vmatmul.f32.gmra.mxu0 %v3789
        %v4039 = vpop.f32.mrf.mxu0
        %v4040 = vadd.f32 0.0, %v4039
        %4041 = vmatmul.f32.gmra.mxu0 %v3792
        %v4042 = vpop.f32.mrf.mxu0
        %v4043 = vadd.f32 0.0, %v4042
        %4044 = vmatmul.f32.gmra.mxu0 %v3795
        %v4045 = vpop.f32.mrf.mxu0
        %v4046 = vadd.f32 0.0, %v4045
        %4047 = vmatmul.f32.gmra.mxu0 %v3798
        %v4048 = vpop.f32.mrf.mxu0
        %v4049 = vadd.f32 0.0, %v4048
        %4050 = vmatmul.f32.gmra.mxu0 %v3801
        %v4051 = vpop.f32.mrf.mxu0
        %v4052 = vadd.f32 0.0, %v4051
        %4053 = vmatmul.f32.gmra.mxu0 %v3804
        %v4054 = vpop.f32.mrf.mxu0
        %v4055 = vadd.f32 0.0, %v4054
        %4056 = vmatmul.f32.gmra.mxu0 %v3807
        %v4057 = vpop.f32.mrf.mxu0
        %v4058 = vadd.f32 0.0, %v4057
        %4059 = vmatmul.f32.gmra.mxu0 %v3810
        %v4060 = vpop.f32.mrf.mxu0
        %v4061 = vadd.f32 0.0, %v4060
        %4062 = vmatmul.f32.gmra.mxu0 %v3813
        %v4063 = vpop.f32.mrf.mxu0
        %v4064 = vadd.f32 0.0, %v4063
        %4065 = vmatmul.f32.gmra.mxu0 %v3816
        %v4066 = vpop.f32.mrf.mxu0
        %v4067 = vadd.f32 0.0, %v4066
        %4068 = vmatmul.f32.gmra.mxu0 %v3819
        %v4069 = vpop.f32.mrf.mxu0
        %v4070 = vadd.f32 0.0, %v4069
        %4071 = vmatmul.f32.gmra.mxu0 %v3822
        %v4072 = vpop.f32.mrf.mxu0
        %v4073 = vadd.f32 0.0, %v4072
        %4074 = vmatmul.f32.gmra.mxu0 %v3825
        %v4075 = vpop.f32.mrf.mxu0
        %v4076 = vadd.f32 0.0, %v4075
        %4077 = vdwg.mxu0
        %v4078 = vadd.f32 %v3432, %v3845
        %v4079 = vadd.f32 %v3433, %v3848
        %v4080 = vadd.f32 %v3434, %v3851
        %v4081 = vadd.f32 %v3435, %v3854
        %v4082 = vadd.f32 %v3436, %v3857
        %v4083 = vadd.f32 %v3437, %v3860
        %v4084 = vadd.f32 %v3438, %v3863
        %v4085 = vadd.f32 %v3439, %v3866
        %v4086 = vadd.f32 %v3440, %v3869
        %v4087 = vadd.f32 %v3441, %v3872
        %v4088 = vadd.f32 %v3442, %v3875
        %v4089 = vadd.f32 %v3443, %v3878
        %v4090 = vadd.f32 %v3444, %v3881
        %v4091 = vadd.f32 %v3445, %v3884
        %v4092 = vadd.f32 %v3446, %v3887
        %v4093 = vadd.f32 %v3447, %v3890
        %v4094 = vadd.f32 %v3448, %v3893
        %v4095 = vadd.f32 %v3449, %v3896
        %v4096 = vadd.f32 %v3450, %v3899
        %v4097 = vadd.f32 %v3451, %v3902
        %v4098 = vadd.f32 %v3452, %v3905
        %v4099 = vadd.f32 %v3453, %v3908
        %v4100 = vadd.f32 %v3454, %v3911
        %v4101 = vadd.f32 %v3455, %v3914
        %v4102 = vadd.f32 %v3456, %v3917
        %v4103 = vadd.f32 %v3457, %v3920
        %v4104 = vadd.f32 %v3458, %v3923
        %v4105 = vadd.f32 %v3459, %v3926
        %v4106 = vadd.f32 %v3460, %v3929
        %v4107 = vadd.f32 %v3461, %v3932
        %v4108 = vadd.f32 %v3462, %v3935
        %v4109 = vadd.f32 %v3463, %v3938
        %v4110 = vadd.f32 %v3464, %v3941
        %v4111 = vadd.f32 %v3465, %v3944
        %v4112 = vadd.f32 %v3466, %v3947
        %v4113 = vadd.f32 %v3467, %v3950
        %v4114 = vadd.f32 %v3468, %v3953
        %v4115 = vadd.f32 %v3469, %v3956
        %v4116 = vadd.f32 %v3470, %v3959
        %v4117 = vadd.f32 %v3471, %v3962
        %v4118 = vadd.f32 %v3472, %v3965
        %v4119 = vadd.f32 %v3473, %v3968
        %v4120 = vadd.f32 %v3474, %v3971
        %v4121 = vadd.f32 %v3475, %v3974
        %v4122 = vadd.f32 %v3476, %v3977
        %v4123 = vadd.f32 %v3477, %v3980
        %v4124 = vadd.f32 %v3478, %v3983
        %v4125 = vadd.f32 %v3479, %v3986
        %v4126 = vadd.f32 %v3480, %v3989
        %v4127 = vadd.f32 %v3481, %v3992
        %v4128 = vadd.f32 %v3482, %v3995
        %v4129 = vadd.f32 %v3483, %v3998
        %v4130 = vadd.f32 %v3484, %v4001
        %v4131 = vadd.f32 %v3485, %v4004
        %v4132 = vadd.f32 %v3486, %v4007
        %v4133 = vadd.f32 %v3487, %v4010
        %v4134 = vadd.f32 %v3488, %v4013
        %v4135 = vadd.f32 %v3489, %v4016
        %v4136 = vadd.f32 %v3490, %v4019
        %v4137 = vadd.f32 %v3491, %v4022
        %v4138 = vadd.f32 %v3492, %v4025
        %v4139 = vadd.f32 %v3493, %v4028
        %v4140 = vadd.f32 %v3494, %v4031
        %v4141 = vadd.f32 %v3495, %v4034
        %v4142 = vadd.f32 %v3496, %v4037
        %v4143 = vadd.f32 %v3497, %v4040
        %v4144 = vadd.f32 %v3498, %v4043
        %v4145 = vadd.f32 %v3499, %v4046
        %v4146 = vadd.f32 %v3500, %v4049
        %v4147 = vadd.f32 %v3501, %v4052
        %v4148 = vadd.f32 %v3502, %v4055
        %v4149 = vadd.f32 %v3503, %v4058
        %v4150 = vadd.f32 %v3504, %v4061
        %v4151 = vadd.f32 %v3505, %v4064
        %v4152 = vadd.f32 %v3506, %v4067
        %v4153 = vadd.f32 %v3507, %v4070
        %v4154 = vadd.f32 %v3508, %v4073
        %v4155 = vadd.f32 %v3509, %v4076
        %v4156 = vld [vmem:[#allocation2 + $0x1c] sm:$0xff]
        %v4157 = vld [vmem:[#allocation2 + $0x24] sm:$0xff]
        %v4158 = vld [vmem:[#allocation2 + $0x2c] sm:$0xff]
        %v4159 = vld [vmem:[#allocation2 + $0x34] sm:$0xff]
        %v4160 = vld [vmem:[#allocation2 + $0x3c] sm:$0xff]
        %v4161 = vld [vmem:[#allocation2 + $0x44] sm:$0xff]
        %v4162 = vld [vmem:[#allocation2 + $0x4c] sm:$0xff]
        %v4163 = vld [vmem:[#allocation2 + $0x54] sm:$0xff]
        %v4164 = vld [vmem:[#allocation2 + $0x5c] sm:$0xff]
        %v4165 = vld [vmem:[#allocation2 + $0x64] sm:$0xff]
        %v4166 = vld [vmem:[#allocation2 + $0x6c] sm:$0xff]
        %v4167 = vld [vmem:[#allocation2 + $0x74] sm:$0xff]
        %v4168 = vld [vmem:[#allocation2 + $0x7c] sm:$0xff]
        %v4169 = vld [vmem:[#allocation2 + $0x84] sm:$0xff]
        %v4170 = vld [vmem:[#allocation2 + $0x8c] sm:$0xff]
        %v4171 = vld [vmem:[#allocation2 + $0x94] sm:$0xff]
        %v4172 = vld [vmem:[#allocation2 + $0x9c] sm:$0xff]
        %v4173 = vld [vmem:[#allocation2 + $0xa4] sm:$0xff]
        %v4174 = vld [vmem:[#allocation2 + $0xac] sm:$0xff]
        %v4175 = vld [vmem:[#allocation2 + $0xb4] sm:$0xff]
        %v4176 = vld [vmem:[#allocation2 + $0xbc] sm:$0xff]
        %v4177 = vld [vmem:[#allocation2 + $0xc4] sm:$0xff]
        %v4178 = vld [vmem:[#allocation2 + $0xcc] sm:$0xff]
        %v4179 = vld [vmem:[#allocation2 + $0xd4] sm:$0xff]
        %v4180 = vld [vmem:[#allocation2 + $0xdc] sm:$0xff]
        %v4181 = vld [vmem:[#allocation2 + $0xe4] sm:$0xff]
        %v4182 = vld [vmem:[#allocation2 + $0xec] sm:$0xff]
        %v4183 = vld [vmem:[#allocation2 + $0xf4] sm:$0xff]
        %v4184 = vld [vmem:[#allocation2 + $0xfc] sm:$0xff]
        %v4185 = vld [vmem:[#allocation2 + $0x104] sm:$0xff]
        %v4186 = vld [vmem:[#allocation2 + $0x10c] sm:$0xff]
        %v4187 = vld [vmem:[#allocation2 + $0x114] sm:$0xff]
        %v4188 = vld [vmem:[#allocation2 + $0x11c] sm:$0xff]
        %v4189 = vld [vmem:[#allocation2 + $0x124] sm:$0xff]
        %v4190 = vld [vmem:[#allocation2 + $0x12c] sm:$0xff]
        %v4191 = vld [vmem:[#allocation2 + $0x134] sm:$0xff]
        %v4192 = vld [vmem:[#allocation2 + $0x13c] sm:$0xff]
        %v4193 = vld [vmem:[#allocation2 + $0x144] sm:$0xff]
        %v4194 = vld [vmem:[#allocation2 + $0x14c] sm:$0xff]
        %v4195 = vld [vmem:[#allocation2 + $0x154] sm:$0xff]
        %v4196 = vld [vmem:[#allocation2 + $0x15c] sm:$0xff]
        %v4197 = vld [vmem:[#allocation2 + $0x164] sm:$0xff]
        %v4198 = vld [vmem:[#allocation2 + $0x16c] sm:$0xff]
        %v4199 = vld [vmem:[#allocation2 + $0x174] sm:$0xff]
        %v4200 = vld [vmem:[#allocation2 + $0x17c] sm:$0xff]
        %v4201 = vld [vmem:[#allocation2 + $0x184] sm:$0xff]
        %v4202 = vld [vmem:[#allocation2 + $0x18c] sm:$0xff]
        %v4203 = vld [vmem:[#allocation2 + $0x194] sm:$0xff]
        %v4204 = vld [vmem:[#allocation2 + $0x19c] sm:$0xff]
        %v4205 = vld [vmem:[#allocation2 + $0x1a4] sm:$0xff]
        %v4206 = vld [vmem:[#allocation2 + $0x1ac] sm:$0xff]
        %v4207 = vld [vmem:[#allocation2 + $0x1b4] sm:$0xff]
        %v4208 = vld [vmem:[#allocation2 + $0x1bc] sm:$0xff]
        %v4209 = vld [vmem:[#allocation2 + $0x1c4] sm:$0xff]
        %v4210 = vld [vmem:[#allocation2 + $0x1cc] sm:$0xff]
        %v4211 = vld [vmem:[#allocation2 + $0x1d4] sm:$0xff]
        %v4212 = vld [vmem:[#allocation2 + $0x1dc] sm:$0xff]
        %v4213 = vld [vmem:[#allocation2 + $0x1e4] sm:$0xff]
        %v4214 = vld [vmem:[#allocation2 + $0x1ec] sm:$0xff]
        %v4215 = vld [vmem:[#allocation2 + $0x1f4] sm:$0xff]
        %v4216 = vld [vmem:[#allocation2 + $0x1fc] sm:$0xff]
        %v4217 = vld [vmem:[#allocation2 + $0x204] sm:$0xff]
        %v4218 = vld [vmem:[#allocation2 + $0x20c] sm:$0xff]
        %v4219 = vld [vmem:[#allocation2 + $0x214] sm:$0xff]
        %v4220 = vld [vmem:[#allocation2 + $0x21c] sm:$0xff]
        %v4221 = vld [vmem:[#allocation2 + $0x224] sm:$0xff]
        %v4222 = vld [vmem:[#allocation2 + $0x22c] sm:$0xff]
        %v4223 = vld [vmem:[#allocation2 + $0x234] sm:$0xff]
        %v4224 = vld [vmem:[#allocation2 + $0x23c] sm:$0xff]
        %v4225 = vld [vmem:[#allocation2 + $0x244] sm:$0xff]
        %v4226 = vld [vmem:[#allocation2 + $0x24c] sm:$0xff]
        %v4227 = vld [vmem:[#allocation2 + $0x254] sm:$0xff]
        %v4228 = vld [vmem:[#allocation2 + $0x25c] sm:$0xff]
        %v4229 = vld [vmem:[#allocation2 + $0x264] sm:$0xff]
        %v4230 = vld [vmem:[#allocation2 + $0x26c] sm:$0xff]
        %v4231 = vld [vmem:[#allocation2 + $0x274] sm:$0xff]
        %v4232 = vld [vmem:[#allocation2 + $0x27c] sm:$0xff]
        %v4233 = vld [vmem:[#allocation2 + $0x284] sm:$0x3f]
        %s4234 = scalar_lea.vmem [#allocation8], 160
        %v4235 = vld [vmem:[%s4234] sm:$0xff]
        %v4236 = vld [vmem:[%s4234 + $0x8] sm:$0xff]
        %v4237 = vld [vmem:[%s4234 + $0x10] sm:$0xff]
        %v4238 = vld [vmem:[%s4234 + $0x18] sm:$0xff]
        %v4240 = vsel %vm996, %v4156, 0
        %v4243 = vsel %vm996, %v4157, 0
        %v4246 = vsel %vm996, %v4158, 0
        %v4249 = vsel %vm996, %v4159, 0
        %v4252 = vsel %vm996, %v4160, 0
        %v4255 = vsel %vm996, %v4161, 0
        %v4258 = vsel %vm996, %v4162, 0
        %v4261 = vsel %vm996, %v4163, 0
        %v4264 = vsel %vm996, %v4164, 0
        %v4267 = vsel %vm996, %v4165, 0
        %v4270 = vsel %vm996, %v4166, 0
        %v4273 = vsel %vm996, %v4167, 0
        %v4276 = vsel %vm996, %v4168, 0
        %v4279 = vsel %vm996, %v4169, 0
        %v4282 = vsel %vm996, %v4170, 0
        %v4285 = vsel %vm996, %v4171, 0
        %v4288 = vsel %vm996, %v4172, 0
        %v4291 = vsel %vm996, %v4173, 0
        %v4294 = vsel %vm996, %v4174, 0
        %v4297 = vsel %vm996, %v4175, 0
        %v4300 = vsel %vm996, %v4176, 0
        %v4303 = vsel %vm996, %v4177, 0
        %v4306 = vsel %vm996, %v4178, 0
        %v4309 = vsel %vm996, %v4179, 0
        %v4312 = vsel %vm996, %v4180, 0
        %v4315 = vsel %vm996, %v4181, 0
        %v4318 = vsel %vm996, %v4182, 0
        %v4321 = vsel %vm996, %v4183, 0
        %v4324 = vsel %vm996, %v4184, 0
        %v4327 = vsel %vm996, %v4185, 0
        %v4330 = vsel %vm996, %v4186, 0
        %v4333 = vsel %vm996, %v4187, 0
        %v4336 = vsel %vm996, %v4188, 0
        %v4339 = vsel %vm996, %v4189, 0
        %v4342 = vsel %vm996, %v4190, 0
        %v4345 = vsel %vm996, %v4191, 0
        %v4348 = vsel %vm996, %v4192, 0
        %v4351 = vsel %vm996, %v4193, 0
        %v4354 = vsel %vm996, %v4194, 0
        %v4357 = vsel %vm996, %v4195, 0
        %v4360 = vsel %vm996, %v4196, 0
        %v4363 = vsel %vm996, %v4197, 0
        %v4366 = vsel %vm996, %v4198, 0
        %v4369 = vsel %vm996, %v4199, 0
        %v4372 = vsel %vm996, %v4200, 0
        %v4375 = vsel %vm996, %v4201, 0
        %v4378 = vsel %vm996, %v4202, 0
        %v4381 = vsel %vm996, %v4203, 0
        %v4384 = vsel %vm996, %v4204, 0
        %v4387 = vsel %vm996, %v4205, 0
        %v4390 = vsel %vm996, %v4206, 0
        %v4393 = vsel %vm996, %v4207, 0
        %v4396 = vsel %vm996, %v4208, 0
        %v4399 = vsel %vm996, %v4209, 0
        %v4402 = vsel %vm996, %v4210, 0
        %v4405 = vsel %vm996, %v4211, 0
        %v4408 = vsel %vm996, %v4212, 0
        %v4411 = vsel %vm996, %v4213, 0
        %v4414 = vsel %vm996, %v4214, 0
        %v4417 = vsel %vm996, %v4215, 0
        %v4420 = vsel %vm996, %v4216, 0
        %v4423 = vsel %vm996, %v4217, 0
        %v4426 = vsel %vm996, %v4218, 0
        %v4429 = vsel %vm996, %v4219, 0
        %v4432 = vsel %vm996, %v4220, 0
        %v4435 = vsel %vm996, %v4221, 0
        %v4438 = vsel %vm996, %v4222, 0
        %v4441 = vsel %vm996, %v4223, 0
        %v4444 = vsel %vm996, %v4224, 0
        %v4447 = vsel %vm996, %v4225, 0
        %v4450 = vsel %vm996, %v4226, 0
        %v4453 = vsel %vm996, %v4227, 0
        %v4456 = vsel %vm996, %v4228, 0
        %v4459 = vsel %vm996, %v4229, 0
        %v4462 = vsel %vm996, %v4230, 0
        %v4465 = vsel %vm996, %v4231, 0
        %v4468 = vsel %vm996, %v4232, 0
        %v4471 = vsel %vm996, %v4233, 0
        %4473 = vmatpush.msra.mxu0 0.0
        %4474 = vmatpush.msra.mxu0 0.0
        %4475 = vmatpush.msra.mxu0 0.0
        %4476 = vmatpush.msra.mxu0 0.0
        %4477 = vmatpush.msra.mxu0 0.0
        %4478 = vmatpush.msra.mxu0 0.0
        %4479 = vmatpush.msra.mxu0 0.0
        %4480 = vmatpush.msra.mxu0 0.0
        %4481 = vmatpush.msra.mxu0 0.0
        %4482 = vmatpush.msra.mxu0 0.0
        %4483 = vmatpush.msra.mxu0 0.0
        %4484 = vmatpush.msra.mxu0 0.0
        %4485 = vmatpush.msra.mxu0 %v4238
        %4486 = vmatpush.msra.mxu0 %v4237
        %4487 = vmatpush.msra.mxu0 %v4236
        %4488 = vmatpush.msra.mxu0 %v4235
        %4489 = vmatmul.f32.gmra.mxu0 %v4240
        %v4490 = vpop.f32.mrf.mxu0
        %v4491 = vadd.f32 0.0, %v4490
        %4492 = vmatmul.f32.gmra.mxu0 %v4243
        %v4493 = vpop.f32.mrf.mxu0
        %v4494 = vadd.f32 0.0, %v4493
        %4495 = vmatmul.f32.gmra.mxu0 %v4246
        %v4496 = vpop.f32.mrf.mxu0
        %v4497 = vadd.f32 0.0, %v4496
        %4498 = vmatmul.f32.gmra.mxu0 %v4249
        %v4499 = vpop.f32.mrf.mxu0
        %v4500 = vadd.f32 0.0, %v4499
        %4501 = vmatmul.f32.gmra.mxu0 %v4252
        %v4502 = vpop.f32.mrf.mxu0
        %v4503 = vadd.f32 0.0, %v4502
        %4504 = vmatmul.f32.gmra.mxu0 %v4255
        %v4505 = vpop.f32.mrf.mxu0
        %v4506 = vadd.f32 0.0, %v4505
        %4507 = vmatmul.f32.gmra.mxu0 %v4258
        %v4508 = vpop.f32.mrf.mxu0
        %v4509 = vadd.f32 0.0, %v4508
        %4510 = vmatmul.f32.gmra.mxu0 %v4261
        %v4511 = vpop.f32.mrf.mxu0
        %v4512 = vadd.f32 0.0, %v4511
        %4513 = vmatmul.f32.gmra.mxu0 %v4264
        %v4514 = vpop.f32.mrf.mxu0
        %v4515 = vadd.f32 0.0, %v4514
        %4516 = vmatmul.f32.gmra.mxu0 %v4267
        %v4517 = vpop.f32.mrf.mxu0
        %v4518 = vadd.f32 0.0, %v4517
        %4519 = vmatmul.f32.gmra.mxu0 %v4270
        %v4520 = vpop.f32.mrf.mxu0
        %v4521 = vadd.f32 0.0, %v4520
        %4522 = vmatmul.f32.gmra.mxu0 %v4273
        %v4523 = vpop.f32.mrf.mxu0
        %v4524 = vadd.f32 0.0, %v4523
        %4525 = vmatmul.f32.gmra.mxu0 %v4276
        %v4526 = vpop.f32.mrf.mxu0
        %v4527 = vadd.f32 0.0, %v4526
        %4528 = vmatmul.f32.gmra.mxu0 %v4279
        %v4529 = vpop.f32.mrf.mxu0
        %v4530 = vadd.f32 0.0, %v4529
        %4531 = vmatmul.f32.gmra.mxu0 %v4282
        %v4532 = vpop.f32.mrf.mxu0
        %v4533 = vadd.f32 0.0, %v4532
        %4534 = vmatmul.f32.gmra.mxu0 %v4285
        %v4535 = vpop.f32.mrf.mxu0
        %v4536 = vadd.f32 0.0, %v4535
        %4537 = vmatmul.f32.gmra.mxu0 %v4288
        %v4538 = vpop.f32.mrf.mxu0
        %v4539 = vadd.f32 0.0, %v4538
        %4540 = vmatmul.f32.gmra.mxu0 %v4291
        %v4541 = vpop.f32.mrf.mxu0
        %v4542 = vadd.f32 0.0, %v4541
        %4543 = vmatmul.f32.gmra.mxu0 %v4294
        %v4544 = vpop.f32.mrf.mxu0
        %v4545 = vadd.f32 0.0, %v4544
        %4546 = vmatmul.f32.gmra.mxu0 %v4297
        %v4547 = vpop.f32.mrf.mxu0
        %v4548 = vadd.f32 0.0, %v4547
        %4549 = vmatmul.f32.gmra.mxu0 %v4300
        %v4550 = vpop.f32.mrf.mxu0
        %v4551 = vadd.f32 0.0, %v4550
        %4552 = vmatmul.f32.gmra.mxu0 %v4303
        %v4553 = vpop.f32.mrf.mxu0
        %v4554 = vadd.f32 0.0, %v4553
        %4555 = vmatmul.f32.gmra.mxu0 %v4306
        %v4556 = vpop.f32.mrf.mxu0
        %v4557 = vadd.f32 0.0, %v4556
        %4558 = vmatmul.f32.gmra.mxu0 %v4309
        %v4559 = vpop.f32.mrf.mxu0
        %v4560 = vadd.f32 0.0, %v4559
        %4561 = vmatmul.f32.gmra.mxu0 %v4312
        %v4562 = vpop.f32.mrf.mxu0
        %v4563 = vadd.f32 0.0, %v4562
        %4564 = vmatmul.f32.gmra.mxu0 %v4315
        %v4565 = vpop.f32.mrf.mxu0
        %v4566 = vadd.f32 0.0, %v4565
        %4567 = vmatmul.f32.gmra.mxu0 %v4318
        %v4568 = vpop.f32.mrf.mxu0
        %v4569 = vadd.f32 0.0, %v4568
        %4570 = vmatmul.f32.gmra.mxu0 %v4321
        %v4571 = vpop.f32.mrf.mxu0
        %v4572 = vadd.f32 0.0, %v4571
        %4573 = vmatmul.f32.gmra.mxu0 %v4324
        %v4574 = vpop.f32.mrf.mxu0
        %v4575 = vadd.f32 0.0, %v4574
        %4576 = vmatmul.f32.gmra.mxu0 %v4327
        %v4577 = vpop.f32.mrf.mxu0
        %v4578 = vadd.f32 0.0, %v4577
        %4579 = vmatmul.f32.gmra.mxu0 %v4330
        %v4580 = vpop.f32.mrf.mxu0
        %v4581 = vadd.f32 0.0, %v4580
        %4582 = vmatmul.f32.gmra.mxu0 %v4333
        %v4583 = vpop.f32.mrf.mxu0
        %v4584 = vadd.f32 0.0, %v4583
        %4585 = vmatmul.f32.gmra.mxu0 %v4336
        %v4586 = vpop.f32.mrf.mxu0
        %v4587 = vadd.f32 0.0, %v4586
        %4588 = vmatmul.f32.gmra.mxu0 %v4339
        %v4589 = vpop.f32.mrf.mxu0
        %v4590 = vadd.f32 0.0, %v4589
        %4591 = vmatmul.f32.gmra.mxu0 %v4342
        %v4592 = vpop.f32.mrf.mxu0
        %v4593 = vadd.f32 0.0, %v4592
        %4594 = vmatmul.f32.gmra.mxu0 %v4345
        %v4595 = vpop.f32.mrf.mxu0
        %v4596 = vadd.f32 0.0, %v4595
        %4597 = vmatmul.f32.gmra.mxu0 %v4348
        %v4598 = vpop.f32.mrf.mxu0
        %v4599 = vadd.f32 0.0, %v4598
        %4600 = vmatmul.f32.gmra.mxu0 %v4351
        %v4601 = vpop.f32.mrf.mxu0
        %v4602 = vadd.f32 0.0, %v4601
        %4603 = vmatmul.f32.gmra.mxu0 %v4354
        %v4604 = vpop.f32.mrf.mxu0
        %v4605 = vadd.f32 0.0, %v4604
        %4606 = vmatmul.f32.gmra.mxu0 %v4357
        %v4607 = vpop.f32.mrf.mxu0
        %v4608 = vadd.f32 0.0, %v4607
        %4609 = vmatmul.f32.gmra.mxu0 %v4360
        %v4610 = vpop.f32.mrf.mxu0
        %v4611 = vadd.f32 0.0, %v4610
        %4612 = vmatmul.f32.gmra.mxu0 %v4363
        %v4613 = vpop.f32.mrf.mxu0
        %v4614 = vadd.f32 0.0, %v4613
        %4615 = vmatmul.f32.gmra.mxu0 %v4366
        %v4616 = vpop.f32.mrf.mxu0
        %v4617 = vadd.f32 0.0, %v4616
        %4618 = vmatmul.f32.gmra.mxu0 %v4369
        %v4619 = vpop.f32.mrf.mxu0
        %v4620 = vadd.f32 0.0, %v4619
        %4621 = vmatmul.f32.gmra.mxu0 %v4372
        %v4622 = vpop.f32.mrf.mxu0
        %v4623 = vadd.f32 0.0, %v4622
        %4624 = vmatmul.f32.gmra.mxu0 %v4375
        %v4625 = vpop.f32.mrf.mxu0
        %v4626 = vadd.f32 0.0, %v4625
        %4627 = vmatmul.f32.gmra.mxu0 %v4378
        %v4628 = vpop.f32.mrf.mxu0
        %v4629 = vadd.f32 0.0, %v4628
        %4630 = vmatmul.f32.gmra.mxu0 %v4381
        %v4631 = vpop.f32.mrf.mxu0
        %v4632 = vadd.f32 0.0, %v4631
        %4633 = vmatmul.f32.gmra.mxu0 %v4384
        %v4634 = vpop.f32.mrf.mxu0
        %v4635 = vadd.f32 0.0, %v4634
        %4636 = vmatmul.f32.gmra.mxu0 %v4387
        %v4637 = vpop.f32.mrf.mxu0
        %v4638 = vadd.f32 0.0, %v4637
        %4639 = vmatmul.f32.gmra.mxu0 %v4390
        %v4640 = vpop.f32.mrf.mxu0
        %v4641 = vadd.f32 0.0, %v4640
        %4642 = vmatmul.f32.gmra.mxu0 %v4393
        %v4643 = vpop.f32.mrf.mxu0
        %v4644 = vadd.f32 0.0, %v4643
        %4645 = vmatmul.f32.gmra.mxu0 %v4396
        %v4646 = vpop.f32.mrf.mxu0
        %v4647 = vadd.f32 0.0, %v4646
        %4648 = vmatmul.f32.gmra.mxu0 %v4399
        %v4649 = vpop.f32.mrf.mxu0
        %v4650 = vadd.f32 0.0, %v4649
        %4651 = vmatmul.f32.gmra.mxu0 %v4402
        %v4652 = vpop.f32.mrf.mxu0
        %v4653 = vadd.f32 0.0, %v4652
        %4654 = vmatmul.f32.gmra.mxu0 %v4405
        %v4655 = vpop.f32.mrf.mxu0
        %v4656 = vadd.f32 0.0, %v4655
        %4657 = vmatmul.f32.gmra.mxu0 %v4408
        %v4658 = vpop.f32.mrf.mxu0
        %v4659 = vadd.f32 0.0, %v4658
        %4660 = vmatmul.f32.gmra.mxu0 %v4411
        %v4661 = vpop.f32.mrf.mxu0
        %v4662 = vadd.f32 0.0, %v4661
        %4663 = vmatmul.f32.gmra.mxu0 %v4414
        %v4664 = vpop.f32.mrf.mxu0
        %v4665 = vadd.f32 0.0, %v4664
        %4666 = vmatmul.f32.gmra.mxu0 %v4417
        %v4667 = vpop.f32.mrf.mxu0
        %v4668 = vadd.f32 0.0, %v4667
        %4669 = vmatmul.f32.gmra.mxu0 %v4420
        %v4670 = vpop.f32.mrf.mxu0
        %v4671 = vadd.f32 0.0, %v4670
        %4672 = vmatmul.f32.gmra.mxu0 %v4423
        %v4673 = vpop.f32.mrf.mxu0
        %v4674 = vadd.f32 0.0, %v4673
        %4675 = vmatmul.f32.gmra.mxu0 %v4426
        %v4676 = vpop.f32.mrf.mxu0
        %v4677 = vadd.f32 0.0, %v4676
        %4678 = vmatmul.f32.gmra.mxu0 %v4429
        %v4679 = vpop.f32.mrf.mxu0
        %v4680 = vadd.f32 0.0, %v4679
        %4681 = vmatmul.f32.gmra.mxu0 %v4432
        %v4682 = vpop.f32.mrf.mxu0
        %v4683 = vadd.f32 0.0, %v4682
        %4684 = vmatmul.f32.gmra.mxu0 %v4435
        %v4685 = vpop.f32.mrf.mxu0
        %v4686 = vadd.f32 0.0, %v4685
        %4687 = vmatmul.f32.gmra.mxu0 %v4438
        %v4688 = vpop.f32.mrf.mxu0
        %v4689 = vadd.f32 0.0, %v4688
        %4690 = vmatmul.f32.gmra.mxu0 %v4441
        %v4691 = vpop.f32.mrf.mxu0
        %v4692 = vadd.f32 0.0, %v4691
        %4693 = vmatmul.f32.gmra.mxu0 %v4444
        %v4694 = vpop.f32.mrf.mxu0
        %v4695 = vadd.f32 0.0, %v4694
        %4696 = vmatmul.f32.gmra.mxu0 %v4447
        %v4697 = vpop.f32.mrf.mxu0
        %v4698 = vadd.f32 0.0, %v4697
        %4699 = vmatmul.f32.gmra.mxu0 %v4450
        %v4700 = vpop.f32.mrf.mxu0
        %v4701 = vadd.f32 0.0, %v4700
        %4702 = vmatmul.f32.gmra.mxu0 %v4453
        %v4703 = vpop.f32.mrf.mxu0
        %v4704 = vadd.f32 0.0, %v4703
        %4705 = vmatmul.f32.gmra.mxu0 %v4456
        %v4706 = vpop.f32.mrf.mxu0
        %v4707 = vadd.f32 0.0, %v4706
        %4708 = vmatmul.f32.gmra.mxu0 %v4459
        %v4709 = vpop.f32.mrf.mxu0
        %v4710 = vadd.f32 0.0, %v4709
        %4711 = vmatmul.f32.gmra.mxu0 %v4462
        %v4712 = vpop.f32.mrf.mxu0
        %v4713 = vadd.f32 0.0, %v4712
        %4714 = vmatmul.f32.gmra.mxu0 %v4465
        %v4715 = vpop.f32.mrf.mxu0
        %v4716 = vadd.f32 0.0, %v4715
        %4717 = vmatmul.f32.gmra.mxu0 %v4468
        %v4718 = vpop.f32.mrf.mxu0
        %v4719 = vadd.f32 0.0, %v4718
        %4720 = vmatmul.f32.gmra.mxu0 %v4471
        %v4721 = vpop.f32.mrf.mxu0
        %v4722 = vadd.f32 0.0, %v4721
        %4723 = vdwg.mxu0
        %v4724 = vadd.f32 %v4078, %v4491
        %v4725 = vadd.f32 %v4079, %v4494
        %v4726 = vadd.f32 %v4080, %v4497
        %v4727 = vadd.f32 %v4081, %v4500
        %v4728 = vadd.f32 %v4082, %v4503
        %v4729 = vadd.f32 %v4083, %v4506
        %v4730 = vadd.f32 %v4084, %v4509
        %v4731 = vadd.f32 %v4085, %v4512
        %v4732 = vadd.f32 %v4086, %v4515
        %v4733 = vadd.f32 %v4087, %v4518
        %v4734 = vadd.f32 %v4088, %v4521
        %v4735 = vadd.f32 %v4089, %v4524
        %v4736 = vadd.f32 %v4090, %v4527
        %v4737 = vadd.f32 %v4091, %v4530
        %v4738 = vadd.f32 %v4092, %v4533
        %v4739 = vadd.f32 %v4093, %v4536
        %v4740 = vadd.f32 %v4094, %v4539
        %v4741 = vadd.f32 %v4095, %v4542
        %v4742 = vadd.f32 %v4096, %v4545
        %v4743 = vadd.f32 %v4097, %v4548
        %v4744 = vadd.f32 %v4098, %v4551
        %v4745 = vadd.f32 %v4099, %v4554
        %v4746 = vadd.f32 %v4100, %v4557
        %v4747 = vadd.f32 %v4101, %v4560
        %v4748 = vadd.f32 %v4102, %v4563
        %v4749 = vadd.f32 %v4103, %v4566
        %v4750 = vadd.f32 %v4104, %v4569
        %v4751 = vadd.f32 %v4105, %v4572
        %v4752 = vadd.f32 %v4106, %v4575
        %v4753 = vadd.f32 %v4107, %v4578
        %v4754 = vadd.f32 %v4108, %v4581
        %v4755 = vadd.f32 %v4109, %v4584
        %v4756 = vadd.f32 %v4110, %v4587
        %v4757 = vadd.f32 %v4111, %v4590
        %v4758 = vadd.f32 %v4112, %v4593
        %v4759 = vadd.f32 %v4113, %v4596
        %v4760 = vadd.f32 %v4114, %v4599
        %v4761 = vadd.f32 %v4115, %v4602
        %v4762 = vadd.f32 %v4116, %v4605
        %v4763 = vadd.f32 %v4117, %v4608
        %v4764 = vadd.f32 %v4118, %v4611
        %v4765 = vadd.f32 %v4119, %v4614
        %v4766 = vadd.f32 %v4120, %v4617
        %v4767 = vadd.f32 %v4121, %v4620
        %v4768 = vadd.f32 %v4122, %v4623
        %v4769 = vadd.f32 %v4123, %v4626
        %v4770 = vadd.f32 %v4124, %v4629
        %v4771 = vadd.f32 %v4125, %v4632
        %v4772 = vadd.f32 %v4126, %v4635
        %v4773 = vadd.f32 %v4127, %v4638
        %v4774 = vadd.f32 %v4128, %v4641
        %v4775 = vadd.f32 %v4129, %v4644
        %v4776 = vadd.f32 %v4130, %v4647
        %v4777 = vadd.f32 %v4131, %v4650
        %v4778 = vadd.f32 %v4132, %v4653
        %v4779 = vadd.f32 %v4133, %v4656
        %v4780 = vadd.f32 %v4134, %v4659
        %v4781 = vadd.f32 %v4135, %v4662
        %v4782 = vadd.f32 %v4136, %v4665
        %v4783 = vadd.f32 %v4137, %v4668
        %v4784 = vadd.f32 %v4138, %v4671
        %v4785 = vadd.f32 %v4139, %v4674
        %v4786 = vadd.f32 %v4140, %v4677
        %v4787 = vadd.f32 %v4141, %v4680
        %v4788 = vadd.f32 %v4142, %v4683
        %v4789 = vadd.f32 %v4143, %v4686
        %v4790 = vadd.f32 %v4144, %v4689
        %v4791 = vadd.f32 %v4145, %v4692
        %v4792 = vadd.f32 %v4146, %v4695
        %v4793 = vadd.f32 %v4147, %v4698
        %v4794 = vadd.f32 %v4148, %v4701
        %v4795 = vadd.f32 %v4149, %v4704
        %v4796 = vadd.f32 %v4150, %v4707
        %v4797 = vadd.f32 %v4151, %v4710
        %v4798 = vadd.f32 %v4152, %v4713
        %v4799 = vadd.f32 %v4153, %v4716
        %v4800 = vadd.f32 %v4154, %v4719
        %v4801 = vadd.f32 %v4155, %v4722
        %v4802 = vld [vmem:[#allocation2 + $0x34] sm:$0xff]
        %v4803 = vld [vmem:[#allocation2 + $0x3c] sm:$0xff]
        %v4804 = vld [vmem:[#allocation2 + $0x44] sm:$0xff]
        %v4805 = vld [vmem:[#allocation2 + $0x4c] sm:$0xff]
        %v4806 = vld [vmem:[#allocation2 + $0x54] sm:$0xff]
        %v4807 = vld [vmem:[#allocation2 + $0x5c] sm:$0xff]
        %v4808 = vld [vmem:[#allocation2 + $0x64] sm:$0xff]
        %v4809 = vld [vmem:[#allocation2 + $0x6c] sm:$0xff]
        %v4810 = vld [vmem:[#allocation2 + $0x74] sm:$0xff]
        %v4811 = vld [vmem:[#allocation2 + $0x7c] sm:$0xff]
        %v4812 = vld [vmem:[#allocation2 + $0x84] sm:$0xff]
        %v4813 = vld [vmem:[#allocation2 + $0x8c] sm:$0xff]
        %v4814 = vld [vmem:[#allocation2 + $0x94] sm:$0xff]
        %v4815 = vld [vmem:[#allocation2 + $0x9c] sm:$0xff]
        %v4816 = vld [vmem:[#allocation2 + $0xa4] sm:$0xff]
        %v4817 = vld [vmem:[#allocation2 + $0xac] sm:$0xff]
        %v4818 = vld [vmem:[#allocation2 + $0xb4] sm:$0xff]
        %v4819 = vld [vmem:[#allocation2 + $0xbc] sm:$0xff]
        %v4820 = vld [vmem:[#allocation2 + $0xc4] sm:$0xff]
        %v4821 = vld [vmem:[#allocation2 + $0xcc] sm:$0xff]
        %v4822 = vld [vmem:[#allocation2 + $0xd4] sm:$0xff]
        %v4823 = vld [vmem:[#allocation2 + $0xdc] sm:$0xff]
        %v4824 = vld [vmem:[#allocation2 + $0xe4] sm:$0xff]
        %v4825 = vld [vmem:[#allocation2 + $0xec] sm:$0xff]
        %v4826 = vld [vmem:[#allocation2 + $0xf4] sm:$0xff]
        %v4827 = vld [vmem:[#allocation2 + $0xfc] sm:$0xff]
        %v4828 = vld [vmem:[#allocation2 + $0x104] sm:$0xff]
        %v4829 = vld [vmem:[#allocation2 + $0x10c] sm:$0xff]
        %v4830 = vld [vmem:[#allocation2 + $0x114] sm:$0xff]
        %v4831 = vld [vmem:[#allocation2 + $0x11c] sm:$0xff]
        %v4832 = vld [vmem:[#allocation2 + $0x124] sm:$0xff]
        %v4833 = vld [vmem:[#allocation2 + $0x12c] sm:$0xff]
        %v4834 = vld [vmem:[#allocation2 + $0x134] sm:$0xff]
        %v4835 = vld [vmem:[#allocation2 + $0x13c] sm:$0xff]
        %v4836 = vld [vmem:[#allocation2 + $0x144] sm:$0xff]
        %v4837 = vld [vmem:[#allocation2 + $0x14c] sm:$0xff]
        %v4838 = vld [vmem:[#allocation2 + $0x154] sm:$0xff]
        %v4839 = vld [vmem:[#allocation2 + $0x15c] sm:$0xff]
        %v4840 = vld [vmem:[#allocation2 + $0x164] sm:$0xff]
        %v4841 = vld [vmem:[#allocation2 + $0x16c] sm:$0xff]
        %v4842 = vld [vmem:[#allocation2 + $0x174] sm:$0xff]
        %v4843 = vld [vmem:[#allocation2 + $0x17c] sm:$0xff]
        %v4844 = vld [vmem:[#allocation2 + $0x184] sm:$0xff]
        %v4845 = vld [vmem:[#allocation2 + $0x18c] sm:$0xff]
        %v4846 = vld [vmem:[#allocation2 + $0x194] sm:$0xff]
        %v4847 = vld [vmem:[#allocation2 + $0x19c] sm:$0xff]
        %v4848 = vld [vmem:[#allocation2 + $0x1a4] sm:$0xff]
        %v4849 = vld [vmem:[#allocation2 + $0x1ac] sm:$0xff]
        %v4850 = vld [vmem:[#allocation2 + $0x1b4] sm:$0xff]
        %v4851 = vld [vmem:[#allocation2 + $0x1bc] sm:$0xff]
        %v4852 = vld [vmem:[#allocation2 + $0x1c4] sm:$0xff]
        %v4853 = vld [vmem:[#allocation2 + $0x1cc] sm:$0xff]
        %v4854 = vld [vmem:[#allocation2 + $0x1d4] sm:$0xff]
        %v4855 = vld [vmem:[#allocation2 + $0x1dc] sm:$0xff]
        %v4856 = vld [vmem:[#allocation2 + $0x1e4] sm:$0xff]
        %v4857 = vld [vmem:[#allocation2 + $0x1ec] sm:$0xff]
        %v4858 = vld [vmem:[#allocation2 + $0x1f4] sm:$0xff]
        %v4859 = vld [vmem:[#allocation2 + $0x1fc] sm:$0xff]
        %v4860 = vld [vmem:[#allocation2 + $0x204] sm:$0xff]
        %v4861 = vld [vmem:[#allocation2 + $0x20c] sm:$0xff]
        %v4862 = vld [vmem:[#allocation2 + $0x214] sm:$0xff]
        %v4863 = vld [vmem:[#allocation2 + $0x21c] sm:$0xff]
        %v4864 = vld [vmem:[#allocation2 + $0x224] sm:$0xff]
        %v4865 = vld [vmem:[#allocation2 + $0x22c] sm:$0xff]
        %v4866 = vld [vmem:[#allocation2 + $0x234] sm:$0xff]
        %v4867 = vld [vmem:[#allocation2 + $0x23c] sm:$0xff]
        %v4868 = vld [vmem:[#allocation2 + $0x244] sm:$0xff]
        %v4869 = vld [vmem:[#allocation2 + $0x24c] sm:$0xff]
        %v4870 = vld [vmem:[#allocation2 + $0x254] sm:$0xff]
        %v4871 = vld [vmem:[#allocation2 + $0x25c] sm:$0xff]
        %v4872 = vld [vmem:[#allocation2 + $0x264] sm:$0xff]
        %v4873 = vld [vmem:[#allocation2 + $0x26c] sm:$0xff]
        %v4874 = vld [vmem:[#allocation2 + $0x274] sm:$0xff]
        %v4875 = vld [vmem:[#allocation2 + $0x27c] sm:$0xff]
        %v4876 = vld [vmem:[#allocation2 + $0x284] sm:$0xff]
        %v4877 = vld [vmem:[#allocation2 + $0x28c] sm:$0xff]
        %v4878 = vld [vmem:[#allocation2 + $0x294] sm:$0xff]
        %v4879 = vld [vmem:[#allocation2 + $0x29c] sm:$0x3f]
        %s4880 = scalar_lea.vmem [#allocation8], 192
        %v4881 = vld [vmem:[%s4880] sm:$0xff]
        %v4882 = vld [vmem:[%s4880 + $0x8] sm:$0xff]
        %v4883 = vld [vmem:[%s4880 + $0x10] sm:$0xff]
        %v4884 = vld [vmem:[%s4880 + $0x18] sm:$0xff]
        %v4886 = vsel %vm996, %v4802, 0
        %v4889 = vsel %vm996, %v4803, 0
        %v4892 = vsel %vm996, %v4804, 0
        %v4895 = vsel %vm996, %v4805, 0
        %v4898 = vsel %vm996, %v4806, 0
        %v4901 = vsel %vm996, %v4807, 0
        %v4904 = vsel %vm996, %v4808, 0
        %v4907 = vsel %vm996, %v4809, 0
        %v4910 = vsel %vm996, %v4810, 0
        %v4913 = vsel %vm996, %v4811, 0
        %v4916 = vsel %vm996, %v4812, 0
        %v4919 = vsel %vm996, %v4813, 0
        %v4922 = vsel %vm996, %v4814, 0
        %v4925 = vsel %vm996, %v4815, 0
        %v4928 = vsel %vm996, %v4816, 0
        %v4931 = vsel %vm996, %v4817, 0
        %v4934 = vsel %vm996, %v4818, 0
        %v4937 = vsel %vm996, %v4819, 0
        %v4940 = vsel %vm996, %v4820, 0
        %v4943 = vsel %vm996, %v4821, 0
        %v4946 = vsel %vm996, %v4822, 0
        %v4949 = vsel %vm996, %v4823, 0
        %v4952 = vsel %vm996, %v4824, 0
        %v4955 = vsel %vm996, %v4825, 0
        %v4958 = vsel %vm996, %v4826, 0
        %v4961 = vsel %vm996, %v4827, 0
        %v4964 = vsel %vm996, %v4828, 0
        %v4967 = vsel %vm996, %v4829, 0
        %v4970 = vsel %vm996, %v4830, 0
        %v4973 = vsel %vm996, %v4831, 0
        %v4976 = vsel %vm996, %v4832, 0
        %v4979 = vsel %vm996, %v4833, 0
        %v4982 = vsel %vm996, %v4834, 0
        %v4985 = vsel %vm996, %v4835, 0
        %v4988 = vsel %vm996, %v4836, 0
        %v4991 = vsel %vm996, %v4837, 0
        %v4994 = vsel %vm996, %v4838, 0
        %v4997 = vsel %vm996, %v4839, 0
        %v5000 = vsel %vm996, %v4840, 0
        %v5003 = vsel %vm996, %v4841, 0
        %v5006 = vsel %vm996, %v4842, 0
        %v5009 = vsel %vm996, %v4843, 0
        %v5012 = vsel %vm996, %v4844, 0
        %v5015 = vsel %vm996, %v4845, 0
        %v5018 = vsel %vm996, %v4846, 0
        %v5021 = vsel %vm996, %v4847, 0
        %v5024 = vsel %vm996, %v4848, 0
        %v5027 = vsel %vm996, %v4849, 0
        %v5030 = vsel %vm996, %v4850, 0
        %v5033 = vsel %vm996, %v4851, 0
        %v5036 = vsel %vm996, %v4852, 0
        %v5039 = vsel %vm996, %v4853, 0
        %v5042 = vsel %vm996, %v4854, 0
        %v5045 = vsel %vm996, %v4855, 0
        %v5048 = vsel %vm996, %v4856, 0
        %v5051 = vsel %vm996, %v4857, 0
        %v5054 = vsel %vm996, %v4858, 0
        %v5057 = vsel %vm996, %v4859, 0
        %v5060 = vsel %vm996, %v4860, 0
        %v5063 = vsel %vm996, %v4861, 0
        %v5066 = vsel %vm996, %v4862, 0
        %v5069 = vsel %vm996, %v4863, 0
        %v5072 = vsel %vm996, %v4864, 0
        %v5075 = vsel %vm996, %v4865, 0
        %v5078 = vsel %vm996, %v4866, 0
        %v5081 = vsel %vm996, %v4867, 0
        %v5084 = vsel %vm996, %v4868, 0
        %v5087 = vsel %vm996, %v4869, 0
        %v5090 = vsel %vm996, %v4870, 0
        %v5093 = vsel %vm996, %v4871, 0
        %v5096 = vsel %vm996, %v4872, 0
        %v5099 = vsel %vm996, %v4873, 0
        %v5102 = vsel %vm996, %v4874, 0
        %v5105 = vsel %vm996, %v4875, 0
        %v5108 = vsel %vm996, %v4876, 0
        %v5111 = vsel %vm996, %v4877, 0
        %v5114 = vsel %vm996, %v4878, 0
        %v5117 = vsel %vm996, %v4879, 0
        %5119 = vmatpush.msra.mxu0 0.0
        %5120 = vmatpush.msra.mxu0 0.0
        %5121 = vmatpush.msra.mxu0 0.0
        %5122 = vmatpush.msra.mxu0 0.0
        %5123 = vmatpush.msra.mxu0 0.0
        %5124 = vmatpush.msra.mxu0 0.0
        %5125 = vmatpush.msra.mxu0 0.0
        %5126 = vmatpush.msra.mxu0 0.0
        %5127 = vmatpush.msra.mxu0 0.0
        %5128 = vmatpush.msra.mxu0 0.0
        %5129 = vmatpush.msra.mxu0 0.0
        %5130 = vmatpush.msra.mxu0 0.0
        %5131 = vmatpush.msra.mxu0 %v4884
        %5132 = vmatpush.msra.mxu0 %v4883
        %5133 = vmatpush.msra.mxu0 %v4882
        %5134 = vmatpush.msra.mxu0 %v4881
        %5135 = vmatmul.f32.gmra.mxu0 %v4886
        %v5136 = vpop.f32.mrf.mxu0
        %v5137 = vadd.f32 0.0, %v5136
        %5138 = vmatmul.f32.gmra.mxu0 %v4889
        %v5139 = vpop.f32.mrf.mxu0
        %v5140 = vadd.f32 0.0, %v5139
        %5141 = vmatmul.f32.gmra.mxu0 %v4892
        %v5142 = vpop.f32.mrf.mxu0
        %v5143 = vadd.f32 0.0, %v5142
        %5144 = vmatmul.f32.gmra.mxu0 %v4895
        %v5145 = vpop.f32.mrf.mxu0
        %v5146 = vadd.f32 0.0, %v5145
        %5147 = vmatmul.f32.gmra.mxu0 %v4898
        %v5148 = vpop.f32.mrf.mxu0
        %v5149 = vadd.f32 0.0, %v5148
        %5150 = vmatmul.f32.gmra.mxu0 %v4901
        %v5151 = vpop.f32.mrf.mxu0
        %v5152 = vadd.f32 0.0, %v5151
        %5153 = vmatmul.f32.gmra.mxu0 %v4904
        %v5154 = vpop.f32.mrf.mxu0
        %v5155 = vadd.f32 0.0, %v5154
        %5156 = vmatmul.f32.gmra.mxu0 %v4907
        %v5157 = vpop.f32.mrf.mxu0
        %v5158 = vadd.f32 0.0, %v5157
        %5159 = vmatmul.f32.gmra.mxu0 %v4910
        %v5160 = vpop.f32.mrf.mxu0
        %v5161 = vadd.f32 0.0, %v5160
        %5162 = vmatmul.f32.gmra.mxu0 %v4913
        %v5163 = vpop.f32.mrf.mxu0
        %v5164 = vadd.f32 0.0, %v5163
        %5165 = vmatmul.f32.gmra.mxu0 %v4916
        %v5166 = vpop.f32.mrf.mxu0
        %v5167 = vadd.f32 0.0, %v5166
        %5168 = vmatmul.f32.gmra.mxu0 %v4919
        %v5169 = vpop.f32.mrf.mxu0
        %v5170 = vadd.f32 0.0, %v5169
        %5171 = vmatmul.f32.gmra.mxu0 %v4922
        %v5172 = vpop.f32.mrf.mxu0
        %v5173 = vadd.f32 0.0, %v5172
        %5174 = vmatmul.f32.gmra.mxu0 %v4925
        %v5175 = vpop.f32.mrf.mxu0
        %v5176 = vadd.f32 0.0, %v5175
        %5177 = vmatmul.f32.gmra.mxu0 %v4928
        %v5178 = vpop.f32.mrf.mxu0
        %v5179 = vadd.f32 0.0, %v5178
        %5180 = vmatmul.f32.gmra.mxu0 %v4931
        %v5181 = vpop.f32.mrf.mxu0
        %v5182 = vadd.f32 0.0, %v5181
        %5183 = vmatmul.f32.gmra.mxu0 %v4934
        %v5184 = vpop.f32.mrf.mxu0
        %v5185 = vadd.f32 0.0, %v5184
        %5186 = vmatmul.f32.gmra.mxu0 %v4937
        %v5187 = vpop.f32.mrf.mxu0
        %v5188 = vadd.f32 0.0, %v5187
        %5189 = vmatmul.f32.gmra.mxu0 %v4940
        %v5190 = vpop.f32.mrf.mxu0
        %v5191 = vadd.f32 0.0, %v5190
        %5192 = vmatmul.f32.gmra.mxu0 %v4943
        %v5193 = vpop.f32.mrf.mxu0
        %v5194 = vadd.f32 0.0, %v5193
        %5195 = vmatmul.f32.gmra.mxu0 %v4946
        %v5196 = vpop.f32.mrf.mxu0
        %v5197 = vadd.f32 0.0, %v5196
        %5198 = vmatmul.f32.gmra.mxu0 %v4949
        %v5199 = vpop.f32.mrf.mxu0
        %v5200 = vadd.f32 0.0, %v5199
        %5201 = vmatmul.f32.gmra.mxu0 %v4952
        %v5202 = vpop.f32.mrf.mxu0
        %v5203 = vadd.f32 0.0, %v5202
        %5204 = vmatmul.f32.gmra.mxu0 %v4955
        %v5205 = vpop.f32.mrf.mxu0
        %v5206 = vadd.f32 0.0, %v5205
        %5207 = vmatmul.f32.gmra.mxu0 %v4958
        %v5208 = vpop.f32.mrf.mxu0
        %v5209 = vadd.f32 0.0, %v5208
        %5210 = vmatmul.f32.gmra.mxu0 %v4961
        %v5211 = vpop.f32.mrf.mxu0
        %v5212 = vadd.f32 0.0, %v5211
        %5213 = vmatmul.f32.gmra.mxu0 %v4964
        %v5214 = vpop.f32.mrf.mxu0
        %v5215 = vadd.f32 0.0, %v5214
        %5216 = vmatmul.f32.gmra.mxu0 %v4967
        %v5217 = vpop.f32.mrf.mxu0
        %v5218 = vadd.f32 0.0, %v5217
        %5219 = vmatmul.f32.gmra.mxu0 %v4970
        %v5220 = vpop.f32.mrf.mxu0
        %v5221 = vadd.f32 0.0, %v5220
        %5222 = vmatmul.f32.gmra.mxu0 %v4973
        %v5223 = vpop.f32.mrf.mxu0
        %v5224 = vadd.f32 0.0, %v5223
        %5225 = vmatmul.f32.gmra.mxu0 %v4976
        %v5226 = vpop.f32.mrf.mxu0
        %v5227 = vadd.f32 0.0, %v5226
        %5228 = vmatmul.f32.gmra.mxu0 %v4979
        %v5229 = vpop.f32.mrf.mxu0
        %v5230 = vadd.f32 0.0, %v5229
        %5231 = vmatmul.f32.gmra.mxu0 %v4982
        %v5232 = vpop.f32.mrf.mxu0
        %v5233 = vadd.f32 0.0, %v5232
        %5234 = vmatmul.f32.gmra.mxu0 %v4985
        %v5235 = vpop.f32.mrf.mxu0
        %v5236 = vadd.f32 0.0, %v5235
        %5237 = vmatmul.f32.gmra.mxu0 %v4988
        %v5238 = vpop.f32.mrf.mxu0
        %v5239 = vadd.f32 0.0, %v5238
        %5240 = vmatmul.f32.gmra.mxu0 %v4991
        %v5241 = vpop.f32.mrf.mxu0
        %v5242 = vadd.f32 0.0, %v5241
        %5243 = vmatmul.f32.gmra.mxu0 %v4994
        %v5244 = vpop.f32.mrf.mxu0
        %v5245 = vadd.f32 0.0, %v5244
        %5246 = vmatmul.f32.gmra.mxu0 %v4997
        %v5247 = vpop.f32.mrf.mxu0
        %v5248 = vadd.f32 0.0, %v5247
        %5249 = vmatmul.f32.gmra.mxu0 %v5000
        %v5250 = vpop.f32.mrf.mxu0
        %v5251 = vadd.f32 0.0, %v5250
        %5252 = vmatmul.f32.gmra.mxu0 %v5003
        %v5253 = vpop.f32.mrf.mxu0
        %v5254 = vadd.f32 0.0, %v5253
        %5255 = vmatmul.f32.gmra.mxu0 %v5006
        %v5256 = vpop.f32.mrf.mxu0
        %v5257 = vadd.f32 0.0, %v5256
        %5258 = vmatmul.f32.gmra.mxu0 %v5009
        %v5259 = vpop.f32.mrf.mxu0
        %v5260 = vadd.f32 0.0, %v5259
        %5261 = vmatmul.f32.gmra.mxu0 %v5012
        %v5262 = vpop.f32.mrf.mxu0
        %v5263 = vadd.f32 0.0, %v5262
        %5264 = vmatmul.f32.gmra.mxu0 %v5015
        %v5265 = vpop.f32.mrf.mxu0
        %v5266 = vadd.f32 0.0, %v5265
        %5267 = vmatmul.f32.gmra.mxu0 %v5018
        %v5268 = vpop.f32.mrf.mxu0
        %v5269 = vadd.f32 0.0, %v5268
        %5270 = vmatmul.f32.gmra.mxu0 %v5021
        %v5271 = vpop.f32.mrf.mxu0
        %v5272 = vadd.f32 0.0, %v5271
        %5273 = vmatmul.f32.gmra.mxu0 %v5024
        %v5274 = vpop.f32.mrf.mxu0
        %v5275 = vadd.f32 0.0, %v5274
        %5276 = vmatmul.f32.gmra.mxu0 %v5027
        %v5277 = vpop.f32.mrf.mxu0
        %v5278 = vadd.f32 0.0, %v5277
        %5279 = vmatmul.f32.gmra.mxu0 %v5030
        %v5280 = vpop.f32.mrf.mxu0
        %v5281 = vadd.f32 0.0, %v5280
        %5282 = vmatmul.f32.gmra.mxu0 %v5033
        %v5283 = vpop.f32.mrf.mxu0
        %v5284 = vadd.f32 0.0, %v5283
        %5285 = vmatmul.f32.gmra.mxu0 %v5036
        %v5286 = vpop.f32.mrf.mxu0
        %v5287 = vadd.f32 0.0, %v5286
        %5288 = vmatmul.f32.gmra.mxu0 %v5039
        %v5289 = vpop.f32.mrf.mxu0
        %v5290 = vadd.f32 0.0, %v5289
        %5291 = vmatmul.f32.gmra.mxu0 %v5042
        %v5292 = vpop.f32.mrf.mxu0
        %v5293 = vadd.f32 0.0, %v5292
        %5294 = vmatmul.f32.gmra.mxu0 %v5045
        %v5295 = vpop.f32.mrf.mxu0
        %v5296 = vadd.f32 0.0, %v5295
        %5297 = vmatmul.f32.gmra.mxu0 %v5048
        %v5298 = vpop.f32.mrf.mxu0
        %v5299 = vadd.f32 0.0, %v5298
        %5300 = vmatmul.f32.gmra.mxu0 %v5051
        %v5301 = vpop.f32.mrf.mxu0
        %v5302 = vadd.f32 0.0, %v5301
        %5303 = vmatmul.f32.gmra.mxu0 %v5054
        %v5304 = vpop.f32.mrf.mxu0
        %v5305 = vadd.f32 0.0, %v5304
        %5306 = vmatmul.f32.gmra.mxu0 %v5057
        %v5307 = vpop.f32.mrf.mxu0
        %v5308 = vadd.f32 0.0, %v5307
        %5309 = vmatmul.f32.gmra.mxu0 %v5060
        %v5310 = vpop.f32.mrf.mxu0
        %v5311 = vadd.f32 0.0, %v5310
        %5312 = vmatmul.f32.gmra.mxu0 %v5063
        %v5313 = vpop.f32.mrf.mxu0
        %v5314 = vadd.f32 0.0, %v5313
        %5315 = vmatmul.f32.gmra.mxu0 %v5066
        %v5316 = vpop.f32.mrf.mxu0
        %v5317 = vadd.f32 0.0, %v5316
        %5318 = vmatmul.f32.gmra.mxu0 %v5069
        %v5319 = vpop.f32.mrf.mxu0
        %v5320 = vadd.f32 0.0, %v5319
        %5321 = vmatmul.f32.gmra.mxu0 %v5072
        %v5322 = vpop.f32.mrf.mxu0
        %v5323 = vadd.f32 0.0, %v5322
        %5324 = vmatmul.f32.gmra.mxu0 %v5075
        %v5325 = vpop.f32.mrf.mxu0
        %v5326 = vadd.f32 0.0, %v5325
        %5327 = vmatmul.f32.gmra.mxu0 %v5078
        %v5328 = vpop.f32.mrf.mxu0
        %v5329 = vadd.f32 0.0, %v5328
        %5330 = vmatmul.f32.gmra.mxu0 %v5081
        %v5331 = vpop.f32.mrf.mxu0
        %v5332 = vadd.f32 0.0, %v5331
        %5333 = vmatmul.f32.gmra.mxu0 %v5084
        %v5334 = vpop.f32.mrf.mxu0
        %v5335 = vadd.f32 0.0, %v5334
        %5336 = vmatmul.f32.gmra.mxu0 %v5087
        %v5337 = vpop.f32.mrf.mxu0
        %v5338 = vadd.f32 0.0, %v5337
        %5339 = vmatmul.f32.gmra.mxu0 %v5090
        %v5340 = vpop.f32.mrf.mxu0
        %v5341 = vadd.f32 0.0, %v5340
        %5342 = vmatmul.f32.gmra.mxu0 %v5093
        %v5343 = vpop.f32.mrf.mxu0
        %v5344 = vadd.f32 0.0, %v5343
        %5345 = vmatmul.f32.gmra.mxu0 %v5096
        %v5346 = vpop.f32.mrf.mxu0
        %v5347 = vadd.f32 0.0, %v5346
        %5348 = vmatmul.f32.gmra.mxu0 %v5099
        %v5349 = vpop.f32.mrf.mxu0
        %v5350 = vadd.f32 0.0, %v5349
        %5351 = vmatmul.f32.gmra.mxu0 %v5102
        %v5352 = vpop.f32.mrf.mxu0
        %v5353 = vadd.f32 0.0, %v5352
        %5354 = vmatmul.f32.gmra.mxu0 %v5105
        %v5355 = vpop.f32.mrf.mxu0
        %v5356 = vadd.f32 0.0, %v5355
        %5357 = vmatmul.f32.gmra.mxu0 %v5108
        %v5358 = vpop.f32.mrf.mxu0
        %v5359 = vadd.f32 0.0, %v5358
        %5360 = vmatmul.f32.gmra.mxu0 %v5111
        %v5361 = vpop.f32.mrf.mxu0
        %v5362 = vadd.f32 0.0, %v5361
        %5363 = vmatmul.f32.gmra.mxu0 %v5114
        %v5364 = vpop.f32.mrf.mxu0
        %v5365 = vadd.f32 0.0, %v5364
        %5366 = vmatmul.f32.gmra.mxu0 %v5117
        %v5367 = vpop.f32.mrf.mxu0
        %v5368 = vadd.f32 0.0, %v5367
        %5369 = vdwg.mxu0
        %v5370 = vadd.f32 %v4724, %v5137
        %v5371 = vadd.f32 %v4725, %v5140
        %v5372 = vadd.f32 %v4726, %v5143
        %v5373 = vadd.f32 %v4727, %v5146
        %v5374 = vadd.f32 %v4728, %v5149
        %v5375 = vadd.f32 %v4729, %v5152
        %v5376 = vadd.f32 %v4730, %v5155
        %v5377 = vadd.f32 %v4731, %v5158
        %v5378 = vadd.f32 %v4732, %v5161
        %v5379 = vadd.f32 %v4733, %v5164
        %v5380 = vadd.f32 %v4734, %v5167
        %v5381 = vadd.f32 %v4735, %v5170
        %v5382 = vadd.f32 %v4736, %v5173
        %v5383 = vadd.f32 %v4737, %v5176
        %v5384 = vadd.f32 %v4738, %v5179
        %v5385 = vadd.f32 %v4739, %v5182
        %v5386 = vadd.f32 %v4740, %v5185
        %v5387 = vadd.f32 %v4741, %v5188
        %v5388 = vadd.f32 %v4742, %v5191
        %v5389 = vadd.f32 %v4743, %v5194
        %v5390 = vadd.f32 %v4744, %v5197
        %v5391 = vadd.f32 %v4745, %v5200
        %v5392 = vadd.f32 %v4746, %v5203
        %v5393 = vadd.f32 %v4747, %v5206
        %v5394 = vadd.f32 %v4748, %v5209
        %v5395 = vadd.f32 %v4749, %v5212
        %v5396 = vadd.f32 %v4750, %v5215
        %v5397 = vadd.f32 %v4751, %v5218
        %v5398 = vadd.f32 %v4752, %v5221
        %v5399 = vadd.f32 %v4753, %v5224
        %v5400 = vadd.f32 %v4754, %v5227
        %v5401 = vadd.f32 %v4755, %v5230
        %v5402 = vadd.f32 %v4756, %v5233
        %v5403 = vadd.f32 %v4757, %v5236
        %v5404 = vadd.f32 %v4758, %v5239
        %v5405 = vadd.f32 %v4759, %v5242
        %v5406 = vadd.f32 %v4760, %v5245
        %v5407 = vadd.f32 %v4761, %v5248
        %v5408 = vadd.f32 %v4762, %v5251
        %v5409 = vadd.f32 %v4763, %v5254
        %v5410 = vadd.f32 %v4764, %v5257
        %v5411 = vadd.f32 %v4765, %v5260
        %v5412 = vadd.f32 %v4766, %v5263
        %v5413 = vadd.f32 %v4767, %v5266
        %v5414 = vadd.f32 %v4768, %v5269
        %v5415 = vadd.f32 %v4769, %v5272
        %v5416 = vadd.f32 %v4770, %v5275
        %v5417 = vadd.f32 %v4771, %v5278
        %v5418 = vadd.f32 %v4772, %v5281
        %v5419 = vadd.f32 %v4773, %v5284
        %v5420 = vadd.f32 %v4774, %v5287
        %v5421 = vadd.f32 %v4775, %v5290
        %v5422 = vadd.f32 %v4776, %v5293
        %v5423 = vadd.f32 %v4777, %v5296
        %v5424 = vadd.f32 %v4778, %v5299
        %v5425 = vadd.f32 %v4779, %v5302
        %v5426 = vadd.f32 %v4780, %v5305
        %v5427 = vadd.f32 %v4781, %v5308
        %v5428 = vadd.f32 %v4782, %v5311
        %v5429 = vadd.f32 %v4783, %v5314
        %v5430 = vadd.f32 %v4784, %v5317
        %v5431 = vadd.f32 %v4785, %v5320
        %v5432 = vadd.f32 %v4786, %v5323
        %v5433 = vadd.f32 %v4787, %v5326
        %v5434 = vadd.f32 %v4788, %v5329
        %v5435 = vadd.f32 %v4789, %v5332
        %v5436 = vadd.f32 %v4790, %v5335
        %v5437 = vadd.f32 %v4791, %v5338
        %v5438 = vadd.f32 %v4792, %v5341
        %v5439 = vadd.f32 %v4793, %v5344
        %v5440 = vadd.f32 %v4794, %v5347
        %v5441 = vadd.f32 %v4795, %v5350
        %v5442 = vadd.f32 %v4796, %v5353
        %v5443 = vadd.f32 %v4797, %v5356
        %v5444 = vadd.f32 %v4798, %v5359
        %v5445 = vadd.f32 %v4799, %v5362
        %v5446 = vadd.f32 %v4800, %v5365
        %v5447 = vadd.f32 %v4801, %v5368
        %v5448 = vld [vmem:[#allocation2 + $0x35] sm:$0xff]
        %v5449 = vld [vmem:[#allocation2 + $0x3d] sm:$0xff]
        %v5450 = vld [vmem:[#allocation2 + $0x45] sm:$0xff]
        %v5451 = vld [vmem:[#allocation2 + $0x4d] sm:$0xff]
        %v5452 = vld [vmem:[#allocation2 + $0x55] sm:$0xff]
        %v5453 = vld [vmem:[#allocation2 + $0x5d] sm:$0xff]
        %v5454 = vld [vmem:[#allocation2 + $0x65] sm:$0xff]
        %v5455 = vld [vmem:[#allocation2 + $0x6d] sm:$0xff]
        %v5456 = vld [vmem:[#allocation2 + $0x75] sm:$0xff]
        %v5457 = vld [vmem:[#allocation2 + $0x7d] sm:$0xff]
        %v5458 = vld [vmem:[#allocation2 + $0x85] sm:$0xff]
        %v5459 = vld [vmem:[#allocation2 + $0x8d] sm:$0xff]
        %v5460 = vld [vmem:[#allocation2 + $0x95] sm:$0xff]
        %v5461 = vld [vmem:[#allocation2 + $0x9d] sm:$0xff]
        %v5462 = vld [vmem:[#allocation2 + $0xa5] sm:$0xff]
        %v5463 = vld [vmem:[#allocation2 + $0xad] sm:$0xff]
        %v5464 = vld [vmem:[#allocation2 + $0xb5] sm:$0xff]
        %v5465 = vld [vmem:[#allocation2 + $0xbd] sm:$0xff]
        %v5466 = vld [vmem:[#allocation2 + $0xc5] sm:$0xff]
        %v5467 = vld [vmem:[#allocation2 + $0xcd] sm:$0xff]
        %v5468 = vld [vmem:[#allocation2 + $0xd5] sm:$0xff]
        %v5469 = vld [vmem:[#allocation2 + $0xdd] sm:$0xff]
        %v5470 = vld [vmem:[#allocation2 + $0xe5] sm:$0xff]
        %v5471 = vld [vmem:[#allocation2 + $0xed] sm:$0xff]
        %v5472 = vld [vmem:[#allocation2 + $0xf5] sm:$0xff]
        %v5473 = vld [vmem:[#allocation2 + $0xfd] sm:$0xff]
        %v5474 = vld [vmem:[#allocation2 + $0x105] sm:$0xff]
        %v5475 = vld [vmem:[#allocation2 + $0x10d] sm:$0xff]
        %v5476 = vld [vmem:[#allocation2 + $0x115] sm:$0xff]
        %v5477 = vld [vmem:[#allocation2 + $0x11d] sm:$0xff]
        %v5478 = vld [vmem:[#allocation2 + $0x125] sm:$0xff]
        %v5479 = vld [vmem:[#allocation2 + $0x12d] sm:$0xff]
        %v5480 = vld [vmem:[#allocation2 + $0x135] sm:$0xff]
        %v5481 = vld [vmem:[#allocation2 + $0x13d] sm:$0xff]
        %v5482 = vld [vmem:[#allocation2 + $0x145] sm:$0xff]
        %v5483 = vld [vmem:[#allocation2 + $0x14d] sm:$0xff]
        %v5484 = vld [vmem:[#allocation2 + $0x155] sm:$0xff]
        %v5485 = vld [vmem:[#allocation2 + $0x15d] sm:$0xff]
        %v5486 = vld [vmem:[#allocation2 + $0x165] sm:$0xff]
        %v5487 = vld [vmem:[#allocation2 + $0x16d] sm:$0xff]
        %v5488 = vld [vmem:[#allocation2 + $0x175] sm:$0xff]
        %v5489 = vld [vmem:[#allocation2 + $0x17d] sm:$0xff]
        %v5490 = vld [vmem:[#allocation2 + $0x185] sm:$0xff]
        %v5491 = vld [vmem:[#allocation2 + $0x18d] sm:$0xff]
        %v5492 = vld [vmem:[#allocation2 + $0x195] sm:$0xff]
        %v5493 = vld [vmem:[#allocation2 + $0x19d] sm:$0xff]
        %v5494 = vld [vmem:[#allocation2 + $0x1a5] sm:$0xff]
        %v5495 = vld [vmem:[#allocation2 + $0x1ad] sm:$0xff]
        %v5496 = vld [vmem:[#allocation2 + $0x1b5] sm:$0xff]
        %v5497 = vld [vmem:[#allocation2 + $0x1bd] sm:$0xff]
        %v5498 = vld [vmem:[#allocation2 + $0x1c5] sm:$0xff]
        %v5499 = vld [vmem:[#allocation2 + $0x1cd] sm:$0xff]
        %v5500 = vld [vmem:[#allocation2 + $0x1d5] sm:$0xff]
        %v5501 = vld [vmem:[#allocation2 + $0x1dd] sm:$0xff]
        %v5502 = vld [vmem:[#allocation2 + $0x1e5] sm:$0xff]
        %v5503 = vld [vmem:[#allocation2 + $0x1ed] sm:$0xff]
        %v5504 = vld [vmem:[#allocation2 + $0x1f5] sm:$0xff]
        %v5505 = vld [vmem:[#allocation2 + $0x1fd] sm:$0xff]
        %v5506 = vld [vmem:[#allocation2 + $0x205] sm:$0xff]
        %v5507 = vld [vmem:[#allocation2 + $0x20d] sm:$0xff]
        %v5508 = vld [vmem:[#allocation2 + $0x215] sm:$0xff]
        %v5509 = vld [vmem:[#allocation2 + $0x21d] sm:$0xff]
        %v5510 = vld [vmem:[#allocation2 + $0x225] sm:$0xff]
        %v5511 = vld [vmem:[#allocation2 + $0x22d] sm:$0xff]
        %v5512 = vld [vmem:[#allocation2 + $0x235] sm:$0xff]
        %v5513 = vld [vmem:[#allocation2 + $0x23d] sm:$0xff]
        %v5514 = vld [vmem:[#allocation2 + $0x245] sm:$0xff]
        %v5515 = vld [vmem:[#allocation2 + $0x24d] sm:$0xff]
        %v5516 = vld [vmem:[#allocation2 + $0x255] sm:$0xff]
        %v5517 = vld [vmem:[#allocation2 + $0x25d] sm:$0xff]
        %v5518 = vld [vmem:[#allocation2 + $0x265] sm:$0xff]
        %v5519 = vld [vmem:[#allocation2 + $0x26d] sm:$0xff]
        %v5520 = vld [vmem:[#allocation2 + $0x275] sm:$0xff]
        %v5521 = vld [vmem:[#allocation2 + $0x27d] sm:$0xff]
        %v5522 = vld [vmem:[#allocation2 + $0x285] sm:$0xff]
        %v5523 = vld [vmem:[#allocation2 + $0x28d] sm:$0xff]
        %v5524 = vld [vmem:[#allocation2 + $0x295] sm:$0xff]
        %v5525 = vld [vmem:[#allocation2 + $0x29d] sm:$0x3f]
        %s5526 = scalar_lea.vmem [#allocation8], 224
        %v5527 = vld [vmem:[%s5526] sm:$0xff]
        %v5528 = vld [vmem:[%s5526 + $0x8] sm:$0xff]
        %v5529 = vld [vmem:[%s5526 + $0x10] sm:$0xff]
        %v5530 = vld [vmem:[%s5526 + $0x18] sm:$0xff]
        %v5532 = vsel %vm996, %v5448, 0
        %v5535 = vsel %vm996, %v5449, 0
        %v5538 = vsel %vm996, %v5450, 0
        %v5541 = vsel %vm996, %v5451, 0
        %v5544 = vsel %vm996, %v5452, 0
        %v5547 = vsel %vm996, %v5453, 0
        %v5550 = vsel %vm996, %v5454, 0
        %v5553 = vsel %vm996, %v5455, 0
        %v5556 = vsel %vm996, %v5456, 0
        %v5559 = vsel %vm996, %v5457, 0
        %v5562 = vsel %vm996, %v5458, 0
        %v5565 = vsel %vm996, %v5459, 0
        %v5568 = vsel %vm996, %v5460, 0
        %v5571 = vsel %vm996, %v5461, 0
        %v5574 = vsel %vm996, %v5462, 0
        %v5577 = vsel %vm996, %v5463, 0
        %v5580 = vsel %vm996, %v5464, 0
        %v5583 = vsel %vm996, %v5465, 0
        %v5586 = vsel %vm996, %v5466, 0
        %v5589 = vsel %vm996, %v5467, 0
        %v5592 = vsel %vm996, %v5468, 0
        %v5595 = vsel %vm996, %v5469, 0
        %v5598 = vsel %vm996, %v5470, 0
        %v5601 = vsel %vm996, %v5471, 0
        %v5604 = vsel %vm996, %v5472, 0
        %v5607 = vsel %vm996, %v5473, 0
        %v5610 = vsel %vm996, %v5474, 0
        %v5613 = vsel %vm996, %v5475, 0
        %v5616 = vsel %vm996, %v5476, 0
        %v5619 = vsel %vm996, %v5477, 0
        %v5622 = vsel %vm996, %v5478, 0
        %v5625 = vsel %vm996, %v5479, 0
        %v5628 = vsel %vm996, %v5480, 0
        %v5631 = vsel %vm996, %v5481, 0
        %v5634 = vsel %vm996, %v5482, 0
        %v5637 = vsel %vm996, %v5483, 0
        %v5640 = vsel %vm996, %v5484, 0
        %v5643 = vsel %vm996, %v5485, 0
        %v5646 = vsel %vm996, %v5486, 0
        %v5649 = vsel %vm996, %v5487, 0
        %v5652 = vsel %vm996, %v5488, 0
        %v5655 = vsel %vm996, %v5489, 0
        %v5658 = vsel %vm996, %v5490, 0
        %v5661 = vsel %vm996, %v5491, 0
        %v5664 = vsel %vm996, %v5492, 0
        %v5667 = vsel %vm996, %v5493, 0
        %v5670 = vsel %vm996, %v5494, 0
        %v5673 = vsel %vm996, %v5495, 0
        %v5676 = vsel %vm996, %v5496, 0
        %v5679 = vsel %vm996, %v5497, 0
        %v5682 = vsel %vm996, %v5498, 0
        %v5685 = vsel %vm996, %v5499, 0
        %v5688 = vsel %vm996, %v5500, 0
        %v5691 = vsel %vm996, %v5501, 0
        %v5694 = vsel %vm996, %v5502, 0
        %v5697 = vsel %vm996, %v5503, 0
        %v5700 = vsel %vm996, %v5504, 0
        %v5703 = vsel %vm996, %v5505, 0
        %v5706 = vsel %vm996, %v5506, 0
        %v5709 = vsel %vm996, %v5507, 0
        %v5712 = vsel %vm996, %v5508, 0
        %v5715 = vsel %vm996, %v5509, 0
        %v5718 = vsel %vm996, %v5510, 0
        %v5721 = vsel %vm996, %v5511, 0
        %v5724 = vsel %vm996, %v5512, 0
        %v5727 = vsel %vm996, %v5513, 0
        %v5730 = vsel %vm996, %v5514, 0
        %v5733 = vsel %vm996, %v5515, 0
        %v5736 = vsel %vm996, %v5516, 0
        %v5739 = vsel %vm996, %v5517, 0
        %v5742 = vsel %vm996, %v5518, 0
        %v5745 = vsel %vm996, %v5519, 0
        %v5748 = vsel %vm996, %v5520, 0
        %v5751 = vsel %vm996, %v5521, 0
        %v5754 = vsel %vm996, %v5522, 0
        %v5757 = vsel %vm996, %v5523, 0
        %v5760 = vsel %vm996, %v5524, 0
        %v5763 = vsel %vm996, %v5525, 0
        %5765 = vmatpush.msra.mxu0 0.0
        %5766 = vmatpush.msra.mxu0 0.0
        %5767 = vmatpush.msra.mxu0 0.0
        %5768 = vmatpush.msra.mxu0 0.0
        %5769 = vmatpush.msra.mxu0 0.0
        %5770 = vmatpush.msra.mxu0 0.0
        %5771 = vmatpush.msra.mxu0 0.0
        %5772 = vmatpush.msra.mxu0 0.0
        %5773 = vmatpush.msra.mxu0 0.0
        %5774 = vmatpush.msra.mxu0 0.0
        %5775 = vmatpush.msra.mxu0 0.0
        %5776 = vmatpush.msra.mxu0 0.0
        %5777 = vmatpush.msra.mxu0 %v5530
        %5778 = vmatpush.msra.mxu0 %v5529
        %5779 = vmatpush.msra.mxu0 %v5528
        %5780 = vmatpush.msra.mxu0 %v5527
        %5781 = vmatmul.f32.gmra.mxu0 %v5532
        %v5782 = vpop.f32.mrf.mxu0
        %v5783 = vadd.f32 0.0, %v5782
        %5784 = vmatmul.f32.gmra.mxu0 %v5535
        %v5785 = vpop.f32.mrf.mxu0
        %v5786 = vadd.f32 0.0, %v5785
        %5787 = vmatmul.f32.gmra.mxu0 %v5538
        %v5788 = vpop.f32.mrf.mxu0
        %v5789 = vadd.f32 0.0, %v5788
        %5790 = vmatmul.f32.gmra.mxu0 %v5541
        %v5791 = vpop.f32.mrf.mxu0
        %v5792 = vadd.f32 0.0, %v5791
        %5793 = vmatmul.f32.gmra.mxu0 %v5544
        %v5794 = vpop.f32.mrf.mxu0
        %v5795 = vadd.f32 0.0, %v5794
        %5796 = vmatmul.f32.gmra.mxu0 %v5547
        %v5797 = vpop.f32.mrf.mxu0
        %v5798 = vadd.f32 0.0, %v5797
        %5799 = vmatmul.f32.gmra.mxu0 %v5550
        %v5800 = vpop.f32.mrf.mxu0
        %v5801 = vadd.f32 0.0, %v5800
        %5802 = vmatmul.f32.gmra.mxu0 %v5553
        %v5803 = vpop.f32.mrf.mxu0
        %v5804 = vadd.f32 0.0, %v5803
        %5805 = vmatmul.f32.gmra.mxu0 %v5556
        %v5806 = vpop.f32.mrf.mxu0
        %v5807 = vadd.f32 0.0, %v5806
        %5808 = vmatmul.f32.gmra.mxu0 %v5559
        %v5809 = vpop.f32.mrf.mxu0
        %v5810 = vadd.f32 0.0, %v5809
        %5811 = vmatmul.f32.gmra.mxu0 %v5562
        %v5812 = vpop.f32.mrf.mxu0
        %v5813 = vadd.f32 0.0, %v5812
        %5814 = vmatmul.f32.gmra.mxu0 %v5565
        %v5815 = vpop.f32.mrf.mxu0
        %v5816 = vadd.f32 0.0, %v5815
        %5817 = vmatmul.f32.gmra.mxu0 %v5568
        %v5818 = vpop.f32.mrf.mxu0
        %v5819 = vadd.f32 0.0, %v5818
        %5820 = vmatmul.f32.gmra.mxu0 %v5571
        %v5821 = vpop.f32.mrf.mxu0
        %v5822 = vadd.f32 0.0, %v5821
        %5823 = vmatmul.f32.gmra.mxu0 %v5574
        %v5824 = vpop.f32.mrf.mxu0
        %v5825 = vadd.f32 0.0, %v5824
        %5826 = vmatmul.f32.gmra.mxu0 %v5577
        %v5827 = vpop.f32.mrf.mxu0
        %v5828 = vadd.f32 0.0, %v5827
        %5829 = vmatmul.f32.gmra.mxu0 %v5580
        %v5830 = vpop.f32.mrf.mxu0
        %v5831 = vadd.f32 0.0, %v5830
        %5832 = vmatmul.f32.gmra.mxu0 %v5583
        %v5833 = vpop.f32.mrf.mxu0
        %v5834 = vadd.f32 0.0, %v5833
        %5835 = vmatmul.f32.gmra.mxu0 %v5586
        %v5836 = vpop.f32.mrf.mxu0
        %v5837 = vadd.f32 0.0, %v5836
        %5838 = vmatmul.f32.gmra.mxu0 %v5589
        %v5839 = vpop.f32.mrf.mxu0
        %v5840 = vadd.f32 0.0, %v5839
        %5841 = vmatmul.f32.gmra.mxu0 %v5592
        %v5842 = vpop.f32.mrf.mxu0
        %v5843 = vadd.f32 0.0, %v5842
        %5844 = vmatmul.f32.gmra.mxu0 %v5595
        %v5845 = vpop.f32.mrf.mxu0
        %v5846 = vadd.f32 0.0, %v5845
        %5847 = vmatmul.f32.gmra.mxu0 %v5598
        %v5848 = vpop.f32.mrf.mxu0
        %v5849 = vadd.f32 0.0, %v5848
        %5850 = vmatmul.f32.gmra.mxu0 %v5601
        %v5851 = vpop.f32.mrf.mxu0
        %v5852 = vadd.f32 0.0, %v5851
        %5853 = vmatmul.f32.gmra.mxu0 %v5604
        %v5854 = vpop.f32.mrf.mxu0
        %v5855 = vadd.f32 0.0, %v5854
        %5856 = vmatmul.f32.gmra.mxu0 %v5607
        %v5857 = vpop.f32.mrf.mxu0
        %v5858 = vadd.f32 0.0, %v5857
        %5859 = vmatmul.f32.gmra.mxu0 %v5610
        %v5860 = vpop.f32.mrf.mxu0
        %v5861 = vadd.f32 0.0, %v5860
        %5862 = vmatmul.f32.gmra.mxu0 %v5613
        %v5863 = vpop.f32.mrf.mxu0
        %v5864 = vadd.f32 0.0, %v5863
        %5865 = vmatmul.f32.gmra.mxu0 %v5616
        %v5866 = vpop.f32.mrf.mxu0
        %v5867 = vadd.f32 0.0, %v5866
        %5868 = vmatmul.f32.gmra.mxu0 %v5619
        %v5869 = vpop.f32.mrf.mxu0
        %v5870 = vadd.f32 0.0, %v5869
        %5871 = vmatmul.f32.gmra.mxu0 %v5622
        %v5872 = vpop.f32.mrf.mxu0
        %v5873 = vadd.f32 0.0, %v5872
        %5874 = vmatmul.f32.gmra.mxu0 %v5625
        %v5875 = vpop.f32.mrf.mxu0
        %v5876 = vadd.f32 0.0, %v5875
        %5877 = vmatmul.f32.gmra.mxu0 %v5628
        %v5878 = vpop.f32.mrf.mxu0
        %v5879 = vadd.f32 0.0, %v5878
        %5880 = vmatmul.f32.gmra.mxu0 %v5631
        %v5881 = vpop.f32.mrf.mxu0
        %v5882 = vadd.f32 0.0, %v5881
        %5883 = vmatmul.f32.gmra.mxu0 %v5634
        %v5884 = vpop.f32.mrf.mxu0
        %v5885 = vadd.f32 0.0, %v5884
        %5886 = vmatmul.f32.gmra.mxu0 %v5637
        %v5887 = vpop.f32.mrf.mxu0
        %v5888 = vadd.f32 0.0, %v5887
        %5889 = vmatmul.f32.gmra.mxu0 %v5640
        %v5890 = vpop.f32.mrf.mxu0
        %v5891 = vadd.f32 0.0, %v5890
        %5892 = vmatmul.f32.gmra.mxu0 %v5643
        %v5893 = vpop.f32.mrf.mxu0
        %v5894 = vadd.f32 0.0, %v5893
        %5895 = vmatmul.f32.gmra.mxu0 %v5646
        %v5896 = vpop.f32.mrf.mxu0
        %v5897 = vadd.f32 0.0, %v5896
        %5898 = vmatmul.f32.gmra.mxu0 %v5649
        %v5899 = vpop.f32.mrf.mxu0
        %v5900 = vadd.f32 0.0, %v5899
        %5901 = vmatmul.f32.gmra.mxu0 %v5652
        %v5902 = vpop.f32.mrf.mxu0
        %v5903 = vadd.f32 0.0, %v5902
        %5904 = vmatmul.f32.gmra.mxu0 %v5655
        %v5905 = vpop.f32.mrf.mxu0
        %v5906 = vadd.f32 0.0, %v5905
        %5907 = vmatmul.f32.gmra.mxu0 %v5658
        %v5908 = vpop.f32.mrf.mxu0
        %v5909 = vadd.f32 0.0, %v5908
        %5910 = vmatmul.f32.gmra.mxu0 %v5661
        %v5911 = vpop.f32.mrf.mxu0
        %v5912 = vadd.f32 0.0, %v5911
        %5913 = vmatmul.f32.gmra.mxu0 %v5664
        %v5914 = vpop.f32.mrf.mxu0
        %v5915 = vadd.f32 0.0, %v5914
        %5916 = vmatmul.f32.gmra.mxu0 %v5667
        %v5917 = vpop.f32.mrf.mxu0
        %v5918 = vadd.f32 0.0, %v5917
        %5919 = vmatmul.f32.gmra.mxu0 %v5670
        %v5920 = vpop.f32.mrf.mxu0
        %v5921 = vadd.f32 0.0, %v5920
        %5922 = vmatmul.f32.gmra.mxu0 %v5673
        %v5923 = vpop.f32.mrf.mxu0
        %v5924 = vadd.f32 0.0, %v5923
        %5925 = vmatmul.f32.gmra.mxu0 %v5676
        %v5926 = vpop.f32.mrf.mxu0
        %v5927 = vadd.f32 0.0, %v5926
        %5928 = vmatmul.f32.gmra.mxu0 %v5679
        %v5929 = vpop.f32.mrf.mxu0
        %v5930 = vadd.f32 0.0, %v5929
        %5931 = vmatmul.f32.gmra.mxu0 %v5682
        %v5932 = vpop.f32.mrf.mxu0
        %v5933 = vadd.f32 0.0, %v5932
        %5934 = vmatmul.f32.gmra.mxu0 %v5685
        %v5935 = vpop.f32.mrf.mxu0
        %v5936 = vadd.f32 0.0, %v5935
        %5937 = vmatmul.f32.gmra.mxu0 %v5688
        %v5938 = vpop.f32.mrf.mxu0
        %v5939 = vadd.f32 0.0, %v5938
        %5940 = vmatmul.f32.gmra.mxu0 %v5691
        %v5941 = vpop.f32.mrf.mxu0
        %v5942 = vadd.f32 0.0, %v5941
        %5943 = vmatmul.f32.gmra.mxu0 %v5694
        %v5944 = vpop.f32.mrf.mxu0
        %v5945 = vadd.f32 0.0, %v5944
        %5946 = vmatmul.f32.gmra.mxu0 %v5697
        %v5947 = vpop.f32.mrf.mxu0
        %v5948 = vadd.f32 0.0, %v5947
        %5949 = vmatmul.f32.gmra.mxu0 %v5700
        %v5950 = vpop.f32.mrf.mxu0
        %v5951 = vadd.f32 0.0, %v5950
        %5952 = vmatmul.f32.gmra.mxu0 %v5703
        %v5953 = vpop.f32.mrf.mxu0
        %v5954 = vadd.f32 0.0, %v5953
        %5955 = vmatmul.f32.gmra.mxu0 %v5706
        %v5956 = vpop.f32.mrf.mxu0
        %v5957 = vadd.f32 0.0, %v5956
        %5958 = vmatmul.f32.gmra.mxu0 %v5709
        %v5959 = vpop.f32.mrf.mxu0
        %v5960 = vadd.f32 0.0, %v5959
        %5961 = vmatmul.f32.gmra.mxu0 %v5712
        %v5962 = vpop.f32.mrf.mxu0
        %v5963 = vadd.f32 0.0, %v5962
        %5964 = vmatmul.f32.gmra.mxu0 %v5715
        %v5965 = vpop.f32.mrf.mxu0
        %v5966 = vadd.f32 0.0, %v5965
        %5967 = vmatmul.f32.gmra.mxu0 %v5718
        %v5968 = vpop.f32.mrf.mxu0
        %v5969 = vadd.f32 0.0, %v5968
        %5970 = vmatmul.f32.gmra.mxu0 %v5721
        %v5971 = vpop.f32.mrf.mxu0
        %v5972 = vadd.f32 0.0, %v5971
        %5973 = vmatmul.f32.gmra.mxu0 %v5724
        %v5974 = vpop.f32.mrf.mxu0
        %v5975 = vadd.f32 0.0, %v5974
        %5976 = vmatmul.f32.gmra.mxu0 %v5727
        %v5977 = vpop.f32.mrf.mxu0
        %v5978 = vadd.f32 0.0, %v5977
        %5979 = vmatmul.f32.gmra.mxu0 %v5730
        %v5980 = vpop.f32.mrf.mxu0
        %v5981 = vadd.f32 0.0, %v5980
        %5982 = vmatmul.f32.gmra.mxu0 %v5733
        %v5983 = vpop.f32.mrf.mxu0
        %v5984 = vadd.f32 0.0, %v5983
        %5985 = vmatmul.f32.gmra.mxu0 %v5736
        %v5986 = vpop.f32.mrf.mxu0
        %v5987 = vadd.f32 0.0, %v5986
        %5988 = vmatmul.f32.gmra.mxu0 %v5739
        %v5989 = vpop.f32.mrf.mxu0
        %v5990 = vadd.f32 0.0, %v5989
        %5991 = vmatmul.f32.gmra.mxu0 %v5742
        %v5992 = vpop.f32.mrf.mxu0
        %v5993 = vadd.f32 0.0, %v5992
        %5994 = vmatmul.f32.gmra.mxu0 %v5745
        %v5995 = vpop.f32.mrf.mxu0
        %v5996 = vadd.f32 0.0, %v5995
        %5997 = vmatmul.f32.gmra.mxu0 %v5748
        %v5998 = vpop.f32.mrf.mxu0
        %v5999 = vadd.f32 0.0, %v5998
        %6000 = vmatmul.f32.gmra.mxu0 %v5751
        %v6001 = vpop.f32.mrf.mxu0
        %v6002 = vadd.f32 0.0, %v6001
        %6003 = vmatmul.f32.gmra.mxu0 %v5754
        %v6004 = vpop.f32.mrf.mxu0
        %v6005 = vadd.f32 0.0, %v6004
        %6006 = vmatmul.f32.gmra.mxu0 %v5757
        %v6007 = vpop.f32.mrf.mxu0
        %v6008 = vadd.f32 0.0, %v6007
        %6009 = vmatmul.f32.gmra.mxu0 %v5760
        %v6010 = vpop.f32.mrf.mxu0
        %v6011 = vadd.f32 0.0, %v6010
        %6012 = vmatmul.f32.gmra.mxu0 %v5763
        %v6013 = vpop.f32.mrf.mxu0
        %v6014 = vadd.f32 0.0, %v6013
        %6015 = vdwg.mxu0
        %v6016 = vadd.f32 %v5370, %v5783
        %v6017 = vadd.f32 %v5371, %v5786
        %v6018 = vadd.f32 %v5372, %v5789
        %v6019 = vadd.f32 %v5373, %v5792
        %v6020 = vadd.f32 %v5374, %v5795
        %v6021 = vadd.f32 %v5375, %v5798
        %v6022 = vadd.f32 %v5376, %v5801
        %v6023 = vadd.f32 %v5377, %v5804
        %v6024 = vadd.f32 %v5378, %v5807
        %v6025 = vadd.f32 %v5379, %v5810
        %v6026 = vadd.f32 %v5380, %v5813
        %v6027 = vadd.f32 %v5381, %v5816
        %v6028 = vadd.f32 %v5382, %v5819
        %v6029 = vadd.f32 %v5383, %v5822
        %v6030 = vadd.f32 %v5384, %v5825
        %v6031 = vadd.f32 %v5385, %v5828
        %v6032 = vadd.f32 %v5386, %v5831
        %v6033 = vadd.f32 %v5387, %v5834
        %v6034 = vadd.f32 %v5388, %v5837
        %v6035 = vadd.f32 %v5389, %v5840
        %v6036 = vadd.f32 %v5390, %v5843
        %v6037 = vadd.f32 %v5391, %v5846
        %v6038 = vadd.f32 %v5392, %v5849
        %v6039 = vadd.f32 %v5393, %v5852
        %v6040 = vadd.f32 %v5394, %v5855
        %v6041 = vadd.f32 %v5395, %v5858
        %v6042 = vadd.f32 %v5396, %v5861
        %v6043 = vadd.f32 %v5397, %v5864
        %v6044 = vadd.f32 %v5398, %v5867
        %v6045 = vadd.f32 %v5399, %v5870
        %v6046 = vadd.f32 %v5400, %v5873
        %v6047 = vadd.f32 %v5401, %v5876
        %v6048 = vadd.f32 %v5402, %v5879
        %v6049 = vadd.f32 %v5403, %v5882
        %v6050 = vadd.f32 %v5404, %v5885
        %v6051 = vadd.f32 %v5405, %v5888
        %v6052 = vadd.f32 %v5406, %v5891
        %v6053 = vadd.f32 %v5407, %v5894
        %v6054 = vadd.f32 %v5408, %v5897
        %v6055 = vadd.f32 %v5409, %v5900
        %v6056 = vadd.f32 %v5410, %v5903
        %v6057 = vadd.f32 %v5411, %v5906
        %v6058 = vadd.f32 %v5412, %v5909
        %v6059 = vadd.f32 %v5413, %v5912
        %v6060 = vadd.f32 %v5414, %v5915
        %v6061 = vadd.f32 %v5415, %v5918
        %v6062 = vadd.f32 %v5416, %v5921
        %v6063 = vadd.f32 %v5417, %v5924
        %v6064 = vadd.f32 %v5418, %v5927
        %v6065 = vadd.f32 %v5419, %v5930
        %v6066 = vadd.f32 %v5420, %v5933
        %v6067 = vadd.f32 %v5421, %v5936
        %v6068 = vadd.f32 %v5422, %v5939
        %v6069 = vadd.f32 %v5423, %v5942
        %v6070 = vadd.f32 %v5424, %v5945
        %v6071 = vadd.f32 %v5425, %v5948
        %v6072 = vadd.f32 %v5426, %v5951
        %v6073 = vadd.f32 %v5427, %v5954
        %v6074 = vadd.f32 %v5428, %v5957
        %v6075 = vadd.f32 %v5429, %v5960
        %v6076 = vadd.f32 %v5430, %v5963
        %v6077 = vadd.f32 %v5431, %v5966
        %v6078 = vadd.f32 %v5432, %v5969
        %v6079 = vadd.f32 %v5433, %v5972
        %v6080 = vadd.f32 %v5434, %v5975
        %v6081 = vadd.f32 %v5435, %v5978
        %v6082 = vadd.f32 %v5436, %v5981
        %v6083 = vadd.f32 %v5437, %v5984
        %v6084 = vadd.f32 %v5438, %v5987
        %v6085 = vadd.f32 %v5439, %v5990
        %v6086 = vadd.f32 %v5440, %v5993
        %v6087 = vadd.f32 %v5441, %v5996
        %v6088 = vadd.f32 %v5442, %v5999
        %v6089 = vadd.f32 %v5443, %v6002
        %v6090 = vadd.f32 %v5444, %v6005
        %v6091 = vadd.f32 %v5445, %v6008
        %v6092 = vadd.f32 %v5446, %v6011
        %v6093 = vadd.f32 %v5447, %v6014
        %v6094 = vld [vmem:[#allocation2 + $0x36] sm:$0xff]
        %v6095 = vld [vmem:[#allocation2 + $0x3e] sm:$0xff]
        %v6096 = vld [vmem:[#allocation2 + $0x46] sm:$0xff]
        %v6097 = vld [vmem:[#allocation2 + $0x4e] sm:$0xff]
        %v6098 = vld [vmem:[#allocation2 + $0x56] sm:$0xff]
        %v6099 = vld [vmem:[#allocation2 + $0x5e] sm:$0xff]
        %v6100 = vld [vmem:[#allocation2 + $0x66] sm:$0xff]
        %v6101 = vld [vmem:[#allocation2 + $0x6e] sm:$0xff]
        %v6102 = vld [vmem:[#allocation2 + $0x76] sm:$0xff]
        %v6103 = vld [vmem:[#allocation2 + $0x7e] sm:$0xff]
        %v6104 = vld [vmem:[#allocation2 + $0x86] sm:$0xff]
        %v6105 = vld [vmem:[#allocation2 + $0x8e] sm:$0xff]
        %v6106 = vld [vmem:[#allocation2 + $0x96] sm:$0xff]
        %v6107 = vld [vmem:[#allocation2 + $0x9e] sm:$0xff]
        %v6108 = vld [vmem:[#allocation2 + $0xa6] sm:$0xff]
        %v6109 = vld [vmem:[#allocation2 + $0xae] sm:$0xff]
        %v6110 = vld [vmem:[#allocation2 + $0xb6] sm:$0xff]
        %v6111 = vld [vmem:[#allocation2 + $0xbe] sm:$0xff]
        %v6112 = vld [vmem:[#allocation2 + $0xc6] sm:$0xff]
        %v6113 = vld [vmem:[#allocation2 + $0xce] sm:$0xff]
        %v6114 = vld [vmem:[#allocation2 + $0xd6] sm:$0xff]
        %v6115 = vld [vmem:[#allocation2 + $0xde] sm:$0xff]
        %v6116 = vld [vmem:[#allocation2 + $0xe6] sm:$0xff]
        %v6117 = vld [vmem:[#allocation2 + $0xee] sm:$0xff]
        %v6118 = vld [vmem:[#allocation2 + $0xf6] sm:$0xff]
        %v6119 = vld [vmem:[#allocation2 + $0xfe] sm:$0xff]
        %v6120 = vld [vmem:[#allocation2 + $0x106] sm:$0xff]
        %v6121 = vld [vmem:[#allocation2 + $0x10e] sm:$0xff]
        %v6122 = vld [vmem:[#allocation2 + $0x116] sm:$0xff]
        %v6123 = vld [vmem:[#allocation2 + $0x11e] sm:$0xff]
        %v6124 = vld [vmem:[#allocation2 + $0x126] sm:$0xff]
        %v6125 = vld [vmem:[#allocation2 + $0x12e] sm:$0xff]
        %v6126 = vld [vmem:[#allocation2 + $0x136] sm:$0xff]
        %v6127 = vld [vmem:[#allocation2 + $0x13e] sm:$0xff]
        %v6128 = vld [vmem:[#allocation2 + $0x146] sm:$0xff]
        %v6129 = vld [vmem:[#allocation2 + $0x14e] sm:$0xff]
        %v6130 = vld [vmem:[#allocation2 + $0x156] sm:$0xff]
        %v6131 = vld [vmem:[#allocation2 + $0x15e] sm:$0xff]
        %v6132 = vld [vmem:[#allocation2 + $0x166] sm:$0xff]
        %v6133 = vld [vmem:[#allocation2 + $0x16e] sm:$0xff]
        %v6134 = vld [vmem:[#allocation2 + $0x176] sm:$0xff]
        %v6135 = vld [vmem:[#allocation2 + $0x17e] sm:$0xff]
        %v6136 = vld [vmem:[#allocation2 + $0x186] sm:$0xff]
        %v6137 = vld [vmem:[#allocation2 + $0x18e] sm:$0xff]
        %v6138 = vld [vmem:[#allocation2 + $0x196] sm:$0xff]
        %v6139 = vld [vmem:[#allocation2 + $0x19e] sm:$0xff]
        %v6140 = vld [vmem:[#allocation2 + $0x1a6] sm:$0xff]
        %v6141 = vld [vmem:[#allocation2 + $0x1ae] sm:$0xff]
        %v6142 = vld [vmem:[#allocation2 + $0x1b6] sm:$0xff]
        %v6143 = vld [vmem:[#allocation2 + $0x1be] sm:$0xff]
        %v6144 = vld [vmem:[#allocation2 + $0x1c6] sm:$0xff]
        %v6145 = vld [vmem:[#allocation2 + $0x1ce] sm:$0xff]
        %v6146 = vld [vmem:[#allocation2 + $0x1d6] sm:$0xff]
        %v6147 = vld [vmem:[#allocation2 + $0x1de] sm:$0xff]
        %v6148 = vld [vmem:[#allocation2 + $0x1e6] sm:$0xff]
        %v6149 = vld [vmem:[#allocation2 + $0x1ee] sm:$0xff]
        %v6150 = vld [vmem:[#allocation2 + $0x1f6] sm:$0xff]
        %v6151 = vld [vmem:[#allocation2 + $0x1fe] sm:$0xff]
        %v6152 = vld [vmem:[#allocation2 + $0x206] sm:$0xff]
        %v6153 = vld [vmem:[#allocation2 + $0x20e] sm:$0xff]
        %v6154 = vld [vmem:[#allocation2 + $0x216] sm:$0xff]
        %v6155 = vld [vmem:[#allocation2 + $0x21e] sm:$0xff]
        %v6156 = vld [vmem:[#allocation2 + $0x226] sm:$0xff]
        %v6157 = vld [vmem:[#allocation2 + $0x22e] sm:$0xff]
        %v6158 = vld [vmem:[#allocation2 + $0x236] sm:$0xff]
        %v6159 = vld [vmem:[#allocation2 + $0x23e] sm:$0xff]
        %v6160 = vld [vmem:[#allocation2 + $0x246] sm:$0xff]
        %v6161 = vld [vmem:[#allocation2 + $0x24e] sm:$0xff]
        %v6162 = vld [vmem:[#allocation2 + $0x256] sm:$0xff]
        %v6163 = vld [vmem:[#allocation2 + $0x25e] sm:$0xff]
        %v6164 = vld [vmem:[#allocation2 + $0x266] sm:$0xff]
        %v6165 = vld [vmem:[#allocation2 + $0x26e] sm:$0xff]
        %v6166 = vld [vmem:[#allocation2 + $0x276] sm:$0xff]
        %v6167 = vld [vmem:[#allocation2 + $0x27e] sm:$0xff]
        %v6168 = vld [vmem:[#allocation2 + $0x286] sm:$0xff]
        %v6169 = vld [vmem:[#allocation2 + $0x28e] sm:$0xff]
        %v6170 = vld [vmem:[#allocation2 + $0x296] sm:$0xff]
        %v6171 = vld [vmem:[#allocation2 + $0x29e] sm:$0x3f]
        %s6172 = scalar_lea.vmem [#allocation8], 256
        %v6173 = vld [vmem:[%s6172] sm:$0xff]
        %v6174 = vld [vmem:[%s6172 + $0x8] sm:$0xff]
        %v6175 = vld [vmem:[%s6172 + $0x10] sm:$0xff]
        %v6176 = vld [vmem:[%s6172 + $0x18] sm:$0xff]
        %v6178 = vsel %vm996, %v6094, 0
        %v6181 = vsel %vm996, %v6095, 0
        %v6184 = vsel %vm996, %v6096, 0
        %v6187 = vsel %vm996, %v6097, 0
        %v6190 = vsel %vm996, %v6098, 0
        %v6193 = vsel %vm996, %v6099, 0
        %v6196 = vsel %vm996, %v6100, 0
        %v6199 = vsel %vm996, %v6101, 0
        %v6202 = vsel %vm996, %v6102, 0
        %v6205 = vsel %vm996, %v6103, 0
        %v6208 = vsel %vm996, %v6104, 0
        %v6211 = vsel %vm996, %v6105, 0
        %v6214 = vsel %vm996, %v6106, 0
        %v6217 = vsel %vm996, %v6107, 0
        %v6220 = vsel %vm996, %v6108, 0
        %v6223 = vsel %vm996, %v6109, 0
        %v6226 = vsel %vm996, %v6110, 0
        %v6229 = vsel %vm996, %v6111, 0
        %v6232 = vsel %vm996, %v6112, 0
        %v6235 = vsel %vm996, %v6113, 0
        %v6238 = vsel %vm996, %v6114, 0
        %v6241 = vsel %vm996, %v6115, 0
        %v6244 = vsel %vm996, %v6116, 0
        %v6247 = vsel %vm996, %v6117, 0
        %v6250 = vsel %vm996, %v6118, 0
        %v6253 = vsel %vm996, %v6119, 0
        %v6256 = vsel %vm996, %v6120, 0
        %v6259 = vsel %vm996, %v6121, 0
        %v6262 = vsel %vm996, %v6122, 0
        %v6265 = vsel %vm996, %v6123, 0
        %v6268 = vsel %vm996, %v6124, 0
        %v6271 = vsel %vm996, %v6125, 0
        %v6274 = vsel %vm996, %v6126, 0
        %v6277 = vsel %vm996, %v6127, 0
        %v6280 = vsel %vm996, %v6128, 0
        %v6283 = vsel %vm996, %v6129, 0
        %v6286 = vsel %vm996, %v6130, 0
        %v6289 = vsel %vm996, %v6131, 0
        %v6292 = vsel %vm996, %v6132, 0
        %v6295 = vsel %vm996, %v6133, 0
        %v6298 = vsel %vm996, %v6134, 0
        %v6301 = vsel %vm996, %v6135, 0
        %v6304 = vsel %vm996, %v6136, 0
        %v6307 = vsel %vm996, %v6137, 0
        %v6310 = vsel %vm996, %v6138, 0
        %v6313 = vsel %vm996, %v6139, 0
        %v6316 = vsel %vm996, %v6140, 0
        %v6319 = vsel %vm996, %v6141, 0
        %v6322 = vsel %vm996, %v6142, 0
        %v6325 = vsel %vm996, %v6143, 0
        %v6328 = vsel %vm996, %v6144, 0
        %v6331 = vsel %vm996, %v6145, 0
        %v6334 = vsel %vm996, %v6146, 0
        %v6337 = vsel %vm996, %v6147, 0
        %v6340 = vsel %vm996, %v6148, 0
        %v6343 = vsel %vm996, %v6149, 0
        %v6346 = vsel %vm996, %v6150, 0
        %v6349 = vsel %vm996, %v6151, 0
        %v6352 = vsel %vm996, %v6152, 0
        %v6355 = vsel %vm996, %v6153, 0
        %v6358 = vsel %vm996, %v6154, 0
        %v6361 = vsel %vm996, %v6155, 0
        %v6364 = vsel %vm996, %v6156, 0
        %v6367 = vsel %vm996, %v6157, 0
        %v6370 = vsel %vm996, %v6158, 0
        %v6373 = vsel %vm996, %v6159, 0
        %v6376 = vsel %vm996, %v6160, 0
        %v6379 = vsel %vm996, %v6161, 0
        %v6382 = vsel %vm996, %v6162, 0
        %v6385 = vsel %vm996, %v6163, 0
        %v6388 = vsel %vm996, %v6164, 0
        %v6391 = vsel %vm996, %v6165, 0
        %v6394 = vsel %vm996, %v6166, 0
        %v6397 = vsel %vm996, %v6167, 0
        %v6400 = vsel %vm996, %v6168, 0
        %v6403 = vsel %vm996, %v6169, 0
        %v6406 = vsel %vm996, %v6170, 0
        %v6409 = vsel %vm996, %v6171, 0
        %6411 = vmatpush.msra.mxu0 0.0
        %6412 = vmatpush.msra.mxu0 0.0
        %6413 = vmatpush.msra.mxu0 0.0
        %6414 = vmatpush.msra.mxu0 0.0
        %6415 = vmatpush.msra.mxu0 0.0
        %6416 = vmatpush.msra.mxu0 0.0
        %6417 = vmatpush.msra.mxu0 0.0
        %6418 = vmatpush.msra.mxu0 0.0
        %6419 = vmatpush.msra.mxu0 0.0
        %6420 = vmatpush.msra.mxu0 0.0
        %6421 = vmatpush.msra.mxu0 0.0
        %6422 = vmatpush.msra.mxu0 0.0
        %6423 = vmatpush.msra.mxu0 %v6176
        %6424 = vmatpush.msra.mxu0 %v6175
        %6425 = vmatpush.msra.mxu0 %v6174
        %6426 = vmatpush.msra.mxu0 %v6173
        %6427 = vmatmul.f32.gmra.mxu0 %v6178
        %v6428 = vpop.f32.mrf.mxu0
        %v6429 = vadd.f32 0.0, %v6428
        %6430 = vmatmul.f32.gmra.mxu0 %v6181
        %v6431 = vpop.f32.mrf.mxu0
        %v6432 = vadd.f32 0.0, %v6431
        %6433 = vmatmul.f32.gmra.mxu0 %v6184
        %v6434 = vpop.f32.mrf.mxu0
        %v6435 = vadd.f32 0.0, %v6434
        %6436 = vmatmul.f32.gmra.mxu0 %v6187
        %v6437 = vpop.f32.mrf.mxu0
        %v6438 = vadd.f32 0.0, %v6437
        %6439 = vmatmul.f32.gmra.mxu0 %v6190
        %v6440 = vpop.f32.mrf.mxu0
        %v6441 = vadd.f32 0.0, %v6440
        %6442 = vmatmul.f32.gmra.mxu0 %v6193
        %v6443 = vpop.f32.mrf.mxu0
        %v6444 = vadd.f32 0.0, %v6443
        %6445 = vmatmul.f32.gmra.mxu0 %v6196
        %v6446 = vpop.f32.mrf.mxu0
        %v6447 = vadd.f32 0.0, %v6446
        %6448 = vmatmul.f32.gmra.mxu0 %v6199
        %v6449 = vpop.f32.mrf.mxu0
        %v6450 = vadd.f32 0.0, %v6449
        %6451 = vmatmul.f32.gmra.mxu0 %v6202
        %v6452 = vpop.f32.mrf.mxu0
        %v6453 = vadd.f32 0.0, %v6452
        %6454 = vmatmul.f32.gmra.mxu0 %v6205
        %v6455 = vpop.f32.mrf.mxu0
        %v6456 = vadd.f32 0.0, %v6455
        %6457 = vmatmul.f32.gmra.mxu0 %v6208
        %v6458 = vpop.f32.mrf.mxu0
        %v6459 = vadd.f32 0.0, %v6458
        %6460 = vmatmul.f32.gmra.mxu0 %v6211
        %v6461 = vpop.f32.mrf.mxu0
        %v6462 = vadd.f32 0.0, %v6461
        %6463 = vmatmul.f32.gmra.mxu0 %v6214
        %v6464 = vpop.f32.mrf.mxu0
        %v6465 = vadd.f32 0.0, %v6464
        %6466 = vmatmul.f32.gmra.mxu0 %v6217
        %v6467 = vpop.f32.mrf.mxu0
        %v6468 = vadd.f32 0.0, %v6467
        %6469 = vmatmul.f32.gmra.mxu0 %v6220
        %v6470 = vpop.f32.mrf.mxu0
        %v6471 = vadd.f32 0.0, %v6470
        %6472 = vmatmul.f32.gmra.mxu0 %v6223
        %v6473 = vpop.f32.mrf.mxu0
        %v6474 = vadd.f32 0.0, %v6473
        %6475 = vmatmul.f32.gmra.mxu0 %v6226
        %v6476 = vpop.f32.mrf.mxu0
        %v6477 = vadd.f32 0.0, %v6476
        %6478 = vmatmul.f32.gmra.mxu0 %v6229
        %v6479 = vpop.f32.mrf.mxu0
        %v6480 = vadd.f32 0.0, %v6479
        %6481 = vmatmul.f32.gmra.mxu0 %v6232
        %v6482 = vpop.f32.mrf.mxu0
        %v6483 = vadd.f32 0.0, %v6482
        %6484 = vmatmul.f32.gmra.mxu0 %v6235
        %v6485 = vpop.f32.mrf.mxu0
        %v6486 = vadd.f32 0.0, %v6485
        %6487 = vmatmul.f32.gmra.mxu0 %v6238
        %v6488 = vpop.f32.mrf.mxu0
        %v6489 = vadd.f32 0.0, %v6488
        %6490 = vmatmul.f32.gmra.mxu0 %v6241
        %v6491 = vpop.f32.mrf.mxu0
        %v6492 = vadd.f32 0.0, %v6491
        %6493 = vmatmul.f32.gmra.mxu0 %v6244
        %v6494 = vpop.f32.mrf.mxu0
        %v6495 = vadd.f32 0.0, %v6494
        %6496 = vmatmul.f32.gmra.mxu0 %v6247
        %v6497 = vpop.f32.mrf.mxu0
        %v6498 = vadd.f32 0.0, %v6497
        %6499 = vmatmul.f32.gmra.mxu0 %v6250
        %v6500 = vpop.f32.mrf.mxu0
        %v6501 = vadd.f32 0.0, %v6500
        %6502 = vmatmul.f32.gmra.mxu0 %v6253
        %v6503 = vpop.f32.mrf.mxu0
        %v6504 = vadd.f32 0.0, %v6503
        %6505 = vmatmul.f32.gmra.mxu0 %v6256
        %v6506 = vpop.f32.mrf.mxu0
        %v6507 = vadd.f32 0.0, %v6506
        %6508 = vmatmul.f32.gmra.mxu0 %v6259
        %v6509 = vpop.f32.mrf.mxu0
        %v6510 = vadd.f32 0.0, %v6509
        %6511 = vmatmul.f32.gmra.mxu0 %v6262
        %v6512 = vpop.f32.mrf.mxu0
        %v6513 = vadd.f32 0.0, %v6512
        %6514 = vmatmul.f32.gmra.mxu0 %v6265
        %v6515 = vpop.f32.mrf.mxu0
        %v6516 = vadd.f32 0.0, %v6515
        %6517 = vmatmul.f32.gmra.mxu0 %v6268
        %v6518 = vpop.f32.mrf.mxu0
        %v6519 = vadd.f32 0.0, %v6518
        %6520 = vmatmul.f32.gmra.mxu0 %v6271
        %v6521 = vpop.f32.mrf.mxu0
        %v6522 = vadd.f32 0.0, %v6521
        %6523 = vmatmul.f32.gmra.mxu0 %v6274
        %v6524 = vpop.f32.mrf.mxu0
        %v6525 = vadd.f32 0.0, %v6524
        %6526 = vmatmul.f32.gmra.mxu0 %v6277
        %v6527 = vpop.f32.mrf.mxu0
        %v6528 = vadd.f32 0.0, %v6527
        %6529 = vmatmul.f32.gmra.mxu0 %v6280
        %v6530 = vpop.f32.mrf.mxu0
        %v6531 = vadd.f32 0.0, %v6530
        %6532 = vmatmul.f32.gmra.mxu0 %v6283
        %v6533 = vpop.f32.mrf.mxu0
        %v6534 = vadd.f32 0.0, %v6533
        %6535 = vmatmul.f32.gmra.mxu0 %v6286
        %v6536 = vpop.f32.mrf.mxu0
        %v6537 = vadd.f32 0.0, %v6536
        %6538 = vmatmul.f32.gmra.mxu0 %v6289
        %v6539 = vpop.f32.mrf.mxu0
        %v6540 = vadd.f32 0.0, %v6539
        %6541 = vmatmul.f32.gmra.mxu0 %v6292
        %v6542 = vpop.f32.mrf.mxu0
        %v6543 = vadd.f32 0.0, %v6542
        %6544 = vmatmul.f32.gmra.mxu0 %v6295
        %v6545 = vpop.f32.mrf.mxu0
        %v6546 = vadd.f32 0.0, %v6545
        %6547 = vmatmul.f32.gmra.mxu0 %v6298
        %v6548 = vpop.f32.mrf.mxu0
        %v6549 = vadd.f32 0.0, %v6548
        %6550 = vmatmul.f32.gmra.mxu0 %v6301
        %v6551 = vpop.f32.mrf.mxu0
        %v6552 = vadd.f32 0.0, %v6551
        %6553 = vmatmul.f32.gmra.mxu0 %v6304
        %v6554 = vpop.f32.mrf.mxu0
        %v6555 = vadd.f32 0.0, %v6554
        %6556 = vmatmul.f32.gmra.mxu0 %v6307
        %v6557 = vpop.f32.mrf.mxu0
        %v6558 = vadd.f32 0.0, %v6557
        %6559 = vmatmul.f32.gmra.mxu0 %v6310
        %v6560 = vpop.f32.mrf.mxu0
        %v6561 = vadd.f32 0.0, %v6560
        %6562 = vmatmul.f32.gmra.mxu0 %v6313
        %v6563 = vpop.f32.mrf.mxu0
        %v6564 = vadd.f32 0.0, %v6563
        %6565 = vmatmul.f32.gmra.mxu0 %v6316
        %v6566 = vpop.f32.mrf.mxu0
        %v6567 = vadd.f32 0.0, %v6566
        %6568 = vmatmul.f32.gmra.mxu0 %v6319
        %v6569 = vpop.f32.mrf.mxu0
        %v6570 = vadd.f32 0.0, %v6569
        %6571 = vmatmul.f32.gmra.mxu0 %v6322
        %v6572 = vpop.f32.mrf.mxu0
        %v6573 = vadd.f32 0.0, %v6572
        %6574 = vmatmul.f32.gmra.mxu0 %v6325
        %v6575 = vpop.f32.mrf.mxu0
        %v6576 = vadd.f32 0.0, %v6575
        %6577 = vmatmul.f32.gmra.mxu0 %v6328
        %v6578 = vpop.f32.mrf.mxu0
        %v6579 = vadd.f32 0.0, %v6578
        %6580 = vmatmul.f32.gmra.mxu0 %v6331
        %v6581 = vpop.f32.mrf.mxu0
        %v6582 = vadd.f32 0.0, %v6581
        %6583 = vmatmul.f32.gmra.mxu0 %v6334
        %v6584 = vpop.f32.mrf.mxu0
        %v6585 = vadd.f32 0.0, %v6584
        %6586 = vmatmul.f32.gmra.mxu0 %v6337
        %v6587 = vpop.f32.mrf.mxu0
        %v6588 = vadd.f32 0.0, %v6587
        %6589 = vmatmul.f32.gmra.mxu0 %v6340
        %v6590 = vpop.f32.mrf.mxu0
        %v6591 = vadd.f32 0.0, %v6590
        %6592 = vmatmul.f32.gmra.mxu0 %v6343
        %v6593 = vpop.f32.mrf.mxu0
        %v6594 = vadd.f32 0.0, %v6593
        %6595 = vmatmul.f32.gmra.mxu0 %v6346
        %v6596 = vpop.f32.mrf.mxu0
        %v6597 = vadd.f32 0.0, %v6596
        %6598 = vmatmul.f32.gmra.mxu0 %v6349
        %v6599 = vpop.f32.mrf.mxu0
        %v6600 = vadd.f32 0.0, %v6599
        %6601 = vmatmul.f32.gmra.mxu0 %v6352
        %v6602 = vpop.f32.mrf.mxu0
        %v6603 = vadd.f32 0.0, %v6602
        %6604 = vmatmul.f32.gmra.mxu0 %v6355
        %v6605 = vpop.f32.mrf.mxu0
        %v6606 = vadd.f32 0.0, %v6605
        %6607 = vmatmul.f32.gmra.mxu0 %v6358
        %v6608 = vpop.f32.mrf.mxu0
        %v6609 = vadd.f32 0.0, %v6608
        %6610 = vmatmul.f32.gmra.mxu0 %v6361
        %v6611 = vpop.f32.mrf.mxu0
        %v6612 = vadd.f32 0.0, %v6611
        %6613 = vmatmul.f32.gmra.mxu0 %v6364
        %v6614 = vpop.f32.mrf.mxu0
        %v6615 = vadd.f32 0.0, %v6614
        %6616 = vmatmul.f32.gmra.mxu0 %v6367
        %v6617 = vpop.f32.mrf.mxu0
        %v6618 = vadd.f32 0.0, %v6617
        %6619 = vmatmul.f32.gmra.mxu0 %v6370
        %v6620 = vpop.f32.mrf.mxu0
        %v6621 = vadd.f32 0.0, %v6620
        %6622 = vmatmul.f32.gmra.mxu0 %v6373
        %v6623 = vpop.f32.mrf.mxu0
        %v6624 = vadd.f32 0.0, %v6623
        %6625 = vmatmul.f32.gmra.mxu0 %v6376
        %v6626 = vpop.f32.mrf.mxu0
        %v6627 = vadd.f32 0.0, %v6626
        %6628 = vmatmul.f32.gmra.mxu0 %v6379
        %v6629 = vpop.f32.mrf.mxu0
        %v6630 = vadd.f32 0.0, %v6629
        %6631 = vmatmul.f32.gmra.mxu0 %v6382
        %v6632 = vpop.f32.mrf.mxu0
        %v6633 = vadd.f32 0.0, %v6632
        %6634 = vmatmul.f32.gmra.mxu0 %v6385
        %v6635 = vpop.f32.mrf.mxu0
        %v6636 = vadd.f32 0.0, %v6635
        %6637 = vmatmul.f32.gmra.mxu0 %v6388
        %v6638 = vpop.f32.mrf.mxu0
        %v6639 = vadd.f32 0.0, %v6638
        %6640 = vmatmul.f32.gmra.mxu0 %v6391
        %v6641 = vpop.f32.mrf.mxu0
        %v6642 = vadd.f32 0.0, %v6641
        %6643 = vmatmul.f32.gmra.mxu0 %v6394
        %v6644 = vpop.f32.mrf.mxu0
        %v6645 = vadd.f32 0.0, %v6644
        %6646 = vmatmul.f32.gmra.mxu0 %v6397
        %v6647 = vpop.f32.mrf.mxu0
        %v6648 = vadd.f32 0.0, %v6647
        %6649 = vmatmul.f32.gmra.mxu0 %v6400
        %v6650 = vpop.f32.mrf.mxu0
        %v6651 = vadd.f32 0.0, %v6650
        %6652 = vmatmul.f32.gmra.mxu0 %v6403
        %v6653 = vpop.f32.mrf.mxu0
        %v6654 = vadd.f32 0.0, %v6653
        %6655 = vmatmul.f32.gmra.mxu0 %v6406
        %v6656 = vpop.f32.mrf.mxu0
        %v6657 = vadd.f32 0.0, %v6656
        %6658 = vmatmul.f32.gmra.mxu0 %v6409
        %v6659 = vpop.f32.mrf.mxu0
        %v6660 = vadd.f32 0.0, %v6659
        %6661 = vdwg.mxu0
        %v6662 = vadd.f32 %v6016, %v6429
        %v6663 = vadd.f32 %v6017, %v6432
        %v6664 = vadd.f32 %v6018, %v6435
        %v6665 = vadd.f32 %v6019, %v6438
        %v6666 = vadd.f32 %v6020, %v6441
        %v6667 = vadd.f32 %v6021, %v6444
        %v6668 = vadd.f32 %v6022, %v6447
        %v6669 = vadd.f32 %v6023, %v6450
        %v6670 = vadd.f32 %v6024, %v6453
        %v6671 = vadd.f32 %v6025, %v6456
        %v6672 = vadd.f32 %v6026, %v6459
        %v6673 = vadd.f32 %v6027, %v6462
        %v6674 = vadd.f32 %v6028, %v6465
        %v6675 = vadd.f32 %v6029, %v6468
        %v6676 = vadd.f32 %v6030, %v6471
        %v6677 = vadd.f32 %v6031, %v6474
        %v6678 = vadd.f32 %v6032, %v6477
        %v6679 = vadd.f32 %v6033, %v6480
        %v6680 = vadd.f32 %v6034, %v6483
        %v6681 = vadd.f32 %v6035, %v6486
        %v6682 = vadd.f32 %v6036, %v6489
        %v6683 = vadd.f32 %v6037, %v6492
        %v6684 = vadd.f32 %v6038, %v6495
        %v6685 = vadd.f32 %v6039, %v6498
        %v6686 = vadd.f32 %v6040, %v6501
        %v6687 = vadd.f32 %v6041, %v6504
        %v6688 = vadd.f32 %v6042, %v6507
        %v6689 = vadd.f32 %v6043, %v6510
        %v6690 = vadd.f32 %v6044, %v6513
        %v6691 = vadd.f32 %v6045, %v6516
        %v6692 = vadd.f32 %v6046, %v6519
        %v6693 = vadd.f32 %v6047, %v6522
        %v6694 = vadd.f32 %v6048, %v6525
        %v6695 = vadd.f32 %v6049, %v6528
        %v6696 = vadd.f32 %v6050, %v6531
        %v6697 = vadd.f32 %v6051, %v6534
        %v6698 = vadd.f32 %v6052, %v6537
        %v6699 = vadd.f32 %v6053, %v6540
        %v6700 = vadd.f32 %v6054, %v6543
        %v6701 = vadd.f32 %v6055, %v6546
        %v6702 = vadd.f32 %v6056, %v6549
        %v6703 = vadd.f32 %v6057, %v6552
        %v6704 = vadd.f32 %v6058, %v6555
        %v6705 = vadd.f32 %v6059, %v6558
        %v6706 = vadd.f32 %v6060, %v6561
        %v6707 = vadd.f32 %v6061, %v6564
        %v6708 = vadd.f32 %v6062, %v6567
        %v6709 = vadd.f32 %v6063, %v6570
        %v6710 = vadd.f32 %v6064, %v6573
        %v6711 = vadd.f32 %v6065, %v6576
        %v6712 = vadd.f32 %v6066, %v6579
        %v6713 = vadd.f32 %v6067, %v6582
        %v6714 = vadd.f32 %v6068, %v6585
        %v6715 = vadd.f32 %v6069, %v6588
        %v6716 = vadd.f32 %v6070, %v6591
        %v6717 = vadd.f32 %v6071, %v6594
        %v6718 = vadd.f32 %v6072, %v6597
        %v6719 = vadd.f32 %v6073, %v6600
        %v6720 = vadd.f32 %v6074, %v6603
        %v6721 = vadd.f32 %v6075, %v6606
        %v6722 = vadd.f32 %v6076, %v6609
        %v6723 = vadd.f32 %v6077, %v6612
        %v6724 = vadd.f32 %v6078, %v6615
        %v6725 = vadd.f32 %v6079, %v6618
        %v6726 = vadd.f32 %v6080, %v6621
        %v6727 = vadd.f32 %v6081, %v6624
        %v6728 = vadd.f32 %v6082, %v6627
        %v6729 = vadd.f32 %v6083, %v6630
        %v6730 = vadd.f32 %v6084, %v6633
        %v6731 = vadd.f32 %v6085, %v6636
        %v6732 = vadd.f32 %v6086, %v6639
        %v6733 = vadd.f32 %v6087, %v6642
        %v6734 = vadd.f32 %v6088, %v6645
        %v6735 = vadd.f32 %v6089, %v6648
        %v6736 = vadd.f32 %v6090, %v6651
        %v6737 = vadd.f32 %v6091, %v6654
        %v6738 = vadd.f32 %v6092, %v6657
        %v6739 = vadd.f32 %v6093, %v6660
        %v6740 = vld [vmem:[#allocation9] sm:$0x1]
        %v6742 = vperm.slane %v6740, 0
        %v6744 = vadd.f32 %v6662, %v6742
        %v6745 = vadd.f32 %v6663, %v6742
        %v6746 = vadd.f32 %v6664, %v6742
        %v6747 = vadd.f32 %v6665, %v6742
        %v6748 = vadd.f32 %v6666, %v6742
        %v6749 = vadd.f32 %v6667, %v6742
        %v6750 = vadd.f32 %v6668, %v6742
        %v6751 = vadd.f32 %v6669, %v6742
        %v6752 = vadd.f32 %v6670, %v6742
        %v6753 = vadd.f32 %v6671, %v6742
        %v6754 = vadd.f32 %v6672, %v6742
        %v6755 = vadd.f32 %v6673, %v6742
        %v6756 = vadd.f32 %v6674, %v6742
        %v6757 = vadd.f32 %v6675, %v6742
        %v6758 = vadd.f32 %v6676, %v6742
        %v6759 = vadd.f32 %v6677, %v6742
        %v6760 = vadd.f32 %v6678, %v6742
        %v6761 = vadd.f32 %v6679, %v6742
        %v6762 = vadd.f32 %v6680, %v6742
        %v6763 = vadd.f32 %v6681, %v6742
        %v6764 = vadd.f32 %v6682, %v6742
        %v6765 = vadd.f32 %v6683, %v6742
        %v6766 = vadd.f32 %v6684, %v6742
        %v6767 = vadd.f32 %v6685, %v6742
        %v6768 = vadd.f32 %v6686, %v6742
        %v6769 = vadd.f32 %v6687, %v6742
        %v6770 = vadd.f32 %v6688, %v6742
        %v6771 = vadd.f32 %v6689, %v6742
        %v6772 = vadd.f32 %v6690, %v6742
        %v6773 = vadd.f32 %v6691, %v6742
        %v6774 = vadd.f32 %v6692, %v6742
        %v6775 = vadd.f32 %v6693, %v6742
        %v6776 = vadd.f32 %v6694, %v6742
        %v6777 = vadd.f32 %v6695, %v6742
        %v6778 = vadd.f32 %v6696, %v6742
        %v6779 = vadd.f32 %v6697, %v6742
        %v6780 = vadd.f32 %v6698, %v6742
        %v6781 = vadd.f32 %v6699, %v6742
        %v6782 = vadd.f32 %v6700, %v6742
        %v6783 = vadd.f32 %v6701, %v6742
        %v6784 = vadd.f32 %v6702, %v6742
        %v6785 = vadd.f32 %v6703, %v6742
        %v6786 = vadd.f32 %v6704, %v6742
        %v6787 = vadd.f32 %v6705, %v6742
        %v6788 = vadd.f32 %v6706, %v6742
        %v6789 = vadd.f32 %v6707, %v6742
        %v6790 = vadd.f32 %v6708, %v6742
        %v6791 = vadd.f32 %v6709, %v6742
        %v6792 = vadd.f32 %v6710, %v6742
        %v6793 = vadd.f32 %v6711, %v6742
        %v6794 = vadd.f32 %v6712, %v6742
        %v6795 = vadd.f32 %v6713, %v6742
        %v6796 = vadd.f32 %v6714, %v6742
        %v6797 = vadd.f32 %v6715, %v6742
        %v6798 = vadd.f32 %v6716, %v6742
        %v6799 = vadd.f32 %v6717, %v6742
        %v6800 = vadd.f32 %v6718, %v6742
        %v6801 = vadd.f32 %v6719, %v6742
        %v6802 = vadd.f32 %v6720, %v6742
        %v6803 = vadd.f32 %v6721, %v6742
        %v6804 = vadd.f32 %v6722, %v6742
        %v6805 = vadd.f32 %v6723, %v6742
        %v6806 = vadd.f32 %v6724, %v6742
        %v6807 = vadd.f32 %v6725, %v6742
        %v6808 = vadd.f32 %v6726, %v6742
        %v6809 = vadd.f32 %v6727, %v6742
        %v6810 = vadd.f32 %v6728, %v6742
        %v6811 = vadd.f32 %v6729, %v6742
        %v6812 = vadd.f32 %v6730, %v6742
        %v6813 = vadd.f32 %v6731, %v6742
        %v6814 = vadd.f32 %v6732, %v6742
        %v6815 = vadd.f32 %v6733, %v6742
        %v6816 = vadd.f32 %v6734, %v6742
        %v6817 = vadd.f32 %v6735, %v6742
        %v6818 = vadd.f32 %v6736, %v6742
        %v6819 = vadd.f32 %v6737, %v6742
        %v6820 = vadd.f32 %v6738, %v6742
        %v6821 = vadd.f32 %v6739, %v6742
        %v6822 = vmax.f32 %v6744, 0.0
        %v6823 = vmax.f32 %v6745, 0.0
        %v6824 = vmax.f32 %v6746, 0.0
        %v6825 = vmax.f32 %v6747, 0.0
        %v6826 = vmax.f32 %v6748, 0.0
        %v6827 = vmax.f32 %v6749, 0.0
        %v6828 = vmax.f32 %v6750, 0.0
        %v6829 = vmax.f32 %v6751, 0.0
        %v6830 = vmax.f32 %v6752, 0.0
        %v6831 = vmax.f32 %v6753, 0.0
        %v6832 = vmax.f32 %v6754, 0.0
        %v6833 = vmax.f32 %v6755, 0.0
        %v6834 = vmax.f32 %v6756, 0.0
        %v6835 = vmax.f32 %v6757, 0.0
        %v6836 = vmax.f32 %v6758, 0.0
        %v6837 = vmax.f32 %v6759, 0.0
        %v6838 = vmax.f32 %v6760, 0.0
        %v6839 = vmax.f32 %v6761, 0.0
        %v6840 = vmax.f32 %v6762, 0.0
        %v6841 = vmax.f32 %v6763, 0.0
        %v6842 = vmax.f32 %v6764, 0.0
        %v6843 = vmax.f32 %v6765, 0.0
        %v6844 = vmax.f32 %v6766, 0.0
        %v6845 = vmax.f32 %v6767, 0.0
        %v6846 = vmax.f32 %v6768, 0.0
        %v6847 = vmax.f32 %v6769, 0.0
        %v6848 = vmax.f32 %v6770, 0.0
        %v6849 = vmax.f32 %v6771, 0.0
        %v6850 = vmax.f32 %v6772, 0.0
        %v6851 = vmax.f32 %v6773, 0.0
        %v6852 = vmax.f32 %v6774, 0.0
        %v6853 = vmax.f32 %v6775, 0.0
        %v6854 = vmax.f32 %v6776, 0.0
        %v6855 = vmax.f32 %v6777, 0.0
        %v6856 = vmax.f32 %v6778, 0.0
        %v6857 = vmax.f32 %v6779, 0.0
        %v6858 = vmax.f32 %v6780, 0.0
        %v6859 = vmax.f32 %v6781, 0.0
        %v6860 = vmax.f32 %v6782, 0.0
        %v6861 = vmax.f32 %v6783, 0.0
        %v6862 = vmax.f32 %v6784, 0.0
        %v6863 = vmax.f32 %v6785, 0.0
        %v6864 = vmax.f32 %v6786, 0.0
        %v6865 = vmax.f32 %v6787, 0.0
        %v6866 = vmax.f32 %v6788, 0.0
        %v6867 = vmax.f32 %v6789, 0.0
        %v6868 = vmax.f32 %v6790, 0.0
        %v6869 = vmax.f32 %v6791, 0.0
        %v6870 = vmax.f32 %v6792, 0.0
        %v6871 = vmax.f32 %v6793, 0.0
        %v6872 = vmax.f32 %v6794, 0.0
        %v6873 = vmax.f32 %v6795, 0.0
        %v6874 = vmax.f32 %v6796, 0.0
        %v6875 = vmax.f32 %v6797, 0.0
        %v6876 = vmax.f32 %v6798, 0.0
        %v6877 = vmax.f32 %v6799, 0.0
        %v6878 = vmax.f32 %v6800, 0.0
        %v6879 = vmax.f32 %v6801, 0.0
        %v6880 = vmax.f32 %v6802, 0.0
        %v6881 = vmax.f32 %v6803, 0.0
        %v6882 = vmax.f32 %v6804, 0.0
        %v6883 = vmax.f32 %v6805, 0.0
        %v6884 = vmax.f32 %v6806, 0.0
        %v6885 = vmax.f32 %v6807, 0.0
        %v6886 = vmax.f32 %v6808, 0.0
        %v6887 = vmax.f32 %v6809, 0.0
        %v6888 = vmax.f32 %v6810, 0.0
        %v6889 = vmax.f32 %v6811, 0.0
        %v6890 = vmax.f32 %v6812, 0.0
        %v6891 = vmax.f32 %v6813, 0.0
        %v6892 = vmax.f32 %v6814, 0.0
        %v6893 = vmax.f32 %v6815, 0.0
        %v6894 = vmax.f32 %v6816, 0.0
        %v6895 = vmax.f32 %v6817, 0.0
        %v6896 = vmax.f32 %v6818, 0.0
        %v6897 = vmax.f32 %v6819, 0.0
        %v6898 = vmax.f32 %v6820, 0.0
        %v6899 = vmax.f32 %v6821, 0.0
        %vm6900 = vcmask 523264
        %6901 = vst.msk [vmem:[#allocation3] sm:$0xff] %vm6900, %v6822
        %6902 = vst.msk [vmem:[#allocation3 + $0x8] sm:$0xff] %vm6900, %v6823
        %6903 = vst.msk [vmem:[#allocation3 + $0x10] sm:$0xff] %vm6900, %v6824
        %6904 = vst.msk [vmem:[#allocation3 + $0x18] sm:$0xff] %vm6900, %v6825
        %6905 = vst.msk [vmem:[#allocation3 + $0x20] sm:$0xff] %vm6900, %v6826
        %6906 = vst.msk [vmem:[#allocation3 + $0x28] sm:$0xff] %vm6900, %v6827
        %6907 = vst.msk [vmem:[#allocation3 + $0x30] sm:$0xff] %vm6900, %v6828
        %6908 = vst.msk [vmem:[#allocation3 + $0x38] sm:$0xff] %vm6900, %v6829
        %6909 = vst.msk [vmem:[#allocation3 + $0x40] sm:$0xff] %vm6900, %v6830
        %6910 = vst.msk [vmem:[#allocation3 + $0x48] sm:$0xff] %vm6900, %v6831
        %6911 = vst.msk [vmem:[#allocation3 + $0x50] sm:$0xff] %vm6900, %v6832
        %6912 = vst.msk [vmem:[#allocation3 + $0x58] sm:$0xff] %vm6900, %v6833
        %6913 = vst.msk [vmem:[#allocation3 + $0x60] sm:$0xff] %vm6900, %v6834
        %6914 = vst.msk [vmem:[#allocation3 + $0x68] sm:$0xff] %vm6900, %v6835
        %6915 = vst.msk [vmem:[#allocation3 + $0x70] sm:$0xff] %vm6900, %v6836
        %6916 = vst.msk [vmem:[#allocation3 + $0x78] sm:$0xff] %vm6900, %v6837
        %6917 = vst.msk [vmem:[#allocation3 + $0x80] sm:$0xff] %vm6900, %v6838
        %6918 = vst.msk [vmem:[#allocation3 + $0x88] sm:$0xff] %vm6900, %v6839
        %6919 = vst.msk [vmem:[#allocation3 + $0x90] sm:$0xff] %vm6900, %v6840
        %6920 = vst.msk [vmem:[#allocation3 + $0x98] sm:$0xff] %vm6900, %v6841
        %6921 = vst.msk [vmem:[#allocation3 + $0xa0] sm:$0xff] %vm6900, %v6842
        %6922 = vst.msk [vmem:[#allocation3 + $0xa8] sm:$0xff] %vm6900, %v6843
        %6923 = vst.msk [vmem:[#allocation3 + $0xb0] sm:$0xff] %vm6900, %v6844
        %6924 = vst.msk [vmem:[#allocation3 + $0xb8] sm:$0xff] %vm6900, %v6845
        %6925 = vst.msk [vmem:[#allocation3 + $0xc0] sm:$0xff] %vm6900, %v6846
        %6926 = vst.msk [vmem:[#allocation3 + $0xc8] sm:$0xff] %vm6900, %v6847
        %6927 = vst.msk [vmem:[#allocation3 + $0xd0] sm:$0xff] %vm6900, %v6848
        %6928 = vst.msk [vmem:[#allocation3 + $0xd8] sm:$0xff] %vm6900, %v6849
        %6929 = vst.msk [vmem:[#allocation3 + $0xe0] sm:$0xff] %vm6900, %v6850
        %6930 = vst.msk [vmem:[#allocation3 + $0xe8] sm:$0xff] %vm6900, %v6851
        %6931 = vst.msk [vmem:[#allocation3 + $0xf0] sm:$0xff] %vm6900, %v6852
        %6932 = vst.msk [vmem:[#allocation3 + $0xf8] sm:$0xff] %vm6900, %v6853
        %6933 = vst.msk [vmem:[#allocation3 + $0x100] sm:$0xff] %vm6900, %v6854
        %6934 = vst.msk [vmem:[#allocation3 + $0x108] sm:$0xff] %vm6900, %v6855
        %6935 = vst.msk [vmem:[#allocation3 + $0x110] sm:$0xff] %vm6900, %v6856
        %6936 = vst.msk [vmem:[#allocation3 + $0x118] sm:$0xff] %vm6900, %v6857
        %6937 = vst.msk [vmem:[#allocation3 + $0x120] sm:$0xff] %vm6900, %v6858
        %6938 = vst.msk [vmem:[#allocation3 + $0x128] sm:$0xff] %vm6900, %v6859
        %6939 = vst.msk [vmem:[#allocation3 + $0x130] sm:$0xff] %vm6900, %v6860
        %6940 = vst.msk [vmem:[#allocation3 + $0x138] sm:$0xff] %vm6900, %v6861
        %6941 = vst.msk [vmem:[#allocation3 + $0x140] sm:$0xff] %vm6900, %v6862
        %6942 = vst.msk [vmem:[#allocation3 + $0x148] sm:$0xff] %vm6900, %v6863
        %6943 = vst.msk [vmem:[#allocation3 + $0x150] sm:$0xff] %vm6900, %v6864
        %6944 = vst.msk [vmem:[#allocation3 + $0x158] sm:$0xff] %vm6900, %v6865
        %6945 = vst.msk [vmem:[#allocation3 + $0x160] sm:$0xff] %vm6900, %v6866
        %6946 = vst.msk [vmem:[#allocation3 + $0x168] sm:$0xff] %vm6900, %v6867
        %6947 = vst.msk [vmem:[#allocation3 + $0x170] sm:$0xff] %vm6900, %v6868
        %6948 = vst.msk [vmem:[#allocation3 + $0x178] sm:$0xff] %vm6900, %v6869
        %6949 = vst.msk [vmem:[#allocation3 + $0x180] sm:$0xff] %vm6900, %v6870
        %6950 = vst.msk [vmem:[#allocation3 + $0x188] sm:$0xff] %vm6900, %v6871
        %6951 = vst.msk [vmem:[#allocation3 + $0x190] sm:$0xff] %vm6900, %v6872
        %6952 = vst.msk [vmem:[#allocation3 + $0x198] sm:$0xff] %vm6900, %v6873
        %6953 = vst.msk [vmem:[#allocation3 + $0x1a0] sm:$0xff] %vm6900, %v6874
        %6954 = vst.msk [vmem:[#allocation3 + $0x1a8] sm:$0xff] %vm6900, %v6875
        %6955 = vst.msk [vmem:[#allocation3 + $0x1b0] sm:$0xff] %vm6900, %v6876
        %6956 = vst.msk [vmem:[#allocation3 + $0x1b8] sm:$0xff] %vm6900, %v6877
        %6957 = vst.msk [vmem:[#allocation3 + $0x1c0] sm:$0xff] %vm6900, %v6878
        %6958 = vst.msk [vmem:[#allocation3 + $0x1c8] sm:$0xff] %vm6900, %v6879
        %6959 = vst.msk [vmem:[#allocation3 + $0x1d0] sm:$0xff] %vm6900, %v6880
        %6960 = vst.msk [vmem:[#allocation3 + $0x1d8] sm:$0xff] %vm6900, %v6881
        %6961 = vst.msk [vmem:[#allocation3 + $0x1e0] sm:$0xff] %vm6900, %v6882
        %6962 = vst.msk [vmem:[#allocation3 + $0x1e8] sm:$0xff] %vm6900, %v6883
        %6963 = vst.msk [vmem:[#allocation3 + $0x1f0] sm:$0xff] %vm6900, %v6884
        %6964 = vst.msk [vmem:[#allocation3 + $0x1f8] sm:$0xff] %vm6900, %v6885
        %6965 = vst.msk [vmem:[#allocation3 + $0x200] sm:$0xff] %vm6900, %v6886
        %6966 = vst.msk [vmem:[#allocation3 + $0x208] sm:$0xff] %vm6900, %v6887
        %6967 = vst.msk [vmem:[#allocation3 + $0x210] sm:$0xff] %vm6900, %v6888
        %6968 = vst.msk [vmem:[#allocation3 + $0x218] sm:$0xff] %vm6900, %v6889
        %6969 = vst.msk [vmem:[#allocation3 + $0x220] sm:$0xff] %vm6900, %v6890
        %6970 = vst.msk [vmem:[#allocation3 + $0x228] sm:$0xff] %vm6900, %v6891
        %6971 = vst.msk [vmem:[#allocation3 + $0x230] sm:$0xff] %vm6900, %v6892
        %6972 = vst.msk [vmem:[#allocation3 + $0x238] sm:$0xff] %vm6900, %v6893
        %6973 = vst.msk [vmem:[#allocation3 + $0x240] sm:$0xff] %vm6900, %v6894
        %6974 = vst.msk [vmem:[#allocation3 + $0x248] sm:$0xff] %vm6900, %v6895
        %6975 = vst.msk [vmem:[#allocation3 + $0x250] sm:$0xff] %vm6900, %v6896
        %6976 = vst.msk [vmem:[#allocation3 + $0x258] sm:$0xff] %vm6900, %v6897
        %6977 = vst.msk [vmem:[#allocation3 + $0x260] sm:$0xff] %vm6900, %v6898
        %vm6978 = vcmask 521216
        %6979 = vst.msk [vmem:[#allocation3 + $0x268] sm:$0x3f] %vm6978, %v6899
        %v6980 = vld [vmem:[#allocation3] ss:$2 sm:$0xff]
        %s6981 = scalar_lea.vmem [#allocation3], 16
        %v6982 = vld [vmem:[%s6981] ss:$2 sm:$0xf]
        %s6983 = scalar_lea.vmem [#allocation3], 1
        %v6984 = vld [vmem:[%s6983] ss:$2 sm:$0xff]
        %s6985 = scalar_lea.vmem [#allocation3], 17
        %v6986 = vld [vmem:[%s6985] ss:$2 sm:$0xf]
        %s6987 = scalar_lea.vmem [#allocation3], 26
        %v6988 = vld [vmem:[%s6987] ss:$2 sm:$0xff]
        %s6989 = scalar_lea.vmem [#allocation3], 42
        %v6990 = vld [vmem:[%s6989] ss:$2 sm:$0xf]
        %s6991 = scalar_lea.vmem [#allocation3], 27
        %v6992 = vld [vmem:[%s6991] ss:$2 sm:$0xff]
        %s6993 = scalar_lea.vmem [#allocation3], 43
        %v6994 = vld [vmem:[%s6993] ss:$2 sm:$0xf]
        %v6995 = vmax.f32 %v6980, %v6984
        %v6996 = vmax.f32 %v6982, %v6986
        %v6997 = vmax.f32 %v6988, %v6992
        %v6998 = vmax.f32 %v6990, %v6994
        %v6999 = vmax.f32 %v6995, %v6997
        %v7000 = vmax.f32 %v6996, %v6998
        %7001 = vst.msk [vmem:[%s287] sm:$0xff] %vm6900, %v6999
        %vm7002 = vcmask 519168
        %7003 = vst.msk [vmem:[%s287 + $0x8] sm:$0xf] %vm7002, %v7000
        %s7004 = scalar_lea.vmem [#allocation3], 52
        %v7005 = vld [vmem:[%s7004] ss:$2 sm:$0xff]
        %s7006 = scalar_lea.vmem [#allocation3], 68
        %v7007 = vld [vmem:[%s7006] ss:$2 sm:$0xf]
        %s7008 = scalar_lea.vmem [#allocation3], 53
        %v7009 = vld [vmem:[%s7008] ss:$2 sm:$0xff]
        %s7010 = scalar_lea.vmem [#allocation3], 69
        %v7011 = vld [vmem:[%s7010] ss:$2 sm:$0xf]
        %s7012 = scalar_lea.vmem [#allocation3], 78
        %v7013 = vld [vmem:[%s7012] ss:$2 sm:$0xff]
        %s7014 = scalar_lea.vmem [#allocation3], 94
        %v7015 = vld [vmem:[%s7014] ss:$2 sm:$0xf]
        %s7016 = scalar_lea.vmem [#allocation3], 79
        %v7017 = vld [vmem:[%s7016] ss:$2 sm:$0xff]
        %s7018 = scalar_lea.vmem [#allocation3], 95
        %v7019 = vld [vmem:[%s7018] ss:$2 sm:$0xf]
        %v7020 = vmax.f32 %v7005, %v7009
        %v7021 = vmax.f32 %v7007, %v7011
        %v7022 = vmax.f32 %v7013, %v7017
        %v7023 = vmax.f32 %v7015, %v7019
        %v7024 = vmax.f32 %v7020, %v7022
        %v7025 = vmax.f32 %v7021, %v7023
        %7026 = vst.msk [vmem:[%s287 + $0xc] sm:$0xff] %vm6900, %v7024
        %7027 = vst.msk [vmem:[%s287 + $0x14] sm:$0xf] %vm7002, %v7025
        %s7028 = scalar_lea.vmem [#allocation3], 104
        %v7029 = vld [vmem:[%s7028] ss:$2 sm:$0xff]
        %s7030 = scalar_lea.vmem [#allocation3], 120
        %v7031 = vld [vmem:[%s7030] ss:$2 sm:$0xf]
        %s7032 = scalar_lea.vmem [#allocation3], 105
        %v7033 = vld [vmem:[%s7032] ss:$2 sm:$0xff]
        %s7034 = scalar_lea.vmem [#allocation3], 121
        %v7035 = vld [vmem:[%s7034] ss:$2 sm:$0xf]
        %s7036 = scalar_lea.vmem [#allocation3], 130
        %v7037 = vld [vmem:[%s7036] ss:$2 sm:$0xff]
        %s7038 = scalar_lea.vmem [#allocation3], 146
        %v7039 = vld [vmem:[%s7038] ss:$2 sm:$0xf]
        %s7040 = scalar_lea.vmem [#allocation3], 131
        %v7041 = vld [vmem:[%s7040] ss:$2 sm:$0xff]
        %s7042 = scalar_lea.vmem [#allocation3], 147
        %v7043 = vld [vmem:[%s7042] ss:$2 sm:$0xf]
        %v7044 = vmax.f32 %v7029, %v7033
        %v7045 = vmax.f32 %v7031, %v7035
        %v7046 = vmax.f32 %v7037, %v7041
        %v7047 = vmax.f32 %v7039, %v7043
        %v7048 = vmax.f32 %v7044, %v7046
        %v7049 = vmax.f32 %v7045, %v7047
        %7050 = vst.msk [vmem:[%s287 + $0x18] sm:$0xff] %vm6900, %v7048
        %7051 = vst.msk [vmem:[%s287 + $0x20] sm:$0xf] %vm7002, %v7049
        %s7052 = scalar_lea.vmem [#allocation3], 156
        %v7053 = vld [vmem:[%s7052] ss:$2 sm:$0xff]
        %s7054 = scalar_lea.vmem [#allocation3], 172
        %v7055 = vld [vmem:[%s7054] ss:$2 sm:$0xf]
        %s7056 = scalar_lea.vmem [#allocation3], 157
        %v7057 = vld [vmem:[%s7056] ss:$2 sm:$0xff]
        %s7058 = scalar_lea.vmem [#allocation3], 173
        %v7059 = vld [vmem:[%s7058] ss:$2 sm:$0xf]
        %s7060 = scalar_lea.vmem [#allocation3], 182
        %v7061 = vld [vmem:[%s7060] ss:$2 sm:$0xff]
        %s7062 = scalar_lea.vmem [#allocation3], 198
        %v7063 = vld [vmem:[%s7062] ss:$2 sm:$0xf]
        %s7064 = scalar_lea.vmem [#allocation3], 183
        %v7065 = vld [vmem:[%s7064] ss:$2 sm:$0xff]
        %s7066 = scalar_lea.vmem [#allocation3], 199
        %v7067 = vld [vmem:[%s7066] ss:$2 sm:$0xf]
        %v7068 = vmax.f32 %v7053, %v7057
        %v7069 = vmax.f32 %v7055, %v7059
        %v7070 = vmax.f32 %v7061, %v7065
        %v7071 = vmax.f32 %v7063, %v7067
        %v7072 = vmax.f32 %v7068, %v7070
        %v7073 = vmax.f32 %v7069, %v7071
        %7074 = vst.msk [vmem:[%s287 + $0x24] sm:$0xff] %vm6900, %v7072
        %7075 = vst.msk [vmem:[%s287 + $0x2c] sm:$0xf] %vm7002, %v7073
        %s7076 = scalar_lea.vmem [#allocation3], 208
        %v7077 = vld [vmem:[%s7076] ss:$2 sm:$0xff]
        %s7078 = scalar_lea.vmem [#allocation3], 224
        %v7079 = vld [vmem:[%s7078] ss:$2 sm:$0xf]
        %s7080 = scalar_lea.vmem [#allocation3], 209
        %v7081 = vld [vmem:[%s7080] ss:$2 sm:$0xff]
        %s7082 = scalar_lea.vmem [#allocation3], 225
        %v7083 = vld [vmem:[%s7082] ss:$2 sm:$0xf]
        %s7084 = scalar_lea.vmem [#allocation3], 234
        %v7085 = vld [vmem:[%s7084] ss:$2 sm:$0xff]
        %s7086 = scalar_lea.vmem [#allocation3], 250
        %v7087 = vld [vmem:[%s7086] ss:$2 sm:$0xf]
        %s7088 = scalar_lea.vmem [#allocation3], 235
        %v7089 = vld [vmem:[%s7088] ss:$2 sm:$0xff]
        %s7090 = scalar_lea.vmem [#allocation3], 251
        %v7091 = vld [vmem:[%s7090] ss:$2 sm:$0xf]
        %v7092 = vmax.f32 %v7077, %v7081
        %v7093 = vmax.f32 %v7079, %v7083
        %v7094 = vmax.f32 %v7085, %v7089
        %v7095 = vmax.f32 %v7087, %v7091
        %v7096 = vmax.f32 %v7092, %v7094
        %v7097 = vmax.f32 %v7093, %v7095
        %7098 = vst.msk [vmem:[%s287 + $0x30] sm:$0xff] %vm6900, %v7096
        %7099 = vst.msk [vmem:[%s287 + $0x38] sm:$0xf] %vm7002, %v7097
        %s7100 = scalar_lea.vmem [#allocation3], 260
        %v7101 = vld [vmem:[%s7100] ss:$2 sm:$0xff]
        %s7102 = scalar_lea.vmem [#allocation3], 276
        %v7103 = vld [vmem:[%s7102] ss:$2 sm:$0xf]
        %s7104 = scalar_lea.vmem [#allocation3], 261
        %v7105 = vld [vmem:[%s7104] ss:$2 sm:$0xff]
        %s7106 = scalar_lea.vmem [#allocation3], 277
        %v7107 = vld [vmem:[%s7106] ss:$2 sm:$0xf]
        %s7108 = scalar_lea.vmem [#allocation3], 286
        %v7109 = vld [vmem:[%s7108] ss:$2 sm:$0xff]
        %s7110 = scalar_lea.vmem [#allocation3], 302
        %v7111 = vld [vmem:[%s7110] ss:$2 sm:$0xf]
        %s7112 = scalar_lea.vmem [#allocation3], 287
        %v7113 = vld [vmem:[%s7112] ss:$2 sm:$0xff]
        %s7114 = scalar_lea.vmem [#allocation3], 303
        %v7115 = vld [vmem:[%s7114] ss:$2 sm:$0xf]
        %v7116 = vmax.f32 %v7101, %v7105
        %v7117 = vmax.f32 %v7103, %v7107
        %v7118 = vmax.f32 %v7109, %v7113
        %v7119 = vmax.f32 %v7111, %v7115
        %v7120 = vmax.f32 %v7116, %v7118
        %v7121 = vmax.f32 %v7117, %v7119
        %7122 = vst.msk [vmem:[%s287 + $0x3c] sm:$0xff] %vm6900, %v7120
        %7123 = vst.msk [vmem:[%s287 + $0x44] sm:$0xf] %vm7002, %v7121
        %s7124 = scalar_lea.vmem [#allocation3], 312
        %v7125 = vld [vmem:[%s7124] ss:$2 sm:$0xff]
        %s7126 = scalar_lea.vmem [#allocation3], 328
        %v7127 = vld [vmem:[%s7126] ss:$2 sm:$0xf]
        %s7128 = scalar_lea.vmem [#allocation3], 313
        %v7129 = vld [vmem:[%s7128] ss:$2 sm:$0xff]
        %s7130 = scalar_lea.vmem [#allocation3], 329
        %v7131 = vld [vmem:[%s7130] ss:$2 sm:$0xf]
        %s7132 = scalar_lea.vmem [#allocation3], 338
        %v7133 = vld [vmem:[%s7132] ss:$2 sm:$0xff]
        %s7134 = scalar_lea.vmem [#allocation3], 354
        %v7135 = vld [vmem:[%s7134] ss:$2 sm:$0xf]
        %s7136 = scalar_lea.vmem [#allocation3], 339
        %v7137 = vld [vmem:[%s7136] ss:$2 sm:$0xff]
        %s7138 = scalar_lea.vmem [#allocation3], 355
        %v7139 = vld [vmem:[%s7138] ss:$2 sm:$0xf]
        %v7140 = vmax.f32 %v7125, %v7129
        %v7141 = vmax.f32 %v7127, %v7131
        %v7142 = vmax.f32 %v7133, %v7137
        %v7143 = vmax.f32 %v7135, %v7139
        %v7144 = vmax.f32 %v7140, %v7142
        %v7145 = vmax.f32 %v7141, %v7143
        %7146 = vst.msk [vmem:[%s287 + $0x48] sm:$0xff] %vm6900, %v7144
        %7147 = vst.msk [vmem:[%s287 + $0x50] sm:$0xf] %vm7002, %v7145
        %s7148 = scalar_lea.vmem [#allocation3], 364
        %v7149 = vld [vmem:[%s7148] ss:$2 sm:$0xff]
        %s7150 = scalar_lea.vmem [#allocation3], 380
        %v7151 = vld [vmem:[%s7150] ss:$2 sm:$0xf]
        %s7152 = scalar_lea.vmem [#allocation3], 365
        %v7153 = vld [vmem:[%s7152] ss:$2 sm:$0xff]
        %s7154 = scalar_lea.vmem [#allocation3], 381
        %v7155 = vld [vmem:[%s7154] ss:$2 sm:$0xf]
        %s7156 = scalar_lea.vmem [#allocation3], 390
        %v7157 = vld [vmem:[%s7156] ss:$2 sm:$0xff]
        %s7158 = scalar_lea.vmem [#allocation3], 406
        %v7159 = vld [vmem:[%s7158] ss:$2 sm:$0xf]
        %s7160 = scalar_lea.vmem [#allocation3], 391
        %v7161 = vld [vmem:[%s7160] ss:$2 sm:$0xff]
        %s7162 = scalar_lea.vmem [#allocation3], 407
        %v7163 = vld [vmem:[%s7162] ss:$2 sm:$0xf]
        %v7164 = vmax.f32 %v7149, %v7153
        %v7165 = vmax.f32 %v7151, %v7155
        %v7166 = vmax.f32 %v7157, %v7161
        %v7167 = vmax.f32 %v7159, %v7163
        %v7168 = vmax.f32 %v7164, %v7166
        %v7169 = vmax.f32 %v7165, %v7167
        %7170 = vst.msk [vmem:[%s287 + $0x54] sm:$0xff] %vm6900, %v7168
        %7171 = vst.msk [vmem:[%s287 + $0x5c] sm:$0xf] %vm7002, %v7169
        %s7172 = scalar_lea.vmem [#allocation3], 416
        %v7173 = vld [vmem:[%s7172] ss:$2 sm:$0xff]
        %s7174 = scalar_lea.vmem [#allocation3], 432
        %v7175 = vld [vmem:[%s7174] ss:$2 sm:$0xf]
        %s7176 = scalar_lea.vmem [#allocation3], 417
        %v7177 = vld [vmem:[%s7176] ss:$2 sm:$0xff]
        %s7178 = scalar_lea.vmem [#allocation3], 433
        %v7179 = vld [vmem:[%s7178] ss:$2 sm:$0xf]
        %s7180 = scalar_lea.vmem [#allocation3], 442
        %v7181 = vld [vmem:[%s7180] ss:$2 sm:$0xff]
        %s7182 = scalar_lea.vmem [#allocation3], 458
        %v7183 = vld [vmem:[%s7182] ss:$2 sm:$0xf]
        %s7184 = scalar_lea.vmem [#allocation3], 443
        %v7185 = vld [vmem:[%s7184] ss:$2 sm:$0xff]
        %s7186 = scalar_lea.vmem [#allocation3], 459
        %v7187 = vld [vmem:[%s7186] ss:$2 sm:$0xf]
        %v7188 = vmax.f32 %v7173, %v7177
        %v7189 = vmax.f32 %v7175, %v7179
        %v7190 = vmax.f32 %v7181, %v7185
        %v7191 = vmax.f32 %v7183, %v7187
        %v7192 = vmax.f32 %v7188, %v7190
        %v7193 = vmax.f32 %v7189, %v7191
        %7194 = vst.msk [vmem:[%s287 + $0x60] sm:$0xff] %vm6900, %v7192
        %7195 = vst.msk [vmem:[%s287 + $0x68] sm:$0xf] %vm7002, %v7193
        %s7196 = scalar_lea.vmem [#allocation3], 468
        %v7197 = vld [vmem:[%s7196] ss:$2 sm:$0xff]
        %s7198 = scalar_lea.vmem [#allocation3], 484
        %v7199 = vld [vmem:[%s7198] ss:$2 sm:$0xf]
        %s7200 = scalar_lea.vmem [#allocation3], 469
        %v7201 = vld [vmem:[%s7200] ss:$2 sm:$0xff]
        %s7202 = scalar_lea.vmem [#allocation3], 485
        %v7203 = vld [vmem:[%s7202] ss:$2 sm:$0xf]
        %s7204 = scalar_lea.vmem [#allocation3], 494
        %v7205 = vld [vmem:[%s7204] ss:$2 sm:$0xff]
        %s7206 = scalar_lea.vmem [#allocation3], 510
        %v7207 = vld [vmem:[%s7206] ss:$2 sm:$0xf]
        %s7208 = scalar_lea.vmem [#allocation3], 495
        %v7209 = vld [vmem:[%s7208] ss:$2 sm:$0xff]
        %s7210 = scalar_lea.vmem [#allocation3], 511
        %v7211 = vld [vmem:[%s7210] ss:$2 sm:$0xf]
        %v7212 = vmax.f32 %v7197, %v7201
        %v7213 = vmax.f32 %v7199, %v7203
        %v7214 = vmax.f32 %v7205, %v7209
        %v7215 = vmax.f32 %v7207, %v7211
        %v7216 = vmax.f32 %v7212, %v7214
        %v7217 = vmax.f32 %v7213, %v7215
        %7218 = vst.msk [vmem:[%s287 + $0x6c] sm:$0xff] %vm6900, %v7216
        %7219 = vst.msk [vmem:[%s287 + $0x74] sm:$0xf] %vm7002, %v7217
        %s7220 = scalar_lea.vmem [#allocation3], 520
        %v7221 = vld [vmem:[%s7220] ss:$2 sm:$0xff]
        %s7222 = scalar_lea.vmem [#allocation3], 536
        %v7223 = vld [vmem:[%s7222] ss:$2 sm:$0xf]
        %s7224 = scalar_lea.vmem [#allocation3], 521
        %v7225 = vld [vmem:[%s7224] ss:$2 sm:$0xff]
        %s7226 = scalar_lea.vmem [#allocation3], 537
        %v7227 = vld [vmem:[%s7226] ss:$2 sm:$0xf]
        %s7228 = scalar_lea.vmem [#allocation3], 546
        %v7229 = vld [vmem:[%s7228] ss:$2 sm:$0xff]
        %s7230 = scalar_lea.vmem [#allocation3], 562
        %v7231 = vld [vmem:[%s7230] ss:$2 sm:$0xf]
        %s7232 = scalar_lea.vmem [#allocation3], 547
        %v7233 = vld [vmem:[%s7232] ss:$2 sm:$0xff]
        %s7234 = scalar_lea.vmem [#allocation3], 563
        %v7235 = vld [vmem:[%s7234] ss:$2 sm:$0xf]
        %v7236 = vmax.f32 %v7221, %v7225
        %v7237 = vmax.f32 %v7223, %v7227
        %v7238 = vmax.f32 %v7229, %v7233
        %v7239 = vmax.f32 %v7231, %v7235
        %v7240 = vmax.f32 %v7236, %v7238
        %v7241 = vmax.f32 %v7237, %v7239
        %7242 = vst.msk [vmem:[%s287 + $0x78] sm:$0xff] %vm6900, %v7240
        %7243 = vst.msk [vmem:[%s287 + $0x80] sm:$0xf] %vm7002, %v7241
        %s7244 = scalar_lea.vmem [#allocation3], 572
        %v7245 = vld [vmem:[%s7244] ss:$2 sm:$0xff]
        %s7246 = scalar_lea.vmem [#allocation3], 588
        %v7247 = vld [vmem:[%s7246] ss:$2 sm:$0xf]
        %s7248 = scalar_lea.vmem [#allocation3], 573
        %v7249 = vld [vmem:[%s7248] ss:$2 sm:$0xff]
        %s7250 = scalar_lea.vmem [#allocation3], 589
        %v7251 = vld [vmem:[%s7250] ss:$2 sm:$0xf]
        %s7252 = scalar_lea.vmem [#allocation3], 598
        %v7253 = vld [vmem:[%s7252] ss:$2 sm:$0xff]
        %s7254 = scalar_lea.vmem [#allocation3], 614
        %v7255 = vld [vmem:[%s7254] ss:$2 sm:$0xf]
        %s7256 = scalar_lea.vmem [#allocation3], 599
        %v7257 = vld [vmem:[%s7256] ss:$2 sm:$0xff]
        %s7258 = scalar_lea.vmem [#allocation3], 615
        %v7259 = vld [vmem:[%s7258] ss:$2 sm:$0xf]
        %v7260 = vmax.f32 %v7245, %v7249
        %v7261 = vmax.f32 %v7247, %v7251
        %v7262 = vmax.f32 %v7253, %v7257
        %v7263 = vmax.f32 %v7255, %v7259
        %v7264 = vmax.f32 %v7260, %v7262
        %v7265 = vmax.f32 %v7261, %v7263
        %7266 = vst.msk [vmem:[%s287 + $0x84] sm:$0xff] %vm6900, %v7264
        %7267 = vst.msk [vmem:[%s287 + $0x8c] sm:$0xf] %vm7002, %v7265
        %p7268 = scmp.lt.s32.totalorder %s19, 1
        %s7269 = scalar_select %p7268, %s19, 1
        %s7270 = smul.addr %s7269, 18
        %s7271 = smul.addr %s7270, 8
        %s7272 = scalar_lea.vmem %s5, %s7271
        // Predicated region
        $region57: #{net_forward.2} parent=39 // pred_check
          %p7273 = pneg %p147
        $region58: #{net_forward.2} parent=39 // pred_check_branch
          %7275 = sbr.rel (%p7273) target = $region60
        $region59: #{net_forward.2} parent=39 // pred_region
          _
        $region60: #{net_forward.2} parent=39 // pred_fallthru
          _
      $region40: #{net_forward.2} parent=5 // pred_fallthru
        _
      %p7276 = scmp.le.s32.totalorder 2, %s14
      // Predicated region
      $region61: #{net_forward.2} parent=5 // pred_check
        %p7277 = pneg %p7276
      $region62: #{net_forward.2} parent=5 // pred_check_branch
        %7279 = sbr.rel (%p7277) target = $region64
      $region63: #{net_forward.2} parent=5 // pred_region
        %s7280 = ssub.s32 %s14, 2
        // Predicated region
        $region65: #{net_forward.2} parent=63 // pred_check
          %p7281 = pneg %p153
        $region66: #{net_forward.2} parent=63 // pred_check_branch
          %7283 = sbr.rel (%p7281) target = $region68
        $region67: #{net_forward.2} parent=63 // pred_region
          %p7284 = scmp.lt.s32.totalorder %s20, 1
          %s7285 = scalar_select %p7284, %s20, 1
          %s7286 = smul.addr %s7285, 18
          %s7287 = smul.addr %s7286, 8
          %s7288 = scalar_lea.vmem %s5, %s7287
        $region68: #{net_forward.2} parent=63 // pred_fallthru
          _
      $region64: #{net_forward.2} parent=5 // pred_fallthru
        _
    $region6: #{net_forward.2} parent=1 // loop_footer
      %s18 = sadd.s32 1, %s14
    $region7: #{net_forward.2} parent=1 // loop_footer_branch
      %13 = sbr.rel target = $region3
    $region8: #{net_forward.2} parent=1 // loop_exit
      _
    %7289 = vsyncpa [#allocation5], 1
    %s7290 = scalar_lea.sflag [#allocation5], 1
    %7291 = vsyncpa %s7290, 1
    %7292 = vsyncpa [#allocation7], 1
    %7293 = vsyncpa [#allocation10], 1

</llo_original>
